<compile_context>
chip_gen: v5e
topology: v5e:2x2
jax: 0.10.0
libtpu: 0.0.40
codegen_flags: <defaults>
</compile_context>

<pallas_src>
import math

import jax
import jax.numpy as jnp
from jax.experimental import pallas as pl
from jax.experimental.pallas import tpu as pltpu


# ---------------------------------------------------------------------------
# Model configuration (small, consistent with the PyTorch module's forward)
# ---------------------------------------------------------------------------
IN_FEATURES = 2
OUT_FEATURES = 3
HIDDEN_LAYERS = 3
HIDDEN_FEATURES = 32
FIRST_OMEGA = 30.0
HIDDEN_OMEGA = 30.0
FBS = 1.0          # first-layer bias bound

N = 1024           # number of coordinates in the primary demo
TN = 512           # default batch tile on the lane axis (even grid at N=1024)


def _finer_activation(z, omega):
    # finer_activation: sin(omega * (|z| + 1) * z), rewritten as sin(t*|z| + t)
    # with t = omega * z -- one fewer VALU op and a shorter chain into the EUP.
    t = omega * z
    return jnp.sin(t * jnp.abs(z) + t)


# ---------------------------------------------------------------------------
# Pallas kernel: fused Finer forward for one batch tile (feature-major layout)
# ---------------------------------------------------------------------------
def finer_kernel(x_ref, w_ref, b_ref, o_ref):
    """x_ref (IN, TN), w_ref (L+2, H, H), b_ref (L+2, H, 1) -> o_ref (OUT, TN)."""
    x = x_ref[...]                                   # (IN, TN), batch on lanes
    tn = x.shape[1]

    # --- Layer 0: Linear(IN=2 -> H) as two broadcast FMAs on the VPU. --------
    w0 = w_ref[0]                                    # (H, H); only [:, :IN] is real
    z = jnp.broadcast_to(b_ref[0], (HIDDEN_FEATURES, tn))
    for k in range(IN_FEATURES):
        z = z + w0[:, k:k + 1] * x[k:k + 1, :]
    h = _finer_activation(z, FIRST_OMEGA)            # (H, TN)

    # --- Hidden layers: Linear(H -> H) + FINER activation. -------------------
    # PyTorch weights are (out, in); with feature-major h this is a plain
    # W @ h, so no transposes anywhere in the kernel.
    for l in range(HIDDEN_LAYERS):
        z = (jnp.dot(w_ref[1 + l], h, preferred_element_type=jnp.float32)
             + b_ref[1 + l])
        h = _finer_activation(z, HIDDEN_OMEGA)

    # --- Last layer: Linear(H -> OUT), no activation (is_last=True). ---------
    wl = w_ref[HIDDEN_LAYERS + 1][:OUT_FEATURES, :]  # (OUT, H)
    bl = b_ref[HIDDEN_LAYERS + 1][:OUT_FEATURES, :]  # (OUT, 1)
    out = jnp.dot(wl, h, preferred_element_type=jnp.float32) + bl
    o_ref[...] = out.astype(o_ref.dtype)             # (OUT, TN) lane-dense store


# ---------------------------------------------------------------------------
# Wrappers
# ---------------------------------------------------------------------------
def finer_forward_fm(coords_fm, packed_params, *, tn=TN):
    """Fused forward, feature-major contract: (IN, N) f32 -> (OUT, N) f32.

    Performance path: nothing wraps the pallas_call.  `tn` is the batch tile
    on the lane axis; sweep per generation (v7x: keep the grid even and
    "parallel"; single-TC v5e/v6e: try tn=1024 -> grid=1, or 256).
    """
    w_packed, b_packed = packed_params
    n = coords_fm.shape[1]
    tn = min(tn, max(128, pl.cdiv(n, 128) * 128))    # don't over-tile tiny N
    grid = (pl.cdiv(n, tn),)

    # Advisory cost hint for XLA's scheduler around the custom call.
    flops = 2 * n * (HIDDEN_FEATURES * IN_FEATURES
                     + HIDDEN_LAYERS * HIDDEN_FEATURES * HIDDEN_FEATURES
                     + OUT_FEATURES * HIDDEN_FEATURES)
    transcendentals = (HIDDEN_LAYERS + 1) * HIDDEN_FEATURES * n
    bytes_accessed = 4 * (coords_fm.size + OUT_FEATURES * n
                          + w_packed.size + b_packed.size)

    return pl.pallas_call(
        finer_kernel,
        out_shape=jax.ShapeDtypeStruct((OUT_FEATURES, n), jnp.float32),
        grid_spec=pltpu.PrefetchScalarGridSpec(
            num_scalar_prefetch=0,
            grid=grid,
            in_specs=[
                # Streamed coords tile: batch on the 128-lane axis.
                pl.BlockSpec((IN_FEATURES, tn), lambda i: (0, i)),
                # Packed params: full array + constant index_map -> fetched
                # once and kept resident in VMEM across all grid steps.
                pl.BlockSpec(w_packed.shape, lambda i: (0, 0, 0)),
                pl.BlockSpec(b_packed.shape, lambda i: (0, 0, 0)),
            ],
            out_specs=pl.BlockSpec((OUT_FEATURES, tn), lambda i: (0, i)),
        ),
        compiler_params=pltpu.CompilerParams(
            dimension_semantics=("parallel",)),
        cost_estimate=pl.CostEstimate(flops=flops,
                                      transcendentals=transcendentals,
                                      bytes_accessed=bytes_accessed),
    )(coords_fm, w_packed, b_packed)


def finer_forward(coords, packed_params, *, tn=TN):
    """PyTorch-layout shim: (N, IN) -> (N, OUT).

    Adds two XLA transposes around the fused kernel; prefer finer_forward_fm
    (feature-major end-to-end) when the caller controls the layout.
    """
    return finer_forward_fm(coords.T, packed_params, tn=tn).T


# ---------------------------------------------------------------------------
# Parameter init (mirrors the PyTorch init scheme) and packing
# ---------------------------------------------------------------------------
def init_params(key):
    keys = jax.random.split(key, 4 + 2 * HIDDEN_LAYERS)
    ki = iter(keys)

    # First layer: weight bound = 1/fan_in (is_first), bias ~ U(-fbs, fbs).
    w0_bound = 1.0 / IN_FEATURES
    w0 = jax.random.uniform(next(ki), (HIDDEN_FEATURES, IN_FEATURES),
                            minval=-w0_bound, maxval=w0_bound, dtype=jnp.float32)
    b0 = jax.random.uniform(next(ki), (HIDDEN_FEATURES,),
                            minval=-FBS, maxval=FBS, dtype=jnp.float32)

    # Hidden / last layers: 'sine' weight init sqrt(6/fan_in)/omega; biases
    # keep the nn.Linear default U(-1/sqrt(fan_in), 1/sqrt(fan_in)).
    w_bound = math.sqrt(6.0 / HIDDEN_FEATURES) / HIDDEN_OMEGA
    b_bound = 1.0 / math.sqrt(HIDDEN_FEATURES)
    wh_list, bh_list = [], []
    for _ in range(HIDDEN_LAYERS):
        wh_list.append(jax.random.uniform(
            next(ki), (HIDDEN_FEATURES, HIDDEN_FEATURES),
            minval=-w_bound, maxval=w_bound, dtype=jnp.float32))
        bh_list.append(jax.random.uniform(
            next(ki), (HIDDEN_FEATURES,),
            minval=-b_bound, maxval=b_bound, dtype=jnp.float32))
    wh = jnp.stack(wh_list)                           # (L, H, H)
    bh = jnp.stack(bh_list)                           # (L, H)

    wl = jax.random.uniform(next(ki), (OUT_FEATURES, HIDDEN_FEATURES),
                            minval=-w_bound, maxval=w_bound, dtype=jnp.float32)
    bl = jax.random.uniform(next(ki), (OUT_FEATURES,),
                            minval=-b_bound, maxval=b_bound, dtype=jnp.float32)
    return w0, b0, wh, bh, wl, bl


def pack_params(params):
    """Pack 6 layer params into 2 kernel operands (fewer per-step operand
    bookkeeping costs; 2 first-step DMAs instead of 6)."""
    w0, b0, wh, bh, wl, bl = params
    L, H = HIDDEN_LAYERS, HIDDEN_FEATURES
    w_packed = jnp.zeros((L + 2, H, H), jnp.float32)
    w_packed = w_packed.at[0, :, :IN_FEATURES].set(w0)
    w_packed = w_packed.at[1:L + 1].set(wh)
    w_packed = w_packed.at[L + 1, :OUT_FEATURES, :].set(wl)
    b_packed = jnp.zeros((L + 2, H, 1), jnp.float32)
    b_packed = b_packed.at[0, :, 0].set(b0)
    b_packed = b_packed.at[1:L + 1, :, 0].set(bh)
    b_packed = b_packed.at[L + 1, :OUT_FEATURES, 0].set(bl)
    return w_packed, b_packed


# ---------------------------------------------------------------------------
# Pure-JAX reference (row-major, mirrors the PyTorch module exactly)
# ---------------------------------------------------------------------------
def finer_reference(coords, params):
    """(N, IN) -> (N, OUT).  HIGHEST matmul precision so the reference itself
    is true f32 (default XLA precision may drop f32 dots to 1-pass bf16, which
    omega=30 would amplify and contaminate the comparison)."""
    w0, b0, wh, bh, wl, bl = params
    hp = jax.lax.Precision.HIGHEST
    h = _finer_activation(jnp.dot(coords, w0.T, precision=hp) + b0, FIRST_OMEGA)
    for l in range(HIDDEN_LAYERS):
        h = _finer_activation(jnp.dot(h, wh[l].T, precision=hp) + bh[l],
                              HIDDEN_OMEGA)
    return jnp.dot(h, wl.T, precision=hp) + bl


if __name__ == "__main__":
    key = jax.random.PRNGKey(0)
    k_params, k_a, k_b = jax.random.split(key, 3)

    params = init_params(k_params)
    packed = pack_params(params)

    # --- primary check: feature-major contract, N=1024 (even, "parallel"
    #     grid of 2 -> both v7x TensorCores get one step each). --------------
    coords_fm = jax.random.uniform(k_a, (IN_FEATURES, N),
                                   minval=-1.0, maxval=1.0, dtype=jnp.float32)
    out_fm = jax.block_until_ready(finer_forward_fm(coords_fm, packed))
    assert out_fm.shape == (OUT_FEATURES, N)
    ref = finer_reference(coords_fm.T, params)
    # MXU accumulation order differs from the XLA reference and omega=30
    # amplifies tiny phase differences through sin, hence the loose-ish bound.
    assert jnp.allclose(out_fm.T, ref, atol=2e-3, rtol=2e-3), \
        float(jnp.max(jnp.abs(out_fm.T - ref)))

    # --- ragged N: no wrapper pad/slice; Pallas masks the partial edge block.
    n2 = 1000
    coords2_fm = jax.random.uniform(k_b, (IN_FEATURES, n2),
                                    minval=-1.0, maxval=1.0, dtype=jnp.float32)
    out2_fm = jax.block_until_ready(finer_forward_fm(coords2_fm, packed))
    assert out2_fm.shape == (OUT_FEATURES, n2)
    ref2 = finer_reference(coords2_fm.T, params)
    assert jnp.allclose(out2_fm.T, ref2, atol=2e-3, rtol=2e-3), \
        float(jnp.max(jnp.abs(out2_fm.T - ref2)))

    # --- PyTorch-layout shim ((N, IN) -> (N, OUT)) for interface parity. -----
    out2_rm = jax.block_until_ready(finer_forward(coords2_fm.T, packed))
    assert out2_rm.shape == (n2, OUT_FEATURES)
    assert jnp.allclose(out2_rm, ref2, atol=2e-3, rtol=2e-3)

    print("KERNEL_OK")
</pallas_src>

<mosaic_0001>
module attributes {stable_mosaic.version = 11 : i64} {
  func.func @finer_kernel(%arg0: i32, %arg1: memref<2x512xf32, #tpu.memory_space<vmem>>, %arg2: memref<5x32x32xf32, #tpu.memory_space<vmem>>, %arg3: memref<5x32x1xf32, #tpu.memory_space<vmem>>, %arg4: memref<3x512xf32, #tpu.memory_space<vmem>>) attributes {dimension_semantics = [#tpu.dimension_semantics<parallel>], iteration_bounds = array<i64: 2>, scalar_prefetch = 0 : i64, scratch_operands = 0 : i64, tpu.core_type = #tpu.core_type<tc>, window_params = [{transform_indices = @transform_0, window_bounds = array<i64: 2, 512>}, {pipeline_mode = #tpu.pipeline_mode<synchronous>, transform_indices = @transform_1, window_bounds = array<i64: 5, 32, 32>}, {pipeline_mode = #tpu.pipeline_mode<synchronous>, transform_indices = @transform_2, window_bounds = array<i64: 5, 32, 1>}, {transform_indices = @transform_3, window_bounds = array<i64: 3, 512>}]} {
    %c0 = arith.constant 0 : index
    %c0_0 = arith.constant 0 : index
    %0 = vector.load %arg1[%c0, %c0_0] : memref<2x512xf32, #tpu.memory_space<vmem>>, vector<2x512xf32>
    %c0_1 = arith.constant 0 : index
    %c0_2 = arith.constant 0 : index
    %c0_3 = arith.constant 0 : index
    %1 = vector.load %arg2[%c0_1, %c0_2, %c0_3] : memref<5x32x32xf32, #tpu.memory_space<vmem>>, vector<1x32x32xf32>
    %2 = vector.shape_cast %1 : vector<1x32x32xf32> to vector<32x32xf32>
    %c0_4 = arith.constant 0 : index
    %c0_5 = arith.constant 0 : index
    %c0_6 = arith.constant 0 : index
    %3 = vector.load %arg3[%c0_4, %c0_5, %c0_6] : memref<5x32x1xf32, #tpu.memory_space<vmem>>, vector<1x32x1xf32>
    %4 = vector.shape_cast %3 : vector<1x32x1xf32> to vector<32x1xf32>
    %5 = vector.shape_cast %4 : vector<32x1xf32> to vector<32x1xf32>
    %6 = vector.broadcast %5 : vector<32x1xf32> to vector<32x512xf32>
    %7 = vector.extract_strided_slice %2 {offsets = [0, 0], sizes = [32, 1], strides = [1, 1]} : vector<32x32xf32> to vector<32x1xf32>
    %8 = vector.extract_strided_slice %0 {offsets = [0, 0], sizes = [1, 512], strides = [1, 1]} : vector<2x512xf32> to vector<1x512xf32>
    %9 = vector.broadcast %7 : vector<32x1xf32> to vector<32x512xf32>
    %10 = vector.broadcast %8 : vector<1x512xf32> to vector<32x512xf32>
    %11 = arith.mulf %9, %10 : vector<32x512xf32>
    %12 = arith.addf %6, %11 : vector<32x512xf32>
    %13 = vector.extract_strided_slice %2 {offsets = [0, 1], sizes = [32, 1], strides = [1, 1]} : vector<32x32xf32> to vector<32x1xf32>
    %14 = vector.extract_strided_slice %0 {offsets = [1, 0], sizes = [1, 512], strides = [1, 1]} : vector<2x512xf32> to vector<1x512xf32>
    %15 = vector.broadcast %13 : vector<32x1xf32> to vector<32x512xf32>
    %16 = vector.broadcast %14 : vector<1x512xf32> to vector<32x512xf32>
    %17 = arith.mulf %15, %16 : vector<32x512xf32>
    %18 = arith.addf %12, %17 : vector<32x512xf32>
    %cst = arith.constant 3.000000e+01 : f32
    %19 = vector.broadcast %cst : f32 to vector<32x512xf32>
    %20 = arith.mulf %19, %18 : vector<32x512xf32>
    %21 = math.absf %18 : vector<32x512xf32>
    %22 = arith.mulf %20, %21 : vector<32x512xf32>
    %23 = arith.addf %22, %20 : vector<32x512xf32>
    %24 = math.sin %23 : vector<32x512xf32>
    %c1 = arith.constant 1 : index
    %c0_7 = arith.constant 0 : index
    %c0_8 = arith.constant 0 : index
    %25 = vector.load %arg2[%c1, %c0_7, %c0_8] : memref<5x32x32xf32, #tpu.memory_space<vmem>>, vector<1x32x32xf32>
    %26 = vector.shape_cast %25 : vector<1x32x32xf32> to vector<32x32xf32>
    %cst_9 = arith.constant dense<0.000000e+00> : vector<32x512xf32>
    %27 = tpu.matmul %26, %24, %cst_9 {dimension_numbers = #tpu.dot_dimension_numbers<[1], [0], [0], [1], [0, 0, 1, 1], [], []>} : vector<32x32xf32>, vector<32x512xf32>, vector<32x512xf32> -> vector<32x512xf32>
    %c1_10 = arith.constant 1 : index
    %c0_11 = arith.constant 0 : index
    %c0_12 = arith.constant 0 : index
    %28 = vector.load %arg3[%c1_10, %c0_11, %c0_12] : memref<5x32x1xf32, #tpu.memory_space<vmem>>, vector<1x32x1xf32>
    %29 = vector.shape_cast %28 : vector<1x32x1xf32> to vector<32x1xf32>
    %30 = vector.broadcast %29 : vector<32x1xf32> to vector<32x512xf32>
    %31 = arith.addf %27, %30 : vector<32x512xf32>
    %cst_13 = arith.constant 3.000000e+01 : f32
    %32 = vector.broadcast %cst_13 : f32 to vector<32x512xf32>
    %33 = arith.mulf %32, %31 : vector<32x512xf32>
    %34 = math.absf %31 : vector<32x512xf32>
    %35 = arith.mulf %33, %34 : vector<32x512xf32>
    %36 = arith.addf %35, %33 : vector<32x512xf32>
    %37 = math.sin %36 : vector<32x512xf32>
    %c2 = arith.constant 2 : index
    %c0_14 = arith.constant 0 : index
    %c0_15 = arith.constant 0 : index
    %38 = vector.load %arg2[%c2, %c0_14, %c0_15] : memref<5x32x32xf32, #tpu.memory_space<vmem>>, vector<1x32x32xf32>
    %39 = vector.shape_cast %38 : vector<1x32x32xf32> to vector<32x32xf32>
    %cst_16 = arith.constant dense<0.000000e+00> : vector<32x512xf32>
    %40 = tpu.matmul %39, %37, %cst_16 {dimension_numbers = #tpu.dot_dimension_numbers<[1], [0], [0], [1], [0, 0, 1, 1], [], []>} : vector<32x32xf32>, vector<32x512xf32>, vector<32x512xf32> -> vector<32x512xf32>
    %c2_17 = arith.constant 2 : index
    %c0_18 = arith.constant 0 : index
    %c0_19 = arith.constant 0 : index
    %41 = vector.load %arg3[%c2_17, %c0_18, %c0_19] : memref<5x32x1xf32, #tpu.memory_space<vmem>>, vector<1x32x1xf32>
    %42 = vector.shape_cast %41 : vector<1x32x1xf32> to vector<32x1xf32>
    %43 = vector.broadcast %42 : vector<32x1xf32> to vector<32x512xf32>
    %44 = arith.addf %40, %43 : vector<32x512xf32>
    %cst_20 = arith.constant 3.000000e+01 : f32
    %45 = vector.broadcast %cst_20 : f32 to vector<32x512xf32>
    %46 = arith.mulf %45, %44 : vector<32x512xf32>
    %47 = math.absf %44 : vector<32x512xf32>
    %48 = arith.mulf %46, %47 : vector<32x512xf32>
    %49 = arith.addf %48, %46 : vector<32x512xf32>
    %50 = math.sin %49 : vector<32x512xf32>
    %c3 = arith.constant 3 : index
    %c0_21 = arith.constant 0 : index
    %c0_22 = arith.constant 0 : index
    %51 = vector.load %arg2[%c3, %c0_21, %c0_22] : memref<5x32x32xf32, #tpu.memory_space<vmem>>, vector<1x32x32xf32>
    %52 = vector.shape_cast %51 : vector<1x32x32xf32> to vector<32x32xf32>
    %cst_23 = arith.constant dense<0.000000e+00> : vector<32x512xf32>
    %53 = tpu.matmul %52, %50, %cst_23 {dimension_numbers = #tpu.dot_dimension_numbers<[1], [0], [0], [1], [0, 0, 1, 1], [], []>} : vector<32x32xf32>, vector<32x512xf32>, vector<32x512xf32> -> vector<32x512xf32>
    %c3_24 = arith.constant 3 : index
    %c0_25 = arith.constant 0 : index
    %c0_26 = arith.constant 0 : index
    %54 = vector.load %arg3[%c3_24, %c0_25, %c0_26] : memref<5x32x1xf32, #tpu.memory_space<vmem>>, vector<1x32x1xf32>
    %55 = vector.shape_cast %54 : vector<1x32x1xf32> to vector<32x1xf32>
    %56 = vector.broadcast %55 : vector<32x1xf32> to vector<32x512xf32>
    %57 = arith.addf %53, %56 : vector<32x512xf32>
    %cst_27 = arith.constant 3.000000e+01 : f32
    %58 = vector.broadcast %cst_27 : f32 to vector<32x512xf32>
    %59 = arith.mulf %58, %57 : vector<32x512xf32>
    %60 = math.absf %57 : vector<32x512xf32>
    %61 = arith.mulf %59, %60 : vector<32x512xf32>
    %62 = arith.addf %61, %59 : vector<32x512xf32>
    %63 = math.sin %62 : vector<32x512xf32>
    %c4 = arith.constant 4 : index
    %c0_28 = arith.constant 0 : index
    %c0_29 = arith.constant 0 : index
    %64 = vector.load %arg2[%c4, %c0_28, %c0_29] : memref<5x32x32xf32, #tpu.memory_space<vmem>>, vector<1x32x32xf32>
    %65 = vector.shape_cast %64 : vector<1x32x32xf32> to vector<32x32xf32>
    %66 = vector.extract_strided_slice %65 {offsets = [0, 0], sizes = [3, 32], strides = [1, 1]} : vector<32x32xf32> to vector<3x32xf32>
    %c4_30 = arith.constant 4 : index
    %c0_31 = arith.constant 0 : index
    %c0_32 = arith.constant 0 : index
    %67 = vector.load %arg3[%c4_30, %c0_31, %c0_32] : memref<5x32x1xf32, #tpu.memory_space<vmem>>, vector<1x32x1xf32>
    %68 = vector.shape_cast %67 : vector<1x32x1xf32> to vector<32x1xf32>
    %69 = vector.extract_strided_slice %68 {offsets = [0, 0], sizes = [3, 1], strides = [1, 1]} : vector<32x1xf32> to vector<3x1xf32>
    %cst_33 = arith.constant dense<0.000000e+00> : vector<3x512xf32>
    %70 = tpu.matmul %66, %63, %cst_33 {dimension_numbers = #tpu.dot_dimension_numbers<[1], [0], [0], [1], [0, 0, 1, 1], [], []>} : vector<3x32xf32>, vector<32x512xf32>, vector<3x512xf32> -> vector<3x512xf32>
    %71 = vector.broadcast %69 : vector<3x1xf32> to vector<3x512xf32>
    %72 = arith.addf %70, %71 : vector<3x512xf32>
    %c0_34 = arith.constant 0 : index
    %c0_35 = arith.constant 0 : index
    %73 = vector.load %arg4[%c0_34, %c0_35] : memref<3x512xf32, #tpu.memory_space<vmem>>, vector<3x512xf32>
    tpu.vector_store %arg4[%c0_34, %c0_35], %72 {strides = array<i32>} : memref<3x512xf32, #tpu.memory_space<vmem>>, vector<3x512xf32>,
    return
  }
  func.func @transform_0(%arg0: i32) -> (i32, i32) {
    %c0_i32 = arith.constant 0 : i32
    %c0_i32_0 = arith.constant 0 : i32
    return %c0_i32, %arg0 : i32, i32
  }
  func.func @transform_1(%arg0: i32) -> (i32, i32, i32) {
    %c0_i32 = arith.constant 0 : i32
    %c0_i32_0 = arith.constant 0 : i32
    %c0_i32_1 = arith.constant 0 : i32
    %c0_i32_2 = arith.constant 0 : i32
    return %c0_i32, %c0_i32_0, %c0_i32_1 : i32, i32, i32
  }
  func.func @transform_2(%arg0: i32) -> (i32, i32, i32) {
    %c0_i32 = arith.constant 0 : i32
    %c0_i32_0 = arith.constant 0 : i32
    %c0_i32_1 = arith.constant 0 : i32
    %c0_i32_2 = arith.constant 0 : i32
    return %c0_i32, %c0_i32_0, %c0_i32_1 : i32, i32, i32
  }
  func.func @transform_3(%arg0: i32) -> (i32, i32) {
    %c0_i32 = arith.constant 0 : i32
    %c0_i32_0 = arith.constant 0 : i32
    return %c0_i32, %arg0 : i32, i32
  }
}

</mosaic_0001>

<llo_original>
// kernel: tpu_custom_call.1
$region0: #{tpu_custom_call.1}
  #allocation0 [shape = 'u32[]', space=smem, size = 0x4, offset = 0x4, fixed_abs, tag = 'smem constant byte address 0x4 - core index']
  #allocation1 [shape = 'u32[72,128]{1,0:T(1,128)}', space=vmem, size = 0x9000, scoped, tag = 'internal scratch']
  %s0 = inlined_call_operand.hbm [shape: f32[2,1024], index: 0, kind: input, shape index: {}]
  %s1 = inlined_call_operand.vmem [shape: f32[5,32,32], index: 1, kind: input, shape index: {}]
  %s2 = inlined_call_operand.vmem [shape: f32[5,32,1], index: 2, kind: input, shape index: {}]
  %s3 = inlined_call_operand.hbm [shape: f32[3,1024], index: 3, kind: output, shape index: {}]
  %s4 = sld [smem:[#allocation0]]
  $region49: #{tpu_custom_call.1} parent=0
    _
  %s6 = ssub.s32 1, %s4
  %s7 = scalar_select 0, %s6, %s4
  $region1: #{tpu_custom_call.1} parent=0
    #allocation2 [shape = 'u8[8192]{0}', space=vmem, size = 0x2000, scoped, tag = 'input window, operand 0']
    #allocation3 [shape = 's32[2]{0}', space=sflag, size = 0x8, scoped, tag = 'scoped memory for tpu_custom_call.1']
    #allocation4 [shape = 's32[2]{0}', space=sflag, size = 0x8, scoped, tag = 'scoped memory for tpu_custom_call.1']
    #allocation5 [shape = 'u8[16384]{0}', space=vmem, size = 0x4000, scoped, tag = 'output window, operand 0']
    %8 = vsyncpa [#allocation3], 0
    %s9 = scalar_lea.sflag [#allocation3], 1
    %10 = vsyncpa %s9, 0
    %11 = vsyncpa [#allocation4], 0
    %s12 = scalar_lea.sflag [#allocation4], 1
    %13 = vsyncpa %s12, 0
    loop: start=0, step=1, limit=4
    $region2: #{tpu_custom_call.1} parent=1 // loop_pre_header
      _
    $region3: #{tpu_custom_call.1} parent=1 // loop_header
      %s15 = sphi 0, %s19
      %p16 = scmp.ge.s32.totalorder %s15, 4
      %s25 = sphi 0, %s27
      %s28 = sphi 0, %s25
      %s29 = sphi 0, %s28
      %s45 = sphi 0, %s29
      %s49 = sphi 0, %s49
      %s51 = sphi 0, %s49
      %s52 = sphi 0, %s51
      %s66 = sphi 0, %s52
      %s70 = sphi 0, %s70
      %s72 = sphi 0, %s70
      %s73 = sphi 0, %s72
      %s87 = sphi 0, %s73
      %s93 = sphi 0, %s95
      %s96 = sphi 0, %s93
      %s97 = sphi 0, %s96
      %s113 = sphi 0, %s97
    $region4: #{tpu_custom_call.1} parent=1 // loop_header_branch
      %18 = sbr.rel (%p16) target = $region8
    $region5: #{tpu_custom_call.1} parent=1 // loop_body
      %s20 = ssub.s32 %s15, 1
      %s21 = ssub.s32 %s15, 2
      %s22 = sadd.s32 %s15, 1
      %s23 = ssub.s32 %s15, %s22
      %p24 = scmp.eq.s32.totalorder %s23, 0
      %s26 = sadd.s32 %s25, 1
      %s27 = scalar_select %p24, %s25, %s26
      %p30 = pneg %p24
      %p31 = scmp.eq.s32.totalorder %s15, 1
      %p32 = por %p30, %p31
      %p33 = scmp.ne.s32.totalorder %s25, %s28
      %p34 = scmp.eq.s32.totalorder %s15, 0
      %p35 = por %p33, %p34
      %p36 = scmp.ne.s32.totalorder %s25, %s28
      %p37 = scmp.eq.s32.totalorder %s20, 1
      %p38 = por %p36, %p37
      %p39 = scmp.ne.s32.totalorder %s28, %s29
      %p40 = scmp.eq.s32.totalorder %s20, 0
      %p41 = por %p39, %p40
      %p42 = scmp.ne.s32.totalorder %s28, %s29
      %p43 = scmp.eq.s32.totalorder %s21, 1
      %p44 = por %p42, %p43
      %p46 = scmp.ne.s32.totalorder %s29, %s45
      %p47 = scmp.eq.s32.totalorder %s21, 0
      %p48 = por %p46, %p47
      %s50 = sadd.s32 %s49, 1
      %p53 = scmp.eq.s32.totalorder %s15, 1
      %p54 = scmp.ne.s32.totalorder %s49, %s51
      %p55 = scmp.eq.s32.totalorder %s15, 0
      %p56 = por %p54, %p55
      %p57 = scmp.ne.s32.totalorder %s49, %s51
      %p58 = scmp.eq.s32.totalorder %s20, 1
      %p59 = por %p57, %p58
      %p60 = scmp.ne.s32.totalorder %s51, %s52
      %p61 = scmp.eq.s32.totalorder %s20, 0
      %p62 = por %p60, %p61
      %p63 = scmp.ne.s32.totalorder %s51, %s52
      %p64 = scmp.eq.s32.totalorder %s21, 1
      %p65 = por %p63, %p64
      %p67 = scmp.ne.s32.totalorder %s52, %s66
      %p68 = scmp.eq.s32.totalorder %s21, 0
      %p69 = por %p67, %p68
      %s71 = sadd.s32 %s70, 1
      %p74 = scmp.eq.s32.totalorder %s15, 1
      %p75 = scmp.ne.s32.totalorder %s70, %s72
      %p76 = scmp.eq.s32.totalorder %s15, 0
      %p77 = por %p75, %p76
      %p78 = scmp.ne.s32.totalorder %s70, %s72
      %p79 = scmp.eq.s32.totalorder %s20, 1
      %p80 = por %p78, %p79
      %p81 = scmp.ne.s32.totalorder %s72, %s73
      %p82 = scmp.eq.s32.totalorder %s20, 0
      %p83 = por %p81, %p82
      %p84 = scmp.ne.s32.totalorder %s72, %s73
      %p85 = scmp.eq.s32.totalorder %s21, 1
      %p86 = por %p84, %p85
      %p88 = scmp.ne.s32.totalorder %s73, %s87
      %p89 = scmp.eq.s32.totalorder %s21, 0
      %p90 = por %p88, %p89
      %s91 = ssub.s32 %s15, %s22
      %p92 = scmp.eq.s32.totalorder %s91, 0
      %s94 = sadd.s32 %s93, 1
      %s95 = scalar_select %p92, %s93, %s94
      %p98 = pneg %p92
      %p99 = scmp.eq.s32.totalorder %s15, 1
      %p100 = por %p98, %p99
      %p101 = scmp.ne.s32.totalorder %s93, %s96
      %p102 = scmp.eq.s32.totalorder %s15, 0
      %p103 = por %p101, %p102
      %p104 = scmp.ne.s32.totalorder %s93, %s96
      %p105 = scmp.eq.s32.totalorder %s20, 1
      %p106 = por %p104, %p105
      %p107 = scmp.ne.s32.totalorder %s96, %s97
      %p108 = scmp.eq.s32.totalorder %s20, 0
      %p109 = por %p107, %p108
      %p110 = scmp.ne.s32.totalorder %s96, %s97
      %p111 = scmp.eq.s32.totalorder %s21, 1
      %p112 = por %p110, %p111
      %p114 = scmp.ne.s32.totalorder %s97, %s113
      %p115 = scmp.eq.s32.totalorder %s21, 0
      %p116 = por %p114, %p115
      %p117 = scmp.le.s32.totalorder 1, %s15
      %p118 = scmp.lt.s32.totalorder %s15, 3
      %p119 = pnand %p117, %p118
      %p120 = pneg %p119
      // Predicated region
      $region9: #{tpu_custom_call.1} parent=5 // pred_check
        _
      $region10: #{tpu_custom_call.1} parent=5 // pred_check_branch
        %122 = sbr.rel (%p119) target = $region12
      $region11: #{tpu_custom_call.1} parent=5 // pred_region
        %s123 = ssub.s32 %s15, 1
        // Predicated region
        $region13: #{tpu_custom_call.1} parent=11 // pred_check
          %p124 = pneg %p62
        $region14: #{tpu_custom_call.1} parent=11 // pred_check_branch
          %126 = sbr.rel (%p124) target = $region16
        $region15: #{tpu_custom_call.1} parent=11 // pred_region
          _
        $region16: #{tpu_custom_call.1} parent=11 // pred_fallthru
          _
        // Predicated region
        $region17: #{tpu_custom_call.1} parent=11 // pred_check
          %p127 = pneg %p83
        $region18: #{tpu_custom_call.1} parent=11 // pred_check_branch
          %129 = sbr.rel (%p127) target = $region20
        $region19: #{tpu_custom_call.1} parent=11 // pred_region
          _
        $region20: #{tpu_custom_call.1} parent=11 // pred_fallthru
          _
      $region12: #{tpu_custom_call.1} parent=5 // pred_fallthru
        _
      %p130 = scmp.lt.s32.totalorder %s15, 2
      // Predicated region
      $region21: #{tpu_custom_call.1} parent=5 // pred_check
        %p131 = pneg %p130
      $region22: #{tpu_custom_call.1} parent=5 // pred_check_branch
        %133 = sbr.rel (%p131) target = $region24
      $region23: #{tpu_custom_call.1} parent=5 // pred_region
        // Predicated region
        $region25: #{tpu_custom_call.1} parent=23 // pred_check
          %p134 = pneg %p35
        $region26: #{tpu_custom_call.1} parent=23 // pred_check_branch
          %136 = sbr.rel (%p134) target = $region28
        $region27: #{tpu_custom_call.1} parent=23 // pred_region
          %s137 = sand.u32 %s25, 1
          %s138 = scalar_lea.sflag [#allocation3], %s137
          %s139 = sand.u32 %s25, 1
          %s140 = smul.addr %s139, 8
          %s141 = scalar_lea.vmem [#allocation2], %s140
          %s142 = smul.u32 4, %s15
          %144 = vsyncadd %s138, 0
          %s145 = smul.addr %s142, 2
          %s146 = scalar_lea.hbm %s0, %s145
          %s148 = sshll.u32 %s146, 4
          %s149 = int_to_ptr.hbm [resolvable:$true] %s148
          %s150 = sshll.u32 %s141, 4
          %s151 = int_to_ptr.vmem [resolvable:$true] %s150
          %153 = dma.hbm_to_vmem [thread:$0]  %s149, 128, %s151, %s138
        $region28: #{tpu_custom_call.1} parent=23 // pred_fallthru
          _
      $region24: #{tpu_custom_call.1} parent=5 // pred_fallthru
        _
      %p154 = scmp.le.s32.totalorder 1, %s15
      %p155 = scmp.lt.s32.totalorder %s15, 3
      %p156 = pnand %p154, %p155
      %p157 = pneg %p156
      // Predicated region
      $region29: #{tpu_custom_call.1} parent=5 // pred_check
        _
      $region30: #{tpu_custom_call.1} parent=5 // pred_check_branch
        %159 = sbr.rel (%p156) target = $region32
      $region31: #{tpu_custom_call.1} parent=5 // pred_region
        %s160 = ssub.s32 %s15, 1
        %s161 = sand.u32 %s28, 1
        %s162 = scalar_lea.sflag [#allocation3], %s161
        %s163 = sand.u32 %s28, 1
        %s164 = smul.addr %s163, 8
        %s165 = scalar_lea.vmem [#allocation2], %s164
        // Predicated region
        $region33: #{tpu_custom_call.1} parent=31 // pred_check
          %p166 = pneg %p41
        $region34: #{tpu_custom_call.1} parent=31 // pred_check_branch
          %168 = sbr.rel (%p166) target = $region36
        $region35: #{tpu_custom_call.1} parent=31 // pred_region
          %170 = dma.done %s162, 128
        $region36: #{tpu_custom_call.1} parent=31 // pred_fallthru
          _
        %s171 = sand.u32 %s28, 1
        %s172 = scalar_lea.sflag [#allocation3], %s171
        %s173 = sand.u32 %s28, 1
        %s174 = smul.addr %s173, 8
        %s175 = scalar_lea.vmem [#allocation2], %s174
        %p176 = pneg %p41
        %p177 = pneg %p38
        %p178 = pneg %p62
        %p179 = pneg %p59
        %p180 = pneg %p83
        %p181 = pneg %p80
        %p182 = pneg %p109
        %p183 = pneg %p106
        %s184 = sand.u32 %s96, 1
        %s185 = scalar_lea.sflag [#allocation4], %s184
        %s186 = sand.u32 %s96, 1
        %s187 = smul.addr %s186, 16
        %s188 = scalar_lea.vmem [#allocation5], %s187
        %s189 = smul.u32 4, %s20
        %s190 = smul.u32 4, %s20
        %v191 = vld [vmem:[%s165] sm:$0xff]
        %v192 = vld [vmem:[%s1] sm:$0xff]
        %v193 = vld [vmem:[%s1 + $0x8] sm:$0xff]
        %v194 = vld [vmem:[%s1 + $0x10] sm:$0xff]
        %v195 = vld [vmem:[%s1 + $0x18] sm:$0xff]
        %v196 = vld [vmem:[%s2] sm:$0xff]
        %v197 = vld [vmem:[%s2 + $0x8] sm:$0xff]
        %v198 = vld [vmem:[%s2 + $0x10] sm:$0xff]
        %v199 = vld [vmem:[%s2 + $0x18] sm:$0xff]
        %201 = vset.pattern.permute.xlu0 0
        %202 = vperm.xlu0 %201, %v196
        %v203 = vpop.permute.xlu0 %202
        %206 = vset.pattern.permute.xlu0 0
        %207 = vperm.xlu0 %206, %v197
        %v208 = vpop.permute.xlu0 %207
        %211 = vset.pattern.permute.xlu0 0
        %212 = vperm.xlu0 %211, %v198
        %v213 = vpop.permute.xlu0 %212
        %216 = vset.pattern.permute.xlu0 0
        %217 = vperm.xlu0 %216, %v199
        %v218 = vpop.permute.xlu0 %217
        %221 = vset.pattern.permute.xlu0 0
        %222 = vperm.xlu0 %221, %v192
        %v223 = vpop.permute.xlu0 %222
        %226 = vset.pattern.permute.xlu0 0
        %227 = vperm.xlu0 %226, %v193
        %v228 = vpop.permute.xlu0 %227
        %231 = vset.pattern.permute.xlu0 0
        %232 = vperm.xlu0 %231, %v194
        %v233 = vpop.permute.xlu0 %232
        %236 = vset.pattern.permute.xlu0 0
        %237 = vperm.xlu0 %236, %v195
        %v238 = vpop.permute.xlu0 %237
        %v241 = vperm.slane %v191, 0
        %v242 = vperm.slane %v191, 2
        %v243 = vperm.slane %v191, 4
        %v244 = vperm.slane %v191, 6
        %v249 = vperm.slane %v241, 0
        %v250 = vperm.slane %v242, 0
        %v251 = vperm.slane %v243, 0
        %v252 = vperm.slane %v244, 0
        %v253 = vmul.f32 %v223, %v249
        %v254 = vmul.f32 %v223, %v250
        %v255 = vmul.f32 %v223, %v251
        %v256 = vmul.f32 %v223, %v252
        %v257 = vmul.f32 %v228, %v249
        %v258 = vmul.f32 %v228, %v250
        %v259 = vmul.f32 %v228, %v251
        %v260 = vmul.f32 %v228, %v252
        %v261 = vmul.f32 %v233, %v249
        %v262 = vmul.f32 %v233, %v250
        %v263 = vmul.f32 %v233, %v251
        %v264 = vmul.f32 %v233, %v252
        %v265 = vmul.f32 %v238, %v249
        %v266 = vmul.f32 %v238, %v250
        %v267 = vmul.f32 %v238, %v251
        %v268 = vmul.f32 %v238, %v252
        %v269 = vadd.f32 %v203, %v253
        %v270 = vadd.f32 %v203, %v254
        %v271 = vadd.f32 %v203, %v255
        %v272 = vadd.f32 %v203, %v256
        %v273 = vadd.f32 %v208, %v257
        %v274 = vadd.f32 %v208, %v258
        %v275 = vadd.f32 %v208, %v259
        %v276 = vadd.f32 %v208, %v260
        %v277 = vadd.f32 %v213, %v261
        %v278 = vadd.f32 %v213, %v262
        %v279 = vadd.f32 %v213, %v263
        %v280 = vadd.f32 %v213, %v264
        %v281 = vadd.f32 %v218, %v265
        %v282 = vadd.f32 %v218, %v266
        %v283 = vadd.f32 %v218, %v267
        %v284 = vadd.f32 %v218, %v268
        %285 = vset.pattern.permute.xlu0 1
        %286 = vperm.xlu0 %285, %v192
        %v287 = vpop.permute.xlu0 %286
        %289 = vset.pattern.permute.xlu0 1
        %290 = vperm.xlu0 %289, %v193
        %v291 = vpop.permute.xlu0 %290
        %293 = vset.pattern.permute.xlu0 1
        %294 = vperm.xlu0 %293, %v194
        %v295 = vpop.permute.xlu0 %294
        %297 = vset.pattern.permute.xlu0 1
        %298 = vperm.xlu0 %297, %v195
        %v299 = vpop.permute.xlu0 %298
        %v301 = vperm.slane %v191, 1
        %v302 = vperm.slane %v191, 3
        %v303 = vperm.slane %v191, 5
        %v304 = vperm.slane %v191, 7
        %v309 = vperm.slane %v301, 1
        %v310 = vperm.slane %v302, 1
        %v311 = vperm.slane %v303, 1
        %v312 = vperm.slane %v304, 1
        %v313 = vmul.f32 %v287, %v309
        %v314 = vmul.f32 %v287, %v310
        %v315 = vmul.f32 %v287, %v311
        %v316 = vmul.f32 %v287, %v312
        %v317 = vmul.f32 %v291, %v309
        %v318 = vmul.f32 %v291, %v310
        %v319 = vmul.f32 %v291, %v311
        %v320 = vmul.f32 %v291, %v312
        %v321 = vmul.f32 %v295, %v309
        %v322 = vmul.f32 %v295, %v310
        %v323 = vmul.f32 %v295, %v311
        %v324 = vmul.f32 %v295, %v312
        %v325 = vmul.f32 %v299, %v309
        %v326 = vmul.f32 %v299, %v310
        %v327 = vmul.f32 %v299, %v311
        %v328 = vmul.f32 %v299, %v312
        %v329 = vadd.f32 %v269, %v313
        %v330 = vadd.f32 %v270, %v314
        %v331 = vadd.f32 %v271, %v315
        %v332 = vadd.f32 %v272, %v316
        %v333 = vadd.f32 %v273, %v317
        %v334 = vadd.f32 %v274, %v318
        %v335 = vadd.f32 %v275, %v319
        %v336 = vadd.f32 %v276, %v320
        %v337 = vadd.f32 %v277, %v321
        %v338 = vadd.f32 %v278, %v322
        %v339 = vadd.f32 %v279, %v323
        %v340 = vadd.f32 %v280, %v324
        %v341 = vadd.f32 %v281, %v325
        %v342 = vadd.f32 %v282, %v326
        %v343 = vadd.f32 %v283, %v327
        %v344 = vadd.f32 %v284, %v328
        %v345 = vmul.f32 %v329, 30.0
        %v346 = vmul.f32 %v330, 30.0
        %v347 = vmul.f32 %v331, 30.0
        %v348 = vmul.f32 %v332, 30.0
        %v349 = vmul.f32 %v333, 30.0
        %v350 = vmul.f32 %v334, 30.0
        %v351 = vmul.f32 %v335, 30.0
        %v352 = vmul.f32 %v336, 30.0
        %v353 = vmul.f32 %v337, 30.0
        %v354 = vmul.f32 %v338, 30.0
        %v355 = vmul.f32 %v339, 30.0
        %v356 = vmul.f32 %v340, 30.0
        %v357 = vmul.f32 %v341, 30.0
        %v358 = vmul.f32 %v342, 30.0
        %v359 = vmul.f32 %v343, 30.0
        %v360 = vmul.f32 %v344, 30.0
        %v361 = vand.u32 2147483647, %v329
        %v362 = vand.u32 2147483647, %v330
        %v363 = vand.u32 2147483647, %v331
        %v364 = vand.u32 2147483647, %v332
        %v365 = vand.u32 2147483647, %v333
        %v366 = vand.u32 2147483647, %v334
        %v367 = vand.u32 2147483647, %v335
        %v368 = vand.u32 2147483647, %v336
        %v369 = vand.u32 2147483647, %v337
        %v370 = vand.u32 2147483647, %v338
        %v371 = vand.u32 2147483647, %v339
        %v372 = vand.u32 2147483647, %v340
        %v373 = vand.u32 2147483647, %v341
        %v374 = vand.u32 2147483647, %v342
        %v375 = vand.u32 2147483647, %v343
        %v376 = vand.u32 2147483647, %v344
        %v377 = vmul.f32 %v345, %v361
        %v378 = vmul.f32 %v346, %v362
        %v379 = vmul.f32 %v347, %v363
        %v380 = vmul.f32 %v348, %v364
        %v381 = vmul.f32 %v349, %v365
        %v382 = vmul.f32 %v350, %v366
        %v383 = vmul.f32 %v351, %v367
        %v384 = vmul.f32 %v352, %v368
        %v385 = vmul.f32 %v353, %v369
        %v386 = vmul.f32 %v354, %v370
        %v387 = vmul.f32 %v355, %v371
        %v388 = vmul.f32 %v356, %v372
        %v389 = vmul.f32 %v357, %v373
        %v390 = vmul.f32 %v358, %v374
        %v391 = vmul.f32 %v359, %v375
        %v392 = vmul.f32 %v360, %v376
        %v393 = vadd.f32 %v377, %v345
        %v394 = vadd.f32 %v378, %v346
        %v395 = vadd.f32 %v379, %v347
        %v396 = vadd.f32 %v380, %v348
        %v397 = vadd.f32 %v381, %v349
        %v398 = vadd.f32 %v382, %v350
        %v399 = vadd.f32 %v383, %v351
        %v400 = vadd.f32 %v384, %v352
        %v401 = vadd.f32 %v385, %v353
        %v402 = vadd.f32 %v386, %v354
        %v403 = vadd.f32 %v387, %v355
        %v404 = vadd.f32 %v388, %v356
        %v405 = vadd.f32 %v389, %v357
        %v406 = vadd.f32 %v390, %v358
        %v407 = vadd.f32 %v391, %v359
        %v408 = vadd.f32 %v392, %v360
        %v409 = vand.u32 2147483647, %v393
        %vm410 = vcmp.le.f32.partialorder %v409, 0.7853982
        %vm411 = vcmp.lt.s32.totalorder %v393, 0
        %v412 = vand.u32 %v393, 2139095040
        %v413 = vshrl.u32 %v412, 23
        %v414 = vsub.s32 %v413, 127
        %v415 = vand.u32 2147483647, %v393
        %v416 = vand.u32 %v415, 8388607
        %v417 = vor.u32 %v416, 8388608
        %v418 = vsub.s32 0, %v417
        %v419 = vadd.s32 %v414, 1
        %vm420 = vcmp.gt.s32.totalorder %v419, 0
        %v421 = vsel %vm420, %v419, 0
        %v422 = vshrl.u32 %v421, 5
        %v423 = vand.u32 %v421, 31
        %v424 = vsub.s32 32, %v423
        %v425 = vshrl.u32 683565275, %v424
        %v426 = vshll.u32 683565275, %v423
        %v427 = vshrl.u32 2475754826, %v424
        %v428 = vor.u32 %v426, %v427
        %v429 = vshll.u32 2475754826, %v423
        %v430 = vshrl.u32 2131351028, %v424
        %v431 = vor.u32 %v429, %v430
        %v432 = vshll.u32 2131351028, %v423
        %v433 = vshrl.u32 2102212464, %v424
        %v434 = vor.u32 %v432, %v433
        %v435 = vshll.u32 2102212464, %v423
        %v436 = vshrl.u32 920167782, %v424
        %v437 = vor.u32 %v435, %v436
        %v438 = vshll.u32 920167782, %v423
        %v439 = vshrl.u32 1326507024, %v424
        %v440 = vor.u32 %v438, %v439
        %vm441 = vcmp.lt.s32.totalorder %v422, 1
        %vm442 = vcmp.lt.s32.totalorder %v422, 2
        %vm443 = vcmp.lt.s32.totalorder %v422, 3
        %vm444 = vcmp.lt.s32.totalorder %v422, 4
        %v445 = vsel %vm441, %v425, %v428
        %v446 = vsel %vm444, %v434, 2102212464
        %v447 = vsel %vm443, %v431, %v446
        %v448 = vsel %vm442, %v445, %v447
        %v449 = vsel %vm441, %v428, %v431
        %v450 = vsel %vm444, %v437, 920167782
        %v451 = vsel %vm443, %v434, %v450
        %v452 = vsel %vm442, %v449, %v451
        %v453 = vsel %vm441, %v431, %v434
        %v454 = vsel %vm444, %v440, 1326507024
        %v455 = vsel %vm443, %v437, %v454
        %v456 = vsel %vm442, %v453, %v455
        %v457 = vshll.u32 %v417, 8
        %v458 = vand.u32 %v457, 65535
        %v459 = vshrl.u32 %v457, 16
        %v460 = vand.u32 %v456, 65535
        %v461 = vshrl.u32 %v456, 16
        %v462 = vmul.u32 %v458, %v460
        %v463 = vmul.u32 %v458, %v461
        %v464 = vmul.u32 %v459, %v460
        %v465 = vmul.u32 %v459, %v461
        %v466 = vshll.u32 %v463, 16
        %v467 = vshrl.u32 %v463, 16
        %v468 = vshll.u32 %v464, 16
        %v469 = vshrl.u32 %v464, 16
        %vm470 = vc.u32 %v462, %v466
        %v471 = vsel %vm470, 1, 0
        %v472 = vadd.s32 %v462, %v466
        %v473 = vadd.s32 %v465, %v471
        %vm474 = vc.u32 %v472, %v468
        %v475 = vsel %vm474, 1, 0
        %v476 = vadd.s32 %v472, %v468
        %v477 = vadd.s32 %v473, %v475
        %v478 = vadd.s32 %v477, %v467
        %v479 = vadd.s32 %v478, %v469
        %v480 = vand.u32 %v457, 65535
        %v481 = vshrl.u32 %v457, 16
        %v482 = vand.u32 %v452, 65535
        %v483 = vshrl.u32 %v452, 16
        %v484 = vmul.u32 %v480, %v482
        %v485 = vmul.u32 %v480, %v483
        %v486 = vmul.u32 %v481, %v482
        %v487 = vmul.u32 %v481, %v483
        %v488 = vshll.u32 %v485, 16
        %v489 = vshrl.u32 %v485, 16
        %v490 = vshll.u32 %v486, 16
        %v491 = vshrl.u32 %v486, 16
        %vm492 = vc.u32 %v484, %v488
        %v493 = vsel %vm492, 1, 0
        %v494 = vadd.s32 %v484, %v488
        %v495 = vadd.s32 %v487, %v493
        %vm496 = vc.u32 %v494, %v490
        %v497 = vsel %vm496, 1, 0
        %v498 = vadd.s32 %v494, %v490
        %v499 = vadd.s32 %v495, %v497
        %v500 = vadd.s32 %v499, %v489
        %v501 = vadd.s32 %v500, %v491
        %v502 = vmul.u32 %v457, %v448
        %v503 = vadd.s32 %v479, %v498
        %vm504 = vc.u32 %v479, %v498
        %v505 = vadd.s32 %v501, 1
        %v506 = vsel %vm504, %v505, %v501
        %v507 = vadd.s32 %v502, %v506
        %v508 = vadd.s32 %v507, 536870912
        %v509 = vshrl.u32 %v508, 30
        %v510 = vshll.u32 %v509, 30
        %v511 = vsub.s32 %v507, %v510
        %vm512 = vcmp.lt.s32.totalorder %v511, 0
        %v513 = vsub.s32 0, %v511
        %v514 = vsel %vm512, %v513, %v511
        %v515 = vclz %v514
        %v516 = vsub.s32 %v515, 2
        %vm517 = vcmp.gt.s32.totalorder 0, %v516
        %v518 = vsel %vm517, 0, %v516
        %v519 = vsub.s32 32, %v518
        %v520 = vshll.u32 %v511, %v518
        %v521 = vshrl.u32 %v503, %v519
        %v522 = vor.u32 %v520, %v521
        %v523 = vsub.s32 4294967266, %v518
        %v524 = vadd.s32 %v523, 127
        %v525 = vshll.u32 %v524, 23
        %v526 = vor.u32 4788187, %v525
        %v527 = vand.u32 2147483647, %v526
        %v529 = vcvt.s32.f32 %v522
        %v530 = vmul.f32 %v529, %v527
        %v531 = vxor.u32 %v530, 2147483648
        %v532 = vsel %vm411, %v531, %v530
        %v533 = vsub.s32 4, %v509
        %v534 = vsel %vm411, %v533, %v509
        %v535 = vsel %vm410, %v393, %v532
        %v536 = vsel %vm410, 0, %v534
        %v537 = vmul.f32 %v535, %v535
        %v538 = vmul.f32 %v537, -0.001358992
        %v539 = vadd.f32 %v538, 0.041655596
        %v540 = vmul.f32 %v537, %v539
        %v541 = vadd.f32 %v540, -0.4999988
        %v542 = vmul.f32 %v537, %v541
        %v543 = vadd.f32 1.0, %v542
        %v544 = vmul.f32 %v535, %v535
        %v545 = vmul.f32 %v544, -0.00019511016
        %v546 = vadd.f32 %v545, 0.008332121
        %v547 = vmul.f32 %v544, %v546
        %v548 = vadd.f32 %v547, -0.16666654
        %v549 = vmul.f32 %v544, %v548
        %v550 = vadd.f32 %v549, 1.0
        %v551 = vmul.f32 %v550, %v535
        %vm552 = vweird.f32 %v393
        %v553 = vadd.s32 %v536, 3
        %v554 = vand.u32 %v553, 3
        %vm555 = vcmp.lt.s32.totalorder %v554, 2
        %vm556 = vcmp.eq.s32.totalorder %v554, 0
        %v557 = vxor.u32 %v551, 2147483648
        %v558 = vsel %vm556, %v543, %v557
        %vm559 = vcmp.eq.s32.totalorder %v554, 2
        %v560 = vxor.u32 %v543, 2147483648
        %v561 = vsel %vm559, %v560, %v551
        %v562 = vsel %vm555, %v558, %v561
        %v563 = vsel %vm552, nan, %v562
        %v564 = vand.u32 2147483647, %v394
        %vm565 = vcmp.le.f32.partialorder %v564, 0.7853982
        %vm566 = vcmp.lt.s32.totalorder %v394, 0
        %v567 = vand.u32 %v394, 2139095040
        %v568 = vshrl.u32 %v567, 23
        %v569 = vsub.s32 %v568, 127
        %v570 = vand.u32 2147483647, %v394
        %v571 = vand.u32 %v570, 8388607
        %v572 = vor.u32 %v571, 8388608
        %v573 = vsub.s32 0, %v572
        %v574 = vadd.s32 %v569, 1
        %vm575 = vcmp.gt.s32.totalorder %v574, 0
        %v576 = vsel %vm575, %v574, 0
        %v577 = vshrl.u32 %v576, 5
        %v578 = vand.u32 %v576, 31
        %v579 = vsub.s32 32, %v578
        %v580 = vshrl.u32 683565275, %v579
        %v581 = vshll.u32 683565275, %v578
        %v582 = vshrl.u32 2475754826, %v579
        %v583 = vor.u32 %v581, %v582
        %v584 = vshll.u32 2475754826, %v578
        %v585 = vshrl.u32 2131351028, %v579
        %v586 = vor.u32 %v584, %v585
        %v587 = vshll.u32 2131351028, %v578
        %v588 = vshrl.u32 2102212464, %v579
        %v589 = vor.u32 %v587, %v588
        %v590 = vshll.u32 2102212464, %v578
        %v591 = vshrl.u32 920167782, %v579
        %v592 = vor.u32 %v590, %v591
        %v593 = vshll.u32 920167782, %v578
        %v594 = vshrl.u32 1326507024, %v579
        %v595 = vor.u32 %v593, %v594
        %vm596 = vcmp.lt.s32.totalorder %v577, 1
        %vm597 = vcmp.lt.s32.totalorder %v577, 2
        %vm598 = vcmp.lt.s32.totalorder %v577, 3
        %vm599 = vcmp.lt.s32.totalorder %v577, 4
        %v600 = vsel %vm596, %v580, %v583
        %v601 = vsel %vm599, %v589, 2102212464
        %v602 = vsel %vm598, %v586, %v601
        %v603 = vsel %vm597, %v600, %v602
        %v604 = vsel %vm596, %v583, %v586
        %v605 = vsel %vm599, %v592, 920167782
        %v606 = vsel %vm598, %v589, %v605
        %v607 = vsel %vm597, %v604, %v606
        %v608 = vsel %vm596, %v586, %v589
        %v609 = vsel %vm599, %v595, 1326507024
        %v610 = vsel %vm598, %v592, %v609
        %v611 = vsel %vm597, %v608, %v610
        %v612 = vshll.u32 %v572, 8
        %v613 = vand.u32 %v612, 65535
        %v614 = vshrl.u32 %v612, 16
        %v615 = vand.u32 %v611, 65535
        %v616 = vshrl.u32 %v611, 16
        %v617 = vmul.u32 %v613, %v615
        %v618 = vmul.u32 %v613, %v616
        %v619 = vmul.u32 %v614, %v615
        %v620 = vmul.u32 %v614, %v616
        %v621 = vshll.u32 %v618, 16
        %v622 = vshrl.u32 %v618, 16
        %v623 = vshll.u32 %v619, 16
        %v624 = vshrl.u32 %v619, 16
        %vm625 = vc.u32 %v617, %v621
        %v626 = vsel %vm625, 1, 0
        %v627 = vadd.s32 %v617, %v621
        %v628 = vadd.s32 %v620, %v626
        %vm629 = vc.u32 %v627, %v623
        %v630 = vsel %vm629, 1, 0
        %v631 = vadd.s32 %v627, %v623
        %v632 = vadd.s32 %v628, %v630
        %v633 = vadd.s32 %v632, %v622
        %v634 = vadd.s32 %v633, %v624
        %v635 = vand.u32 %v612, 65535
        %v636 = vshrl.u32 %v612, 16
        %v637 = vand.u32 %v607, 65535
        %v638 = vshrl.u32 %v607, 16
        %v639 = vmul.u32 %v635, %v637
        %v640 = vmul.u32 %v635, %v638
        %v641 = vmul.u32 %v636, %v637
        %v642 = vmul.u32 %v636, %v638
        %v643 = vshll.u32 %v640, 16
        %v644 = vshrl.u32 %v640, 16
        %v645 = vshll.u32 %v641, 16
        %v646 = vshrl.u32 %v641, 16
        %vm647 = vc.u32 %v639, %v643
        %v648 = vsel %vm647, 1, 0
        %v649 = vadd.s32 %v639, %v643
        %v650 = vadd.s32 %v642, %v648
        %vm651 = vc.u32 %v649, %v645
        %v652 = vsel %vm651, 1, 0
        %v653 = vadd.s32 %v649, %v645
        %v654 = vadd.s32 %v650, %v652
        %v655 = vadd.s32 %v654, %v644
        %v656 = vadd.s32 %v655, %v646
        %v657 = vmul.u32 %v612, %v603
        %v658 = vadd.s32 %v634, %v653
        %vm659 = vc.u32 %v634, %v653
        %v660 = vadd.s32 %v656, 1
        %v661 = vsel %vm659, %v660, %v656
        %v662 = vadd.s32 %v657, %v661
        %v663 = vadd.s32 %v662, 536870912
        %v664 = vshrl.u32 %v663, 30
        %v665 = vshll.u32 %v664, 30
        %v666 = vsub.s32 %v662, %v665
        %vm667 = vcmp.lt.s32.totalorder %v666, 0
        %v668 = vsub.s32 0, %v666
        %v669 = vsel %vm667, %v668, %v666
        %v670 = vclz %v669
        %v671 = vsub.s32 %v670, 2
        %vm672 = vcmp.gt.s32.totalorder 0, %v671
        %v673 = vsel %vm672, 0, %v671
        %v674 = vsub.s32 32, %v673
        %v675 = vshll.u32 %v666, %v673
        %v676 = vshrl.u32 %v658, %v674
        %v677 = vor.u32 %v675, %v676
        %v678 = vsub.s32 4294967266, %v673
        %v679 = vadd.s32 %v678, 127
        %v680 = vshll.u32 %v679, 23
        %v681 = vor.u32 4788187, %v680
        %v682 = vand.u32 2147483647, %v681
        %v684 = vcvt.s32.f32 %v677
        %v685 = vmul.f32 %v684, %v682
        %v686 = vxor.u32 %v685, 2147483648
        %v687 = vsel %vm566, %v686, %v685
        %v688 = vsub.s32 4, %v664
        %v689 = vsel %vm566, %v688, %v664
        %v690 = vsel %vm565, %v394, %v687
        %v691 = vsel %vm565, 0, %v689
        %v692 = vmul.f32 %v690, %v690
        %v693 = vmul.f32 %v692, -0.001358992
        %v694 = vadd.f32 %v693, 0.041655596
        %v695 = vmul.f32 %v692, %v694
        %v696 = vadd.f32 %v695, -0.4999988
        %v697 = vmul.f32 %v692, %v696
        %v698 = vadd.f32 1.0, %v697
        %v699 = vmul.f32 %v690, %v690
        %v700 = vmul.f32 %v699, -0.00019511016
        %v701 = vadd.f32 %v700, 0.008332121
        %v702 = vmul.f32 %v699, %v701
        %v703 = vadd.f32 %v702, -0.16666654
        %v704 = vmul.f32 %v699, %v703
        %v705 = vadd.f32 %v704, 1.0
        %v706 = vmul.f32 %v705, %v690
        %vm707 = vweird.f32 %v394
        %v708 = vadd.s32 %v691, 3
        %v709 = vand.u32 %v708, 3
        %vm710 = vcmp.lt.s32.totalorder %v709, 2
        %vm711 = vcmp.eq.s32.totalorder %v709, 0
        %v712 = vxor.u32 %v706, 2147483648
        %v713 = vsel %vm711, %v698, %v712
        %vm714 = vcmp.eq.s32.totalorder %v709, 2
        %v715 = vxor.u32 %v698, 2147483648
        %v716 = vsel %vm714, %v715, %v706
        %v717 = vsel %vm710, %v713, %v716
        %v718 = vsel %vm707, nan, %v717
        %v719 = vand.u32 2147483647, %v395
        %vm720 = vcmp.le.f32.partialorder %v719, 0.7853982
        %vm721 = vcmp.lt.s32.totalorder %v395, 0
        %v722 = vand.u32 %v395, 2139095040
        %v723 = vshrl.u32 %v722, 23
        %v724 = vsub.s32 %v723, 127
        %v725 = vand.u32 2147483647, %v395
        %v726 = vand.u32 %v725, 8388607
        %v727 = vor.u32 %v726, 8388608
        %v728 = vsub.s32 0, %v727
        %v729 = vadd.s32 %v724, 1
        %vm730 = vcmp.gt.s32.totalorder %v729, 0
        %v731 = vsel %vm730, %v729, 0
        %v732 = vshrl.u32 %v731, 5
        %v733 = vand.u32 %v731, 31
        %v734 = vsub.s32 32, %v733
        %v735 = vshrl.u32 683565275, %v734
        %v736 = vshll.u32 683565275, %v733
        %v737 = vshrl.u32 2475754826, %v734
        %v738 = vor.u32 %v736, %v737
        %v739 = vshll.u32 2475754826, %v733
        %v740 = vshrl.u32 2131351028, %v734
        %v741 = vor.u32 %v739, %v740
        %v742 = vshll.u32 2131351028, %v733
        %v743 = vshrl.u32 2102212464, %v734
        %v744 = vor.u32 %v742, %v743
        %v745 = vshll.u32 2102212464, %v733
        %v746 = vshrl.u32 920167782, %v734
        %v747 = vor.u32 %v745, %v746
        %v748 = vshll.u32 920167782, %v733
        %v749 = vshrl.u32 1326507024, %v734
        %v750 = vor.u32 %v748, %v749
        %vm751 = vcmp.lt.s32.totalorder %v732, 1
        %vm752 = vcmp.lt.s32.totalorder %v732, 2
        %vm753 = vcmp.lt.s32.totalorder %v732, 3
        %vm754 = vcmp.lt.s32.totalorder %v732, 4
        %v755 = vsel %vm751, %v735, %v738
        %v756 = vsel %vm754, %v744, 2102212464
        %v757 = vsel %vm753, %v741, %v756
        %v758 = vsel %vm752, %v755, %v757
        %v759 = vsel %vm751, %v738, %v741
        %v760 = vsel %vm754, %v747, 920167782
        %v761 = vsel %vm753, %v744, %v760
        %v762 = vsel %vm752, %v759, %v761
        %v763 = vsel %vm751, %v741, %v744
        %v764 = vsel %vm754, %v750, 1326507024
        %v765 = vsel %vm753, %v747, %v764
        %v766 = vsel %vm752, %v763, %v765
        %v767 = vshll.u32 %v727, 8
        %v768 = vand.u32 %v767, 65535
        %v769 = vshrl.u32 %v767, 16
        %v770 = vand.u32 %v766, 65535
        %v771 = vshrl.u32 %v766, 16
        %v772 = vmul.u32 %v768, %v770
        %v773 = vmul.u32 %v768, %v771
        %v774 = vmul.u32 %v769, %v770
        %v775 = vmul.u32 %v769, %v771
        %v776 = vshll.u32 %v773, 16
        %v777 = vshrl.u32 %v773, 16
        %v778 = vshll.u32 %v774, 16
        %v779 = vshrl.u32 %v774, 16
        %vm780 = vc.u32 %v772, %v776
        %v781 = vsel %vm780, 1, 0
        %v782 = vadd.s32 %v772, %v776
        %v783 = vadd.s32 %v775, %v781
        %vm784 = vc.u32 %v782, %v778
        %v785 = vsel %vm784, 1, 0
        %v786 = vadd.s32 %v782, %v778
        %v787 = vadd.s32 %v783, %v785
        %v788 = vadd.s32 %v787, %v777
        %v789 = vadd.s32 %v788, %v779
        %v790 = vand.u32 %v767, 65535
        %v791 = vshrl.u32 %v767, 16
        %v792 = vand.u32 %v762, 65535
        %v793 = vshrl.u32 %v762, 16
        %v794 = vmul.u32 %v790, %v792
        %v795 = vmul.u32 %v790, %v793
        %v796 = vmul.u32 %v791, %v792
        %v797 = vmul.u32 %v791, %v793
        %v798 = vshll.u32 %v795, 16
        %v799 = vshrl.u32 %v795, 16
        %v800 = vshll.u32 %v796, 16
        %v801 = vshrl.u32 %v796, 16
        %vm802 = vc.u32 %v794, %v798
        %v803 = vsel %vm802, 1, 0
        %v804 = vadd.s32 %v794, %v798
        %v805 = vadd.s32 %v797, %v803
        %vm806 = vc.u32 %v804, %v800
        %v807 = vsel %vm806, 1, 0
        %v808 = vadd.s32 %v804, %v800
        %v809 = vadd.s32 %v805, %v807
        %v810 = vadd.s32 %v809, %v799
        %v811 = vadd.s32 %v810, %v801
        %v812 = vmul.u32 %v767, %v758
        %v813 = vadd.s32 %v789, %v808
        %vm814 = vc.u32 %v789, %v808
        %v815 = vadd.s32 %v811, 1
        %v816 = vsel %vm814, %v815, %v811
        %v817 = vadd.s32 %v812, %v816
        %v818 = vadd.s32 %v817, 536870912
        %v819 = vshrl.u32 %v818, 30
        %v820 = vshll.u32 %v819, 30
        %v821 = vsub.s32 %v817, %v820
        %vm822 = vcmp.lt.s32.totalorder %v821, 0
        %v823 = vsub.s32 0, %v821
        %v824 = vsel %vm822, %v823, %v821
        %v825 = vclz %v824
        %v826 = vsub.s32 %v825, 2
        %vm827 = vcmp.gt.s32.totalorder 0, %v826
        %v828 = vsel %vm827, 0, %v826
        %v829 = vsub.s32 32, %v828
        %v830 = vshll.u32 %v821, %v828
        %v831 = vshrl.u32 %v813, %v829
        %v832 = vor.u32 %v830, %v831
        %v833 = vsub.s32 4294967266, %v828
        %v834 = vadd.s32 %v833, 127
        %v835 = vshll.u32 %v834, 23
        %v836 = vor.u32 4788187, %v835
        %v837 = vand.u32 2147483647, %v836
        %v839 = vcvt.s32.f32 %v832
        %v840 = vmul.f32 %v839, %v837
        %v841 = vxor.u32 %v840, 2147483648
        %v842 = vsel %vm721, %v841, %v840
        %v843 = vsub.s32 4, %v819
        %v844 = vsel %vm721, %v843, %v819
        %v845 = vsel %vm720, %v395, %v842
        %v846 = vsel %vm720, 0, %v844
        %v847 = vmul.f32 %v845, %v845
        %v848 = vmul.f32 %v847, -0.001358992
        %v849 = vadd.f32 %v848, 0.041655596
        %v850 = vmul.f32 %v847, %v849
        %v851 = vadd.f32 %v850, -0.4999988
        %v852 = vmul.f32 %v847, %v851
        %v853 = vadd.f32 1.0, %v852
        %v854 = vmul.f32 %v845, %v845
        %v855 = vmul.f32 %v854, -0.00019511016
        %v856 = vadd.f32 %v855, 0.008332121
        %v857 = vmul.f32 %v854, %v856
        %v858 = vadd.f32 %v857, -0.16666654
        %v859 = vmul.f32 %v854, %v858
        %v860 = vadd.f32 %v859, 1.0
        %v861 = vmul.f32 %v860, %v845
        %vm862 = vweird.f32 %v395
        %v863 = vadd.s32 %v846, 3
        %v864 = vand.u32 %v863, 3
        %vm865 = vcmp.lt.s32.totalorder %v864, 2
        %vm866 = vcmp.eq.s32.totalorder %v864, 0
        %v867 = vxor.u32 %v861, 2147483648
        %v868 = vsel %vm866, %v853, %v867
        %vm869 = vcmp.eq.s32.totalorder %v864, 2
        %v870 = vxor.u32 %v853, 2147483648
        %v871 = vsel %vm869, %v870, %v861
        %v872 = vsel %vm865, %v868, %v871
        %v873 = vsel %vm862, nan, %v872
        %v874 = vand.u32 2147483647, %v396
        %vm875 = vcmp.le.f32.partialorder %v874, 0.7853982
        %vm876 = vcmp.lt.s32.totalorder %v396, 0
        %v877 = vand.u32 %v396, 2139095040
        %v878 = vshrl.u32 %v877, 23
        %v879 = vsub.s32 %v878, 127
        %v880 = vand.u32 2147483647, %v396
        %v881 = vand.u32 %v880, 8388607
        %v882 = vor.u32 %v881, 8388608
        %v883 = vsub.s32 0, %v882
        %v884 = vadd.s32 %v879, 1
        %vm885 = vcmp.gt.s32.totalorder %v884, 0
        %v886 = vsel %vm885, %v884, 0
        %v887 = vshrl.u32 %v886, 5
        %v888 = vand.u32 %v886, 31
        %v889 = vsub.s32 32, %v888
        %v890 = vshrl.u32 683565275, %v889
        %v891 = vshll.u32 683565275, %v888
        %v892 = vshrl.u32 2475754826, %v889
        %v893 = vor.u32 %v891, %v892
        %v894 = vshll.u32 2475754826, %v888
        %v895 = vshrl.u32 2131351028, %v889
        %v896 = vor.u32 %v894, %v895
        %v897 = vshll.u32 2131351028, %v888
        %v898 = vshrl.u32 2102212464, %v889
        %v899 = vor.u32 %v897, %v898
        %v900 = vshll.u32 2102212464, %v888
        %v901 = vshrl.u32 920167782, %v889
        %v902 = vor.u32 %v900, %v901
        %v903 = vshll.u32 920167782, %v888
        %v904 = vshrl.u32 1326507024, %v889
        %v905 = vor.u32 %v903, %v904
        %vm906 = vcmp.lt.s32.totalorder %v887, 1
        %vm907 = vcmp.lt.s32.totalorder %v887, 2
        %vm908 = vcmp.lt.s32.totalorder %v887, 3
        %vm909 = vcmp.lt.s32.totalorder %v887, 4
        %v910 = vsel %vm906, %v890, %v893
        %v911 = vsel %vm909, %v899, 2102212464
        %v912 = vsel %vm908, %v896, %v911
        %v913 = vsel %vm907, %v910, %v912
        %v914 = vsel %vm906, %v893, %v896
        %v915 = vsel %vm909, %v902, 920167782
        %v916 = vsel %vm908, %v899, %v915
        %v917 = vsel %vm907, %v914, %v916
        %v918 = vsel %vm906, %v896, %v899
        %v919 = vsel %vm909, %v905, 1326507024
        %v920 = vsel %vm908, %v902, %v919
        %v921 = vsel %vm907, %v918, %v920
        %v922 = vshll.u32 %v882, 8
        %v923 = vand.u32 %v922, 65535
        %v924 = vshrl.u32 %v922, 16
        %v925 = vand.u32 %v921, 65535
        %v926 = vshrl.u32 %v921, 16
        %v927 = vmul.u32 %v923, %v925
        %v928 = vmul.u32 %v923, %v926
        %v929 = vmul.u32 %v924, %v925
        %v930 = vmul.u32 %v924, %v926
        %v931 = vshll.u32 %v928, 16
        %v932 = vshrl.u32 %v928, 16
        %v933 = vshll.u32 %v929, 16
        %v934 = vshrl.u32 %v929, 16
        %vm935 = vc.u32 %v927, %v931
        %v936 = vsel %vm935, 1, 0
        %v937 = vadd.s32 %v927, %v931
        %v938 = vadd.s32 %v930, %v936
        %vm939 = vc.u32 %v937, %v933
        %v940 = vsel %vm939, 1, 0
        %v941 = vadd.s32 %v937, %v933
        %v942 = vadd.s32 %v938, %v940
        %v943 = vadd.s32 %v942, %v932
        %v944 = vadd.s32 %v943, %v934
        %v945 = vand.u32 %v922, 65535
        %v946 = vshrl.u32 %v922, 16
        %v947 = vand.u32 %v917, 65535
        %v948 = vshrl.u32 %v917, 16
        %v949 = vmul.u32 %v945, %v947
        %v950 = vmul.u32 %v945, %v948
        %v951 = vmul.u32 %v946, %v947
        %v952 = vmul.u32 %v946, %v948
        %v953 = vshll.u32 %v950, 16
        %v954 = vshrl.u32 %v950, 16
        %v955 = vshll.u32 %v951, 16
        %v956 = vshrl.u32 %v951, 16
        %vm957 = vc.u32 %v949, %v953
        %v958 = vsel %vm957, 1, 0
        %v959 = vadd.s32 %v949, %v953
        %v960 = vadd.s32 %v952, %v958
        %vm961 = vc.u32 %v959, %v955
        %v962 = vsel %vm961, 1, 0
        %v963 = vadd.s32 %v959, %v955
        %v964 = vadd.s32 %v960, %v962
        %v965 = vadd.s32 %v964, %v954
        %v966 = vadd.s32 %v965, %v956
        %v967 = vmul.u32 %v922, %v913
        %v968 = vadd.s32 %v944, %v963
        %vm969 = vc.u32 %v944, %v963
        %v970 = vadd.s32 %v966, 1
        %v971 = vsel %vm969, %v970, %v966
        %v972 = vadd.s32 %v967, %v971
        %v973 = vadd.s32 %v972, 536870912
        %v974 = vshrl.u32 %v973, 30
        %v975 = vshll.u32 %v974, 30
        %v976 = vsub.s32 %v972, %v975
        %vm977 = vcmp.lt.s32.totalorder %v976, 0
        %v978 = vsub.s32 0, %v976
        %v979 = vsel %vm977, %v978, %v976
        %v980 = vclz %v979
        %v981 = vsub.s32 %v980, 2
        %vm982 = vcmp.gt.s32.totalorder 0, %v981
        %v983 = vsel %vm982, 0, %v981
        %v984 = vsub.s32 32, %v983
        %v985 = vshll.u32 %v976, %v983
        %v986 = vshrl.u32 %v968, %v984
        %v987 = vor.u32 %v985, %v986
        %v988 = vsub.s32 4294967266, %v983
        %v989 = vadd.s32 %v988, 127
        %v990 = vshll.u32 %v989, 23
        %v991 = vor.u32 4788187, %v990
        %v992 = vand.u32 2147483647, %v991
        %v994 = vcvt.s32.f32 %v987
        %v995 = vmul.f32 %v994, %v992
        %v996 = vxor.u32 %v995, 2147483648
        %v997 = vsel %vm876, %v996, %v995
        %v998 = vsub.s32 4, %v974
        %v999 = vsel %vm876, %v998, %v974
        %v1000 = vsel %vm875, %v396, %v997
        %v1001 = vsel %vm875, 0, %v999
        %v1002 = vmul.f32 %v1000, %v1000
        %v1003 = vmul.f32 %v1002, -0.001358992
        %v1004 = vadd.f32 %v1003, 0.041655596
        %v1005 = vmul.f32 %v1002, %v1004
        %v1006 = vadd.f32 %v1005, -0.4999988
        %v1007 = vmul.f32 %v1002, %v1006
        %v1008 = vadd.f32 1.0, %v1007
        %v1009 = vmul.f32 %v1000, %v1000
        %v1010 = vmul.f32 %v1009, -0.00019511016
        %v1011 = vadd.f32 %v1010, 0.008332121
        %v1012 = vmul.f32 %v1009, %v1011
        %v1013 = vadd.f32 %v1012, -0.16666654
        %v1014 = vmul.f32 %v1009, %v1013
        %v1015 = vadd.f32 %v1014, 1.0
        %v1016 = vmul.f32 %v1015, %v1000
        %vm1017 = vweird.f32 %v396
        %v1018 = vadd.s32 %v1001, 3
        %v1019 = vand.u32 %v1018, 3
        %vm1020 = vcmp.lt.s32.totalorder %v1019, 2
        %vm1021 = vcmp.eq.s32.totalorder %v1019, 0
        %v1022 = vxor.u32 %v1016, 2147483648
        %v1023 = vsel %vm1021, %v1008, %v1022
        %vm1024 = vcmp.eq.s32.totalorder %v1019, 2
        %v1025 = vxor.u32 %v1008, 2147483648
        %v1026 = vsel %vm1024, %v1025, %v1016
        %v1027 = vsel %vm1020, %v1023, %v1026
        %v1028 = vsel %vm1017, nan, %v1027
        %v1029 = vand.u32 2147483647, %v397
        %vm1030 = vcmp.le.f32.partialorder %v1029, 0.7853982
        %vm1031 = vcmp.lt.s32.totalorder %v397, 0
        %v1032 = vand.u32 %v397, 2139095040
        %v1033 = vshrl.u32 %v1032, 23
        %v1034 = vsub.s32 %v1033, 127
        %v1035 = vand.u32 2147483647, %v397
        %v1036 = vand.u32 %v1035, 8388607
        %v1037 = vor.u32 %v1036, 8388608
        %v1038 = vsub.s32 0, %v1037
        %v1039 = vadd.s32 %v1034, 1
        %vm1040 = vcmp.gt.s32.totalorder %v1039, 0
        %v1041 = vsel %vm1040, %v1039, 0
        %v1042 = vshrl.u32 %v1041, 5
        %v1043 = vand.u32 %v1041, 31
        %v1044 = vsub.s32 32, %v1043
        %v1045 = vshrl.u32 683565275, %v1044
        %v1046 = vshll.u32 683565275, %v1043
        %v1047 = vshrl.u32 2475754826, %v1044
        %v1048 = vor.u32 %v1046, %v1047
        %v1049 = vshll.u32 2475754826, %v1043
        %v1050 = vshrl.u32 2131351028, %v1044
        %v1051 = vor.u32 %v1049, %v1050
        %v1052 = vshll.u32 2131351028, %v1043
        %v1053 = vshrl.u32 2102212464, %v1044
        %v1054 = vor.u32 %v1052, %v1053
        %v1055 = vshll.u32 2102212464, %v1043
        %v1056 = vshrl.u32 920167782, %v1044
        %v1057 = vor.u32 %v1055, %v1056
        %v1058 = vshll.u32 920167782, %v1043
        %v1059 = vshrl.u32 1326507024, %v1044
        %v1060 = vor.u32 %v1058, %v1059
        %vm1061 = vcmp.lt.s32.totalorder %v1042, 1
        %vm1062 = vcmp.lt.s32.totalorder %v1042, 2
        %vm1063 = vcmp.lt.s32.totalorder %v1042, 3
        %vm1064 = vcmp.lt.s32.totalorder %v1042, 4
        %v1065 = vsel %vm1061, %v1045, %v1048
        %v1066 = vsel %vm1064, %v1054, 2102212464
        %v1067 = vsel %vm1063, %v1051, %v1066
        %v1068 = vsel %vm1062, %v1065, %v1067
        %v1069 = vsel %vm1061, %v1048, %v1051
        %v1070 = vsel %vm1064, %v1057, 920167782
        %v1071 = vsel %vm1063, %v1054, %v1070
        %v1072 = vsel %vm1062, %v1069, %v1071
        %v1073 = vsel %vm1061, %v1051, %v1054
        %v1074 = vsel %vm1064, %v1060, 1326507024
        %v1075 = vsel %vm1063, %v1057, %v1074
        %v1076 = vsel %vm1062, %v1073, %v1075
        %v1077 = vshll.u32 %v1037, 8
        %v1078 = vand.u32 %v1077, 65535
        %v1079 = vshrl.u32 %v1077, 16
        %v1080 = vand.u32 %v1076, 65535
        %v1081 = vshrl.u32 %v1076, 16
        %v1082 = vmul.u32 %v1078, %v1080
        %v1083 = vmul.u32 %v1078, %v1081
        %v1084 = vmul.u32 %v1079, %v1080
        %v1085 = vmul.u32 %v1079, %v1081
        %v1086 = vshll.u32 %v1083, 16
        %v1087 = vshrl.u32 %v1083, 16
        %v1088 = vshll.u32 %v1084, 16
        %v1089 = vshrl.u32 %v1084, 16
        %vm1090 = vc.u32 %v1082, %v1086
        %v1091 = vsel %vm1090, 1, 0
        %v1092 = vadd.s32 %v1082, %v1086
        %v1093 = vadd.s32 %v1085, %v1091
        %vm1094 = vc.u32 %v1092, %v1088
        %v1095 = vsel %vm1094, 1, 0
        %v1096 = vadd.s32 %v1092, %v1088
        %v1097 = vadd.s32 %v1093, %v1095
        %v1098 = vadd.s32 %v1097, %v1087
        %v1099 = vadd.s32 %v1098, %v1089
        %v1100 = vand.u32 %v1077, 65535
        %v1101 = vshrl.u32 %v1077, 16
        %v1102 = vand.u32 %v1072, 65535
        %v1103 = vshrl.u32 %v1072, 16
        %v1104 = vmul.u32 %v1100, %v1102
        %v1105 = vmul.u32 %v1100, %v1103
        %v1106 = vmul.u32 %v1101, %v1102
        %v1107 = vmul.u32 %v1101, %v1103
        %v1108 = vshll.u32 %v1105, 16
        %v1109 = vshrl.u32 %v1105, 16
        %v1110 = vshll.u32 %v1106, 16
        %v1111 = vshrl.u32 %v1106, 16
        %vm1112 = vc.u32 %v1104, %v1108
        %v1113 = vsel %vm1112, 1, 0
        %v1114 = vadd.s32 %v1104, %v1108
        %v1115 = vadd.s32 %v1107, %v1113
        %vm1116 = vc.u32 %v1114, %v1110
        %v1117 = vsel %vm1116, 1, 0
        %v1118 = vadd.s32 %v1114, %v1110
        %v1119 = vadd.s32 %v1115, %v1117
        %v1120 = vadd.s32 %v1119, %v1109
        %v1121 = vadd.s32 %v1120, %v1111
        %v1122 = vmul.u32 %v1077, %v1068
        %v1123 = vadd.s32 %v1099, %v1118
        %vm1124 = vc.u32 %v1099, %v1118
        %v1125 = vadd.s32 %v1121, 1
        %v1126 = vsel %vm1124, %v1125, %v1121
        %v1127 = vadd.s32 %v1122, %v1126
        %v1128 = vadd.s32 %v1127, 536870912
        %v1129 = vshrl.u32 %v1128, 30
        %v1130 = vshll.u32 %v1129, 30
        %v1131 = vsub.s32 %v1127, %v1130
        %vm1132 = vcmp.lt.s32.totalorder %v1131, 0
        %v1133 = vsub.s32 0, %v1131
        %v1134 = vsel %vm1132, %v1133, %v1131
        %v1135 = vclz %v1134
        %v1136 = vsub.s32 %v1135, 2
        %vm1137 = vcmp.gt.s32.totalorder 0, %v1136
        %v1138 = vsel %vm1137, 0, %v1136
        %v1139 = vsub.s32 32, %v1138
        %v1140 = vshll.u32 %v1131, %v1138
        %v1141 = vshrl.u32 %v1123, %v1139
        %v1142 = vor.u32 %v1140, %v1141
        %v1143 = vsub.s32 4294967266, %v1138
        %v1144 = vadd.s32 %v1143, 127
        %v1145 = vshll.u32 %v1144, 23
        %v1146 = vor.u32 4788187, %v1145
        %v1147 = vand.u32 2147483647, %v1146
        %v1149 = vcvt.s32.f32 %v1142
        %v1150 = vmul.f32 %v1149, %v1147
        %v1151 = vxor.u32 %v1150, 2147483648
        %v1152 = vsel %vm1031, %v1151, %v1150
        %v1153 = vsub.s32 4, %v1129
        %v1154 = vsel %vm1031, %v1153, %v1129
        %v1155 = vsel %vm1030, %v397, %v1152
        %v1156 = vsel %vm1030, 0, %v1154
        %v1157 = vmul.f32 %v1155, %v1155
        %v1158 = vmul.f32 %v1157, -0.001358992
        %v1159 = vadd.f32 %v1158, 0.041655596
        %v1160 = vmul.f32 %v1157, %v1159
        %v1161 = vadd.f32 %v1160, -0.4999988
        %v1162 = vmul.f32 %v1157, %v1161
        %v1163 = vadd.f32 1.0, %v1162
        %v1164 = vmul.f32 %v1155, %v1155
        %v1165 = vmul.f32 %v1164, -0.00019511016
        %v1166 = vadd.f32 %v1165, 0.008332121
        %v1167 = vmul.f32 %v1164, %v1166
        %v1168 = vadd.f32 %v1167, -0.16666654
        %v1169 = vmul.f32 %v1164, %v1168
        %v1170 = vadd.f32 %v1169, 1.0
        %v1171 = vmul.f32 %v1170, %v1155
        %vm1172 = vweird.f32 %v397
        %v1173 = vadd.s32 %v1156, 3
        %v1174 = vand.u32 %v1173, 3
        %vm1175 = vcmp.lt.s32.totalorder %v1174, 2
        %vm1176 = vcmp.eq.s32.totalorder %v1174, 0
        %v1177 = vxor.u32 %v1171, 2147483648
        %v1178 = vsel %vm1176, %v1163, %v1177
        %vm1179 = vcmp.eq.s32.totalorder %v1174, 2
        %v1180 = vxor.u32 %v1163, 2147483648
        %v1181 = vsel %vm1179, %v1180, %v1171
        %v1182 = vsel %vm1175, %v1178, %v1181
        %v1183 = vsel %vm1172, nan, %v1182
        %v1184 = vand.u32 2147483647, %v398
        %vm1185 = vcmp.le.f32.partialorder %v1184, 0.7853982
        %vm1186 = vcmp.lt.s32.totalorder %v398, 0
        %v1187 = vand.u32 %v398, 2139095040
        %v1188 = vshrl.u32 %v1187, 23
        %v1189 = vsub.s32 %v1188, 127
        %v1190 = vand.u32 2147483647, %v398
        %v1191 = vand.u32 %v1190, 8388607
        %v1192 = vor.u32 %v1191, 8388608
        %v1193 = vsub.s32 0, %v1192
        %v1194 = vadd.s32 %v1189, 1
        %vm1195 = vcmp.gt.s32.totalorder %v1194, 0
        %v1196 = vsel %vm1195, %v1194, 0
        %v1197 = vshrl.u32 %v1196, 5
        %v1198 = vand.u32 %v1196, 31
        %v1199 = vsub.s32 32, %v1198
        %v1200 = vshrl.u32 683565275, %v1199
        %v1201 = vshll.u32 683565275, %v1198
        %v1202 = vshrl.u32 2475754826, %v1199
        %v1203 = vor.u32 %v1201, %v1202
        %v1204 = vshll.u32 2475754826, %v1198
        %v1205 = vshrl.u32 2131351028, %v1199
        %v1206 = vor.u32 %v1204, %v1205
        %v1207 = vshll.u32 2131351028, %v1198
        %v1208 = vshrl.u32 2102212464, %v1199
        %v1209 = vor.u32 %v1207, %v1208
        %v1210 = vshll.u32 2102212464, %v1198
        %v1211 = vshrl.u32 920167782, %v1199
        %v1212 = vor.u32 %v1210, %v1211
        %v1213 = vshll.u32 920167782, %v1198
        %v1214 = vshrl.u32 1326507024, %v1199
        %v1215 = vor.u32 %v1213, %v1214
        %vm1216 = vcmp.lt.s32.totalorder %v1197, 1
        %vm1217 = vcmp.lt.s32.totalorder %v1197, 2
        %vm1218 = vcmp.lt.s32.totalorder %v1197, 3
        %vm1219 = vcmp.lt.s32.totalorder %v1197, 4
        %v1220 = vsel %vm1216, %v1200, %v1203
        %v1221 = vsel %vm1219, %v1209, 2102212464
        %v1222 = vsel %vm1218, %v1206, %v1221
        %v1223 = vsel %vm1217, %v1220, %v1222
        %v1224 = vsel %vm1216, %v1203, %v1206
        %v1225 = vsel %vm1219, %v1212, 920167782
        %v1226 = vsel %vm1218, %v1209, %v1225
        %v1227 = vsel %vm1217, %v1224, %v1226
        %v1228 = vsel %vm1216, %v1206, %v1209
        %v1229 = vsel %vm1219, %v1215, 1326507024
        %v1230 = vsel %vm1218, %v1212, %v1229
        %v1231 = vsel %vm1217, %v1228, %v1230
        %v1232 = vshll.u32 %v1192, 8
        %v1233 = vand.u32 %v1232, 65535
        %v1234 = vshrl.u32 %v1232, 16
        %v1235 = vand.u32 %v1231, 65535
        %v1236 = vshrl.u32 %v1231, 16
        %v1237 = vmul.u32 %v1233, %v1235
        %v1238 = vmul.u32 %v1233, %v1236
        %v1239 = vmul.u32 %v1234, %v1235
        %v1240 = vmul.u32 %v1234, %v1236
        %v1241 = vshll.u32 %v1238, 16
        %v1242 = vshrl.u32 %v1238, 16
        %v1243 = vshll.u32 %v1239, 16
        %v1244 = vshrl.u32 %v1239, 16
        %vm1245 = vc.u32 %v1237, %v1241
        %v1246 = vsel %vm1245, 1, 0
        %v1247 = vadd.s32 %v1237, %v1241
        %v1248 = vadd.s32 %v1240, %v1246
        %vm1249 = vc.u32 %v1247, %v1243
        %v1250 = vsel %vm1249, 1, 0
        %v1251 = vadd.s32 %v1247, %v1243
        %v1252 = vadd.s32 %v1248, %v1250
        %v1253 = vadd.s32 %v1252, %v1242
        %v1254 = vadd.s32 %v1253, %v1244
        %v1255 = vand.u32 %v1232, 65535
        %v1256 = vshrl.u32 %v1232, 16
        %v1257 = vand.u32 %v1227, 65535
        %v1258 = vshrl.u32 %v1227, 16
        %v1259 = vmul.u32 %v1255, %v1257
        %v1260 = vmul.u32 %v1255, %v1258
        %v1261 = vmul.u32 %v1256, %v1257
        %v1262 = vmul.u32 %v1256, %v1258
        %v1263 = vshll.u32 %v1260, 16
        %v1264 = vshrl.u32 %v1260, 16
        %v1265 = vshll.u32 %v1261, 16
        %v1266 = vshrl.u32 %v1261, 16
        %vm1267 = vc.u32 %v1259, %v1263
        %v1268 = vsel %vm1267, 1, 0
        %v1269 = vadd.s32 %v1259, %v1263
        %v1270 = vadd.s32 %v1262, %v1268
        %vm1271 = vc.u32 %v1269, %v1265
        %v1272 = vsel %vm1271, 1, 0
        %v1273 = vadd.s32 %v1269, %v1265
        %v1274 = vadd.s32 %v1270, %v1272
        %v1275 = vadd.s32 %v1274, %v1264
        %v1276 = vadd.s32 %v1275, %v1266
        %v1277 = vmul.u32 %v1232, %v1223
        %v1278 = vadd.s32 %v1254, %v1273
        %vm1279 = vc.u32 %v1254, %v1273
        %v1280 = vadd.s32 %v1276, 1
        %v1281 = vsel %vm1279, %v1280, %v1276
        %v1282 = vadd.s32 %v1277, %v1281
        %v1283 = vadd.s32 %v1282, 536870912
        %v1284 = vshrl.u32 %v1283, 30
        %v1285 = vshll.u32 %v1284, 30
        %v1286 = vsub.s32 %v1282, %v1285
        %vm1287 = vcmp.lt.s32.totalorder %v1286, 0
        %v1288 = vsub.s32 0, %v1286
        %v1289 = vsel %vm1287, %v1288, %v1286
        %v1290 = vclz %v1289
        %v1291 = vsub.s32 %v1290, 2
        %vm1292 = vcmp.gt.s32.totalorder 0, %v1291
        %v1293 = vsel %vm1292, 0, %v1291
        %v1294 = vsub.s32 32, %v1293
        %v1295 = vshll.u32 %v1286, %v1293
        %v1296 = vshrl.u32 %v1278, %v1294
        %v1297 = vor.u32 %v1295, %v1296
        %v1298 = vsub.s32 4294967266, %v1293
        %v1299 = vadd.s32 %v1298, 127
        %v1300 = vshll.u32 %v1299, 23
        %v1301 = vor.u32 4788187, %v1300
        %v1302 = vand.u32 2147483647, %v1301
        %v1304 = vcvt.s32.f32 %v1297
        %v1305 = vmul.f32 %v1304, %v1302
        %v1306 = vxor.u32 %v1305, 2147483648
        %v1307 = vsel %vm1186, %v1306, %v1305
        %v1308 = vsub.s32 4, %v1284
        %v1309 = vsel %vm1186, %v1308, %v1284
        %v1310 = vsel %vm1185, %v398, %v1307
        %v1311 = vsel %vm1185, 0, %v1309
        %v1312 = vmul.f32 %v1310, %v1310
        %v1313 = vmul.f32 %v1312, -0.001358992
        %v1314 = vadd.f32 %v1313, 0.041655596
        %v1315 = vmul.f32 %v1312, %v1314
        %v1316 = vadd.f32 %v1315, -0.4999988
        %v1317 = vmul.f32 %v1312, %v1316
        %v1318 = vadd.f32 1.0, %v1317
        %v1319 = vmul.f32 %v1310, %v1310
        %v1320 = vmul.f32 %v1319, -0.00019511016
        %v1321 = vadd.f32 %v1320, 0.008332121
        %v1322 = vmul.f32 %v1319, %v1321
        %v1323 = vadd.f32 %v1322, -0.16666654
        %v1324 = vmul.f32 %v1319, %v1323
        %v1325 = vadd.f32 %v1324, 1.0
        %v1326 = vmul.f32 %v1325, %v1310
        %vm1327 = vweird.f32 %v398
        %v1328 = vadd.s32 %v1311, 3
        %v1329 = vand.u32 %v1328, 3
        %vm1330 = vcmp.lt.s32.totalorder %v1329, 2
        %vm1331 = vcmp.eq.s32.totalorder %v1329, 0
        %v1332 = vxor.u32 %v1326, 2147483648
        %v1333 = vsel %vm1331, %v1318, %v1332
        %vm1334 = vcmp.eq.s32.totalorder %v1329, 2
        %v1335 = vxor.u32 %v1318, 2147483648
        %v1336 = vsel %vm1334, %v1335, %v1326
        %v1337 = vsel %vm1330, %v1333, %v1336
        %v1338 = vsel %vm1327, nan, %v1337
        %v1339 = vand.u32 2147483647, %v399
        %vm1340 = vcmp.le.f32.partialorder %v1339, 0.7853982
        %vm1341 = vcmp.lt.s32.totalorder %v399, 0
        %v1342 = vand.u32 %v399, 2139095040
        %v1343 = vshrl.u32 %v1342, 23
        %v1344 = vsub.s32 %v1343, 127
        %v1345 = vand.u32 2147483647, %v399
        %v1346 = vand.u32 %v1345, 8388607
        %v1347 = vor.u32 %v1346, 8388608
        %v1348 = vsub.s32 0, %v1347
        %v1349 = vadd.s32 %v1344, 1
        %vm1350 = vcmp.gt.s32.totalorder %v1349, 0
        %v1351 = vsel %vm1350, %v1349, 0
        %v1352 = vshrl.u32 %v1351, 5
        %v1353 = vand.u32 %v1351, 31
        %v1354 = vsub.s32 32, %v1353
        %v1355 = vshrl.u32 683565275, %v1354
        %v1356 = vshll.u32 683565275, %v1353
        %v1357 = vshrl.u32 2475754826, %v1354
        %v1358 = vor.u32 %v1356, %v1357
        %v1359 = vshll.u32 2475754826, %v1353
        %v1360 = vshrl.u32 2131351028, %v1354
        %v1361 = vor.u32 %v1359, %v1360
        %v1362 = vshll.u32 2131351028, %v1353
        %v1363 = vshrl.u32 2102212464, %v1354
        %v1364 = vor.u32 %v1362, %v1363
        %v1365 = vshll.u32 2102212464, %v1353
        %v1366 = vshrl.u32 920167782, %v1354
        %v1367 = vor.u32 %v1365, %v1366
        %v1368 = vshll.u32 920167782, %v1353
        %v1369 = vshrl.u32 1326507024, %v1354
        %v1370 = vor.u32 %v1368, %v1369
        %vm1371 = vcmp.lt.s32.totalorder %v1352, 1
        %vm1372 = vcmp.lt.s32.totalorder %v1352, 2
        %vm1373 = vcmp.lt.s32.totalorder %v1352, 3
        %vm1374 = vcmp.lt.s32.totalorder %v1352, 4
        %v1375 = vsel %vm1371, %v1355, %v1358
        %v1376 = vsel %vm1374, %v1364, 2102212464
        %v1377 = vsel %vm1373, %v1361, %v1376
        %v1378 = vsel %vm1372, %v1375, %v1377
        %v1379 = vsel %vm1371, %v1358, %v1361
        %v1380 = vsel %vm1374, %v1367, 920167782
        %v1381 = vsel %vm1373, %v1364, %v1380
        %v1382 = vsel %vm1372, %v1379, %v1381
        %v1383 = vsel %vm1371, %v1361, %v1364
        %v1384 = vsel %vm1374, %v1370, 1326507024
        %v1385 = vsel %vm1373, %v1367, %v1384
        %v1386 = vsel %vm1372, %v1383, %v1385
        %v1387 = vshll.u32 %v1347, 8
        %v1388 = vand.u32 %v1387, 65535
        %v1389 = vshrl.u32 %v1387, 16
        %v1390 = vand.u32 %v1386, 65535
        %v1391 = vshrl.u32 %v1386, 16
        %v1392 = vmul.u32 %v1388, %v1390
        %v1393 = vmul.u32 %v1388, %v1391
        %v1394 = vmul.u32 %v1389, %v1390
        %v1395 = vmul.u32 %v1389, %v1391
        %v1396 = vshll.u32 %v1393, 16
        %v1397 = vshrl.u32 %v1393, 16
        %v1398 = vshll.u32 %v1394, 16
        %v1399 = vshrl.u32 %v1394, 16
        %vm1400 = vc.u32 %v1392, %v1396
        %v1401 = vsel %vm1400, 1, 0
        %v1402 = vadd.s32 %v1392, %v1396
        %v1403 = vadd.s32 %v1395, %v1401
        %vm1404 = vc.u32 %v1402, %v1398
        %v1405 = vsel %vm1404, 1, 0
        %v1406 = vadd.s32 %v1402, %v1398
        %v1407 = vadd.s32 %v1403, %v1405
        %v1408 = vadd.s32 %v1407, %v1397
        %v1409 = vadd.s32 %v1408, %v1399
        %v1410 = vand.u32 %v1387, 65535
        %v1411 = vshrl.u32 %v1387, 16
        %v1412 = vand.u32 %v1382, 65535
        %v1413 = vshrl.u32 %v1382, 16
        %v1414 = vmul.u32 %v1410, %v1412
        %v1415 = vmul.u32 %v1410, %v1413
        %v1416 = vmul.u32 %v1411, %v1412
        %v1417 = vmul.u32 %v1411, %v1413
        %v1418 = vshll.u32 %v1415, 16
        %v1419 = vshrl.u32 %v1415, 16
        %v1420 = vshll.u32 %v1416, 16
        %v1421 = vshrl.u32 %v1416, 16
        %vm1422 = vc.u32 %v1414, %v1418
        %v1423 = vsel %vm1422, 1, 0
        %v1424 = vadd.s32 %v1414, %v1418
        %v1425 = vadd.s32 %v1417, %v1423
        %vm1426 = vc.u32 %v1424, %v1420
        %v1427 = vsel %vm1426, 1, 0
        %v1428 = vadd.s32 %v1424, %v1420
        %v1429 = vadd.s32 %v1425, %v1427
        %v1430 = vadd.s32 %v1429, %v1419
        %v1431 = vadd.s32 %v1430, %v1421
        %v1432 = vmul.u32 %v1387, %v1378
        %v1433 = vadd.s32 %v1409, %v1428
        %vm1434 = vc.u32 %v1409, %v1428
        %v1435 = vadd.s32 %v1431, 1
        %v1436 = vsel %vm1434, %v1435, %v1431
        %v1437 = vadd.s32 %v1432, %v1436
        %v1438 = vadd.s32 %v1437, 536870912
        %v1439 = vshrl.u32 %v1438, 30
        %v1440 = vshll.u32 %v1439, 30
        %v1441 = vsub.s32 %v1437, %v1440
        %vm1442 = vcmp.lt.s32.totalorder %v1441, 0
        %v1443 = vsub.s32 0, %v1441
        %v1444 = vsel %vm1442, %v1443, %v1441
        %v1445 = vclz %v1444
        %v1446 = vsub.s32 %v1445, 2
        %vm1447 = vcmp.gt.s32.totalorder 0, %v1446
        %v1448 = vsel %vm1447, 0, %v1446
        %v1449 = vsub.s32 32, %v1448
        %v1450 = vshll.u32 %v1441, %v1448
        %v1451 = vshrl.u32 %v1433, %v1449
        %v1452 = vor.u32 %v1450, %v1451
        %v1453 = vsub.s32 4294967266, %v1448
        %v1454 = vadd.s32 %v1453, 127
        %v1455 = vshll.u32 %v1454, 23
        %v1456 = vor.u32 4788187, %v1455
        %v1457 = vand.u32 2147483647, %v1456
        %v1459 = vcvt.s32.f32 %v1452
        %v1460 = vmul.f32 %v1459, %v1457
        %v1461 = vxor.u32 %v1460, 2147483648
        %v1462 = vsel %vm1341, %v1461, %v1460
        %v1463 = vsub.s32 4, %v1439
        %v1464 = vsel %vm1341, %v1463, %v1439
        %v1465 = vsel %vm1340, %v399, %v1462
        %v1466 = vsel %vm1340, 0, %v1464
        %v1467 = vmul.f32 %v1465, %v1465
        %v1468 = vmul.f32 %v1467, -0.001358992
        %v1469 = vadd.f32 %v1468, 0.041655596
        %v1470 = vmul.f32 %v1467, %v1469
        %v1471 = vadd.f32 %v1470, -0.4999988
        %v1472 = vmul.f32 %v1467, %v1471
        %v1473 = vadd.f32 1.0, %v1472
        %v1474 = vmul.f32 %v1465, %v1465
        %v1475 = vmul.f32 %v1474, -0.00019511016
        %v1476 = vadd.f32 %v1475, 0.008332121
        %v1477 = vmul.f32 %v1474, %v1476
        %v1478 = vadd.f32 %v1477, -0.16666654
        %v1479 = vmul.f32 %v1474, %v1478
        %v1480 = vadd.f32 %v1479, 1.0
        %v1481 = vmul.f32 %v1480, %v1465
        %vm1482 = vweird.f32 %v399
        %v1483 = vadd.s32 %v1466, 3
        %v1484 = vand.u32 %v1483, 3
        %vm1485 = vcmp.lt.s32.totalorder %v1484, 2
        %vm1486 = vcmp.eq.s32.totalorder %v1484, 0
        %v1487 = vxor.u32 %v1481, 2147483648
        %v1488 = vsel %vm1486, %v1473, %v1487
        %vm1489 = vcmp.eq.s32.totalorder %v1484, 2
        %v1490 = vxor.u32 %v1473, 2147483648
        %v1491 = vsel %vm1489, %v1490, %v1481
        %v1492 = vsel %vm1485, %v1488, %v1491
        %v1493 = vsel %vm1482, nan, %v1492
        %v1494 = vand.u32 2147483647, %v400
        %vm1495 = vcmp.le.f32.partialorder %v1494, 0.7853982
        %vm1496 = vcmp.lt.s32.totalorder %v400, 0
        %v1497 = vand.u32 %v400, 2139095040
        %v1498 = vshrl.u32 %v1497, 23
        %v1499 = vsub.s32 %v1498, 127
        %v1500 = vand.u32 2147483647, %v400
        %v1501 = vand.u32 %v1500, 8388607
        %v1502 = vor.u32 %v1501, 8388608
        %v1503 = vsub.s32 0, %v1502
        %v1504 = vadd.s32 %v1499, 1
        %vm1505 = vcmp.gt.s32.totalorder %v1504, 0
        %v1506 = vsel %vm1505, %v1504, 0
        %v1507 = vshrl.u32 %v1506, 5
        %v1508 = vand.u32 %v1506, 31
        %v1509 = vsub.s32 32, %v1508
        %v1510 = vshrl.u32 683565275, %v1509
        %v1511 = vshll.u32 683565275, %v1508
        %v1512 = vshrl.u32 2475754826, %v1509
        %v1513 = vor.u32 %v1511, %v1512
        %v1514 = vshll.u32 2475754826, %v1508
        %v1515 = vshrl.u32 2131351028, %v1509
        %v1516 = vor.u32 %v1514, %v1515
        %v1517 = vshll.u32 2131351028, %v1508
        %v1518 = vshrl.u32 2102212464, %v1509
        %v1519 = vor.u32 %v1517, %v1518
        %v1520 = vshll.u32 2102212464, %v1508
        %v1521 = vshrl.u32 920167782, %v1509
        %v1522 = vor.u32 %v1520, %v1521
        %v1523 = vshll.u32 920167782, %v1508
        %v1524 = vshrl.u32 1326507024, %v1509
        %v1525 = vor.u32 %v1523, %v1524
        %vm1526 = vcmp.lt.s32.totalorder %v1507, 1
        %vm1527 = vcmp.lt.s32.totalorder %v1507, 2
        %vm1528 = vcmp.lt.s32.totalorder %v1507, 3
        %vm1529 = vcmp.lt.s32.totalorder %v1507, 4
        %v1530 = vsel %vm1526, %v1510, %v1513
        %v1531 = vsel %vm1529, %v1519, 2102212464
        %v1532 = vsel %vm1528, %v1516, %v1531
        %v1533 = vsel %vm1527, %v1530, %v1532
        %v1534 = vsel %vm1526, %v1513, %v1516
        %v1535 = vsel %vm1529, %v1522, 920167782
        %v1536 = vsel %vm1528, %v1519, %v1535
        %v1537 = vsel %vm1527, %v1534, %v1536
        %v1538 = vsel %vm1526, %v1516, %v1519
        %v1539 = vsel %vm1529, %v1525, 1326507024
        %v1540 = vsel %vm1528, %v1522, %v1539
        %v1541 = vsel %vm1527, %v1538, %v1540
        %v1542 = vshll.u32 %v1502, 8
        %v1543 = vand.u32 %v1542, 65535
        %v1544 = vshrl.u32 %v1542, 16
        %v1545 = vand.u32 %v1541, 65535
        %v1546 = vshrl.u32 %v1541, 16
        %v1547 = vmul.u32 %v1543, %v1545
        %v1548 = vmul.u32 %v1543, %v1546
        %v1549 = vmul.u32 %v1544, %v1545
        %v1550 = vmul.u32 %v1544, %v1546
        %v1551 = vshll.u32 %v1548, 16
        %v1552 = vshrl.u32 %v1548, 16
        %v1553 = vshll.u32 %v1549, 16
        %v1554 = vshrl.u32 %v1549, 16
        %vm1555 = vc.u32 %v1547, %v1551
        %v1556 = vsel %vm1555, 1, 0
        %v1557 = vadd.s32 %v1547, %v1551
        %v1558 = vadd.s32 %v1550, %v1556
        %vm1559 = vc.u32 %v1557, %v1553
        %v1560 = vsel %vm1559, 1, 0
        %v1561 = vadd.s32 %v1557, %v1553
        %v1562 = vadd.s32 %v1558, %v1560
        %v1563 = vadd.s32 %v1562, %v1552
        %v1564 = vadd.s32 %v1563, %v1554
        %v1565 = vand.u32 %v1542, 65535
        %v1566 = vshrl.u32 %v1542, 16
        %v1567 = vand.u32 %v1537, 65535
        %v1568 = vshrl.u32 %v1537, 16
        %v1569 = vmul.u32 %v1565, %v1567
        %v1570 = vmul.u32 %v1565, %v1568
        %v1571 = vmul.u32 %v1566, %v1567
        %v1572 = vmul.u32 %v1566, %v1568
        %v1573 = vshll.u32 %v1570, 16
        %v1574 = vshrl.u32 %v1570, 16
        %v1575 = vshll.u32 %v1571, 16
        %v1576 = vshrl.u32 %v1571, 16
        %vm1577 = vc.u32 %v1569, %v1573
        %v1578 = vsel %vm1577, 1, 0
        %v1579 = vadd.s32 %v1569, %v1573
        %v1580 = vadd.s32 %v1572, %v1578
        %vm1581 = vc.u32 %v1579, %v1575
        %v1582 = vsel %vm1581, 1, 0
        %v1583 = vadd.s32 %v1579, %v1575
        %v1584 = vadd.s32 %v1580, %v1582
        %v1585 = vadd.s32 %v1584, %v1574
        %v1586 = vadd.s32 %v1585, %v1576
        %v1587 = vmul.u32 %v1542, %v1533
        %v1588 = vadd.s32 %v1564, %v1583
        %vm1589 = vc.u32 %v1564, %v1583
        %v1590 = vadd.s32 %v1586, 1
        %v1591 = vsel %vm1589, %v1590, %v1586
        %v1592 = vadd.s32 %v1587, %v1591
        %v1593 = vadd.s32 %v1592, 536870912
        %v1594 = vshrl.u32 %v1593, 30
        %v1595 = vshll.u32 %v1594, 30
        %v1596 = vsub.s32 %v1592, %v1595
        %vm1597 = vcmp.lt.s32.totalorder %v1596, 0
        %v1598 = vsub.s32 0, %v1596
        %v1599 = vsel %vm1597, %v1598, %v1596
        %v1600 = vclz %v1599
        %v1601 = vsub.s32 %v1600, 2
        %vm1602 = vcmp.gt.s32.totalorder 0, %v1601
        %v1603 = vsel %vm1602, 0, %v1601
        %v1604 = vsub.s32 32, %v1603
        %v1605 = vshll.u32 %v1596, %v1603
        %v1606 = vshrl.u32 %v1588, %v1604
        %v1607 = vor.u32 %v1605, %v1606
        %v1608 = vsub.s32 4294967266, %v1603
        %v1609 = vadd.s32 %v1608, 127
        %v1610 = vshll.u32 %v1609, 23
        %v1611 = vor.u32 4788187, %v1610
        %v1612 = vand.u32 2147483647, %v1611
        %v1614 = vcvt.s32.f32 %v1607
        %v1615 = vmul.f32 %v1614, %v1612
        %v1616 = vxor.u32 %v1615, 2147483648
        %v1617 = vsel %vm1496, %v1616, %v1615
        %v1618 = vsub.s32 4, %v1594
        %v1619 = vsel %vm1496, %v1618, %v1594
        %v1620 = vsel %vm1495, %v400, %v1617
        %v1621 = vsel %vm1495, 0, %v1619
        %v1622 = vmul.f32 %v1620, %v1620
        %v1623 = vmul.f32 %v1622, -0.001358992
        %v1624 = vadd.f32 %v1623, 0.041655596
        %v1625 = vmul.f32 %v1622, %v1624
        %v1626 = vadd.f32 %v1625, -0.4999988
        %v1627 = vmul.f32 %v1622, %v1626
        %v1628 = vadd.f32 1.0, %v1627
        %v1629 = vmul.f32 %v1620, %v1620
        %v1630 = vmul.f32 %v1629, -0.00019511016
        %v1631 = vadd.f32 %v1630, 0.008332121
        %v1632 = vmul.f32 %v1629, %v1631
        %v1633 = vadd.f32 %v1632, -0.16666654
        %v1634 = vmul.f32 %v1629, %v1633
        %v1635 = vadd.f32 %v1634, 1.0
        %v1636 = vmul.f32 %v1635, %v1620
        %vm1637 = vweird.f32 %v400
        %v1638 = vadd.s32 %v1621, 3
        %v1639 = vand.u32 %v1638, 3
        %vm1640 = vcmp.lt.s32.totalorder %v1639, 2
        %vm1641 = vcmp.eq.s32.totalorder %v1639, 0
        %v1642 = vxor.u32 %v1636, 2147483648
        %v1643 = vsel %vm1641, %v1628, %v1642
        %vm1644 = vcmp.eq.s32.totalorder %v1639, 2
        %v1645 = vxor.u32 %v1628, 2147483648
        %v1646 = vsel %vm1644, %v1645, %v1636
        %v1647 = vsel %vm1640, %v1643, %v1646
        %v1648 = vsel %vm1637, nan, %v1647
        %v1649 = vand.u32 2147483647, %v401
        %vm1650 = vcmp.le.f32.partialorder %v1649, 0.7853982
        %vm1651 = vcmp.lt.s32.totalorder %v401, 0
        %v1652 = vand.u32 %v401, 2139095040
        %v1653 = vshrl.u32 %v1652, 23
        %v1654 = vsub.s32 %v1653, 127
        %v1655 = vand.u32 2147483647, %v401
        %v1656 = vand.u32 %v1655, 8388607
        %v1657 = vor.u32 %v1656, 8388608
        %v1658 = vsub.s32 0, %v1657
        %v1659 = vadd.s32 %v1654, 1
        %vm1660 = vcmp.gt.s32.totalorder %v1659, 0
        %v1661 = vsel %vm1660, %v1659, 0
        %v1662 = vshrl.u32 %v1661, 5
        %v1663 = vand.u32 %v1661, 31
        %v1664 = vsub.s32 32, %v1663
        %v1665 = vshrl.u32 683565275, %v1664
        %v1666 = vshll.u32 683565275, %v1663
        %v1667 = vshrl.u32 2475754826, %v1664
        %v1668 = vor.u32 %v1666, %v1667
        %v1669 = vshll.u32 2475754826, %v1663
        %v1670 = vshrl.u32 2131351028, %v1664
        %v1671 = vor.u32 %v1669, %v1670
        %v1672 = vshll.u32 2131351028, %v1663
        %v1673 = vshrl.u32 2102212464, %v1664
        %v1674 = vor.u32 %v1672, %v1673
        %v1675 = vshll.u32 2102212464, %v1663
        %v1676 = vshrl.u32 920167782, %v1664
        %v1677 = vor.u32 %v1675, %v1676
        %v1678 = vshll.u32 920167782, %v1663
        %v1679 = vshrl.u32 1326507024, %v1664
        %v1680 = vor.u32 %v1678, %v1679
        %vm1681 = vcmp.lt.s32.totalorder %v1662, 1
        %vm1682 = vcmp.lt.s32.totalorder %v1662, 2
        %vm1683 = vcmp.lt.s32.totalorder %v1662, 3
        %vm1684 = vcmp.lt.s32.totalorder %v1662, 4
        %v1685 = vsel %vm1681, %v1665, %v1668
        %v1686 = vsel %vm1684, %v1674, 2102212464
        %v1687 = vsel %vm1683, %v1671, %v1686
        %v1688 = vsel %vm1682, %v1685, %v1687
        %v1689 = vsel %vm1681, %v1668, %v1671
        %v1690 = vsel %vm1684, %v1677, 920167782
        %v1691 = vsel %vm1683, %v1674, %v1690
        %v1692 = vsel %vm1682, %v1689, %v1691
        %v1693 = vsel %vm1681, %v1671, %v1674
        %v1694 = vsel %vm1684, %v1680, 1326507024
        %v1695 = vsel %vm1683, %v1677, %v1694
        %v1696 = vsel %vm1682, %v1693, %v1695
        %v1697 = vshll.u32 %v1657, 8
        %v1698 = vand.u32 %v1697, 65535
        %v1699 = vshrl.u32 %v1697, 16
        %v1700 = vand.u32 %v1696, 65535
        %v1701 = vshrl.u32 %v1696, 16
        %v1702 = vmul.u32 %v1698, %v1700
        %v1703 = vmul.u32 %v1698, %v1701
        %v1704 = vmul.u32 %v1699, %v1700
        %v1705 = vmul.u32 %v1699, %v1701
        %v1706 = vshll.u32 %v1703, 16
        %v1707 = vshrl.u32 %v1703, 16
        %v1708 = vshll.u32 %v1704, 16
        %v1709 = vshrl.u32 %v1704, 16
        %vm1710 = vc.u32 %v1702, %v1706
        %v1711 = vsel %vm1710, 1, 0
        %v1712 = vadd.s32 %v1702, %v1706
        %v1713 = vadd.s32 %v1705, %v1711
        %vm1714 = vc.u32 %v1712, %v1708
        %v1715 = vsel %vm1714, 1, 0
        %v1716 = vadd.s32 %v1712, %v1708
        %v1717 = vadd.s32 %v1713, %v1715
        %v1718 = vadd.s32 %v1717, %v1707
        %v1719 = vadd.s32 %v1718, %v1709
        %v1720 = vand.u32 %v1697, 65535
        %v1721 = vshrl.u32 %v1697, 16
        %v1722 = vand.u32 %v1692, 65535
        %v1723 = vshrl.u32 %v1692, 16
        %v1724 = vmul.u32 %v1720, %v1722
        %v1725 = vmul.u32 %v1720, %v1723
        %v1726 = vmul.u32 %v1721, %v1722
        %v1727 = vmul.u32 %v1721, %v1723
        %v1728 = vshll.u32 %v1725, 16
        %v1729 = vshrl.u32 %v1725, 16
        %v1730 = vshll.u32 %v1726, 16
        %v1731 = vshrl.u32 %v1726, 16
        %vm1732 = vc.u32 %v1724, %v1728
        %v1733 = vsel %vm1732, 1, 0
        %v1734 = vadd.s32 %v1724, %v1728
        %v1735 = vadd.s32 %v1727, %v1733
        %vm1736 = vc.u32 %v1734, %v1730
        %v1737 = vsel %vm1736, 1, 0
        %v1738 = vadd.s32 %v1734, %v1730
        %v1739 = vadd.s32 %v1735, %v1737
        %v1740 = vadd.s32 %v1739, %v1729
        %v1741 = vadd.s32 %v1740, %v1731
        %v1742 = vmul.u32 %v1697, %v1688
        %v1743 = vadd.s32 %v1719, %v1738
        %vm1744 = vc.u32 %v1719, %v1738
        %v1745 = vadd.s32 %v1741, 1
        %v1746 = vsel %vm1744, %v1745, %v1741
        %v1747 = vadd.s32 %v1742, %v1746
        %v1748 = vadd.s32 %v1747, 536870912
        %v1749 = vshrl.u32 %v1748, 30
        %v1750 = vshll.u32 %v1749, 30
        %v1751 = vsub.s32 %v1747, %v1750
        %vm1752 = vcmp.lt.s32.totalorder %v1751, 0
        %v1753 = vsub.s32 0, %v1751
        %v1754 = vsel %vm1752, %v1753, %v1751
        %v1755 = vclz %v1754
        %v1756 = vsub.s32 %v1755, 2
        %vm1757 = vcmp.gt.s32.totalorder 0, %v1756
        %v1758 = vsel %vm1757, 0, %v1756
        %v1759 = vsub.s32 32, %v1758
        %v1760 = vshll.u32 %v1751, %v1758
        %v1761 = vshrl.u32 %v1743, %v1759
        %v1762 = vor.u32 %v1760, %v1761
        %v1763 = vsub.s32 4294967266, %v1758
        %v1764 = vadd.s32 %v1763, 127
        %v1765 = vshll.u32 %v1764, 23
        %v1766 = vor.u32 4788187, %v1765
        %v1767 = vand.u32 2147483647, %v1766
        %v1769 = vcvt.s32.f32 %v1762
        %v1770 = vmul.f32 %v1769, %v1767
        %v1771 = vxor.u32 %v1770, 2147483648
        %v1772 = vsel %vm1651, %v1771, %v1770
        %v1773 = vsub.s32 4, %v1749
        %v1774 = vsel %vm1651, %v1773, %v1749
        %v1775 = vsel %vm1650, %v401, %v1772
        %v1776 = vsel %vm1650, 0, %v1774
        %v1777 = vmul.f32 %v1775, %v1775
        %v1778 = vmul.f32 %v1777, -0.001358992
        %v1779 = vadd.f32 %v1778, 0.041655596
        %v1780 = vmul.f32 %v1777, %v1779
        %v1781 = vadd.f32 %v1780, -0.4999988
        %v1782 = vmul.f32 %v1777, %v1781
        %v1783 = vadd.f32 1.0, %v1782
        %v1784 = vmul.f32 %v1775, %v1775
        %v1785 = vmul.f32 %v1784, -0.00019511016
        %v1786 = vadd.f32 %v1785, 0.008332121
        %v1787 = vmul.f32 %v1784, %v1786
        %v1788 = vadd.f32 %v1787, -0.16666654
        %v1789 = vmul.f32 %v1784, %v1788
        %v1790 = vadd.f32 %v1789, 1.0
        %v1791 = vmul.f32 %v1790, %v1775
        %vm1792 = vweird.f32 %v401
        %v1793 = vadd.s32 %v1776, 3
        %v1794 = vand.u32 %v1793, 3
        %vm1795 = vcmp.lt.s32.totalorder %v1794, 2
        %vm1796 = vcmp.eq.s32.totalorder %v1794, 0
        %v1797 = vxor.u32 %v1791, 2147483648
        %v1798 = vsel %vm1796, %v1783, %v1797
        %vm1799 = vcmp.eq.s32.totalorder %v1794, 2
        %v1800 = vxor.u32 %v1783, 2147483648
        %v1801 = vsel %vm1799, %v1800, %v1791
        %v1802 = vsel %vm1795, %v1798, %v1801
        %v1803 = vsel %vm1792, nan, %v1802
        %v1804 = vand.u32 2147483647, %v402
        %vm1805 = vcmp.le.f32.partialorder %v1804, 0.7853982
        %vm1806 = vcmp.lt.s32.totalorder %v402, 0
        %v1807 = vand.u32 %v402, 2139095040
        %v1808 = vshrl.u32 %v1807, 23
        %v1809 = vsub.s32 %v1808, 127
        %v1810 = vand.u32 2147483647, %v402
        %v1811 = vand.u32 %v1810, 8388607
        %v1812 = vor.u32 %v1811, 8388608
        %v1813 = vsub.s32 0, %v1812
        %v1814 = vadd.s32 %v1809, 1
        %vm1815 = vcmp.gt.s32.totalorder %v1814, 0
        %v1816 = vsel %vm1815, %v1814, 0
        %v1817 = vshrl.u32 %v1816, 5
        %v1818 = vand.u32 %v1816, 31
        %v1819 = vsub.s32 32, %v1818
        %v1820 = vshrl.u32 683565275, %v1819
        %v1821 = vshll.u32 683565275, %v1818
        %v1822 = vshrl.u32 2475754826, %v1819
        %v1823 = vor.u32 %v1821, %v1822
        %v1824 = vshll.u32 2475754826, %v1818
        %v1825 = vshrl.u32 2131351028, %v1819
        %v1826 = vor.u32 %v1824, %v1825
        %v1827 = vshll.u32 2131351028, %v1818
        %v1828 = vshrl.u32 2102212464, %v1819
        %v1829 = vor.u32 %v1827, %v1828
        %v1830 = vshll.u32 2102212464, %v1818
        %v1831 = vshrl.u32 920167782, %v1819
        %v1832 = vor.u32 %v1830, %v1831
        %v1833 = vshll.u32 920167782, %v1818
        %v1834 = vshrl.u32 1326507024, %v1819
        %v1835 = vor.u32 %v1833, %v1834
        %vm1836 = vcmp.lt.s32.totalorder %v1817, 1
        %vm1837 = vcmp.lt.s32.totalorder %v1817, 2
        %vm1838 = vcmp.lt.s32.totalorder %v1817, 3
        %vm1839 = vcmp.lt.s32.totalorder %v1817, 4
        %v1840 = vsel %vm1836, %v1820, %v1823
        %v1841 = vsel %vm1839, %v1829, 2102212464
        %v1842 = vsel %vm1838, %v1826, %v1841
        %v1843 = vsel %vm1837, %v1840, %v1842
        %v1844 = vsel %vm1836, %v1823, %v1826
        %v1845 = vsel %vm1839, %v1832, 920167782
        %v1846 = vsel %vm1838, %v1829, %v1845
        %v1847 = vsel %vm1837, %v1844, %v1846
        %v1848 = vsel %vm1836, %v1826, %v1829
        %v1849 = vsel %vm1839, %v1835, 1326507024
        %v1850 = vsel %vm1838, %v1832, %v1849
        %v1851 = vsel %vm1837, %v1848, %v1850
        %v1852 = vshll.u32 %v1812, 8
        %v1853 = vand.u32 %v1852, 65535
        %v1854 = vshrl.u32 %v1852, 16
        %v1855 = vand.u32 %v1851, 65535
        %v1856 = vshrl.u32 %v1851, 16
        %v1857 = vmul.u32 %v1853, %v1855
        %v1858 = vmul.u32 %v1853, %v1856
        %v1859 = vmul.u32 %v1854, %v1855
        %v1860 = vmul.u32 %v1854, %v1856
        %v1861 = vshll.u32 %v1858, 16
        %v1862 = vshrl.u32 %v1858, 16
        %v1863 = vshll.u32 %v1859, 16
        %v1864 = vshrl.u32 %v1859, 16
        %vm1865 = vc.u32 %v1857, %v1861
        %v1866 = vsel %vm1865, 1, 0
        %v1867 = vadd.s32 %v1857, %v1861
        %v1868 = vadd.s32 %v1860, %v1866
        %vm1869 = vc.u32 %v1867, %v1863
        %v1870 = vsel %vm1869, 1, 0
        %v1871 = vadd.s32 %v1867, %v1863
        %v1872 = vadd.s32 %v1868, %v1870
        %v1873 = vadd.s32 %v1872, %v1862
        %v1874 = vadd.s32 %v1873, %v1864
        %v1875 = vand.u32 %v1852, 65535
        %v1876 = vshrl.u32 %v1852, 16
        %v1877 = vand.u32 %v1847, 65535
        %v1878 = vshrl.u32 %v1847, 16
        %v1879 = vmul.u32 %v1875, %v1877
        %v1880 = vmul.u32 %v1875, %v1878
        %v1881 = vmul.u32 %v1876, %v1877
        %v1882 = vmul.u32 %v1876, %v1878
        %v1883 = vshll.u32 %v1880, 16
        %v1884 = vshrl.u32 %v1880, 16
        %v1885 = vshll.u32 %v1881, 16
        %v1886 = vshrl.u32 %v1881, 16
        %vm1887 = vc.u32 %v1879, %v1883
        %v1888 = vsel %vm1887, 1, 0
        %v1889 = vadd.s32 %v1879, %v1883
        %v1890 = vadd.s32 %v1882, %v1888
        %vm1891 = vc.u32 %v1889, %v1885
        %v1892 = vsel %vm1891, 1, 0
        %v1893 = vadd.s32 %v1889, %v1885
        %v1894 = vadd.s32 %v1890, %v1892
        %v1895 = vadd.s32 %v1894, %v1884
        %v1896 = vadd.s32 %v1895, %v1886
        %v1897 = vmul.u32 %v1852, %v1843
        %v1898 = vadd.s32 %v1874, %v1893
        %vm1899 = vc.u32 %v1874, %v1893
        %v1900 = vadd.s32 %v1896, 1
        %v1901 = vsel %vm1899, %v1900, %v1896
        %v1902 = vadd.s32 %v1897, %v1901
        %v1903 = vadd.s32 %v1902, 536870912
        %v1904 = vshrl.u32 %v1903, 30
        %v1905 = vshll.u32 %v1904, 30
        %v1906 = vsub.s32 %v1902, %v1905
        %vm1907 = vcmp.lt.s32.totalorder %v1906, 0
        %v1908 = vsub.s32 0, %v1906
        %v1909 = vsel %vm1907, %v1908, %v1906
        %v1910 = vclz %v1909
        %v1911 = vsub.s32 %v1910, 2
        %vm1912 = vcmp.gt.s32.totalorder 0, %v1911
        %v1913 = vsel %vm1912, 0, %v1911
        %v1914 = vsub.s32 32, %v1913
        %v1915 = vshll.u32 %v1906, %v1913
        %v1916 = vshrl.u32 %v1898, %v1914
        %v1917 = vor.u32 %v1915, %v1916
        %v1918 = vsub.s32 4294967266, %v1913
        %v1919 = vadd.s32 %v1918, 127
        %v1920 = vshll.u32 %v1919, 23
        %v1921 = vor.u32 4788187, %v1920
        %v1922 = vand.u32 2147483647, %v1921
        %v1924 = vcvt.s32.f32 %v1917
        %v1925 = vmul.f32 %v1924, %v1922
        %v1926 = vxor.u32 %v1925, 2147483648
        %v1927 = vsel %vm1806, %v1926, %v1925
        %v1928 = vsub.s32 4, %v1904
        %v1929 = vsel %vm1806, %v1928, %v1904
        %v1930 = vsel %vm1805, %v402, %v1927
        %v1931 = vsel %vm1805, 0, %v1929
        %v1932 = vmul.f32 %v1930, %v1930
        %v1933 = vmul.f32 %v1932, -0.001358992
        %v1934 = vadd.f32 %v1933, 0.041655596
        %v1935 = vmul.f32 %v1932, %v1934
        %v1936 = vadd.f32 %v1935, -0.4999988
        %v1937 = vmul.f32 %v1932, %v1936
        %v1938 = vadd.f32 1.0, %v1937
        %v1939 = vmul.f32 %v1930, %v1930
        %v1940 = vmul.f32 %v1939, -0.00019511016
        %v1941 = vadd.f32 %v1940, 0.008332121
        %v1942 = vmul.f32 %v1939, %v1941
        %v1943 = vadd.f32 %v1942, -0.16666654
        %v1944 = vmul.f32 %v1939, %v1943
        %v1945 = vadd.f32 %v1944, 1.0
        %v1946 = vmul.f32 %v1945, %v1930
        %vm1947 = vweird.f32 %v402
        %v1948 = vadd.s32 %v1931, 3
        %v1949 = vand.u32 %v1948, 3
        %vm1950 = vcmp.lt.s32.totalorder %v1949, 2
        %vm1951 = vcmp.eq.s32.totalorder %v1949, 0
        %v1952 = vxor.u32 %v1946, 2147483648
        %v1953 = vsel %vm1951, %v1938, %v1952
        %vm1954 = vcmp.eq.s32.totalorder %v1949, 2
        %v1955 = vxor.u32 %v1938, 2147483648
        %v1956 = vsel %vm1954, %v1955, %v1946
        %v1957 = vsel %vm1950, %v1953, %v1956
        %v1958 = vsel %vm1947, nan, %v1957
        %v1959 = vand.u32 2147483647, %v403
        %vm1960 = vcmp.le.f32.partialorder %v1959, 0.7853982
        %vm1961 = vcmp.lt.s32.totalorder %v403, 0
        %v1962 = vand.u32 %v403, 2139095040
        %v1963 = vshrl.u32 %v1962, 23
        %v1964 = vsub.s32 %v1963, 127
        %v1965 = vand.u32 2147483647, %v403
        %v1966 = vand.u32 %v1965, 8388607
        %v1967 = vor.u32 %v1966, 8388608
        %v1968 = vsub.s32 0, %v1967
        %v1969 = vadd.s32 %v1964, 1
        %vm1970 = vcmp.gt.s32.totalorder %v1969, 0
        %v1971 = vsel %vm1970, %v1969, 0
        %v1972 = vshrl.u32 %v1971, 5
        %v1973 = vand.u32 %v1971, 31
        %v1974 = vsub.s32 32, %v1973
        %v1975 = vshrl.u32 683565275, %v1974
        %v1976 = vshll.u32 683565275, %v1973
        %v1977 = vshrl.u32 2475754826, %v1974
        %v1978 = vor.u32 %v1976, %v1977
        %v1979 = vshll.u32 2475754826, %v1973
        %v1980 = vshrl.u32 2131351028, %v1974
        %v1981 = vor.u32 %v1979, %v1980
        %v1982 = vshll.u32 2131351028, %v1973
        %v1983 = vshrl.u32 2102212464, %v1974
        %v1984 = vor.u32 %v1982, %v1983
        %v1985 = vshll.u32 2102212464, %v1973
        %v1986 = vshrl.u32 920167782, %v1974
        %v1987 = vor.u32 %v1985, %v1986
        %v1988 = vshll.u32 920167782, %v1973
        %v1989 = vshrl.u32 1326507024, %v1974
        %v1990 = vor.u32 %v1988, %v1989
        %vm1991 = vcmp.lt.s32.totalorder %v1972, 1
        %vm1992 = vcmp.lt.s32.totalorder %v1972, 2
        %vm1993 = vcmp.lt.s32.totalorder %v1972, 3
        %vm1994 = vcmp.lt.s32.totalorder %v1972, 4
        %v1995 = vsel %vm1991, %v1975, %v1978
        %v1996 = vsel %vm1994, %v1984, 2102212464
        %v1997 = vsel %vm1993, %v1981, %v1996
        %v1998 = vsel %vm1992, %v1995, %v1997
        %v1999 = vsel %vm1991, %v1978, %v1981
        %v2000 = vsel %vm1994, %v1987, 920167782
        %v2001 = vsel %vm1993, %v1984, %v2000
        %v2002 = vsel %vm1992, %v1999, %v2001
        %v2003 = vsel %vm1991, %v1981, %v1984
        %v2004 = vsel %vm1994, %v1990, 1326507024
        %v2005 = vsel %vm1993, %v1987, %v2004
        %v2006 = vsel %vm1992, %v2003, %v2005
        %v2007 = vshll.u32 %v1967, 8
        %v2008 = vand.u32 %v2007, 65535
        %v2009 = vshrl.u32 %v2007, 16
        %v2010 = vand.u32 %v2006, 65535
        %v2011 = vshrl.u32 %v2006, 16
        %v2012 = vmul.u32 %v2008, %v2010
        %v2013 = vmul.u32 %v2008, %v2011
        %v2014 = vmul.u32 %v2009, %v2010
        %v2015 = vmul.u32 %v2009, %v2011
        %v2016 = vshll.u32 %v2013, 16
        %v2017 = vshrl.u32 %v2013, 16
        %v2018 = vshll.u32 %v2014, 16
        %v2019 = vshrl.u32 %v2014, 16
        %vm2020 = vc.u32 %v2012, %v2016
        %v2021 = vsel %vm2020, 1, 0
        %v2022 = vadd.s32 %v2012, %v2016
        %v2023 = vadd.s32 %v2015, %v2021
        %vm2024 = vc.u32 %v2022, %v2018
        %v2025 = vsel %vm2024, 1, 0
        %v2026 = vadd.s32 %v2022, %v2018
        %v2027 = vadd.s32 %v2023, %v2025
        %v2028 = vadd.s32 %v2027, %v2017
        %v2029 = vadd.s32 %v2028, %v2019
        %v2030 = vand.u32 %v2007, 65535
        %v2031 = vshrl.u32 %v2007, 16
        %v2032 = vand.u32 %v2002, 65535
        %v2033 = vshrl.u32 %v2002, 16
        %v2034 = vmul.u32 %v2030, %v2032
        %v2035 = vmul.u32 %v2030, %v2033
        %v2036 = vmul.u32 %v2031, %v2032
        %v2037 = vmul.u32 %v2031, %v2033
        %v2038 = vshll.u32 %v2035, 16
        %v2039 = vshrl.u32 %v2035, 16
        %v2040 = vshll.u32 %v2036, 16
        %v2041 = vshrl.u32 %v2036, 16
        %vm2042 = vc.u32 %v2034, %v2038
        %v2043 = vsel %vm2042, 1, 0
        %v2044 = vadd.s32 %v2034, %v2038
        %v2045 = vadd.s32 %v2037, %v2043
        %vm2046 = vc.u32 %v2044, %v2040
        %v2047 = vsel %vm2046, 1, 0
        %v2048 = vadd.s32 %v2044, %v2040
        %v2049 = vadd.s32 %v2045, %v2047
        %v2050 = vadd.s32 %v2049, %v2039
        %v2051 = vadd.s32 %v2050, %v2041
        %v2052 = vmul.u32 %v2007, %v1998
        %v2053 = vadd.s32 %v2029, %v2048
        %vm2054 = vc.u32 %v2029, %v2048
        %v2055 = vadd.s32 %v2051, 1
        %v2056 = vsel %vm2054, %v2055, %v2051
        %v2057 = vadd.s32 %v2052, %v2056
        %v2058 = vadd.s32 %v2057, 536870912
        %v2059 = vshrl.u32 %v2058, 30
        %v2060 = vshll.u32 %v2059, 30
        %v2061 = vsub.s32 %v2057, %v2060
        %vm2062 = vcmp.lt.s32.totalorder %v2061, 0
        %v2063 = vsub.s32 0, %v2061
        %v2064 = vsel %vm2062, %v2063, %v2061
        %v2065 = vclz %v2064
        %v2066 = vsub.s32 %v2065, 2
        %vm2067 = vcmp.gt.s32.totalorder 0, %v2066
        %v2068 = vsel %vm2067, 0, %v2066
        %v2069 = vsub.s32 32, %v2068
        %v2070 = vshll.u32 %v2061, %v2068
        %v2071 = vshrl.u32 %v2053, %v2069
        %v2072 = vor.u32 %v2070, %v2071
        %v2073 = vsub.s32 4294967266, %v2068
        %v2074 = vadd.s32 %v2073, 127
        %v2075 = vshll.u32 %v2074, 23
        %v2076 = vor.u32 4788187, %v2075
        %v2077 = vand.u32 2147483647, %v2076
        %v2079 = vcvt.s32.f32 %v2072
        %v2080 = vmul.f32 %v2079, %v2077
        %v2081 = vxor.u32 %v2080, 2147483648
        %v2082 = vsel %vm1961, %v2081, %v2080
        %v2083 = vsub.s32 4, %v2059
        %v2084 = vsel %vm1961, %v2083, %v2059
        %v2085 = vsel %vm1960, %v403, %v2082
        %v2086 = vsel %vm1960, 0, %v2084
        %v2087 = vmul.f32 %v2085, %v2085
        %v2088 = vmul.f32 %v2087, -0.001358992
        %v2089 = vadd.f32 %v2088, 0.041655596
        %v2090 = vmul.f32 %v2087, %v2089
        %v2091 = vadd.f32 %v2090, -0.4999988
        %v2092 = vmul.f32 %v2087, %v2091
        %v2093 = vadd.f32 1.0, %v2092
        %v2094 = vmul.f32 %v2085, %v2085
        %v2095 = vmul.f32 %v2094, -0.00019511016
        %v2096 = vadd.f32 %v2095, 0.008332121
        %v2097 = vmul.f32 %v2094, %v2096
        %v2098 = vadd.f32 %v2097, -0.16666654
        %v2099 = vmul.f32 %v2094, %v2098
        %v2100 = vadd.f32 %v2099, 1.0
        %v2101 = vmul.f32 %v2100, %v2085
        %vm2102 = vweird.f32 %v403
        %v2103 = vadd.s32 %v2086, 3
        %v2104 = vand.u32 %v2103, 3
        %vm2105 = vcmp.lt.s32.totalorder %v2104, 2
        %vm2106 = vcmp.eq.s32.totalorder %v2104, 0
        %v2107 = vxor.u32 %v2101, 2147483648
        %v2108 = vsel %vm2106, %v2093, %v2107
        %vm2109 = vcmp.eq.s32.totalorder %v2104, 2
        %v2110 = vxor.u32 %v2093, 2147483648
        %v2111 = vsel %vm2109, %v2110, %v2101
        %v2112 = vsel %vm2105, %v2108, %v2111
        %v2113 = vsel %vm2102, nan, %v2112
        %v2114 = vand.u32 2147483647, %v404
        %vm2115 = vcmp.le.f32.partialorder %v2114, 0.7853982
        %vm2116 = vcmp.lt.s32.totalorder %v404, 0
        %v2117 = vand.u32 %v404, 2139095040
        %v2118 = vshrl.u32 %v2117, 23
        %v2119 = vsub.s32 %v2118, 127
        %v2120 = vand.u32 2147483647, %v404
        %v2121 = vand.u32 %v2120, 8388607
        %v2122 = vor.u32 %v2121, 8388608
        %v2123 = vsub.s32 0, %v2122
        %v2124 = vadd.s32 %v2119, 1
        %vm2125 = vcmp.gt.s32.totalorder %v2124, 0
        %v2126 = vsel %vm2125, %v2124, 0
        %v2127 = vshrl.u32 %v2126, 5
        %v2128 = vand.u32 %v2126, 31
        %v2129 = vsub.s32 32, %v2128
        %v2130 = vshrl.u32 683565275, %v2129
        %v2131 = vshll.u32 683565275, %v2128
        %v2132 = vshrl.u32 2475754826, %v2129
        %v2133 = vor.u32 %v2131, %v2132
        %v2134 = vshll.u32 2475754826, %v2128
        %v2135 = vshrl.u32 2131351028, %v2129
        %v2136 = vor.u32 %v2134, %v2135
        %v2137 = vshll.u32 2131351028, %v2128
        %v2138 = vshrl.u32 2102212464, %v2129
        %v2139 = vor.u32 %v2137, %v2138
        %v2140 = vshll.u32 2102212464, %v2128
        %v2141 = vshrl.u32 920167782, %v2129
        %v2142 = vor.u32 %v2140, %v2141
        %v2143 = vshll.u32 920167782, %v2128
        %v2144 = vshrl.u32 1326507024, %v2129
        %v2145 = vor.u32 %v2143, %v2144
        %vm2146 = vcmp.lt.s32.totalorder %v2127, 1
        %vm2147 = vcmp.lt.s32.totalorder %v2127, 2
        %vm2148 = vcmp.lt.s32.totalorder %v2127, 3
        %vm2149 = vcmp.lt.s32.totalorder %v2127, 4
        %v2150 = vsel %vm2146, %v2130, %v2133
        %v2151 = vsel %vm2149, %v2139, 2102212464
        %v2152 = vsel %vm2148, %v2136, %v2151
        %v2153 = vsel %vm2147, %v2150, %v2152
        %v2154 = vsel %vm2146, %v2133, %v2136
        %v2155 = vsel %vm2149, %v2142, 920167782
        %v2156 = vsel %vm2148, %v2139, %v2155
        %v2157 = vsel %vm2147, %v2154, %v2156
        %v2158 = vsel %vm2146, %v2136, %v2139
        %v2159 = vsel %vm2149, %v2145, 1326507024
        %v2160 = vsel %vm2148, %v2142, %v2159
        %v2161 = vsel %vm2147, %v2158, %v2160
        %v2162 = vshll.u32 %v2122, 8
        %v2163 = vand.u32 %v2162, 65535
        %v2164 = vshrl.u32 %v2162, 16
        %v2165 = vand.u32 %v2161, 65535
        %v2166 = vshrl.u32 %v2161, 16
        %v2167 = vmul.u32 %v2163, %v2165
        %v2168 = vmul.u32 %v2163, %v2166
        %v2169 = vmul.u32 %v2164, %v2165
        %v2170 = vmul.u32 %v2164, %v2166
        %v2171 = vshll.u32 %v2168, 16
        %v2172 = vshrl.u32 %v2168, 16
        %v2173 = vshll.u32 %v2169, 16
        %v2174 = vshrl.u32 %v2169, 16
        %vm2175 = vc.u32 %v2167, %v2171
        %v2176 = vsel %vm2175, 1, 0
        %v2177 = vadd.s32 %v2167, %v2171
        %v2178 = vadd.s32 %v2170, %v2176
        %vm2179 = vc.u32 %v2177, %v2173
        %v2180 = vsel %vm2179, 1, 0
        %v2181 = vadd.s32 %v2177, %v2173
        %v2182 = vadd.s32 %v2178, %v2180
        %v2183 = vadd.s32 %v2182, %v2172
        %v2184 = vadd.s32 %v2183, %v2174
        %v2185 = vand.u32 %v2162, 65535
        %v2186 = vshrl.u32 %v2162, 16
        %v2187 = vand.u32 %v2157, 65535
        %v2188 = vshrl.u32 %v2157, 16
        %v2189 = vmul.u32 %v2185, %v2187
        %v2190 = vmul.u32 %v2185, %v2188
        %v2191 = vmul.u32 %v2186, %v2187
        %v2192 = vmul.u32 %v2186, %v2188
        %v2193 = vshll.u32 %v2190, 16
        %v2194 = vshrl.u32 %v2190, 16
        %v2195 = vshll.u32 %v2191, 16
        %v2196 = vshrl.u32 %v2191, 16
        %vm2197 = vc.u32 %v2189, %v2193
        %v2198 = vsel %vm2197, 1, 0
        %v2199 = vadd.s32 %v2189, %v2193
        %v2200 = vadd.s32 %v2192, %v2198
        %vm2201 = vc.u32 %v2199, %v2195
        %v2202 = vsel %vm2201, 1, 0
        %v2203 = vadd.s32 %v2199, %v2195
        %v2204 = vadd.s32 %v2200, %v2202
        %v2205 = vadd.s32 %v2204, %v2194
        %v2206 = vadd.s32 %v2205, %v2196
        %v2207 = vmul.u32 %v2162, %v2153
        %v2208 = vadd.s32 %v2184, %v2203
        %vm2209 = vc.u32 %v2184, %v2203
        %v2210 = vadd.s32 %v2206, 1
        %v2211 = vsel %vm2209, %v2210, %v2206
        %v2212 = vadd.s32 %v2207, %v2211
        %v2213 = vadd.s32 %v2212, 536870912
        %v2214 = vshrl.u32 %v2213, 30
        %v2215 = vshll.u32 %v2214, 30
        %v2216 = vsub.s32 %v2212, %v2215
        %vm2217 = vcmp.lt.s32.totalorder %v2216, 0
        %v2218 = vsub.s32 0, %v2216
        %v2219 = vsel %vm2217, %v2218, %v2216
        %v2220 = vclz %v2219
        %v2221 = vsub.s32 %v2220, 2
        %vm2222 = vcmp.gt.s32.totalorder 0, %v2221
        %v2223 = vsel %vm2222, 0, %v2221
        %v2224 = vsub.s32 32, %v2223
        %v2225 = vshll.u32 %v2216, %v2223
        %v2226 = vshrl.u32 %v2208, %v2224
        %v2227 = vor.u32 %v2225, %v2226
        %v2228 = vsub.s32 4294967266, %v2223
        %v2229 = vadd.s32 %v2228, 127
        %v2230 = vshll.u32 %v2229, 23
        %v2231 = vor.u32 4788187, %v2230
        %v2232 = vand.u32 2147483647, %v2231
        %v2234 = vcvt.s32.f32 %v2227
        %v2235 = vmul.f32 %v2234, %v2232
        %v2236 = vxor.u32 %v2235, 2147483648
        %v2237 = vsel %vm2116, %v2236, %v2235
        %v2238 = vsub.s32 4, %v2214
        %v2239 = vsel %vm2116, %v2238, %v2214
        %v2240 = vsel %vm2115, %v404, %v2237
        %v2241 = vsel %vm2115, 0, %v2239
        %v2242 = vmul.f32 %v2240, %v2240
        %v2243 = vmul.f32 %v2242, -0.001358992
        %v2244 = vadd.f32 %v2243, 0.041655596
        %v2245 = vmul.f32 %v2242, %v2244
        %v2246 = vadd.f32 %v2245, -0.4999988
        %v2247 = vmul.f32 %v2242, %v2246
        %v2248 = vadd.f32 1.0, %v2247
        %v2249 = vmul.f32 %v2240, %v2240
        %v2250 = vmul.f32 %v2249, -0.00019511016
        %v2251 = vadd.f32 %v2250, 0.008332121
        %v2252 = vmul.f32 %v2249, %v2251
        %v2253 = vadd.f32 %v2252, -0.16666654
        %v2254 = vmul.f32 %v2249, %v2253
        %v2255 = vadd.f32 %v2254, 1.0
        %v2256 = vmul.f32 %v2255, %v2240
        %vm2257 = vweird.f32 %v404
        %v2258 = vadd.s32 %v2241, 3
        %v2259 = vand.u32 %v2258, 3
        %vm2260 = vcmp.lt.s32.totalorder %v2259, 2
        %vm2261 = vcmp.eq.s32.totalorder %v2259, 0
        %v2262 = vxor.u32 %v2256, 2147483648
        %v2263 = vsel %vm2261, %v2248, %v2262
        %vm2264 = vcmp.eq.s32.totalorder %v2259, 2
        %v2265 = vxor.u32 %v2248, 2147483648
        %v2266 = vsel %vm2264, %v2265, %v2256
        %v2267 = vsel %vm2260, %v2263, %v2266
        %v2268 = vsel %vm2257, nan, %v2267
        %v2269 = vand.u32 2147483647, %v405
        %vm2270 = vcmp.le.f32.partialorder %v2269, 0.7853982
        %vm2271 = vcmp.lt.s32.totalorder %v405, 0
        %v2272 = vand.u32 %v405, 2139095040
        %v2273 = vshrl.u32 %v2272, 23
        %v2274 = vsub.s32 %v2273, 127
        %v2275 = vand.u32 2147483647, %v405
        %v2276 = vand.u32 %v2275, 8388607
        %v2277 = vor.u32 %v2276, 8388608
        %v2278 = vsub.s32 0, %v2277
        %v2279 = vadd.s32 %v2274, 1
        %vm2280 = vcmp.gt.s32.totalorder %v2279, 0
        %v2281 = vsel %vm2280, %v2279, 0
        %v2282 = vshrl.u32 %v2281, 5
        %v2283 = vand.u32 %v2281, 31
        %v2284 = vsub.s32 32, %v2283
        %v2285 = vshrl.u32 683565275, %v2284
        %v2286 = vshll.u32 683565275, %v2283
        %v2287 = vshrl.u32 2475754826, %v2284
        %v2288 = vor.u32 %v2286, %v2287
        %v2289 = vshll.u32 2475754826, %v2283
        %v2290 = vshrl.u32 2131351028, %v2284
        %v2291 = vor.u32 %v2289, %v2290
        %v2292 = vshll.u32 2131351028, %v2283
        %v2293 = vshrl.u32 2102212464, %v2284
        %v2294 = vor.u32 %v2292, %v2293
        %v2295 = vshll.u32 2102212464, %v2283
        %v2296 = vshrl.u32 920167782, %v2284
        %v2297 = vor.u32 %v2295, %v2296
        %v2298 = vshll.u32 920167782, %v2283
        %v2299 = vshrl.u32 1326507024, %v2284
        %v2300 = vor.u32 %v2298, %v2299
        %vm2301 = vcmp.lt.s32.totalorder %v2282, 1
        %vm2302 = vcmp.lt.s32.totalorder %v2282, 2
        %vm2303 = vcmp.lt.s32.totalorder %v2282, 3
        %vm2304 = vcmp.lt.s32.totalorder %v2282, 4
        %v2305 = vsel %vm2301, %v2285, %v2288
        %v2306 = vsel %vm2304, %v2294, 2102212464
        %v2307 = vsel %vm2303, %v2291, %v2306
        %v2308 = vsel %vm2302, %v2305, %v2307
        %v2309 = vsel %vm2301, %v2288, %v2291
        %v2310 = vsel %vm2304, %v2297, 920167782
        %v2311 = vsel %vm2303, %v2294, %v2310
        %v2312 = vsel %vm2302, %v2309, %v2311
        %v2313 = vsel %vm2301, %v2291, %v2294
        %v2314 = vsel %vm2304, %v2300, 1326507024
        %v2315 = vsel %vm2303, %v2297, %v2314
        %v2316 = vsel %vm2302, %v2313, %v2315
        %v2317 = vshll.u32 %v2277, 8
        %v2318 = vand.u32 %v2317, 65535
        %v2319 = vshrl.u32 %v2317, 16
        %v2320 = vand.u32 %v2316, 65535
        %v2321 = vshrl.u32 %v2316, 16
        %v2322 = vmul.u32 %v2318, %v2320
        %v2323 = vmul.u32 %v2318, %v2321
        %v2324 = vmul.u32 %v2319, %v2320
        %v2325 = vmul.u32 %v2319, %v2321
        %v2326 = vshll.u32 %v2323, 16
        %v2327 = vshrl.u32 %v2323, 16
        %v2328 = vshll.u32 %v2324, 16
        %v2329 = vshrl.u32 %v2324, 16
        %vm2330 = vc.u32 %v2322, %v2326
        %v2331 = vsel %vm2330, 1, 0
        %v2332 = vadd.s32 %v2322, %v2326
        %v2333 = vadd.s32 %v2325, %v2331
        %vm2334 = vc.u32 %v2332, %v2328
        %v2335 = vsel %vm2334, 1, 0
        %v2336 = vadd.s32 %v2332, %v2328
        %v2337 = vadd.s32 %v2333, %v2335
        %v2338 = vadd.s32 %v2337, %v2327
        %v2339 = vadd.s32 %v2338, %v2329
        %v2340 = vand.u32 %v2317, 65535
        %v2341 = vshrl.u32 %v2317, 16
        %v2342 = vand.u32 %v2312, 65535
        %v2343 = vshrl.u32 %v2312, 16
        %v2344 = vmul.u32 %v2340, %v2342
        %v2345 = vmul.u32 %v2340, %v2343
        %v2346 = vmul.u32 %v2341, %v2342
        %v2347 = vmul.u32 %v2341, %v2343
        %v2348 = vshll.u32 %v2345, 16
        %v2349 = vshrl.u32 %v2345, 16
        %v2350 = vshll.u32 %v2346, 16
        %v2351 = vshrl.u32 %v2346, 16
        %vm2352 = vc.u32 %v2344, %v2348
        %v2353 = vsel %vm2352, 1, 0
        %v2354 = vadd.s32 %v2344, %v2348
        %v2355 = vadd.s32 %v2347, %v2353
        %vm2356 = vc.u32 %v2354, %v2350
        %v2357 = vsel %vm2356, 1, 0
        %v2358 = vadd.s32 %v2354, %v2350
        %v2359 = vadd.s32 %v2355, %v2357
        %v2360 = vadd.s32 %v2359, %v2349
        %v2361 = vadd.s32 %v2360, %v2351
        %v2362 = vmul.u32 %v2317, %v2308
        %v2363 = vadd.s32 %v2339, %v2358
        %vm2364 = vc.u32 %v2339, %v2358
        %v2365 = vadd.s32 %v2361, 1
        %v2366 = vsel %vm2364, %v2365, %v2361
        %v2367 = vadd.s32 %v2362, %v2366
        %v2368 = vadd.s32 %v2367, 536870912
        %v2369 = vshrl.u32 %v2368, 30
        %v2370 = vshll.u32 %v2369, 30
        %v2371 = vsub.s32 %v2367, %v2370
        %vm2372 = vcmp.lt.s32.totalorder %v2371, 0
        %v2373 = vsub.s32 0, %v2371
        %v2374 = vsel %vm2372, %v2373, %v2371
        %v2375 = vclz %v2374
        %v2376 = vsub.s32 %v2375, 2
        %vm2377 = vcmp.gt.s32.totalorder 0, %v2376
        %v2378 = vsel %vm2377, 0, %v2376
        %v2379 = vsub.s32 32, %v2378
        %v2380 = vshll.u32 %v2371, %v2378
        %v2381 = vshrl.u32 %v2363, %v2379
        %v2382 = vor.u32 %v2380, %v2381
        %v2383 = vsub.s32 4294967266, %v2378
        %v2384 = vadd.s32 %v2383, 127
        %v2385 = vshll.u32 %v2384, 23
        %v2386 = vor.u32 4788187, %v2385
        %v2387 = vand.u32 2147483647, %v2386
        %v2389 = vcvt.s32.f32 %v2382
        %v2390 = vmul.f32 %v2389, %v2387
        %v2391 = vxor.u32 %v2390, 2147483648
        %v2392 = vsel %vm2271, %v2391, %v2390
        %v2393 = vsub.s32 4, %v2369
        %v2394 = vsel %vm2271, %v2393, %v2369
        %v2395 = vsel %vm2270, %v405, %v2392
        %v2396 = vsel %vm2270, 0, %v2394
        %v2397 = vmul.f32 %v2395, %v2395
        %v2398 = vmul.f32 %v2397, -0.001358992
        %v2399 = vadd.f32 %v2398, 0.041655596
        %v2400 = vmul.f32 %v2397, %v2399
        %v2401 = vadd.f32 %v2400, -0.4999988
        %v2402 = vmul.f32 %v2397, %v2401
        %v2403 = vadd.f32 1.0, %v2402
        %v2404 = vmul.f32 %v2395, %v2395
        %v2405 = vmul.f32 %v2404, -0.00019511016
        %v2406 = vadd.f32 %v2405, 0.008332121
        %v2407 = vmul.f32 %v2404, %v2406
        %v2408 = vadd.f32 %v2407, -0.16666654
        %v2409 = vmul.f32 %v2404, %v2408
        %v2410 = vadd.f32 %v2409, 1.0
        %v2411 = vmul.f32 %v2410, %v2395
        %vm2412 = vweird.f32 %v405
        %v2413 = vadd.s32 %v2396, 3
        %v2414 = vand.u32 %v2413, 3
        %vm2415 = vcmp.lt.s32.totalorder %v2414, 2
        %vm2416 = vcmp.eq.s32.totalorder %v2414, 0
        %v2417 = vxor.u32 %v2411, 2147483648
        %v2418 = vsel %vm2416, %v2403, %v2417
        %vm2419 = vcmp.eq.s32.totalorder %v2414, 2
        %v2420 = vxor.u32 %v2403, 2147483648
        %v2421 = vsel %vm2419, %v2420, %v2411
        %v2422 = vsel %vm2415, %v2418, %v2421
        %v2423 = vsel %vm2412, nan, %v2422
        %v2424 = vand.u32 2147483647, %v406
        %vm2425 = vcmp.le.f32.partialorder %v2424, 0.7853982
        %vm2426 = vcmp.lt.s32.totalorder %v406, 0
        %v2427 = vand.u32 %v406, 2139095040
        %v2428 = vshrl.u32 %v2427, 23
        %v2429 = vsub.s32 %v2428, 127
        %v2430 = vand.u32 2147483647, %v406
        %v2431 = vand.u32 %v2430, 8388607
        %v2432 = vor.u32 %v2431, 8388608
        %v2433 = vsub.s32 0, %v2432
        %v2434 = vadd.s32 %v2429, 1
        %vm2435 = vcmp.gt.s32.totalorder %v2434, 0
        %v2436 = vsel %vm2435, %v2434, 0
        %v2437 = vshrl.u32 %v2436, 5
        %v2438 = vand.u32 %v2436, 31
        %v2439 = vsub.s32 32, %v2438
        %v2440 = vshrl.u32 683565275, %v2439
        %v2441 = vshll.u32 683565275, %v2438
        %v2442 = vshrl.u32 2475754826, %v2439
        %v2443 = vor.u32 %v2441, %v2442
        %v2444 = vshll.u32 2475754826, %v2438
        %v2445 = vshrl.u32 2131351028, %v2439
        %v2446 = vor.u32 %v2444, %v2445
        %v2447 = vshll.u32 2131351028, %v2438
        %v2448 = vshrl.u32 2102212464, %v2439
        %v2449 = vor.u32 %v2447, %v2448
        %v2450 = vshll.u32 2102212464, %v2438
        %v2451 = vshrl.u32 920167782, %v2439
        %v2452 = vor.u32 %v2450, %v2451
        %v2453 = vshll.u32 920167782, %v2438
        %v2454 = vshrl.u32 1326507024, %v2439
        %v2455 = vor.u32 %v2453, %v2454
        %vm2456 = vcmp.lt.s32.totalorder %v2437, 1
        %vm2457 = vcmp.lt.s32.totalorder %v2437, 2
        %vm2458 = vcmp.lt.s32.totalorder %v2437, 3
        %vm2459 = vcmp.lt.s32.totalorder %v2437, 4
        %v2460 = vsel %vm2456, %v2440, %v2443
        %v2461 = vsel %vm2459, %v2449, 2102212464
        %v2462 = vsel %vm2458, %v2446, %v2461
        %v2463 = vsel %vm2457, %v2460, %v2462
        %v2464 = vsel %vm2456, %v2443, %v2446
        %v2465 = vsel %vm2459, %v2452, 920167782
        %v2466 = vsel %vm2458, %v2449, %v2465
        %v2467 = vsel %vm2457, %v2464, %v2466
        %v2468 = vsel %vm2456, %v2446, %v2449
        %v2469 = vsel %vm2459, %v2455, 1326507024
        %v2470 = vsel %vm2458, %v2452, %v2469
        %v2471 = vsel %vm2457, %v2468, %v2470
        %v2472 = vshll.u32 %v2432, 8
        %v2473 = vand.u32 %v2472, 65535
        %v2474 = vshrl.u32 %v2472, 16
        %v2475 = vand.u32 %v2471, 65535
        %v2476 = vshrl.u32 %v2471, 16
        %v2477 = vmul.u32 %v2473, %v2475
        %v2478 = vmul.u32 %v2473, %v2476
        %v2479 = vmul.u32 %v2474, %v2475
        %v2480 = vmul.u32 %v2474, %v2476
        %v2481 = vshll.u32 %v2478, 16
        %v2482 = vshrl.u32 %v2478, 16
        %v2483 = vshll.u32 %v2479, 16
        %v2484 = vshrl.u32 %v2479, 16
        %vm2485 = vc.u32 %v2477, %v2481
        %v2486 = vsel %vm2485, 1, 0
        %v2487 = vadd.s32 %v2477, %v2481
        %v2488 = vadd.s32 %v2480, %v2486
        %vm2489 = vc.u32 %v2487, %v2483
        %v2490 = vsel %vm2489, 1, 0
        %v2491 = vadd.s32 %v2487, %v2483
        %v2492 = vadd.s32 %v2488, %v2490
        %v2493 = vadd.s32 %v2492, %v2482
        %v2494 = vadd.s32 %v2493, %v2484
        %v2495 = vand.u32 %v2472, 65535
        %v2496 = vshrl.u32 %v2472, 16
        %v2497 = vand.u32 %v2467, 65535
        %v2498 = vshrl.u32 %v2467, 16
        %v2499 = vmul.u32 %v2495, %v2497
        %v2500 = vmul.u32 %v2495, %v2498
        %v2501 = vmul.u32 %v2496, %v2497
        %v2502 = vmul.u32 %v2496, %v2498
        %v2503 = vshll.u32 %v2500, 16
        %v2504 = vshrl.u32 %v2500, 16
        %v2505 = vshll.u32 %v2501, 16
        %v2506 = vshrl.u32 %v2501, 16
        %vm2507 = vc.u32 %v2499, %v2503
        %v2508 = vsel %vm2507, 1, 0
        %v2509 = vadd.s32 %v2499, %v2503
        %v2510 = vadd.s32 %v2502, %v2508
        %vm2511 = vc.u32 %v2509, %v2505
        %v2512 = vsel %vm2511, 1, 0
        %v2513 = vadd.s32 %v2509, %v2505
        %v2514 = vadd.s32 %v2510, %v2512
        %v2515 = vadd.s32 %v2514, %v2504
        %v2516 = vadd.s32 %v2515, %v2506
        %v2517 = vmul.u32 %v2472, %v2463
        %v2518 = vadd.s32 %v2494, %v2513
        %vm2519 = vc.u32 %v2494, %v2513
        %v2520 = vadd.s32 %v2516, 1
        %v2521 = vsel %vm2519, %v2520, %v2516
        %v2522 = vadd.s32 %v2517, %v2521
        %v2523 = vadd.s32 %v2522, 536870912
        %v2524 = vshrl.u32 %v2523, 30
        %v2525 = vshll.u32 %v2524, 30
        %v2526 = vsub.s32 %v2522, %v2525
        %vm2527 = vcmp.lt.s32.totalorder %v2526, 0
        %v2528 = vsub.s32 0, %v2526
        %v2529 = vsel %vm2527, %v2528, %v2526
        %v2530 = vclz %v2529
        %v2531 = vsub.s32 %v2530, 2
        %vm2532 = vcmp.gt.s32.totalorder 0, %v2531
        %v2533 = vsel %vm2532, 0, %v2531
        %v2534 = vsub.s32 32, %v2533
        %v2535 = vshll.u32 %v2526, %v2533
        %v2536 = vshrl.u32 %v2518, %v2534
        %v2537 = vor.u32 %v2535, %v2536
        %v2538 = vsub.s32 4294967266, %v2533
        %v2539 = vadd.s32 %v2538, 127
        %v2540 = vshll.u32 %v2539, 23
        %v2541 = vor.u32 4788187, %v2540
        %v2542 = vand.u32 2147483647, %v2541
        %v2544 = vcvt.s32.f32 %v2537
        %v2545 = vmul.f32 %v2544, %v2542
        %v2546 = vxor.u32 %v2545, 2147483648
        %v2547 = vsel %vm2426, %v2546, %v2545
        %v2548 = vsub.s32 4, %v2524
        %v2549 = vsel %vm2426, %v2548, %v2524
        %v2550 = vsel %vm2425, %v406, %v2547
        %v2551 = vsel %vm2425, 0, %v2549
        %v2552 = vmul.f32 %v2550, %v2550
        %v2553 = vmul.f32 %v2552, -0.001358992
        %v2554 = vadd.f32 %v2553, 0.041655596
        %v2555 = vmul.f32 %v2552, %v2554
        %v2556 = vadd.f32 %v2555, -0.4999988
        %v2557 = vmul.f32 %v2552, %v2556
        %v2558 = vadd.f32 1.0, %v2557
        %v2559 = vmul.f32 %v2550, %v2550
        %v2560 = vmul.f32 %v2559, -0.00019511016
        %v2561 = vadd.f32 %v2560, 0.008332121
        %v2562 = vmul.f32 %v2559, %v2561
        %v2563 = vadd.f32 %v2562, -0.16666654
        %v2564 = vmul.f32 %v2559, %v2563
        %v2565 = vadd.f32 %v2564, 1.0
        %v2566 = vmul.f32 %v2565, %v2550
        %vm2567 = vweird.f32 %v406
        %v2568 = vadd.s32 %v2551, 3
        %v2569 = vand.u32 %v2568, 3
        %vm2570 = vcmp.lt.s32.totalorder %v2569, 2
        %vm2571 = vcmp.eq.s32.totalorder %v2569, 0
        %v2572 = vxor.u32 %v2566, 2147483648
        %v2573 = vsel %vm2571, %v2558, %v2572
        %vm2574 = vcmp.eq.s32.totalorder %v2569, 2
        %v2575 = vxor.u32 %v2558, 2147483648
        %v2576 = vsel %vm2574, %v2575, %v2566
        %v2577 = vsel %vm2570, %v2573, %v2576
        %v2578 = vsel %vm2567, nan, %v2577
        %v2579 = vand.u32 2147483647, %v407
        %vm2580 = vcmp.le.f32.partialorder %v2579, 0.7853982
        %vm2581 = vcmp.lt.s32.totalorder %v407, 0
        %v2582 = vand.u32 %v407, 2139095040
        %v2583 = vshrl.u32 %v2582, 23
        %v2584 = vsub.s32 %v2583, 127
        %v2585 = vand.u32 2147483647, %v407
        %v2586 = vand.u32 %v2585, 8388607
        %v2587 = vor.u32 %v2586, 8388608
        %v2588 = vsub.s32 0, %v2587
        %v2589 = vadd.s32 %v2584, 1
        %vm2590 = vcmp.gt.s32.totalorder %v2589, 0
        %v2591 = vsel %vm2590, %v2589, 0
        %v2592 = vshrl.u32 %v2591, 5
        %v2593 = vand.u32 %v2591, 31
        %v2594 = vsub.s32 32, %v2593
        %v2595 = vshrl.u32 683565275, %v2594
        %v2596 = vshll.u32 683565275, %v2593
        %v2597 = vshrl.u32 2475754826, %v2594
        %v2598 = vor.u32 %v2596, %v2597
        %v2599 = vshll.u32 2475754826, %v2593
        %v2600 = vshrl.u32 2131351028, %v2594
        %v2601 = vor.u32 %v2599, %v2600
        %v2602 = vshll.u32 2131351028, %v2593
        %v2603 = vshrl.u32 2102212464, %v2594
        %v2604 = vor.u32 %v2602, %v2603
        %v2605 = vshll.u32 2102212464, %v2593
        %v2606 = vshrl.u32 920167782, %v2594
        %v2607 = vor.u32 %v2605, %v2606
        %v2608 = vshll.u32 920167782, %v2593
        %v2609 = vshrl.u32 1326507024, %v2594
        %v2610 = vor.u32 %v2608, %v2609
        %vm2611 = vcmp.lt.s32.totalorder %v2592, 1
        %vm2612 = vcmp.lt.s32.totalorder %v2592, 2
        %vm2613 = vcmp.lt.s32.totalorder %v2592, 3
        %vm2614 = vcmp.lt.s32.totalorder %v2592, 4
        %v2615 = vsel %vm2611, %v2595, %v2598
        %v2616 = vsel %vm2614, %v2604, 2102212464
        %v2617 = vsel %vm2613, %v2601, %v2616
        %v2618 = vsel %vm2612, %v2615, %v2617
        %v2619 = vsel %vm2611, %v2598, %v2601
        %v2620 = vsel %vm2614, %v2607, 920167782
        %v2621 = vsel %vm2613, %v2604, %v2620
        %v2622 = vsel %vm2612, %v2619, %v2621
        %v2623 = vsel %vm2611, %v2601, %v2604
        %v2624 = vsel %vm2614, %v2610, 1326507024
        %v2625 = vsel %vm2613, %v2607, %v2624
        %v2626 = vsel %vm2612, %v2623, %v2625
        %v2627 = vshll.u32 %v2587, 8
        %v2628 = vand.u32 %v2627, 65535
        %v2629 = vshrl.u32 %v2627, 16
        %v2630 = vand.u32 %v2626, 65535
        %v2631 = vshrl.u32 %v2626, 16
        %v2632 = vmul.u32 %v2628, %v2630
        %v2633 = vmul.u32 %v2628, %v2631
        %v2634 = vmul.u32 %v2629, %v2630
        %v2635 = vmul.u32 %v2629, %v2631
        %v2636 = vshll.u32 %v2633, 16
        %v2637 = vshrl.u32 %v2633, 16
        %v2638 = vshll.u32 %v2634, 16
        %v2639 = vshrl.u32 %v2634, 16
        %vm2640 = vc.u32 %v2632, %v2636
        %v2641 = vsel %vm2640, 1, 0
        %v2642 = vadd.s32 %v2632, %v2636
        %v2643 = vadd.s32 %v2635, %v2641
        %vm2644 = vc.u32 %v2642, %v2638
        %v2645 = vsel %vm2644, 1, 0
        %v2646 = vadd.s32 %v2642, %v2638
        %v2647 = vadd.s32 %v2643, %v2645
        %v2648 = vadd.s32 %v2647, %v2637
        %v2649 = vadd.s32 %v2648, %v2639
        %v2650 = vand.u32 %v2627, 65535
        %v2651 = vshrl.u32 %v2627, 16
        %v2652 = vand.u32 %v2622, 65535
        %v2653 = vshrl.u32 %v2622, 16
        %v2654 = vmul.u32 %v2650, %v2652
        %v2655 = vmul.u32 %v2650, %v2653
        %v2656 = vmul.u32 %v2651, %v2652
        %v2657 = vmul.u32 %v2651, %v2653
        %v2658 = vshll.u32 %v2655, 16
        %v2659 = vshrl.u32 %v2655, 16
        %v2660 = vshll.u32 %v2656, 16
        %v2661 = vshrl.u32 %v2656, 16
        %vm2662 = vc.u32 %v2654, %v2658
        %v2663 = vsel %vm2662, 1, 0
        %v2664 = vadd.s32 %v2654, %v2658
        %v2665 = vadd.s32 %v2657, %v2663
        %vm2666 = vc.u32 %v2664, %v2660
        %v2667 = vsel %vm2666, 1, 0
        %v2668 = vadd.s32 %v2664, %v2660
        %v2669 = vadd.s32 %v2665, %v2667
        %v2670 = vadd.s32 %v2669, %v2659
        %v2671 = vadd.s32 %v2670, %v2661
        %v2672 = vmul.u32 %v2627, %v2618
        %v2673 = vadd.s32 %v2649, %v2668
        %vm2674 = vc.u32 %v2649, %v2668
        %v2675 = vadd.s32 %v2671, 1
        %v2676 = vsel %vm2674, %v2675, %v2671
        %v2677 = vadd.s32 %v2672, %v2676
        %v2678 = vadd.s32 %v2677, 536870912
        %v2679 = vshrl.u32 %v2678, 30
        %v2680 = vshll.u32 %v2679, 30
        %v2681 = vsub.s32 %v2677, %v2680
        %vm2682 = vcmp.lt.s32.totalorder %v2681, 0
        %v2683 = vsub.s32 0, %v2681
        %v2684 = vsel %vm2682, %v2683, %v2681
        %v2685 = vclz %v2684
        %v2686 = vsub.s32 %v2685, 2
        %vm2687 = vcmp.gt.s32.totalorder 0, %v2686
        %v2688 = vsel %vm2687, 0, %v2686
        %v2689 = vsub.s32 32, %v2688
        %v2690 = vshll.u32 %v2681, %v2688
        %v2691 = vshrl.u32 %v2673, %v2689
        %v2692 = vor.u32 %v2690, %v2691
        %v2693 = vsub.s32 4294967266, %v2688
        %v2694 = vadd.s32 %v2693, 127
        %v2695 = vshll.u32 %v2694, 23
        %v2696 = vor.u32 4788187, %v2695
        %v2697 = vand.u32 2147483647, %v2696
        %v2699 = vcvt.s32.f32 %v2692
        %v2700 = vmul.f32 %v2699, %v2697
        %v2701 = vxor.u32 %v2700, 2147483648
        %v2702 = vsel %vm2581, %v2701, %v2700
        %v2703 = vsub.s32 4, %v2679
        %v2704 = vsel %vm2581, %v2703, %v2679
        %v2705 = vsel %vm2580, %v407, %v2702
        %v2706 = vsel %vm2580, 0, %v2704
        %v2707 = vmul.f32 %v2705, %v2705
        %v2708 = vmul.f32 %v2707, -0.001358992
        %v2709 = vadd.f32 %v2708, 0.041655596
        %v2710 = vmul.f32 %v2707, %v2709
        %v2711 = vadd.f32 %v2710, -0.4999988
        %v2712 = vmul.f32 %v2707, %v2711
        %v2713 = vadd.f32 1.0, %v2712
        %v2714 = vmul.f32 %v2705, %v2705
        %v2715 = vmul.f32 %v2714, -0.00019511016
        %v2716 = vadd.f32 %v2715, 0.008332121
        %v2717 = vmul.f32 %v2714, %v2716
        %v2718 = vadd.f32 %v2717, -0.16666654
        %v2719 = vmul.f32 %v2714, %v2718
        %v2720 = vadd.f32 %v2719, 1.0
        %v2721 = vmul.f32 %v2720, %v2705
        %vm2722 = vweird.f32 %v407
        %v2723 = vadd.s32 %v2706, 3
        %v2724 = vand.u32 %v2723, 3
        %vm2725 = vcmp.lt.s32.totalorder %v2724, 2
        %vm2726 = vcmp.eq.s32.totalorder %v2724, 0
        %v2727 = vxor.u32 %v2721, 2147483648
        %v2728 = vsel %vm2726, %v2713, %v2727
        %vm2729 = vcmp.eq.s32.totalorder %v2724, 2
        %v2730 = vxor.u32 %v2713, 2147483648
        %v2731 = vsel %vm2729, %v2730, %v2721
        %v2732 = vsel %vm2725, %v2728, %v2731
        %v2733 = vsel %vm2722, nan, %v2732
        %v2734 = vand.u32 2147483647, %v408
        %vm2735 = vcmp.le.f32.partialorder %v2734, 0.7853982
        %vm2736 = vcmp.lt.s32.totalorder %v408, 0
        %v2737 = vand.u32 %v408, 2139095040
        %v2738 = vshrl.u32 %v2737, 23
        %v2739 = vsub.s32 %v2738, 127
        %v2740 = vand.u32 2147483647, %v408
        %v2741 = vand.u32 %v2740, 8388607
        %v2742 = vor.u32 %v2741, 8388608
        %v2743 = vsub.s32 0, %v2742
        %v2744 = vadd.s32 %v2739, 1
        %vm2745 = vcmp.gt.s32.totalorder %v2744, 0
        %v2746 = vsel %vm2745, %v2744, 0
        %v2747 = vshrl.u32 %v2746, 5
        %v2748 = vand.u32 %v2746, 31
        %v2749 = vsub.s32 32, %v2748
        %v2750 = vshrl.u32 683565275, %v2749
        %v2751 = vshll.u32 683565275, %v2748
        %v2752 = vshrl.u32 2475754826, %v2749
        %v2753 = vor.u32 %v2751, %v2752
        %v2754 = vshll.u32 2475754826, %v2748
        %v2755 = vshrl.u32 2131351028, %v2749
        %v2756 = vor.u32 %v2754, %v2755
        %v2757 = vshll.u32 2131351028, %v2748
        %v2758 = vshrl.u32 2102212464, %v2749
        %v2759 = vor.u32 %v2757, %v2758
        %v2760 = vshll.u32 2102212464, %v2748
        %v2761 = vshrl.u32 920167782, %v2749
        %v2762 = vor.u32 %v2760, %v2761
        %v2763 = vshll.u32 920167782, %v2748
        %v2764 = vshrl.u32 1326507024, %v2749
        %v2765 = vor.u32 %v2763, %v2764
        %vm2766 = vcmp.lt.s32.totalorder %v2747, 1
        %vm2767 = vcmp.lt.s32.totalorder %v2747, 2
        %vm2768 = vcmp.lt.s32.totalorder %v2747, 3
        %vm2769 = vcmp.lt.s32.totalorder %v2747, 4
        %v2770 = vsel %vm2766, %v2750, %v2753
        %v2771 = vsel %vm2769, %v2759, 2102212464
        %v2772 = vsel %vm2768, %v2756, %v2771
        %v2773 = vsel %vm2767, %v2770, %v2772
        %v2774 = vsel %vm2766, %v2753, %v2756
        %v2775 = vsel %vm2769, %v2762, 920167782
        %v2776 = vsel %vm2768, %v2759, %v2775
        %v2777 = vsel %vm2767, %v2774, %v2776
        %v2778 = vsel %vm2766, %v2756, %v2759
        %v2779 = vsel %vm2769, %v2765, 1326507024
        %v2780 = vsel %vm2768, %v2762, %v2779
        %v2781 = vsel %vm2767, %v2778, %v2780
        %v2782 = vshll.u32 %v2742, 8
        %v2783 = vand.u32 %v2782, 65535
        %v2784 = vshrl.u32 %v2782, 16
        %v2785 = vand.u32 %v2781, 65535
        %v2786 = vshrl.u32 %v2781, 16
        %v2787 = vmul.u32 %v2783, %v2785
        %v2788 = vmul.u32 %v2783, %v2786
        %v2789 = vmul.u32 %v2784, %v2785
        %v2790 = vmul.u32 %v2784, %v2786
        %v2791 = vshll.u32 %v2788, 16
        %v2792 = vshrl.u32 %v2788, 16
        %v2793 = vshll.u32 %v2789, 16
        %v2794 = vshrl.u32 %v2789, 16
        %vm2795 = vc.u32 %v2787, %v2791
        %v2796 = vsel %vm2795, 1, 0
        %v2797 = vadd.s32 %v2787, %v2791
        %v2798 = vadd.s32 %v2790, %v2796
        %vm2799 = vc.u32 %v2797, %v2793
        %v2800 = vsel %vm2799, 1, 0
        %v2801 = vadd.s32 %v2797, %v2793
        %v2802 = vadd.s32 %v2798, %v2800
        %v2803 = vadd.s32 %v2802, %v2792
        %v2804 = vadd.s32 %v2803, %v2794
        %v2805 = vand.u32 %v2782, 65535
        %v2806 = vshrl.u32 %v2782, 16
        %v2807 = vand.u32 %v2777, 65535
        %v2808 = vshrl.u32 %v2777, 16
        %v2809 = vmul.u32 %v2805, %v2807
        %v2810 = vmul.u32 %v2805, %v2808
        %v2811 = vmul.u32 %v2806, %v2807
        %v2812 = vmul.u32 %v2806, %v2808
        %v2813 = vshll.u32 %v2810, 16
        %v2814 = vshrl.u32 %v2810, 16
        %v2815 = vshll.u32 %v2811, 16
        %v2816 = vshrl.u32 %v2811, 16
        %vm2817 = vc.u32 %v2809, %v2813
        %v2818 = vsel %vm2817, 1, 0
        %v2819 = vadd.s32 %v2809, %v2813
        %v2820 = vadd.s32 %v2812, %v2818
        %vm2821 = vc.u32 %v2819, %v2815
        %v2822 = vsel %vm2821, 1, 0
        %v2823 = vadd.s32 %v2819, %v2815
        %v2824 = vadd.s32 %v2820, %v2822
        %v2825 = vadd.s32 %v2824, %v2814
        %v2826 = vadd.s32 %v2825, %v2816
        %v2827 = vmul.u32 %v2782, %v2773
        %v2828 = vadd.s32 %v2804, %v2823
        %vm2829 = vc.u32 %v2804, %v2823
        %v2830 = vadd.s32 %v2826, 1
        %v2831 = vsel %vm2829, %v2830, %v2826
        %v2832 = vadd.s32 %v2827, %v2831
        %v2833 = vadd.s32 %v2832, 536870912
        %v2834 = vshrl.u32 %v2833, 30
        %v2835 = vshll.u32 %v2834, 30
        %v2836 = vsub.s32 %v2832, %v2835
        %vm2837 = vcmp.lt.s32.totalorder %v2836, 0
        %v2838 = vsub.s32 0, %v2836
        %v2839 = vsel %vm2837, %v2838, %v2836
        %v2840 = vclz %v2839
        %v2841 = vsub.s32 %v2840, 2
        %vm2842 = vcmp.gt.s32.totalorder 0, %v2841
        %v2843 = vsel %vm2842, 0, %v2841
        %v2844 = vsub.s32 32, %v2843
        %v2845 = vshll.u32 %v2836, %v2843
        %v2846 = vshrl.u32 %v2828, %v2844
        %v2847 = vor.u32 %v2845, %v2846
        %v2848 = vsub.s32 4294967266, %v2843
        %v2849 = vadd.s32 %v2848, 127
        %v2850 = vshll.u32 %v2849, 23
        %v2851 = vor.u32 4788187, %v2850
        %v2852 = vand.u32 2147483647, %v2851
        %v2854 = vcvt.s32.f32 %v2847
        %v2855 = vmul.f32 %v2854, %v2852
        %v2856 = vxor.u32 %v2855, 2147483648
        %v2857 = vsel %vm2736, %v2856, %v2855
        %v2858 = vsub.s32 4, %v2834
        %v2859 = vsel %vm2736, %v2858, %v2834
        %v2860 = vsel %vm2735, %v408, %v2857
        %v2861 = vsel %vm2735, 0, %v2859
        %v2862 = vmul.f32 %v2860, %v2860
        %v2863 = vmul.f32 %v2862, -0.001358992
        %v2864 = vadd.f32 %v2863, 0.041655596
        %v2865 = vmul.f32 %v2862, %v2864
        %v2866 = vadd.f32 %v2865, -0.4999988
        %v2867 = vmul.f32 %v2862, %v2866
        %v2868 = vadd.f32 1.0, %v2867
        %v2869 = vmul.f32 %v2860, %v2860
        %v2870 = vmul.f32 %v2869, -0.00019511016
        %v2871 = vadd.f32 %v2870, 0.008332121
        %v2872 = vmul.f32 %v2869, %v2871
        %v2873 = vadd.f32 %v2872, -0.16666654
        %v2874 = vmul.f32 %v2869, %v2873
        %v2875 = vadd.f32 %v2874, 1.0
        %v2876 = vmul.f32 %v2875, %v2860
        %vm2877 = vweird.f32 %v408
        %v2878 = vadd.s32 %v2861, 3
        %v2879 = vand.u32 %v2878, 3
        %vm2880 = vcmp.lt.s32.totalorder %v2879, 2
        %vm2881 = vcmp.eq.s32.totalorder %v2879, 0
        %v2882 = vxor.u32 %v2876, 2147483648
        %v2883 = vsel %vm2881, %v2868, %v2882
        %vm2884 = vcmp.eq.s32.totalorder %v2879, 2
        %v2885 = vxor.u32 %v2868, 2147483648
        %v2886 = vsel %vm2884, %v2885, %v2876
        %v2887 = vsel %vm2880, %v2883, %v2886
        %v2888 = vsel %vm2877, nan, %v2887
        %s2889 = scalar_lea.vmem %s1, 32
        %v2890 = vld [vmem:[%s2889] sm:$0xff]
        %v2891 = vld [vmem:[%s2889 + $0x8] sm:$0xff]
        %v2892 = vld [vmem:[%s2889 + $0x10] sm:$0xff]
        %v2893 = vld [vmem:[%s2889 + $0x18] sm:$0xff]
        %s2894 = scalar_lea.vmem %s2, 32
        %v2895 = vld [vmem:[%s2894] sm:$0xff]
        %v2896 = vld [vmem:[%s2894 + $0x8] sm:$0xff]
        %v2897 = vld [vmem:[%s2894 + $0x10] sm:$0xff]
        %v2898 = vld [vmem:[%s2894 + $0x18] sm:$0xff]
        %2900 = vset.pattern.permute.xlu0 0
        %2901 = vperm.xlu0 %2900, %v2895
        %v2902 = vpop.permute.xlu0 %2901
        %2905 = vset.pattern.permute.xlu0 0
        %2906 = vperm.xlu0 %2905, %v2896
        %v2907 = vpop.permute.xlu0 %2906
        %2910 = vset.pattern.permute.xlu0 0
        %2911 = vperm.xlu0 %2910, %v2897
        %v2912 = vpop.permute.xlu0 %2911
        %2915 = vset.pattern.permute.xlu0 0
        %2916 = vperm.xlu0 %2915, %v2898
        %v2917 = vpop.permute.xlu0 %2916
        %vm2919 = vcmask 261120
        %v2921 = vsel %vm2919, %v2890, 0
        %v2924 = vsel %vm2919, %v2891, 0
        %v2927 = vsel %vm2919, %v2892, 0
        %v2930 = vsel %vm2919, %v2893, 0
        %2932 = vmatpush.msra.mxu0 0.0
        %2933 = vmatpush.msra.mxu0 0.0
        %2934 = vmatpush.msra.mxu0 0.0
        %2935 = vmatpush.msra.mxu0 0.0
        %2936 = vmatpush.msra.mxu0 0.0
        %2937 = vmatpush.msra.mxu0 0.0
        %2938 = vmatpush.msra.mxu0 0.0
        %2939 = vmatpush.msra.mxu0 0.0
        %2940 = vmatpush.msra.mxu0 0.0
        %2941 = vmatpush.msra.mxu0 0.0
        %2942 = vmatpush.msra.mxu0 0.0
        %2943 = vmatpush.msra.mxu0 0.0
        %2944 = vmatpush.msra.mxu0 %v2423
        %2945 = vmatpush.msra.mxu0 %v1803
        %2946 = vmatpush.msra.mxu0 %v1183
        %2947 = vmatpush.msra.mxu0 %v563
        %2948 = vmatmul.f32.gmra.mxu0 %v2921
        %v2949 = vpop.f32.mrf.mxu0
        %v2950 = vadd.f32 %v2902, %v2949
        %2951 = vmatmul.f32.gmra.mxu0 %v2924
        %v2952 = vpop.f32.mrf.mxu0
        %v2953 = vadd.f32 %v2907, %v2952
        %2954 = vmatmul.f32.gmra.mxu0 %v2927
        %v2955 = vpop.f32.mrf.mxu0
        %v2956 = vadd.f32 %v2912, %v2955
        %2957 = vmatmul.f32.gmra.mxu0 %v2930
        %v2958 = vpop.f32.mrf.mxu0
        %v2959 = vadd.f32 %v2917, %v2958
        %2960 = vdwg.mxu0
        %2961 = vmatpush.msra.mxu0 0.0
        %2962 = vmatpush.msra.mxu0 0.0
        %2963 = vmatpush.msra.mxu0 0.0
        %2964 = vmatpush.msra.mxu0 0.0
        %2965 = vmatpush.msra.mxu0 0.0
        %2966 = vmatpush.msra.mxu0 0.0
        %2967 = vmatpush.msra.mxu0 0.0
        %2968 = vmatpush.msra.mxu0 0.0
        %2969 = vmatpush.msra.mxu0 0.0
        %2970 = vmatpush.msra.mxu0 0.0
        %2971 = vmatpush.msra.mxu0 0.0
        %2972 = vmatpush.msra.mxu0 0.0
        %2973 = vmatpush.msra.mxu0 %v2578
        %2974 = vmatpush.msra.mxu0 %v1958
        %2975 = vmatpush.msra.mxu0 %v1338
        %2976 = vmatpush.msra.mxu0 %v718
        %2977 = vmatmul.f32.gmra.mxu0 %v2921
        %v2978 = vpop.f32.mrf.mxu0
        %v2979 = vadd.f32 %v2902, %v2978
        %2980 = vmatmul.f32.gmra.mxu0 %v2924
        %v2981 = vpop.f32.mrf.mxu0
        %v2982 = vadd.f32 %v2907, %v2981
        %2983 = vmatmul.f32.gmra.mxu0 %v2927
        %v2984 = vpop.f32.mrf.mxu0
        %v2985 = vadd.f32 %v2912, %v2984
        %2986 = vmatmul.f32.gmra.mxu0 %v2930
        %v2987 = vpop.f32.mrf.mxu0
        %v2988 = vadd.f32 %v2917, %v2987
        %2989 = vdwg.mxu0
        %2990 = vmatpush.msra.mxu0 0.0
        %2991 = vmatpush.msra.mxu0 0.0
        %2992 = vmatpush.msra.mxu0 0.0
        %2993 = vmatpush.msra.mxu0 0.0
        %2994 = vmatpush.msra.mxu0 0.0
        %2995 = vmatpush.msra.mxu0 0.0
        %2996 = vmatpush.msra.mxu0 0.0
        %2997 = vmatpush.msra.mxu0 0.0
        %2998 = vmatpush.msra.mxu0 0.0
        %2999 = vmatpush.msra.mxu0 0.0
        %3000 = vmatpush.msra.mxu0 0.0
        %3001 = vmatpush.msra.mxu0 0.0
        %3002 = vmatpush.msra.mxu0 %v2733
        %3003 = vmatpush.msra.mxu0 %v2113
        %3004 = vmatpush.msra.mxu0 %v1493
        %3005 = vmatpush.msra.mxu0 %v873
        %3006 = vmatmul.f32.gmra.mxu0 %v2921
        %v3007 = vpop.f32.mrf.mxu0
        %v3008 = vadd.f32 %v2902, %v3007
        %3009 = vmatmul.f32.gmra.mxu0 %v2924
        %v3010 = vpop.f32.mrf.mxu0
        %v3011 = vadd.f32 %v2907, %v3010
        %3012 = vmatmul.f32.gmra.mxu0 %v2927
        %v3013 = vpop.f32.mrf.mxu0
        %v3014 = vadd.f32 %v2912, %v3013
        %3015 = vmatmul.f32.gmra.mxu0 %v2930
        %v3016 = vpop.f32.mrf.mxu0
        %v3017 = vadd.f32 %v2917, %v3016
        %3018 = vdwg.mxu0
        %3019 = vmatpush.msra.mxu0 0.0
        %3020 = vmatpush.msra.mxu0 0.0
        %3021 = vmatpush.msra.mxu0 0.0
        %3022 = vmatpush.msra.mxu0 0.0
        %3023 = vmatpush.msra.mxu0 0.0
        %3024 = vmatpush.msra.mxu0 0.0
        %3025 = vmatpush.msra.mxu0 0.0
        %3026 = vmatpush.msra.mxu0 0.0
        %3027 = vmatpush.msra.mxu0 0.0
        %3028 = vmatpush.msra.mxu0 0.0
        %3029 = vmatpush.msra.mxu0 0.0
        %3030 = vmatpush.msra.mxu0 0.0
        %3031 = vmatpush.msra.mxu0 %v2888
        %3032 = vmatpush.msra.mxu0 %v2268
        %3033 = vmatpush.msra.mxu0 %v1648
        %3034 = vmatpush.msra.mxu0 %v1028
        %3035 = vmatmul.f32.gmra.mxu0 %v2921
        %v3036 = vpop.f32.mrf.mxu0
        %v3037 = vadd.f32 %v2902, %v3036
        %3038 = vmatmul.f32.gmra.mxu0 %v2924
        %v3039 = vpop.f32.mrf.mxu0
        %v3040 = vadd.f32 %v2907, %v3039
        %3041 = vmatmul.f32.gmra.mxu0 %v2927
        %v3042 = vpop.f32.mrf.mxu0
        %v3043 = vadd.f32 %v2912, %v3042
        %3044 = vmatmul.f32.gmra.mxu0 %v2930
        %v3045 = vpop.f32.mrf.mxu0
        %v3046 = vadd.f32 %v2917, %v3045
        %3047 = vdwg.mxu0
        %v3048 = vmul.f32 %v2950, 30.0
        %v3049 = vmul.f32 %v2979, 30.0
        %v3050 = vmul.f32 %v3008, 30.0
        %v3051 = vmul.f32 %v3037, 30.0
        %v3052 = vmul.f32 %v2953, 30.0
        %v3053 = vmul.f32 %v2982, 30.0
        %v3054 = vmul.f32 %v3011, 30.0
        %v3055 = vmul.f32 %v3040, 30.0
        %v3056 = vmul.f32 %v2956, 30.0
        %v3057 = vmul.f32 %v2985, 30.0
        %v3058 = vmul.f32 %v3014, 30.0
        %v3059 = vmul.f32 %v3043, 30.0
        %v3060 = vmul.f32 %v2959, 30.0
        %v3061 = vmul.f32 %v2988, 30.0
        %v3062 = vmul.f32 %v3017, 30.0
        %v3063 = vmul.f32 %v3046, 30.0
        %v3064 = vand.u32 2147483647, %v2950
        %v3065 = vand.u32 2147483647, %v2979
        %v3066 = vand.u32 2147483647, %v3008
        %v3067 = vand.u32 2147483647, %v3037
        %v3068 = vand.u32 2147483647, %v2953
        %v3069 = vand.u32 2147483647, %v2982
        %v3070 = vand.u32 2147483647, %v3011
        %v3071 = vand.u32 2147483647, %v3040
        %v3072 = vand.u32 2147483647, %v2956
        %v3073 = vand.u32 2147483647, %v2985
        %v3074 = vand.u32 2147483647, %v3014
        %v3075 = vand.u32 2147483647, %v3043
        %v3076 = vand.u32 2147483647, %v2959
        %v3077 = vand.u32 2147483647, %v2988
        %v3078 = vand.u32 2147483647, %v3017
        %v3079 = vand.u32 2147483647, %v3046
        %v3080 = vmul.f32 %v3048, %v3064
        %v3081 = vmul.f32 %v3049, %v3065
        %v3082 = vmul.f32 %v3050, %v3066
        %v3083 = vmul.f32 %v3051, %v3067
        %v3084 = vmul.f32 %v3052, %v3068
        %v3085 = vmul.f32 %v3053, %v3069
        %v3086 = vmul.f32 %v3054, %v3070
        %v3087 = vmul.f32 %v3055, %v3071
        %v3088 = vmul.f32 %v3056, %v3072
        %v3089 = vmul.f32 %v3057, %v3073
        %v3090 = vmul.f32 %v3058, %v3074
        %v3091 = vmul.f32 %v3059, %v3075
        %v3092 = vmul.f32 %v3060, %v3076
        %v3093 = vmul.f32 %v3061, %v3077
        %v3094 = vmul.f32 %v3062, %v3078
        %v3095 = vmul.f32 %v3063, %v3079
        %v3096 = vadd.f32 %v3080, %v3048
        %v3097 = vadd.f32 %v3081, %v3049
        %v3098 = vadd.f32 %v3082, %v3050
        %v3099 = vadd.f32 %v3083, %v3051
        %v3100 = vadd.f32 %v3084, %v3052
        %v3101 = vadd.f32 %v3085, %v3053
        %v3102 = vadd.f32 %v3086, %v3054
        %v3103 = vadd.f32 %v3087, %v3055
        %v3104 = vadd.f32 %v3088, %v3056
        %v3105 = vadd.f32 %v3089, %v3057
        %v3106 = vadd.f32 %v3090, %v3058
        %v3107 = vadd.f32 %v3091, %v3059
        %v3108 = vadd.f32 %v3092, %v3060
        %v3109 = vadd.f32 %v3093, %v3061
        %v3110 = vadd.f32 %v3094, %v3062
        %v3111 = vadd.f32 %v3095, %v3063
        %v3112 = vand.u32 2147483647, %v3096
        %vm3113 = vcmp.le.f32.partialorder %v3112, 0.7853982
        %vm3114 = vcmp.lt.s32.totalorder %v3096, 0
        %v3115 = vand.u32 %v3096, 2139095040
        %v3116 = vshrl.u32 %v3115, 23
        %v3117 = vsub.s32 %v3116, 127
        %v3118 = vand.u32 2147483647, %v3096
        %v3119 = vand.u32 %v3118, 8388607
        %v3120 = vor.u32 %v3119, 8388608
        %v3121 = vsub.s32 0, %v3120
        %v3122 = vadd.s32 %v3117, 1
        %vm3123 = vcmp.gt.s32.totalorder %v3122, 0
        %v3124 = vsel %vm3123, %v3122, 0
        %v3125 = vshrl.u32 %v3124, 5
        %v3126 = vand.u32 %v3124, 31
        %v3127 = vsub.s32 32, %v3126
        %v3128 = vshrl.u32 683565275, %v3127
        %v3129 = vshll.u32 683565275, %v3126
        %v3130 = vshrl.u32 2475754826, %v3127
        %v3131 = vor.u32 %v3129, %v3130
        %v3132 = vshll.u32 2475754826, %v3126
        %v3133 = vshrl.u32 2131351028, %v3127
        %v3134 = vor.u32 %v3132, %v3133
        %v3135 = vshll.u32 2131351028, %v3126
        %v3136 = vshrl.u32 2102212464, %v3127
        %v3137 = vor.u32 %v3135, %v3136
        %v3138 = vshll.u32 2102212464, %v3126
        %v3139 = vshrl.u32 920167782, %v3127
        %v3140 = vor.u32 %v3138, %v3139
        %v3141 = vshll.u32 920167782, %v3126
        %v3142 = vshrl.u32 1326507024, %v3127
        %v3143 = vor.u32 %v3141, %v3142
        %vm3144 = vcmp.lt.s32.totalorder %v3125, 1
        %vm3145 = vcmp.lt.s32.totalorder %v3125, 2
        %vm3146 = vcmp.lt.s32.totalorder %v3125, 3
        %vm3147 = vcmp.lt.s32.totalorder %v3125, 4
        %v3148 = vsel %vm3144, %v3128, %v3131
        %v3149 = vsel %vm3147, %v3137, 2102212464
        %v3150 = vsel %vm3146, %v3134, %v3149
        %v3151 = vsel %vm3145, %v3148, %v3150
        %v3152 = vsel %vm3144, %v3131, %v3134
        %v3153 = vsel %vm3147, %v3140, 920167782
        %v3154 = vsel %vm3146, %v3137, %v3153
        %v3155 = vsel %vm3145, %v3152, %v3154
        %v3156 = vsel %vm3144, %v3134, %v3137
        %v3157 = vsel %vm3147, %v3143, 1326507024
        %v3158 = vsel %vm3146, %v3140, %v3157
        %v3159 = vsel %vm3145, %v3156, %v3158
        %v3160 = vshll.u32 %v3120, 8
        %v3161 = vand.u32 %v3160, 65535
        %v3162 = vshrl.u32 %v3160, 16
        %v3163 = vand.u32 %v3159, 65535
        %v3164 = vshrl.u32 %v3159, 16
        %v3165 = vmul.u32 %v3161, %v3163
        %v3166 = vmul.u32 %v3161, %v3164
        %v3167 = vmul.u32 %v3162, %v3163
        %v3168 = vmul.u32 %v3162, %v3164
        %v3169 = vshll.u32 %v3166, 16
        %v3170 = vshrl.u32 %v3166, 16
        %v3171 = vshll.u32 %v3167, 16
        %v3172 = vshrl.u32 %v3167, 16
        %vm3173 = vc.u32 %v3165, %v3169
        %v3174 = vsel %vm3173, 1, 0
        %v3175 = vadd.s32 %v3165, %v3169
        %v3176 = vadd.s32 %v3168, %v3174
        %vm3177 = vc.u32 %v3175, %v3171
        %v3178 = vsel %vm3177, 1, 0
        %v3179 = vadd.s32 %v3175, %v3171
        %v3180 = vadd.s32 %v3176, %v3178
        %v3181 = vadd.s32 %v3180, %v3170
        %v3182 = vadd.s32 %v3181, %v3172
        %v3183 = vand.u32 %v3160, 65535
        %v3184 = vshrl.u32 %v3160, 16
        %v3185 = vand.u32 %v3155, 65535
        %v3186 = vshrl.u32 %v3155, 16
        %v3187 = vmul.u32 %v3183, %v3185
        %v3188 = vmul.u32 %v3183, %v3186
        %v3189 = vmul.u32 %v3184, %v3185
        %v3190 = vmul.u32 %v3184, %v3186
        %v3191 = vshll.u32 %v3188, 16
        %v3192 = vshrl.u32 %v3188, 16
        %v3193 = vshll.u32 %v3189, 16
        %v3194 = vshrl.u32 %v3189, 16
        %vm3195 = vc.u32 %v3187, %v3191
        %v3196 = vsel %vm3195, 1, 0
        %v3197 = vadd.s32 %v3187, %v3191
        %v3198 = vadd.s32 %v3190, %v3196
        %vm3199 = vc.u32 %v3197, %v3193
        %v3200 = vsel %vm3199, 1, 0
        %v3201 = vadd.s32 %v3197, %v3193
        %v3202 = vadd.s32 %v3198, %v3200
        %v3203 = vadd.s32 %v3202, %v3192
        %v3204 = vadd.s32 %v3203, %v3194
        %v3205 = vmul.u32 %v3160, %v3151
        %v3206 = vadd.s32 %v3182, %v3201
        %vm3207 = vc.u32 %v3182, %v3201
        %v3208 = vadd.s32 %v3204, 1
        %v3209 = vsel %vm3207, %v3208, %v3204
        %v3210 = vadd.s32 %v3205, %v3209
        %v3211 = vadd.s32 %v3210, 536870912
        %v3212 = vshrl.u32 %v3211, 30
        %v3213 = vshll.u32 %v3212, 30
        %v3214 = vsub.s32 %v3210, %v3213
        %vm3215 = vcmp.lt.s32.totalorder %v3214, 0
        %v3216 = vsub.s32 0, %v3214
        %v3217 = vsel %vm3215, %v3216, %v3214
        %v3218 = vclz %v3217
        %v3219 = vsub.s32 %v3218, 2
        %vm3220 = vcmp.gt.s32.totalorder 0, %v3219
        %v3221 = vsel %vm3220, 0, %v3219
        %v3222 = vsub.s32 32, %v3221
        %v3223 = vshll.u32 %v3214, %v3221
        %v3224 = vshrl.u32 %v3206, %v3222
        %v3225 = vor.u32 %v3223, %v3224
        %v3226 = vsub.s32 4294967266, %v3221
        %v3227 = vadd.s32 %v3226, 127
        %v3228 = vshll.u32 %v3227, 23
        %v3229 = vor.u32 4788187, %v3228
        %v3230 = vand.u32 2147483647, %v3229
        %v3232 = vcvt.s32.f32 %v3225
        %v3233 = vmul.f32 %v3232, %v3230
        %v3234 = vxor.u32 %v3233, 2147483648
        %v3235 = vsel %vm3114, %v3234, %v3233
        %v3236 = vsub.s32 4, %v3212
        %v3237 = vsel %vm3114, %v3236, %v3212
        %v3238 = vsel %vm3113, %v3096, %v3235
        %v3239 = vsel %vm3113, 0, %v3237
        %v3240 = vmul.f32 %v3238, %v3238
        %v3241 = vmul.f32 %v3240, -0.001358992
        %v3242 = vadd.f32 %v3241, 0.041655596
        %v3243 = vmul.f32 %v3240, %v3242
        %v3244 = vadd.f32 %v3243, -0.4999988
        %v3245 = vmul.f32 %v3240, %v3244
        %v3246 = vadd.f32 1.0, %v3245
        %v3247 = vmul.f32 %v3238, %v3238
        %v3248 = vmul.f32 %v3247, -0.00019511016
        %v3249 = vadd.f32 %v3248, 0.008332121
        %v3250 = vmul.f32 %v3247, %v3249
        %v3251 = vadd.f32 %v3250, -0.16666654
        %v3252 = vmul.f32 %v3247, %v3251
        %v3253 = vadd.f32 %v3252, 1.0
        %v3254 = vmul.f32 %v3253, %v3238
        %vm3255 = vweird.f32 %v3096
        %v3256 = vadd.s32 %v3239, 3
        %v3257 = vand.u32 %v3256, 3
        %vm3258 = vcmp.lt.s32.totalorder %v3257, 2
        %vm3259 = vcmp.eq.s32.totalorder %v3257, 0
        %v3260 = vxor.u32 %v3254, 2147483648
        %v3261 = vsel %vm3259, %v3246, %v3260
        %vm3262 = vcmp.eq.s32.totalorder %v3257, 2
        %v3263 = vxor.u32 %v3246, 2147483648
        %v3264 = vsel %vm3262, %v3263, %v3254
        %v3265 = vsel %vm3258, %v3261, %v3264
        %v3266 = vsel %vm3255, nan, %v3265
        %v3267 = vand.u32 2147483647, %v3097
        %vm3268 = vcmp.le.f32.partialorder %v3267, 0.7853982
        %vm3269 = vcmp.lt.s32.totalorder %v3097, 0
        %v3270 = vand.u32 %v3097, 2139095040
        %v3271 = vshrl.u32 %v3270, 23
        %v3272 = vsub.s32 %v3271, 127
        %v3273 = vand.u32 2147483647, %v3097
        %v3274 = vand.u32 %v3273, 8388607
        %v3275 = vor.u32 %v3274, 8388608
        %v3276 = vsub.s32 0, %v3275
        %v3277 = vadd.s32 %v3272, 1
        %vm3278 = vcmp.gt.s32.totalorder %v3277, 0
        %v3279 = vsel %vm3278, %v3277, 0
        %v3280 = vshrl.u32 %v3279, 5
        %v3281 = vand.u32 %v3279, 31
        %v3282 = vsub.s32 32, %v3281
        %v3283 = vshrl.u32 683565275, %v3282
        %v3284 = vshll.u32 683565275, %v3281
        %v3285 = vshrl.u32 2475754826, %v3282
        %v3286 = vor.u32 %v3284, %v3285
        %v3287 = vshll.u32 2475754826, %v3281
        %v3288 = vshrl.u32 2131351028, %v3282
        %v3289 = vor.u32 %v3287, %v3288
        %v3290 = vshll.u32 2131351028, %v3281
        %v3291 = vshrl.u32 2102212464, %v3282
        %v3292 = vor.u32 %v3290, %v3291
        %v3293 = vshll.u32 2102212464, %v3281
        %v3294 = vshrl.u32 920167782, %v3282
        %v3295 = vor.u32 %v3293, %v3294
        %v3296 = vshll.u32 920167782, %v3281
        %v3297 = vshrl.u32 1326507024, %v3282
        %v3298 = vor.u32 %v3296, %v3297
        %vm3299 = vcmp.lt.s32.totalorder %v3280, 1
        %vm3300 = vcmp.lt.s32.totalorder %v3280, 2
        %vm3301 = vcmp.lt.s32.totalorder %v3280, 3
        %vm3302 = vcmp.lt.s32.totalorder %v3280, 4
        %v3303 = vsel %vm3299, %v3283, %v3286
        %v3304 = vsel %vm3302, %v3292, 2102212464
        %v3305 = vsel %vm3301, %v3289, %v3304
        %v3306 = vsel %vm3300, %v3303, %v3305
        %v3307 = vsel %vm3299, %v3286, %v3289
        %v3308 = vsel %vm3302, %v3295, 920167782
        %v3309 = vsel %vm3301, %v3292, %v3308
        %v3310 = vsel %vm3300, %v3307, %v3309
        %v3311 = vsel %vm3299, %v3289, %v3292
        %v3312 = vsel %vm3302, %v3298, 1326507024
        %v3313 = vsel %vm3301, %v3295, %v3312
        %v3314 = vsel %vm3300, %v3311, %v3313
        %v3315 = vshll.u32 %v3275, 8
        %v3316 = vand.u32 %v3315, 65535
        %v3317 = vshrl.u32 %v3315, 16
        %v3318 = vand.u32 %v3314, 65535
        %v3319 = vshrl.u32 %v3314, 16
        %v3320 = vmul.u32 %v3316, %v3318
        %v3321 = vmul.u32 %v3316, %v3319
        %v3322 = vmul.u32 %v3317, %v3318
        %v3323 = vmul.u32 %v3317, %v3319
        %v3324 = vshll.u32 %v3321, 16
        %v3325 = vshrl.u32 %v3321, 16
        %v3326 = vshll.u32 %v3322, 16
        %v3327 = vshrl.u32 %v3322, 16
        %vm3328 = vc.u32 %v3320, %v3324
        %v3329 = vsel %vm3328, 1, 0
        %v3330 = vadd.s32 %v3320, %v3324
        %v3331 = vadd.s32 %v3323, %v3329
        %vm3332 = vc.u32 %v3330, %v3326
        %v3333 = vsel %vm3332, 1, 0
        %v3334 = vadd.s32 %v3330, %v3326
        %v3335 = vadd.s32 %v3331, %v3333
        %v3336 = vadd.s32 %v3335, %v3325
        %v3337 = vadd.s32 %v3336, %v3327
        %v3338 = vand.u32 %v3315, 65535
        %v3339 = vshrl.u32 %v3315, 16
        %v3340 = vand.u32 %v3310, 65535
        %v3341 = vshrl.u32 %v3310, 16
        %v3342 = vmul.u32 %v3338, %v3340
        %v3343 = vmul.u32 %v3338, %v3341
        %v3344 = vmul.u32 %v3339, %v3340
        %v3345 = vmul.u32 %v3339, %v3341
        %v3346 = vshll.u32 %v3343, 16
        %v3347 = vshrl.u32 %v3343, 16
        %v3348 = vshll.u32 %v3344, 16
        %v3349 = vshrl.u32 %v3344, 16
        %vm3350 = vc.u32 %v3342, %v3346
        %v3351 = vsel %vm3350, 1, 0
        %v3352 = vadd.s32 %v3342, %v3346
        %v3353 = vadd.s32 %v3345, %v3351
        %vm3354 = vc.u32 %v3352, %v3348
        %v3355 = vsel %vm3354, 1, 0
        %v3356 = vadd.s32 %v3352, %v3348
        %v3357 = vadd.s32 %v3353, %v3355
        %v3358 = vadd.s32 %v3357, %v3347
        %v3359 = vadd.s32 %v3358, %v3349
        %v3360 = vmul.u32 %v3315, %v3306
        %v3361 = vadd.s32 %v3337, %v3356
        %vm3362 = vc.u32 %v3337, %v3356
        %v3363 = vadd.s32 %v3359, 1
        %v3364 = vsel %vm3362, %v3363, %v3359
        %v3365 = vadd.s32 %v3360, %v3364
        %v3366 = vadd.s32 %v3365, 536870912
        %v3367 = vshrl.u32 %v3366, 30
        %v3368 = vshll.u32 %v3367, 30
        %v3369 = vsub.s32 %v3365, %v3368
        %vm3370 = vcmp.lt.s32.totalorder %v3369, 0
        %v3371 = vsub.s32 0, %v3369
        %v3372 = vsel %vm3370, %v3371, %v3369
        %v3373 = vclz %v3372
        %v3374 = vsub.s32 %v3373, 2
        %vm3375 = vcmp.gt.s32.totalorder 0, %v3374
        %v3376 = vsel %vm3375, 0, %v3374
        %v3377 = vsub.s32 32, %v3376
        %v3378 = vshll.u32 %v3369, %v3376
        %v3379 = vshrl.u32 %v3361, %v3377
        %v3380 = vor.u32 %v3378, %v3379
        %v3381 = vsub.s32 4294967266, %v3376
        %v3382 = vadd.s32 %v3381, 127
        %v3383 = vshll.u32 %v3382, 23
        %v3384 = vor.u32 4788187, %v3383
        %v3385 = vand.u32 2147483647, %v3384
        %v3387 = vcvt.s32.f32 %v3380
        %v3388 = vmul.f32 %v3387, %v3385
        %v3389 = vxor.u32 %v3388, 2147483648
        %v3390 = vsel %vm3269, %v3389, %v3388
        %v3391 = vsub.s32 4, %v3367
        %v3392 = vsel %vm3269, %v3391, %v3367
        %v3393 = vsel %vm3268, %v3097, %v3390
        %v3394 = vsel %vm3268, 0, %v3392
        %v3395 = vmul.f32 %v3393, %v3393
        %v3396 = vmul.f32 %v3395, -0.001358992
        %v3397 = vadd.f32 %v3396, 0.041655596
        %v3398 = vmul.f32 %v3395, %v3397
        %v3399 = vadd.f32 %v3398, -0.4999988
        %v3400 = vmul.f32 %v3395, %v3399
        %v3401 = vadd.f32 1.0, %v3400
        %v3402 = vmul.f32 %v3393, %v3393
        %v3403 = vmul.f32 %v3402, -0.00019511016
        %v3404 = vadd.f32 %v3403, 0.008332121
        %v3405 = vmul.f32 %v3402, %v3404
        %v3406 = vadd.f32 %v3405, -0.16666654
        %v3407 = vmul.f32 %v3402, %v3406
        %v3408 = vadd.f32 %v3407, 1.0
        %v3409 = vmul.f32 %v3408, %v3393
        %vm3410 = vweird.f32 %v3097
        %v3411 = vadd.s32 %v3394, 3
        %v3412 = vand.u32 %v3411, 3
        %vm3413 = vcmp.lt.s32.totalorder %v3412, 2
        %vm3414 = vcmp.eq.s32.totalorder %v3412, 0
        %v3415 = vxor.u32 %v3409, 2147483648
        %v3416 = vsel %vm3414, %v3401, %v3415
        %vm3417 = vcmp.eq.s32.totalorder %v3412, 2
        %v3418 = vxor.u32 %v3401, 2147483648
        %v3419 = vsel %vm3417, %v3418, %v3409
        %v3420 = vsel %vm3413, %v3416, %v3419
        %v3421 = vsel %vm3410, nan, %v3420
        %v3422 = vand.u32 2147483647, %v3098
        %vm3423 = vcmp.le.f32.partialorder %v3422, 0.7853982
        %vm3424 = vcmp.lt.s32.totalorder %v3098, 0
        %v3425 = vand.u32 %v3098, 2139095040
        %v3426 = vshrl.u32 %v3425, 23
        %v3427 = vsub.s32 %v3426, 127
        %v3428 = vand.u32 2147483647, %v3098
        %v3429 = vand.u32 %v3428, 8388607
        %v3430 = vor.u32 %v3429, 8388608
        %v3431 = vsub.s32 0, %v3430
        %v3432 = vadd.s32 %v3427, 1
        %vm3433 = vcmp.gt.s32.totalorder %v3432, 0
        %v3434 = vsel %vm3433, %v3432, 0
        %v3435 = vshrl.u32 %v3434, 5
        %v3436 = vand.u32 %v3434, 31
        %v3437 = vsub.s32 32, %v3436
        %v3438 = vshrl.u32 683565275, %v3437
        %v3439 = vshll.u32 683565275, %v3436
        %v3440 = vshrl.u32 2475754826, %v3437
        %v3441 = vor.u32 %v3439, %v3440
        %v3442 = vshll.u32 2475754826, %v3436
        %v3443 = vshrl.u32 2131351028, %v3437
        %v3444 = vor.u32 %v3442, %v3443
        %v3445 = vshll.u32 2131351028, %v3436
        %v3446 = vshrl.u32 2102212464, %v3437
        %v3447 = vor.u32 %v3445, %v3446
        %v3448 = vshll.u32 2102212464, %v3436
        %v3449 = vshrl.u32 920167782, %v3437
        %v3450 = vor.u32 %v3448, %v3449
        %v3451 = vshll.u32 920167782, %v3436
        %v3452 = vshrl.u32 1326507024, %v3437
        %v3453 = vor.u32 %v3451, %v3452
        %vm3454 = vcmp.lt.s32.totalorder %v3435, 1
        %vm3455 = vcmp.lt.s32.totalorder %v3435, 2
        %vm3456 = vcmp.lt.s32.totalorder %v3435, 3
        %vm3457 = vcmp.lt.s32.totalorder %v3435, 4
        %v3458 = vsel %vm3454, %v3438, %v3441
        %v3459 = vsel %vm3457, %v3447, 2102212464
        %v3460 = vsel %vm3456, %v3444, %v3459
        %v3461 = vsel %vm3455, %v3458, %v3460
        %v3462 = vsel %vm3454, %v3441, %v3444
        %v3463 = vsel %vm3457, %v3450, 920167782
        %v3464 = vsel %vm3456, %v3447, %v3463
        %v3465 = vsel %vm3455, %v3462, %v3464
        %v3466 = vsel %vm3454, %v3444, %v3447
        %v3467 = vsel %vm3457, %v3453, 1326507024
        %v3468 = vsel %vm3456, %v3450, %v3467
        %v3469 = vsel %vm3455, %v3466, %v3468
        %v3470 = vshll.u32 %v3430, 8
        %v3471 = vand.u32 %v3470, 65535
        %v3472 = vshrl.u32 %v3470, 16
        %v3473 = vand.u32 %v3469, 65535
        %v3474 = vshrl.u32 %v3469, 16
        %v3475 = vmul.u32 %v3471, %v3473
        %v3476 = vmul.u32 %v3471, %v3474
        %v3477 = vmul.u32 %v3472, %v3473
        %v3478 = vmul.u32 %v3472, %v3474
        %v3479 = vshll.u32 %v3476, 16
        %v3480 = vshrl.u32 %v3476, 16
        %v3481 = vshll.u32 %v3477, 16
        %v3482 = vshrl.u32 %v3477, 16
        %vm3483 = vc.u32 %v3475, %v3479
        %v3484 = vsel %vm3483, 1, 0
        %v3485 = vadd.s32 %v3475, %v3479
        %v3486 = vadd.s32 %v3478, %v3484
        %vm3487 = vc.u32 %v3485, %v3481
        %v3488 = vsel %vm3487, 1, 0
        %v3489 = vadd.s32 %v3485, %v3481
        %v3490 = vadd.s32 %v3486, %v3488
        %v3491 = vadd.s32 %v3490, %v3480
        %v3492 = vadd.s32 %v3491, %v3482
        %v3493 = vand.u32 %v3470, 65535
        %v3494 = vshrl.u32 %v3470, 16
        %v3495 = vand.u32 %v3465, 65535
        %v3496 = vshrl.u32 %v3465, 16
        %v3497 = vmul.u32 %v3493, %v3495
        %v3498 = vmul.u32 %v3493, %v3496
        %v3499 = vmul.u32 %v3494, %v3495
        %v3500 = vmul.u32 %v3494, %v3496
        %v3501 = vshll.u32 %v3498, 16
        %v3502 = vshrl.u32 %v3498, 16
        %v3503 = vshll.u32 %v3499, 16
        %v3504 = vshrl.u32 %v3499, 16
        %vm3505 = vc.u32 %v3497, %v3501
        %v3506 = vsel %vm3505, 1, 0
        %v3507 = vadd.s32 %v3497, %v3501
        %v3508 = vadd.s32 %v3500, %v3506
        %vm3509 = vc.u32 %v3507, %v3503
        %v3510 = vsel %vm3509, 1, 0
        %v3511 = vadd.s32 %v3507, %v3503
        %v3512 = vadd.s32 %v3508, %v3510
        %v3513 = vadd.s32 %v3512, %v3502
        %v3514 = vadd.s32 %v3513, %v3504
        %v3515 = vmul.u32 %v3470, %v3461
        %v3516 = vadd.s32 %v3492, %v3511
        %vm3517 = vc.u32 %v3492, %v3511
        %v3518 = vadd.s32 %v3514, 1
        %v3519 = vsel %vm3517, %v3518, %v3514
        %v3520 = vadd.s32 %v3515, %v3519
        %v3521 = vadd.s32 %v3520, 536870912
        %v3522 = vshrl.u32 %v3521, 30
        %v3523 = vshll.u32 %v3522, 30
        %v3524 = vsub.s32 %v3520, %v3523
        %vm3525 = vcmp.lt.s32.totalorder %v3524, 0
        %v3526 = vsub.s32 0, %v3524
        %v3527 = vsel %vm3525, %v3526, %v3524
        %v3528 = vclz %v3527
        %v3529 = vsub.s32 %v3528, 2
        %vm3530 = vcmp.gt.s32.totalorder 0, %v3529
        %v3531 = vsel %vm3530, 0, %v3529
        %v3532 = vsub.s32 32, %v3531
        %v3533 = vshll.u32 %v3524, %v3531
        %v3534 = vshrl.u32 %v3516, %v3532
        %v3535 = vor.u32 %v3533, %v3534
        %v3536 = vsub.s32 4294967266, %v3531
        %v3537 = vadd.s32 %v3536, 127
        %v3538 = vshll.u32 %v3537, 23
        %v3539 = vor.u32 4788187, %v3538
        %v3540 = vand.u32 2147483647, %v3539
        %v3542 = vcvt.s32.f32 %v3535
        %v3543 = vmul.f32 %v3542, %v3540
        %v3544 = vxor.u32 %v3543, 2147483648
        %v3545 = vsel %vm3424, %v3544, %v3543
        %v3546 = vsub.s32 4, %v3522
        %v3547 = vsel %vm3424, %v3546, %v3522
        %v3548 = vsel %vm3423, %v3098, %v3545
        %v3549 = vsel %vm3423, 0, %v3547
        %v3550 = vmul.f32 %v3548, %v3548
        %v3551 = vmul.f32 %v3550, -0.001358992
        %v3552 = vadd.f32 %v3551, 0.041655596
        %v3553 = vmul.f32 %v3550, %v3552
        %v3554 = vadd.f32 %v3553, -0.4999988
        %v3555 = vmul.f32 %v3550, %v3554
        %v3556 = vadd.f32 1.0, %v3555
        %v3557 = vmul.f32 %v3548, %v3548
        %v3558 = vmul.f32 %v3557, -0.00019511016
        %v3559 = vadd.f32 %v3558, 0.008332121
        %v3560 = vmul.f32 %v3557, %v3559
        %v3561 = vadd.f32 %v3560, -0.16666654
        %v3562 = vmul.f32 %v3557, %v3561
        %v3563 = vadd.f32 %v3562, 1.0
        %v3564 = vmul.f32 %v3563, %v3548
        %vm3565 = vweird.f32 %v3098
        %v3566 = vadd.s32 %v3549, 3
        %v3567 = vand.u32 %v3566, 3
        %vm3568 = vcmp.lt.s32.totalorder %v3567, 2
        %vm3569 = vcmp.eq.s32.totalorder %v3567, 0
        %v3570 = vxor.u32 %v3564, 2147483648
        %v3571 = vsel %vm3569, %v3556, %v3570
        %vm3572 = vcmp.eq.s32.totalorder %v3567, 2
        %v3573 = vxor.u32 %v3556, 2147483648
        %v3574 = vsel %vm3572, %v3573, %v3564
        %v3575 = vsel %vm3568, %v3571, %v3574
        %v3576 = vsel %vm3565, nan, %v3575
        %v3577 = vand.u32 2147483647, %v3099
        %vm3578 = vcmp.le.f32.partialorder %v3577, 0.7853982
        %vm3579 = vcmp.lt.s32.totalorder %v3099, 0
        %v3580 = vand.u32 %v3099, 2139095040
        %v3581 = vshrl.u32 %v3580, 23
        %v3582 = vsub.s32 %v3581, 127
        %v3583 = vand.u32 2147483647, %v3099
        %v3584 = vand.u32 %v3583, 8388607
        %v3585 = vor.u32 %v3584, 8388608
        %v3586 = vsub.s32 0, %v3585
        %v3587 = vadd.s32 %v3582, 1
        %vm3588 = vcmp.gt.s32.totalorder %v3587, 0
        %v3589 = vsel %vm3588, %v3587, 0
        %v3590 = vshrl.u32 %v3589, 5
        %v3591 = vand.u32 %v3589, 31
        %v3592 = vsub.s32 32, %v3591
        %v3593 = vshrl.u32 683565275, %v3592
        %v3594 = vshll.u32 683565275, %v3591
        %v3595 = vshrl.u32 2475754826, %v3592
        %v3596 = vor.u32 %v3594, %v3595
        %v3597 = vshll.u32 2475754826, %v3591
        %v3598 = vshrl.u32 2131351028, %v3592
        %v3599 = vor.u32 %v3597, %v3598
        %v3600 = vshll.u32 2131351028, %v3591
        %v3601 = vshrl.u32 2102212464, %v3592
        %v3602 = vor.u32 %v3600, %v3601
        %v3603 = vshll.u32 2102212464, %v3591
        %v3604 = vshrl.u32 920167782, %v3592
        %v3605 = vor.u32 %v3603, %v3604
        %v3606 = vshll.u32 920167782, %v3591
        %v3607 = vshrl.u32 1326507024, %v3592
        %v3608 = vor.u32 %v3606, %v3607
        %vm3609 = vcmp.lt.s32.totalorder %v3590, 1
        %vm3610 = vcmp.lt.s32.totalorder %v3590, 2
        %vm3611 = vcmp.lt.s32.totalorder %v3590, 3
        %vm3612 = vcmp.lt.s32.totalorder %v3590, 4
        %v3613 = vsel %vm3609, %v3593, %v3596
        %v3614 = vsel %vm3612, %v3602, 2102212464
        %v3615 = vsel %vm3611, %v3599, %v3614
        %v3616 = vsel %vm3610, %v3613, %v3615
        %v3617 = vsel %vm3609, %v3596, %v3599
        %v3618 = vsel %vm3612, %v3605, 920167782
        %v3619 = vsel %vm3611, %v3602, %v3618
        %v3620 = vsel %vm3610, %v3617, %v3619
        %v3621 = vsel %vm3609, %v3599, %v3602
        %v3622 = vsel %vm3612, %v3608, 1326507024
        %v3623 = vsel %vm3611, %v3605, %v3622
        %v3624 = vsel %vm3610, %v3621, %v3623
        %v3625 = vshll.u32 %v3585, 8
        %v3626 = vand.u32 %v3625, 65535
        %v3627 = vshrl.u32 %v3625, 16
        %v3628 = vand.u32 %v3624, 65535
        %v3629 = vshrl.u32 %v3624, 16
        %v3630 = vmul.u32 %v3626, %v3628
        %v3631 = vmul.u32 %v3626, %v3629
        %v3632 = vmul.u32 %v3627, %v3628
        %v3633 = vmul.u32 %v3627, %v3629
        %v3634 = vshll.u32 %v3631, 16
        %v3635 = vshrl.u32 %v3631, 16
        %v3636 = vshll.u32 %v3632, 16
        %v3637 = vshrl.u32 %v3632, 16
        %vm3638 = vc.u32 %v3630, %v3634
        %v3639 = vsel %vm3638, 1, 0
        %v3640 = vadd.s32 %v3630, %v3634
        %v3641 = vadd.s32 %v3633, %v3639
        %vm3642 = vc.u32 %v3640, %v3636
        %v3643 = vsel %vm3642, 1, 0
        %v3644 = vadd.s32 %v3640, %v3636
        %v3645 = vadd.s32 %v3641, %v3643
        %v3646 = vadd.s32 %v3645, %v3635
        %v3647 = vadd.s32 %v3646, %v3637
        %v3648 = vand.u32 %v3625, 65535
        %v3649 = vshrl.u32 %v3625, 16
        %v3650 = vand.u32 %v3620, 65535
        %v3651 = vshrl.u32 %v3620, 16
        %v3652 = vmul.u32 %v3648, %v3650
        %v3653 = vmul.u32 %v3648, %v3651
        %v3654 = vmul.u32 %v3649, %v3650
        %v3655 = vmul.u32 %v3649, %v3651
        %v3656 = vshll.u32 %v3653, 16
        %v3657 = vshrl.u32 %v3653, 16
        %v3658 = vshll.u32 %v3654, 16
        %v3659 = vshrl.u32 %v3654, 16
        %vm3660 = vc.u32 %v3652, %v3656
        %v3661 = vsel %vm3660, 1, 0
        %v3662 = vadd.s32 %v3652, %v3656
        %v3663 = vadd.s32 %v3655, %v3661
        %vm3664 = vc.u32 %v3662, %v3658
        %v3665 = vsel %vm3664, 1, 0
        %v3666 = vadd.s32 %v3662, %v3658
        %v3667 = vadd.s32 %v3663, %v3665
        %v3668 = vadd.s32 %v3667, %v3657
        %v3669 = vadd.s32 %v3668, %v3659
        %v3670 = vmul.u32 %v3625, %v3616
        %v3671 = vadd.s32 %v3647, %v3666
        %vm3672 = vc.u32 %v3647, %v3666
        %v3673 = vadd.s32 %v3669, 1
        %v3674 = vsel %vm3672, %v3673, %v3669
        %v3675 = vadd.s32 %v3670, %v3674
        %v3676 = vadd.s32 %v3675, 536870912
        %v3677 = vshrl.u32 %v3676, 30
        %v3678 = vshll.u32 %v3677, 30
        %v3679 = vsub.s32 %v3675, %v3678
        %vm3680 = vcmp.lt.s32.totalorder %v3679, 0
        %v3681 = vsub.s32 0, %v3679
        %v3682 = vsel %vm3680, %v3681, %v3679
        %v3683 = vclz %v3682
        %v3684 = vsub.s32 %v3683, 2
        %vm3685 = vcmp.gt.s32.totalorder 0, %v3684
        %v3686 = vsel %vm3685, 0, %v3684
        %v3687 = vsub.s32 32, %v3686
        %v3688 = vshll.u32 %v3679, %v3686
        %v3689 = vshrl.u32 %v3671, %v3687
        %v3690 = vor.u32 %v3688, %v3689
        %v3691 = vsub.s32 4294967266, %v3686
        %v3692 = vadd.s32 %v3691, 127
        %v3693 = vshll.u32 %v3692, 23
        %v3694 = vor.u32 4788187, %v3693
        %v3695 = vand.u32 2147483647, %v3694
        %v3697 = vcvt.s32.f32 %v3690
        %v3698 = vmul.f32 %v3697, %v3695
        %v3699 = vxor.u32 %v3698, 2147483648
        %v3700 = vsel %vm3579, %v3699, %v3698
        %v3701 = vsub.s32 4, %v3677
        %v3702 = vsel %vm3579, %v3701, %v3677
        %v3703 = vsel %vm3578, %v3099, %v3700
        %v3704 = vsel %vm3578, 0, %v3702
        %v3705 = vmul.f32 %v3703, %v3703
        %v3706 = vmul.f32 %v3705, -0.001358992
        %v3707 = vadd.f32 %v3706, 0.041655596
        %v3708 = vmul.f32 %v3705, %v3707
        %v3709 = vadd.f32 %v3708, -0.4999988
        %v3710 = vmul.f32 %v3705, %v3709
        %v3711 = vadd.f32 1.0, %v3710
        %v3712 = vmul.f32 %v3703, %v3703
        %v3713 = vmul.f32 %v3712, -0.00019511016
        %v3714 = vadd.f32 %v3713, 0.008332121
        %v3715 = vmul.f32 %v3712, %v3714
        %v3716 = vadd.f32 %v3715, -0.16666654
        %v3717 = vmul.f32 %v3712, %v3716
        %v3718 = vadd.f32 %v3717, 1.0
        %v3719 = vmul.f32 %v3718, %v3703
        %vm3720 = vweird.f32 %v3099
        %v3721 = vadd.s32 %v3704, 3
        %v3722 = vand.u32 %v3721, 3
        %vm3723 = vcmp.lt.s32.totalorder %v3722, 2
        %vm3724 = vcmp.eq.s32.totalorder %v3722, 0
        %v3725 = vxor.u32 %v3719, 2147483648
        %v3726 = vsel %vm3724, %v3711, %v3725
        %vm3727 = vcmp.eq.s32.totalorder %v3722, 2
        %v3728 = vxor.u32 %v3711, 2147483648
        %v3729 = vsel %vm3727, %v3728, %v3719
        %v3730 = vsel %vm3723, %v3726, %v3729
        %v3731 = vsel %vm3720, nan, %v3730
        %v3732 = vand.u32 2147483647, %v3100
        %vm3733 = vcmp.le.f32.partialorder %v3732, 0.7853982
        %vm3734 = vcmp.lt.s32.totalorder %v3100, 0
        %v3735 = vand.u32 %v3100, 2139095040
        %v3736 = vshrl.u32 %v3735, 23
        %v3737 = vsub.s32 %v3736, 127
        %v3738 = vand.u32 2147483647, %v3100
        %v3739 = vand.u32 %v3738, 8388607
        %v3740 = vor.u32 %v3739, 8388608
        %v3741 = vsub.s32 0, %v3740
        %v3742 = vadd.s32 %v3737, 1
        %vm3743 = vcmp.gt.s32.totalorder %v3742, 0
        %v3744 = vsel %vm3743, %v3742, 0
        %v3745 = vshrl.u32 %v3744, 5
        %v3746 = vand.u32 %v3744, 31
        %v3747 = vsub.s32 32, %v3746
        %v3748 = vshrl.u32 683565275, %v3747
        %v3749 = vshll.u32 683565275, %v3746
        %v3750 = vshrl.u32 2475754826, %v3747
        %v3751 = vor.u32 %v3749, %v3750
        %v3752 = vshll.u32 2475754826, %v3746
        %v3753 = vshrl.u32 2131351028, %v3747
        %v3754 = vor.u32 %v3752, %v3753
        %v3755 = vshll.u32 2131351028, %v3746
        %v3756 = vshrl.u32 2102212464, %v3747
        %v3757 = vor.u32 %v3755, %v3756
        %v3758 = vshll.u32 2102212464, %v3746
        %v3759 = vshrl.u32 920167782, %v3747
        %v3760 = vor.u32 %v3758, %v3759
        %v3761 = vshll.u32 920167782, %v3746
        %v3762 = vshrl.u32 1326507024, %v3747
        %v3763 = vor.u32 %v3761, %v3762
        %vm3764 = vcmp.lt.s32.totalorder %v3745, 1
        %vm3765 = vcmp.lt.s32.totalorder %v3745, 2
        %vm3766 = vcmp.lt.s32.totalorder %v3745, 3
        %vm3767 = vcmp.lt.s32.totalorder %v3745, 4
        %v3768 = vsel %vm3764, %v3748, %v3751
        %v3769 = vsel %vm3767, %v3757, 2102212464
        %v3770 = vsel %vm3766, %v3754, %v3769
        %v3771 = vsel %vm3765, %v3768, %v3770
        %v3772 = vsel %vm3764, %v3751, %v3754
        %v3773 = vsel %vm3767, %v3760, 920167782
        %v3774 = vsel %vm3766, %v3757, %v3773
        %v3775 = vsel %vm3765, %v3772, %v3774
        %v3776 = vsel %vm3764, %v3754, %v3757
        %v3777 = vsel %vm3767, %v3763, 1326507024
        %v3778 = vsel %vm3766, %v3760, %v3777
        %v3779 = vsel %vm3765, %v3776, %v3778
        %v3780 = vshll.u32 %v3740, 8
        %v3781 = vand.u32 %v3780, 65535
        %v3782 = vshrl.u32 %v3780, 16
        %v3783 = vand.u32 %v3779, 65535
        %v3784 = vshrl.u32 %v3779, 16
        %v3785 = vmul.u32 %v3781, %v3783
        %v3786 = vmul.u32 %v3781, %v3784
        %v3787 = vmul.u32 %v3782, %v3783
        %v3788 = vmul.u32 %v3782, %v3784
        %v3789 = vshll.u32 %v3786, 16
        %v3790 = vshrl.u32 %v3786, 16
        %v3791 = vshll.u32 %v3787, 16
        %v3792 = vshrl.u32 %v3787, 16
        %vm3793 = vc.u32 %v3785, %v3789
        %v3794 = vsel %vm3793, 1, 0
        %v3795 = vadd.s32 %v3785, %v3789
        %v3796 = vadd.s32 %v3788, %v3794
        %vm3797 = vc.u32 %v3795, %v3791
        %v3798 = vsel %vm3797, 1, 0
        %v3799 = vadd.s32 %v3795, %v3791
        %v3800 = vadd.s32 %v3796, %v3798
        %v3801 = vadd.s32 %v3800, %v3790
        %v3802 = vadd.s32 %v3801, %v3792
        %v3803 = vand.u32 %v3780, 65535
        %v3804 = vshrl.u32 %v3780, 16
        %v3805 = vand.u32 %v3775, 65535
        %v3806 = vshrl.u32 %v3775, 16
        %v3807 = vmul.u32 %v3803, %v3805
        %v3808 = vmul.u32 %v3803, %v3806
        %v3809 = vmul.u32 %v3804, %v3805
        %v3810 = vmul.u32 %v3804, %v3806
        %v3811 = vshll.u32 %v3808, 16
        %v3812 = vshrl.u32 %v3808, 16
        %v3813 = vshll.u32 %v3809, 16
        %v3814 = vshrl.u32 %v3809, 16
        %vm3815 = vc.u32 %v3807, %v3811
        %v3816 = vsel %vm3815, 1, 0
        %v3817 = vadd.s32 %v3807, %v3811
        %v3818 = vadd.s32 %v3810, %v3816
        %vm3819 = vc.u32 %v3817, %v3813
        %v3820 = vsel %vm3819, 1, 0
        %v3821 = vadd.s32 %v3817, %v3813
        %v3822 = vadd.s32 %v3818, %v3820
        %v3823 = vadd.s32 %v3822, %v3812
        %v3824 = vadd.s32 %v3823, %v3814
        %v3825 = vmul.u32 %v3780, %v3771
        %v3826 = vadd.s32 %v3802, %v3821
        %vm3827 = vc.u32 %v3802, %v3821
        %v3828 = vadd.s32 %v3824, 1
        %v3829 = vsel %vm3827, %v3828, %v3824
        %v3830 = vadd.s32 %v3825, %v3829
        %v3831 = vadd.s32 %v3830, 536870912
        %v3832 = vshrl.u32 %v3831, 30
        %v3833 = vshll.u32 %v3832, 30
        %v3834 = vsub.s32 %v3830, %v3833
        %vm3835 = vcmp.lt.s32.totalorder %v3834, 0
        %v3836 = vsub.s32 0, %v3834
        %v3837 = vsel %vm3835, %v3836, %v3834
        %v3838 = vclz %v3837
        %v3839 = vsub.s32 %v3838, 2
        %vm3840 = vcmp.gt.s32.totalorder 0, %v3839
        %v3841 = vsel %vm3840, 0, %v3839
        %v3842 = vsub.s32 32, %v3841
        %v3843 = vshll.u32 %v3834, %v3841
        %v3844 = vshrl.u32 %v3826, %v3842
        %v3845 = vor.u32 %v3843, %v3844
        %v3846 = vsub.s32 4294967266, %v3841
        %v3847 = vadd.s32 %v3846, 127
        %v3848 = vshll.u32 %v3847, 23
        %v3849 = vor.u32 4788187, %v3848
        %v3850 = vand.u32 2147483647, %v3849
        %v3852 = vcvt.s32.f32 %v3845
        %v3853 = vmul.f32 %v3852, %v3850
        %v3854 = vxor.u32 %v3853, 2147483648
        %v3855 = vsel %vm3734, %v3854, %v3853
        %v3856 = vsub.s32 4, %v3832
        %v3857 = vsel %vm3734, %v3856, %v3832
        %v3858 = vsel %vm3733, %v3100, %v3855
        %v3859 = vsel %vm3733, 0, %v3857
        %v3860 = vmul.f32 %v3858, %v3858
        %v3861 = vmul.f32 %v3860, -0.001358992
        %v3862 = vadd.f32 %v3861, 0.041655596
        %v3863 = vmul.f32 %v3860, %v3862
        %v3864 = vadd.f32 %v3863, -0.4999988
        %v3865 = vmul.f32 %v3860, %v3864
        %v3866 = vadd.f32 1.0, %v3865
        %v3867 = vmul.f32 %v3858, %v3858
        %v3868 = vmul.f32 %v3867, -0.00019511016
        %v3869 = vadd.f32 %v3868, 0.008332121
        %v3870 = vmul.f32 %v3867, %v3869
        %v3871 = vadd.f32 %v3870, -0.16666654
        %v3872 = vmul.f32 %v3867, %v3871
        %v3873 = vadd.f32 %v3872, 1.0
        %v3874 = vmul.f32 %v3873, %v3858
        %vm3875 = vweird.f32 %v3100
        %v3876 = vadd.s32 %v3859, 3
        %v3877 = vand.u32 %v3876, 3
        %vm3878 = vcmp.lt.s32.totalorder %v3877, 2
        %vm3879 = vcmp.eq.s32.totalorder %v3877, 0
        %v3880 = vxor.u32 %v3874, 2147483648
        %v3881 = vsel %vm3879, %v3866, %v3880
        %vm3882 = vcmp.eq.s32.totalorder %v3877, 2
        %v3883 = vxor.u32 %v3866, 2147483648
        %v3884 = vsel %vm3882, %v3883, %v3874
        %v3885 = vsel %vm3878, %v3881, %v3884
        %v3886 = vsel %vm3875, nan, %v3885
        %v3887 = vand.u32 2147483647, %v3101
        %vm3888 = vcmp.le.f32.partialorder %v3887, 0.7853982
        %vm3889 = vcmp.lt.s32.totalorder %v3101, 0
        %v3890 = vand.u32 %v3101, 2139095040
        %v3891 = vshrl.u32 %v3890, 23
        %v3892 = vsub.s32 %v3891, 127
        %v3893 = vand.u32 2147483647, %v3101
        %v3894 = vand.u32 %v3893, 8388607
        %v3895 = vor.u32 %v3894, 8388608
        %v3896 = vsub.s32 0, %v3895
        %v3897 = vadd.s32 %v3892, 1
        %vm3898 = vcmp.gt.s32.totalorder %v3897, 0
        %v3899 = vsel %vm3898, %v3897, 0
        %v3900 = vshrl.u32 %v3899, 5
        %v3901 = vand.u32 %v3899, 31
        %v3902 = vsub.s32 32, %v3901
        %v3903 = vshrl.u32 683565275, %v3902
        %v3904 = vshll.u32 683565275, %v3901
        %v3905 = vshrl.u32 2475754826, %v3902
        %v3906 = vor.u32 %v3904, %v3905
        %v3907 = vshll.u32 2475754826, %v3901
        %v3908 = vshrl.u32 2131351028, %v3902
        %v3909 = vor.u32 %v3907, %v3908
        %v3910 = vshll.u32 2131351028, %v3901
        %v3911 = vshrl.u32 2102212464, %v3902
        %v3912 = vor.u32 %v3910, %v3911
        %v3913 = vshll.u32 2102212464, %v3901
        %v3914 = vshrl.u32 920167782, %v3902
        %v3915 = vor.u32 %v3913, %v3914
        %v3916 = vshll.u32 920167782, %v3901
        %v3917 = vshrl.u32 1326507024, %v3902
        %v3918 = vor.u32 %v3916, %v3917
        %vm3919 = vcmp.lt.s32.totalorder %v3900, 1
        %vm3920 = vcmp.lt.s32.totalorder %v3900, 2
        %vm3921 = vcmp.lt.s32.totalorder %v3900, 3
        %vm3922 = vcmp.lt.s32.totalorder %v3900, 4
        %v3923 = vsel %vm3919, %v3903, %v3906
        %v3924 = vsel %vm3922, %v3912, 2102212464
        %v3925 = vsel %vm3921, %v3909, %v3924
        %v3926 = vsel %vm3920, %v3923, %v3925
        %v3927 = vsel %vm3919, %v3906, %v3909
        %v3928 = vsel %vm3922, %v3915, 920167782
        %v3929 = vsel %vm3921, %v3912, %v3928
        %v3930 = vsel %vm3920, %v3927, %v3929
        %v3931 = vsel %vm3919, %v3909, %v3912
        %v3932 = vsel %vm3922, %v3918, 1326507024
        %v3933 = vsel %vm3921, %v3915, %v3932
        %v3934 = vsel %vm3920, %v3931, %v3933
        %v3935 = vshll.u32 %v3895, 8
        %v3936 = vand.u32 %v3935, 65535
        %v3937 = vshrl.u32 %v3935, 16
        %v3938 = vand.u32 %v3934, 65535
        %v3939 = vshrl.u32 %v3934, 16
        %v3940 = vmul.u32 %v3936, %v3938
        %v3941 = vmul.u32 %v3936, %v3939
        %v3942 = vmul.u32 %v3937, %v3938
        %v3943 = vmul.u32 %v3937, %v3939
        %v3944 = vshll.u32 %v3941, 16
        %v3945 = vshrl.u32 %v3941, 16
        %v3946 = vshll.u32 %v3942, 16
        %v3947 = vshrl.u32 %v3942, 16
        %vm3948 = vc.u32 %v3940, %v3944
        %v3949 = vsel %vm3948, 1, 0
        %v3950 = vadd.s32 %v3940, %v3944
        %v3951 = vadd.s32 %v3943, %v3949
        %vm3952 = vc.u32 %v3950, %v3946
        %v3953 = vsel %vm3952, 1, 0
        %v3954 = vadd.s32 %v3950, %v3946
        %v3955 = vadd.s32 %v3951, %v3953
        %v3956 = vadd.s32 %v3955, %v3945
        %v3957 = vadd.s32 %v3956, %v3947
        %v3958 = vand.u32 %v3935, 65535
        %v3959 = vshrl.u32 %v3935, 16
        %v3960 = vand.u32 %v3930, 65535
        %v3961 = vshrl.u32 %v3930, 16
        %v3962 = vmul.u32 %v3958, %v3960
        %v3963 = vmul.u32 %v3958, %v3961
        %v3964 = vmul.u32 %v3959, %v3960
        %v3965 = vmul.u32 %v3959, %v3961
        %v3966 = vshll.u32 %v3963, 16
        %v3967 = vshrl.u32 %v3963, 16
        %v3968 = vshll.u32 %v3964, 16
        %v3969 = vshrl.u32 %v3964, 16
        %vm3970 = vc.u32 %v3962, %v3966
        %v3971 = vsel %vm3970, 1, 0
        %v3972 = vadd.s32 %v3962, %v3966
        %v3973 = vadd.s32 %v3965, %v3971
        %vm3974 = vc.u32 %v3972, %v3968
        %v3975 = vsel %vm3974, 1, 0
        %v3976 = vadd.s32 %v3972, %v3968
        %v3977 = vadd.s32 %v3973, %v3975
        %v3978 = vadd.s32 %v3977, %v3967
        %v3979 = vadd.s32 %v3978, %v3969
        %v3980 = vmul.u32 %v3935, %v3926
        %v3981 = vadd.s32 %v3957, %v3976
        %vm3982 = vc.u32 %v3957, %v3976
        %v3983 = vadd.s32 %v3979, 1
        %v3984 = vsel %vm3982, %v3983, %v3979
        %v3985 = vadd.s32 %v3980, %v3984
        %v3986 = vadd.s32 %v3985, 536870912
        %v3987 = vshrl.u32 %v3986, 30
        %v3988 = vshll.u32 %v3987, 30
        %v3989 = vsub.s32 %v3985, %v3988
        %vm3990 = vcmp.lt.s32.totalorder %v3989, 0
        %v3991 = vsub.s32 0, %v3989
        %v3992 = vsel %vm3990, %v3991, %v3989
        %v3993 = vclz %v3992
        %v3994 = vsub.s32 %v3993, 2
        %vm3995 = vcmp.gt.s32.totalorder 0, %v3994
        %v3996 = vsel %vm3995, 0, %v3994
        %v3997 = vsub.s32 32, %v3996
        %v3998 = vshll.u32 %v3989, %v3996
        %v3999 = vshrl.u32 %v3981, %v3997
        %v4000 = vor.u32 %v3998, %v3999
        %v4001 = vsub.s32 4294967266, %v3996
        %v4002 = vadd.s32 %v4001, 127
        %v4003 = vshll.u32 %v4002, 23
        %v4004 = vor.u32 4788187, %v4003
        %v4005 = vand.u32 2147483647, %v4004
        %v4007 = vcvt.s32.f32 %v4000
        %v4008 = vmul.f32 %v4007, %v4005
        %v4009 = vxor.u32 %v4008, 2147483648
        %v4010 = vsel %vm3889, %v4009, %v4008
        %v4011 = vsub.s32 4, %v3987
        %v4012 = vsel %vm3889, %v4011, %v3987
        %v4013 = vsel %vm3888, %v3101, %v4010
        %v4014 = vsel %vm3888, 0, %v4012
        %v4015 = vmul.f32 %v4013, %v4013
        %v4016 = vmul.f32 %v4015, -0.001358992
        %v4017 = vadd.f32 %v4016, 0.041655596
        %v4018 = vmul.f32 %v4015, %v4017
        %v4019 = vadd.f32 %v4018, -0.4999988
        %v4020 = vmul.f32 %v4015, %v4019
        %v4021 = vadd.f32 1.0, %v4020
        %v4022 = vmul.f32 %v4013, %v4013
        %v4023 = vmul.f32 %v4022, -0.00019511016
        %v4024 = vadd.f32 %v4023, 0.008332121
        %v4025 = vmul.f32 %v4022, %v4024
        %v4026 = vadd.f32 %v4025, -0.16666654
        %v4027 = vmul.f32 %v4022, %v4026
        %v4028 = vadd.f32 %v4027, 1.0
        %v4029 = vmul.f32 %v4028, %v4013
        %vm4030 = vweird.f32 %v3101
        %v4031 = vadd.s32 %v4014, 3
        %v4032 = vand.u32 %v4031, 3
        %vm4033 = vcmp.lt.s32.totalorder %v4032, 2
        %vm4034 = vcmp.eq.s32.totalorder %v4032, 0
        %v4035 = vxor.u32 %v4029, 2147483648
        %v4036 = vsel %vm4034, %v4021, %v4035
        %vm4037 = vcmp.eq.s32.totalorder %v4032, 2
        %v4038 = vxor.u32 %v4021, 2147483648
        %v4039 = vsel %vm4037, %v4038, %v4029
        %v4040 = vsel %vm4033, %v4036, %v4039
        %v4041 = vsel %vm4030, nan, %v4040
        %v4042 = vand.u32 2147483647, %v3102
        %vm4043 = vcmp.le.f32.partialorder %v4042, 0.7853982
        %vm4044 = vcmp.lt.s32.totalorder %v3102, 0
        %v4045 = vand.u32 %v3102, 2139095040
        %v4046 = vshrl.u32 %v4045, 23
        %v4047 = vsub.s32 %v4046, 127
        %v4048 = vand.u32 2147483647, %v3102
        %v4049 = vand.u32 %v4048, 8388607
        %v4050 = vor.u32 %v4049, 8388608
        %v4051 = vsub.s32 0, %v4050
        %v4052 = vadd.s32 %v4047, 1
        %vm4053 = vcmp.gt.s32.totalorder %v4052, 0
        %v4054 = vsel %vm4053, %v4052, 0
        %v4055 = vshrl.u32 %v4054, 5
        %v4056 = vand.u32 %v4054, 31
        %v4057 = vsub.s32 32, %v4056
        %v4058 = vshrl.u32 683565275, %v4057
        %v4059 = vshll.u32 683565275, %v4056
        %v4060 = vshrl.u32 2475754826, %v4057
        %v4061 = vor.u32 %v4059, %v4060
        %v4062 = vshll.u32 2475754826, %v4056
        %v4063 = vshrl.u32 2131351028, %v4057
        %v4064 = vor.u32 %v4062, %v4063
        %v4065 = vshll.u32 2131351028, %v4056
        %v4066 = vshrl.u32 2102212464, %v4057
        %v4067 = vor.u32 %v4065, %v4066
        %v4068 = vshll.u32 2102212464, %v4056
        %v4069 = vshrl.u32 920167782, %v4057
        %v4070 = vor.u32 %v4068, %v4069
        %v4071 = vshll.u32 920167782, %v4056
        %v4072 = vshrl.u32 1326507024, %v4057
        %v4073 = vor.u32 %v4071, %v4072
        %vm4074 = vcmp.lt.s32.totalorder %v4055, 1
        %vm4075 = vcmp.lt.s32.totalorder %v4055, 2
        %vm4076 = vcmp.lt.s32.totalorder %v4055, 3
        %vm4077 = vcmp.lt.s32.totalorder %v4055, 4
        %v4078 = vsel %vm4074, %v4058, %v4061
        %v4079 = vsel %vm4077, %v4067, 2102212464
        %v4080 = vsel %vm4076, %v4064, %v4079
        %v4081 = vsel %vm4075, %v4078, %v4080
        %v4082 = vsel %vm4074, %v4061, %v4064
        %v4083 = vsel %vm4077, %v4070, 920167782
        %v4084 = vsel %vm4076, %v4067, %v4083
        %v4085 = vsel %vm4075, %v4082, %v4084
        %v4086 = vsel %vm4074, %v4064, %v4067
        %v4087 = vsel %vm4077, %v4073, 1326507024
        %v4088 = vsel %vm4076, %v4070, %v4087
        %v4089 = vsel %vm4075, %v4086, %v4088
        %v4090 = vshll.u32 %v4050, 8
        %v4091 = vand.u32 %v4090, 65535
        %v4092 = vshrl.u32 %v4090, 16
        %v4093 = vand.u32 %v4089, 65535
        %v4094 = vshrl.u32 %v4089, 16
        %v4095 = vmul.u32 %v4091, %v4093
        %v4096 = vmul.u32 %v4091, %v4094
        %v4097 = vmul.u32 %v4092, %v4093
        %v4098 = vmul.u32 %v4092, %v4094
        %v4099 = vshll.u32 %v4096, 16
        %v4100 = vshrl.u32 %v4096, 16
        %v4101 = vshll.u32 %v4097, 16
        %v4102 = vshrl.u32 %v4097, 16
        %vm4103 = vc.u32 %v4095, %v4099
        %v4104 = vsel %vm4103, 1, 0
        %v4105 = vadd.s32 %v4095, %v4099
        %v4106 = vadd.s32 %v4098, %v4104
        %vm4107 = vc.u32 %v4105, %v4101
        %v4108 = vsel %vm4107, 1, 0
        %v4109 = vadd.s32 %v4105, %v4101
        %v4110 = vadd.s32 %v4106, %v4108
        %v4111 = vadd.s32 %v4110, %v4100
        %v4112 = vadd.s32 %v4111, %v4102
        %v4113 = vand.u32 %v4090, 65535
        %v4114 = vshrl.u32 %v4090, 16
        %v4115 = vand.u32 %v4085, 65535
        %v4116 = vshrl.u32 %v4085, 16
        %v4117 = vmul.u32 %v4113, %v4115
        %v4118 = vmul.u32 %v4113, %v4116
        %v4119 = vmul.u32 %v4114, %v4115
        %v4120 = vmul.u32 %v4114, %v4116
        %v4121 = vshll.u32 %v4118, 16
        %v4122 = vshrl.u32 %v4118, 16
        %v4123 = vshll.u32 %v4119, 16
        %v4124 = vshrl.u32 %v4119, 16
        %vm4125 = vc.u32 %v4117, %v4121
        %v4126 = vsel %vm4125, 1, 0
        %v4127 = vadd.s32 %v4117, %v4121
        %v4128 = vadd.s32 %v4120, %v4126
        %vm4129 = vc.u32 %v4127, %v4123
        %v4130 = vsel %vm4129, 1, 0
        %v4131 = vadd.s32 %v4127, %v4123
        %v4132 = vadd.s32 %v4128, %v4130
        %v4133 = vadd.s32 %v4132, %v4122
        %v4134 = vadd.s32 %v4133, %v4124
        %v4135 = vmul.u32 %v4090, %v4081
        %v4136 = vadd.s32 %v4112, %v4131
        %vm4137 = vc.u32 %v4112, %v4131
        %v4138 = vadd.s32 %v4134, 1
        %v4139 = vsel %vm4137, %v4138, %v4134
        %v4140 = vadd.s32 %v4135, %v4139
        %v4141 = vadd.s32 %v4140, 536870912
        %v4142 = vshrl.u32 %v4141, 30
        %v4143 = vshll.u32 %v4142, 30
        %v4144 = vsub.s32 %v4140, %v4143
        %vm4145 = vcmp.lt.s32.totalorder %v4144, 0
        %v4146 = vsub.s32 0, %v4144
        %v4147 = vsel %vm4145, %v4146, %v4144
        %v4148 = vclz %v4147
        %v4149 = vsub.s32 %v4148, 2
        %vm4150 = vcmp.gt.s32.totalorder 0, %v4149
        %v4151 = vsel %vm4150, 0, %v4149
        %v4152 = vsub.s32 32, %v4151
        %v4153 = vshll.u32 %v4144, %v4151
        %v4154 = vshrl.u32 %v4136, %v4152
        %v4155 = vor.u32 %v4153, %v4154
        %v4156 = vsub.s32 4294967266, %v4151
        %v4157 = vadd.s32 %v4156, 127
        %v4158 = vshll.u32 %v4157, 23
        %v4159 = vor.u32 4788187, %v4158
        %v4160 = vand.u32 2147483647, %v4159
        %v4162 = vcvt.s32.f32 %v4155
        %v4163 = vmul.f32 %v4162, %v4160
        %v4164 = vxor.u32 %v4163, 2147483648
        %v4165 = vsel %vm4044, %v4164, %v4163
        %v4166 = vsub.s32 4, %v4142
        %v4167 = vsel %vm4044, %v4166, %v4142
        %v4168 = vsel %vm4043, %v3102, %v4165
        %v4169 = vsel %vm4043, 0, %v4167
        %v4170 = vmul.f32 %v4168, %v4168
        %v4171 = vmul.f32 %v4170, -0.001358992
        %v4172 = vadd.f32 %v4171, 0.041655596
        %v4173 = vmul.f32 %v4170, %v4172
        %v4174 = vadd.f32 %v4173, -0.4999988
        %v4175 = vmul.f32 %v4170, %v4174
        %v4176 = vadd.f32 1.0, %v4175
        %v4177 = vmul.f32 %v4168, %v4168
        %v4178 = vmul.f32 %v4177, -0.00019511016
        %v4179 = vadd.f32 %v4178, 0.008332121
        %v4180 = vmul.f32 %v4177, %v4179
        %v4181 = vadd.f32 %v4180, -0.16666654
        %v4182 = vmul.f32 %v4177, %v4181
        %v4183 = vadd.f32 %v4182, 1.0
        %v4184 = vmul.f32 %v4183, %v4168
        %vm4185 = vweird.f32 %v3102
        %v4186 = vadd.s32 %v4169, 3
        %v4187 = vand.u32 %v4186, 3
        %vm4188 = vcmp.lt.s32.totalorder %v4187, 2
        %vm4189 = vcmp.eq.s32.totalorder %v4187, 0
        %v4190 = vxor.u32 %v4184, 2147483648
        %v4191 = vsel %vm4189, %v4176, %v4190
        %vm4192 = vcmp.eq.s32.totalorder %v4187, 2
        %v4193 = vxor.u32 %v4176, 2147483648
        %v4194 = vsel %vm4192, %v4193, %v4184
        %v4195 = vsel %vm4188, %v4191, %v4194
        %v4196 = vsel %vm4185, nan, %v4195
        %v4197 = vand.u32 2147483647, %v3103
        %vm4198 = vcmp.le.f32.partialorder %v4197, 0.7853982
        %vm4199 = vcmp.lt.s32.totalorder %v3103, 0
        %v4200 = vand.u32 %v3103, 2139095040
        %v4201 = vshrl.u32 %v4200, 23
        %v4202 = vsub.s32 %v4201, 127
        %v4203 = vand.u32 2147483647, %v3103
        %v4204 = vand.u32 %v4203, 8388607
        %v4205 = vor.u32 %v4204, 8388608
        %v4206 = vsub.s32 0, %v4205
        %v4207 = vadd.s32 %v4202, 1
        %vm4208 = vcmp.gt.s32.totalorder %v4207, 0
        %v4209 = vsel %vm4208, %v4207, 0
        %v4210 = vshrl.u32 %v4209, 5
        %v4211 = vand.u32 %v4209, 31
        %v4212 = vsub.s32 32, %v4211
        %v4213 = vshrl.u32 683565275, %v4212
        %v4214 = vshll.u32 683565275, %v4211
        %v4215 = vshrl.u32 2475754826, %v4212
        %v4216 = vor.u32 %v4214, %v4215
        %v4217 = vshll.u32 2475754826, %v4211
        %v4218 = vshrl.u32 2131351028, %v4212
        %v4219 = vor.u32 %v4217, %v4218
        %v4220 = vshll.u32 2131351028, %v4211
        %v4221 = vshrl.u32 2102212464, %v4212
        %v4222 = vor.u32 %v4220, %v4221
        %v4223 = vshll.u32 2102212464, %v4211
        %v4224 = vshrl.u32 920167782, %v4212
        %v4225 = vor.u32 %v4223, %v4224
        %v4226 = vshll.u32 920167782, %v4211
        %v4227 = vshrl.u32 1326507024, %v4212
        %v4228 = vor.u32 %v4226, %v4227
        %vm4229 = vcmp.lt.s32.totalorder %v4210, 1
        %vm4230 = vcmp.lt.s32.totalorder %v4210, 2
        %vm4231 = vcmp.lt.s32.totalorder %v4210, 3
        %vm4232 = vcmp.lt.s32.totalorder %v4210, 4
        %v4233 = vsel %vm4229, %v4213, %v4216
        %v4234 = vsel %vm4232, %v4222, 2102212464
        %v4235 = vsel %vm4231, %v4219, %v4234
        %v4236 = vsel %vm4230, %v4233, %v4235
        %v4237 = vsel %vm4229, %v4216, %v4219
        %v4238 = vsel %vm4232, %v4225, 920167782
        %v4239 = vsel %vm4231, %v4222, %v4238
        %v4240 = vsel %vm4230, %v4237, %v4239
        %v4241 = vsel %vm4229, %v4219, %v4222
        %v4242 = vsel %vm4232, %v4228, 1326507024
        %v4243 = vsel %vm4231, %v4225, %v4242
        %v4244 = vsel %vm4230, %v4241, %v4243
        %v4245 = vshll.u32 %v4205, 8
        %v4246 = vand.u32 %v4245, 65535
        %v4247 = vshrl.u32 %v4245, 16
        %v4248 = vand.u32 %v4244, 65535
        %v4249 = vshrl.u32 %v4244, 16
        %v4250 = vmul.u32 %v4246, %v4248
        %v4251 = vmul.u32 %v4246, %v4249
        %v4252 = vmul.u32 %v4247, %v4248
        %v4253 = vmul.u32 %v4247, %v4249
        %v4254 = vshll.u32 %v4251, 16
        %v4255 = vshrl.u32 %v4251, 16
        %v4256 = vshll.u32 %v4252, 16
        %v4257 = vshrl.u32 %v4252, 16
        %vm4258 = vc.u32 %v4250, %v4254
        %v4259 = vsel %vm4258, 1, 0
        %v4260 = vadd.s32 %v4250, %v4254
        %v4261 = vadd.s32 %v4253, %v4259
        %vm4262 = vc.u32 %v4260, %v4256
        %v4263 = vsel %vm4262, 1, 0
        %v4264 = vadd.s32 %v4260, %v4256
        %v4265 = vadd.s32 %v4261, %v4263
        %v4266 = vadd.s32 %v4265, %v4255
        %v4267 = vadd.s32 %v4266, %v4257
        %v4268 = vand.u32 %v4245, 65535
        %v4269 = vshrl.u32 %v4245, 16
        %v4270 = vand.u32 %v4240, 65535
        %v4271 = vshrl.u32 %v4240, 16
        %v4272 = vmul.u32 %v4268, %v4270
        %v4273 = vmul.u32 %v4268, %v4271
        %v4274 = vmul.u32 %v4269, %v4270
        %v4275 = vmul.u32 %v4269, %v4271
        %v4276 = vshll.u32 %v4273, 16
        %v4277 = vshrl.u32 %v4273, 16
        %v4278 = vshll.u32 %v4274, 16
        %v4279 = vshrl.u32 %v4274, 16
        %vm4280 = vc.u32 %v4272, %v4276
        %v4281 = vsel %vm4280, 1, 0
        %v4282 = vadd.s32 %v4272, %v4276
        %v4283 = vadd.s32 %v4275, %v4281
        %vm4284 = vc.u32 %v4282, %v4278
        %v4285 = vsel %vm4284, 1, 0
        %v4286 = vadd.s32 %v4282, %v4278
        %v4287 = vadd.s32 %v4283, %v4285
        %v4288 = vadd.s32 %v4287, %v4277
        %v4289 = vadd.s32 %v4288, %v4279
        %v4290 = vmul.u32 %v4245, %v4236
        %v4291 = vadd.s32 %v4267, %v4286
        %vm4292 = vc.u32 %v4267, %v4286
        %v4293 = vadd.s32 %v4289, 1
        %v4294 = vsel %vm4292, %v4293, %v4289
        %v4295 = vadd.s32 %v4290, %v4294
        %v4296 = vadd.s32 %v4295, 536870912
        %v4297 = vshrl.u32 %v4296, 30
        %v4298 = vshll.u32 %v4297, 30
        %v4299 = vsub.s32 %v4295, %v4298
        %vm4300 = vcmp.lt.s32.totalorder %v4299, 0
        %v4301 = vsub.s32 0, %v4299
        %v4302 = vsel %vm4300, %v4301, %v4299
        %v4303 = vclz %v4302
        %v4304 = vsub.s32 %v4303, 2
        %vm4305 = vcmp.gt.s32.totalorder 0, %v4304
        %v4306 = vsel %vm4305, 0, %v4304
        %v4307 = vsub.s32 32, %v4306
        %v4308 = vshll.u32 %v4299, %v4306
        %v4309 = vshrl.u32 %v4291, %v4307
        %v4310 = vor.u32 %v4308, %v4309
        %v4311 = vsub.s32 4294967266, %v4306
        %v4312 = vadd.s32 %v4311, 127
        %v4313 = vshll.u32 %v4312, 23
        %v4314 = vor.u32 4788187, %v4313
        %v4315 = vand.u32 2147483647, %v4314
        %v4317 = vcvt.s32.f32 %v4310
        %v4318 = vmul.f32 %v4317, %v4315
        %v4319 = vxor.u32 %v4318, 2147483648
        %v4320 = vsel %vm4199, %v4319, %v4318
        %v4321 = vsub.s32 4, %v4297
        %v4322 = vsel %vm4199, %v4321, %v4297
        %v4323 = vsel %vm4198, %v3103, %v4320
        %v4324 = vsel %vm4198, 0, %v4322
        %v4325 = vmul.f32 %v4323, %v4323
        %v4326 = vmul.f32 %v4325, -0.001358992
        %v4327 = vadd.f32 %v4326, 0.041655596
        %v4328 = vmul.f32 %v4325, %v4327
        %v4329 = vadd.f32 %v4328, -0.4999988
        %v4330 = vmul.f32 %v4325, %v4329
        %v4331 = vadd.f32 1.0, %v4330
        %v4332 = vmul.f32 %v4323, %v4323
        %v4333 = vmul.f32 %v4332, -0.00019511016
        %v4334 = vadd.f32 %v4333, 0.008332121
        %v4335 = vmul.f32 %v4332, %v4334
        %v4336 = vadd.f32 %v4335, -0.16666654
        %v4337 = vmul.f32 %v4332, %v4336
        %v4338 = vadd.f32 %v4337, 1.0
        %v4339 = vmul.f32 %v4338, %v4323
        %vm4340 = vweird.f32 %v3103
        %v4341 = vadd.s32 %v4324, 3
        %v4342 = vand.u32 %v4341, 3
        %vm4343 = vcmp.lt.s32.totalorder %v4342, 2
        %vm4344 = vcmp.eq.s32.totalorder %v4342, 0
        %v4345 = vxor.u32 %v4339, 2147483648
        %v4346 = vsel %vm4344, %v4331, %v4345
        %vm4347 = vcmp.eq.s32.totalorder %v4342, 2
        %v4348 = vxor.u32 %v4331, 2147483648
        %v4349 = vsel %vm4347, %v4348, %v4339
        %v4350 = vsel %vm4343, %v4346, %v4349
        %v4351 = vsel %vm4340, nan, %v4350
        %v4352 = vand.u32 2147483647, %v3104
        %vm4353 = vcmp.le.f32.partialorder %v4352, 0.7853982
        %vm4354 = vcmp.lt.s32.totalorder %v3104, 0
        %v4355 = vand.u32 %v3104, 2139095040
        %v4356 = vshrl.u32 %v4355, 23
        %v4357 = vsub.s32 %v4356, 127
        %v4358 = vand.u32 2147483647, %v3104
        %v4359 = vand.u32 %v4358, 8388607
        %v4360 = vor.u32 %v4359, 8388608
        %v4361 = vsub.s32 0, %v4360
        %v4362 = vadd.s32 %v4357, 1
        %vm4363 = vcmp.gt.s32.totalorder %v4362, 0
        %v4364 = vsel %vm4363, %v4362, 0
        %v4365 = vshrl.u32 %v4364, 5
        %v4366 = vand.u32 %v4364, 31
        %v4367 = vsub.s32 32, %v4366
        %v4368 = vshrl.u32 683565275, %v4367
        %v4369 = vshll.u32 683565275, %v4366
        %v4370 = vshrl.u32 2475754826, %v4367
        %v4371 = vor.u32 %v4369, %v4370
        %v4372 = vshll.u32 2475754826, %v4366
        %v4373 = vshrl.u32 2131351028, %v4367
        %v4374 = vor.u32 %v4372, %v4373
        %v4375 = vshll.u32 2131351028, %v4366
        %v4376 = vshrl.u32 2102212464, %v4367
        %v4377 = vor.u32 %v4375, %v4376
        %v4378 = vshll.u32 2102212464, %v4366
        %v4379 = vshrl.u32 920167782, %v4367
        %v4380 = vor.u32 %v4378, %v4379
        %v4381 = vshll.u32 920167782, %v4366
        %v4382 = vshrl.u32 1326507024, %v4367
        %v4383 = vor.u32 %v4381, %v4382
        %vm4384 = vcmp.lt.s32.totalorder %v4365, 1
        %vm4385 = vcmp.lt.s32.totalorder %v4365, 2
        %vm4386 = vcmp.lt.s32.totalorder %v4365, 3
        %vm4387 = vcmp.lt.s32.totalorder %v4365, 4
        %v4388 = vsel %vm4384, %v4368, %v4371
        %v4389 = vsel %vm4387, %v4377, 2102212464
        %v4390 = vsel %vm4386, %v4374, %v4389
        %v4391 = vsel %vm4385, %v4388, %v4390
        %v4392 = vsel %vm4384, %v4371, %v4374
        %v4393 = vsel %vm4387, %v4380, 920167782
        %v4394 = vsel %vm4386, %v4377, %v4393
        %v4395 = vsel %vm4385, %v4392, %v4394
        %v4396 = vsel %vm4384, %v4374, %v4377
        %v4397 = vsel %vm4387, %v4383, 1326507024
        %v4398 = vsel %vm4386, %v4380, %v4397
        %v4399 = vsel %vm4385, %v4396, %v4398
        %v4400 = vshll.u32 %v4360, 8
        %v4401 = vand.u32 %v4400, 65535
        %v4402 = vshrl.u32 %v4400, 16
        %v4403 = vand.u32 %v4399, 65535
        %v4404 = vshrl.u32 %v4399, 16
        %v4405 = vmul.u32 %v4401, %v4403
        %v4406 = vmul.u32 %v4401, %v4404
        %v4407 = vmul.u32 %v4402, %v4403
        %v4408 = vmul.u32 %v4402, %v4404
        %v4409 = vshll.u32 %v4406, 16
        %v4410 = vshrl.u32 %v4406, 16
        %v4411 = vshll.u32 %v4407, 16
        %v4412 = vshrl.u32 %v4407, 16
        %vm4413 = vc.u32 %v4405, %v4409
        %v4414 = vsel %vm4413, 1, 0
        %v4415 = vadd.s32 %v4405, %v4409
        %v4416 = vadd.s32 %v4408, %v4414
        %vm4417 = vc.u32 %v4415, %v4411
        %v4418 = vsel %vm4417, 1, 0
        %v4419 = vadd.s32 %v4415, %v4411
        %v4420 = vadd.s32 %v4416, %v4418
        %v4421 = vadd.s32 %v4420, %v4410
        %v4422 = vadd.s32 %v4421, %v4412
        %v4423 = vand.u32 %v4400, 65535
        %v4424 = vshrl.u32 %v4400, 16
        %v4425 = vand.u32 %v4395, 65535
        %v4426 = vshrl.u32 %v4395, 16
        %v4427 = vmul.u32 %v4423, %v4425
        %v4428 = vmul.u32 %v4423, %v4426
        %v4429 = vmul.u32 %v4424, %v4425
        %v4430 = vmul.u32 %v4424, %v4426
        %v4431 = vshll.u32 %v4428, 16
        %v4432 = vshrl.u32 %v4428, 16
        %v4433 = vshll.u32 %v4429, 16
        %v4434 = vshrl.u32 %v4429, 16
        %vm4435 = vc.u32 %v4427, %v4431
        %v4436 = vsel %vm4435, 1, 0
        %v4437 = vadd.s32 %v4427, %v4431
        %v4438 = vadd.s32 %v4430, %v4436
        %vm4439 = vc.u32 %v4437, %v4433
        %v4440 = vsel %vm4439, 1, 0
        %v4441 = vadd.s32 %v4437, %v4433
        %v4442 = vadd.s32 %v4438, %v4440
        %v4443 = vadd.s32 %v4442, %v4432
        %v4444 = vadd.s32 %v4443, %v4434
        %v4445 = vmul.u32 %v4400, %v4391
        %v4446 = vadd.s32 %v4422, %v4441
        %vm4447 = vc.u32 %v4422, %v4441
        %v4448 = vadd.s32 %v4444, 1
        %v4449 = vsel %vm4447, %v4448, %v4444
        %v4450 = vadd.s32 %v4445, %v4449
        %v4451 = vadd.s32 %v4450, 536870912
        %v4452 = vshrl.u32 %v4451, 30
        %v4453 = vshll.u32 %v4452, 30
        %v4454 = vsub.s32 %v4450, %v4453
        %vm4455 = vcmp.lt.s32.totalorder %v4454, 0
        %v4456 = vsub.s32 0, %v4454
        %v4457 = vsel %vm4455, %v4456, %v4454
        %v4458 = vclz %v4457
        %v4459 = vsub.s32 %v4458, 2
        %vm4460 = vcmp.gt.s32.totalorder 0, %v4459
        %v4461 = vsel %vm4460, 0, %v4459
        %v4462 = vsub.s32 32, %v4461
        %v4463 = vshll.u32 %v4454, %v4461
        %v4464 = vshrl.u32 %v4446, %v4462
        %v4465 = vor.u32 %v4463, %v4464
        %v4466 = vsub.s32 4294967266, %v4461
        %v4467 = vadd.s32 %v4466, 127
        %v4468 = vshll.u32 %v4467, 23
        %v4469 = vor.u32 4788187, %v4468
        %v4470 = vand.u32 2147483647, %v4469
        %v4472 = vcvt.s32.f32 %v4465
        %v4473 = vmul.f32 %v4472, %v4470
        %v4474 = vxor.u32 %v4473, 2147483648
        %v4475 = vsel %vm4354, %v4474, %v4473
        %v4476 = vsub.s32 4, %v4452
        %v4477 = vsel %vm4354, %v4476, %v4452
        %v4478 = vsel %vm4353, %v3104, %v4475
        %v4479 = vsel %vm4353, 0, %v4477
        %v4480 = vmul.f32 %v4478, %v4478
        %v4481 = vmul.f32 %v4480, -0.001358992
        %v4482 = vadd.f32 %v4481, 0.041655596
        %v4483 = vmul.f32 %v4480, %v4482
        %v4484 = vadd.f32 %v4483, -0.4999988
        %v4485 = vmul.f32 %v4480, %v4484
        %v4486 = vadd.f32 1.0, %v4485
        %v4487 = vmul.f32 %v4478, %v4478
        %v4488 = vmul.f32 %v4487, -0.00019511016
        %v4489 = vadd.f32 %v4488, 0.008332121
        %v4490 = vmul.f32 %v4487, %v4489
        %v4491 = vadd.f32 %v4490, -0.16666654
        %v4492 = vmul.f32 %v4487, %v4491
        %v4493 = vadd.f32 %v4492, 1.0
        %v4494 = vmul.f32 %v4493, %v4478
        %vm4495 = vweird.f32 %v3104
        %v4496 = vadd.s32 %v4479, 3
        %v4497 = vand.u32 %v4496, 3
        %vm4498 = vcmp.lt.s32.totalorder %v4497, 2
        %vm4499 = vcmp.eq.s32.totalorder %v4497, 0
        %v4500 = vxor.u32 %v4494, 2147483648
        %v4501 = vsel %vm4499, %v4486, %v4500
        %vm4502 = vcmp.eq.s32.totalorder %v4497, 2
        %v4503 = vxor.u32 %v4486, 2147483648
        %v4504 = vsel %vm4502, %v4503, %v4494
        %v4505 = vsel %vm4498, %v4501, %v4504
        %v4506 = vsel %vm4495, nan, %v4505
        %v4507 = vand.u32 2147483647, %v3105
        %vm4508 = vcmp.le.f32.partialorder %v4507, 0.7853982
        %vm4509 = vcmp.lt.s32.totalorder %v3105, 0
        %v4510 = vand.u32 %v3105, 2139095040
        %v4511 = vshrl.u32 %v4510, 23
        %v4512 = vsub.s32 %v4511, 127
        %v4513 = vand.u32 2147483647, %v3105
        %v4514 = vand.u32 %v4513, 8388607
        %v4515 = vor.u32 %v4514, 8388608
        %v4516 = vsub.s32 0, %v4515
        %v4517 = vadd.s32 %v4512, 1
        %vm4518 = vcmp.gt.s32.totalorder %v4517, 0
        %v4519 = vsel %vm4518, %v4517, 0
        %v4520 = vshrl.u32 %v4519, 5
        %v4521 = vand.u32 %v4519, 31
        %v4522 = vsub.s32 32, %v4521
        %v4523 = vshrl.u32 683565275, %v4522
        %v4524 = vshll.u32 683565275, %v4521
        %v4525 = vshrl.u32 2475754826, %v4522
        %v4526 = vor.u32 %v4524, %v4525
        %v4527 = vshll.u32 2475754826, %v4521
        %v4528 = vshrl.u32 2131351028, %v4522
        %v4529 = vor.u32 %v4527, %v4528
        %v4530 = vshll.u32 2131351028, %v4521
        %v4531 = vshrl.u32 2102212464, %v4522
        %v4532 = vor.u32 %v4530, %v4531
        %v4533 = vshll.u32 2102212464, %v4521
        %v4534 = vshrl.u32 920167782, %v4522
        %v4535 = vor.u32 %v4533, %v4534
        %v4536 = vshll.u32 920167782, %v4521
        %v4537 = vshrl.u32 1326507024, %v4522
        %v4538 = vor.u32 %v4536, %v4537
        %vm4539 = vcmp.lt.s32.totalorder %v4520, 1
        %vm4540 = vcmp.lt.s32.totalorder %v4520, 2
        %vm4541 = vcmp.lt.s32.totalorder %v4520, 3
        %vm4542 = vcmp.lt.s32.totalorder %v4520, 4
        %v4543 = vsel %vm4539, %v4523, %v4526
        %v4544 = vsel %vm4542, %v4532, 2102212464
        %v4545 = vsel %vm4541, %v4529, %v4544
        %v4546 = vsel %vm4540, %v4543, %v4545
        %v4547 = vsel %vm4539, %v4526, %v4529
        %v4548 = vsel %vm4542, %v4535, 920167782
        %v4549 = vsel %vm4541, %v4532, %v4548
        %v4550 = vsel %vm4540, %v4547, %v4549
        %v4551 = vsel %vm4539, %v4529, %v4532
        %v4552 = vsel %vm4542, %v4538, 1326507024
        %v4553 = vsel %vm4541, %v4535, %v4552
        %v4554 = vsel %vm4540, %v4551, %v4553
        %v4555 = vshll.u32 %v4515, 8
        %v4556 = vand.u32 %v4555, 65535
        %v4557 = vshrl.u32 %v4555, 16
        %v4558 = vand.u32 %v4554, 65535
        %v4559 = vshrl.u32 %v4554, 16
        %v4560 = vmul.u32 %v4556, %v4558
        %v4561 = vmul.u32 %v4556, %v4559
        %v4562 = vmul.u32 %v4557, %v4558
        %v4563 = vmul.u32 %v4557, %v4559
        %v4564 = vshll.u32 %v4561, 16
        %v4565 = vshrl.u32 %v4561, 16
        %v4566 = vshll.u32 %v4562, 16
        %v4567 = vshrl.u32 %v4562, 16
        %vm4568 = vc.u32 %v4560, %v4564
        %v4569 = vsel %vm4568, 1, 0
        %v4570 = vadd.s32 %v4560, %v4564
        %v4571 = vadd.s32 %v4563, %v4569
        %vm4572 = vc.u32 %v4570, %v4566
        %v4573 = vsel %vm4572, 1, 0
        %v4574 = vadd.s32 %v4570, %v4566
        %v4575 = vadd.s32 %v4571, %v4573
        %v4576 = vadd.s32 %v4575, %v4565
        %v4577 = vadd.s32 %v4576, %v4567
        %v4578 = vand.u32 %v4555, 65535
        %v4579 = vshrl.u32 %v4555, 16
        %v4580 = vand.u32 %v4550, 65535
        %v4581 = vshrl.u32 %v4550, 16
        %v4582 = vmul.u32 %v4578, %v4580
        %v4583 = vmul.u32 %v4578, %v4581
        %v4584 = vmul.u32 %v4579, %v4580
        %v4585 = vmul.u32 %v4579, %v4581
        %v4586 = vshll.u32 %v4583, 16
        %v4587 = vshrl.u32 %v4583, 16
        %v4588 = vshll.u32 %v4584, 16
        %v4589 = vshrl.u32 %v4584, 16
        %vm4590 = vc.u32 %v4582, %v4586
        %v4591 = vsel %vm4590, 1, 0
        %v4592 = vadd.s32 %v4582, %v4586
        %v4593 = vadd.s32 %v4585, %v4591
        %vm4594 = vc.u32 %v4592, %v4588
        %v4595 = vsel %vm4594, 1, 0
        %v4596 = vadd.s32 %v4592, %v4588
        %v4597 = vadd.s32 %v4593, %v4595
        %v4598 = vadd.s32 %v4597, %v4587
        %v4599 = vadd.s32 %v4598, %v4589
        %v4600 = vmul.u32 %v4555, %v4546
        %v4601 = vadd.s32 %v4577, %v4596
        %vm4602 = vc.u32 %v4577, %v4596
        %v4603 = vadd.s32 %v4599, 1
        %v4604 = vsel %vm4602, %v4603, %v4599
        %v4605 = vadd.s32 %v4600, %v4604
        %v4606 = vadd.s32 %v4605, 536870912
        %v4607 = vshrl.u32 %v4606, 30
        %v4608 = vshll.u32 %v4607, 30
        %v4609 = vsub.s32 %v4605, %v4608
        %vm4610 = vcmp.lt.s32.totalorder %v4609, 0
        %v4611 = vsub.s32 0, %v4609
        %v4612 = vsel %vm4610, %v4611, %v4609
        %v4613 = vclz %v4612
        %v4614 = vsub.s32 %v4613, 2
        %vm4615 = vcmp.gt.s32.totalorder 0, %v4614
        %v4616 = vsel %vm4615, 0, %v4614
        %v4617 = vsub.s32 32, %v4616
        %v4618 = vshll.u32 %v4609, %v4616
        %v4619 = vshrl.u32 %v4601, %v4617
        %v4620 = vor.u32 %v4618, %v4619
        %v4621 = vsub.s32 4294967266, %v4616
        %v4622 = vadd.s32 %v4621, 127
        %v4623 = vshll.u32 %v4622, 23
        %v4624 = vor.u32 4788187, %v4623
        %v4625 = vand.u32 2147483647, %v4624
        %v4627 = vcvt.s32.f32 %v4620
        %v4628 = vmul.f32 %v4627, %v4625
        %v4629 = vxor.u32 %v4628, 2147483648
        %v4630 = vsel %vm4509, %v4629, %v4628
        %v4631 = vsub.s32 4, %v4607
        %v4632 = vsel %vm4509, %v4631, %v4607
        %v4633 = vsel %vm4508, %v3105, %v4630
        %v4634 = vsel %vm4508, 0, %v4632
        %v4635 = vmul.f32 %v4633, %v4633
        %v4636 = vmul.f32 %v4635, -0.001358992
        %v4637 = vadd.f32 %v4636, 0.041655596
        %v4638 = vmul.f32 %v4635, %v4637
        %v4639 = vadd.f32 %v4638, -0.4999988
        %v4640 = vmul.f32 %v4635, %v4639
        %v4641 = vadd.f32 1.0, %v4640
        %v4642 = vmul.f32 %v4633, %v4633
        %v4643 = vmul.f32 %v4642, -0.00019511016
        %v4644 = vadd.f32 %v4643, 0.008332121
        %v4645 = vmul.f32 %v4642, %v4644
        %v4646 = vadd.f32 %v4645, -0.16666654
        %v4647 = vmul.f32 %v4642, %v4646
        %v4648 = vadd.f32 %v4647, 1.0
        %v4649 = vmul.f32 %v4648, %v4633
        %vm4650 = vweird.f32 %v3105
        %v4651 = vadd.s32 %v4634, 3
        %v4652 = vand.u32 %v4651, 3
        %vm4653 = vcmp.lt.s32.totalorder %v4652, 2
        %vm4654 = vcmp.eq.s32.totalorder %v4652, 0
        %v4655 = vxor.u32 %v4649, 2147483648
        %v4656 = vsel %vm4654, %v4641, %v4655
        %vm4657 = vcmp.eq.s32.totalorder %v4652, 2
        %v4658 = vxor.u32 %v4641, 2147483648
        %v4659 = vsel %vm4657, %v4658, %v4649
        %v4660 = vsel %vm4653, %v4656, %v4659
        %v4661 = vsel %vm4650, nan, %v4660
        %v4662 = vand.u32 2147483647, %v3106
        %vm4663 = vcmp.le.f32.partialorder %v4662, 0.7853982
        %vm4664 = vcmp.lt.s32.totalorder %v3106, 0
        %v4665 = vand.u32 %v3106, 2139095040
        %v4666 = vshrl.u32 %v4665, 23
        %v4667 = vsub.s32 %v4666, 127
        %v4668 = vand.u32 2147483647, %v3106
        %v4669 = vand.u32 %v4668, 8388607
        %v4670 = vor.u32 %v4669, 8388608
        %v4671 = vsub.s32 0, %v4670
        %v4672 = vadd.s32 %v4667, 1
        %vm4673 = vcmp.gt.s32.totalorder %v4672, 0
        %v4674 = vsel %vm4673, %v4672, 0
        %v4675 = vshrl.u32 %v4674, 5
        %v4676 = vand.u32 %v4674, 31
        %v4677 = vsub.s32 32, %v4676
        %v4678 = vshrl.u32 683565275, %v4677
        %v4679 = vshll.u32 683565275, %v4676
        %v4680 = vshrl.u32 2475754826, %v4677
        %v4681 = vor.u32 %v4679, %v4680
        %v4682 = vshll.u32 2475754826, %v4676
        %v4683 = vshrl.u32 2131351028, %v4677
        %v4684 = vor.u32 %v4682, %v4683
        %v4685 = vshll.u32 2131351028, %v4676
        %v4686 = vshrl.u32 2102212464, %v4677
        %v4687 = vor.u32 %v4685, %v4686
        %v4688 = vshll.u32 2102212464, %v4676
        %v4689 = vshrl.u32 920167782, %v4677
        %v4690 = vor.u32 %v4688, %v4689
        %v4691 = vshll.u32 920167782, %v4676
        %v4692 = vshrl.u32 1326507024, %v4677
        %v4693 = vor.u32 %v4691, %v4692
        %vm4694 = vcmp.lt.s32.totalorder %v4675, 1
        %vm4695 = vcmp.lt.s32.totalorder %v4675, 2
        %vm4696 = vcmp.lt.s32.totalorder %v4675, 3
        %vm4697 = vcmp.lt.s32.totalorder %v4675, 4
        %v4698 = vsel %vm4694, %v4678, %v4681
        %v4699 = vsel %vm4697, %v4687, 2102212464
        %v4700 = vsel %vm4696, %v4684, %v4699
        %v4701 = vsel %vm4695, %v4698, %v4700
        %v4702 = vsel %vm4694, %v4681, %v4684
        %v4703 = vsel %vm4697, %v4690, 920167782
        %v4704 = vsel %vm4696, %v4687, %v4703
        %v4705 = vsel %vm4695, %v4702, %v4704
        %v4706 = vsel %vm4694, %v4684, %v4687
        %v4707 = vsel %vm4697, %v4693, 1326507024
        %v4708 = vsel %vm4696, %v4690, %v4707
        %v4709 = vsel %vm4695, %v4706, %v4708
        %v4710 = vshll.u32 %v4670, 8
        %v4711 = vand.u32 %v4710, 65535
        %v4712 = vshrl.u32 %v4710, 16
        %v4713 = vand.u32 %v4709, 65535
        %v4714 = vshrl.u32 %v4709, 16
        %v4715 = vmul.u32 %v4711, %v4713
        %v4716 = vmul.u32 %v4711, %v4714
        %v4717 = vmul.u32 %v4712, %v4713
        %v4718 = vmul.u32 %v4712, %v4714
        %v4719 = vshll.u32 %v4716, 16
        %v4720 = vshrl.u32 %v4716, 16
        %v4721 = vshll.u32 %v4717, 16
        %v4722 = vshrl.u32 %v4717, 16
        %vm4723 = vc.u32 %v4715, %v4719
        %v4724 = vsel %vm4723, 1, 0
        %v4725 = vadd.s32 %v4715, %v4719
        %v4726 = vadd.s32 %v4718, %v4724
        %vm4727 = vc.u32 %v4725, %v4721
        %v4728 = vsel %vm4727, 1, 0
        %v4729 = vadd.s32 %v4725, %v4721
        %v4730 = vadd.s32 %v4726, %v4728
        %v4731 = vadd.s32 %v4730, %v4720
        %v4732 = vadd.s32 %v4731, %v4722
        %v4733 = vand.u32 %v4710, 65535
        %v4734 = vshrl.u32 %v4710, 16
        %v4735 = vand.u32 %v4705, 65535
        %v4736 = vshrl.u32 %v4705, 16
        %v4737 = vmul.u32 %v4733, %v4735
        %v4738 = vmul.u32 %v4733, %v4736
        %v4739 = vmul.u32 %v4734, %v4735
        %v4740 = vmul.u32 %v4734, %v4736
        %v4741 = vshll.u32 %v4738, 16
        %v4742 = vshrl.u32 %v4738, 16
        %v4743 = vshll.u32 %v4739, 16
        %v4744 = vshrl.u32 %v4739, 16
        %vm4745 = vc.u32 %v4737, %v4741
        %v4746 = vsel %vm4745, 1, 0
        %v4747 = vadd.s32 %v4737, %v4741
        %v4748 = vadd.s32 %v4740, %v4746
        %vm4749 = vc.u32 %v4747, %v4743
        %v4750 = vsel %vm4749, 1, 0
        %v4751 = vadd.s32 %v4747, %v4743
        %v4752 = vadd.s32 %v4748, %v4750
        %v4753 = vadd.s32 %v4752, %v4742
        %v4754 = vadd.s32 %v4753, %v4744
        %v4755 = vmul.u32 %v4710, %v4701
        %v4756 = vadd.s32 %v4732, %v4751
        %vm4757 = vc.u32 %v4732, %v4751
        %v4758 = vadd.s32 %v4754, 1
        %v4759 = vsel %vm4757, %v4758, %v4754
        %v4760 = vadd.s32 %v4755, %v4759
        %v4761 = vadd.s32 %v4760, 536870912
        %v4762 = vshrl.u32 %v4761, 30
        %v4763 = vshll.u32 %v4762, 30
        %v4764 = vsub.s32 %v4760, %v4763
        %vm4765 = vcmp.lt.s32.totalorder %v4764, 0
        %v4766 = vsub.s32 0, %v4764
        %v4767 = vsel %vm4765, %v4766, %v4764
        %v4768 = vclz %v4767
        %v4769 = vsub.s32 %v4768, 2
        %vm4770 = vcmp.gt.s32.totalorder 0, %v4769
        %v4771 = vsel %vm4770, 0, %v4769
        %v4772 = vsub.s32 32, %v4771
        %v4773 = vshll.u32 %v4764, %v4771
        %v4774 = vshrl.u32 %v4756, %v4772
        %v4775 = vor.u32 %v4773, %v4774
        %v4776 = vsub.s32 4294967266, %v4771
        %v4777 = vadd.s32 %v4776, 127
        %v4778 = vshll.u32 %v4777, 23
        %v4779 = vor.u32 4788187, %v4778
        %v4780 = vand.u32 2147483647, %v4779
        %v4782 = vcvt.s32.f32 %v4775
        %v4783 = vmul.f32 %v4782, %v4780
        %v4784 = vxor.u32 %v4783, 2147483648
        %v4785 = vsel %vm4664, %v4784, %v4783
        %v4786 = vsub.s32 4, %v4762
        %v4787 = vsel %vm4664, %v4786, %v4762
        %v4788 = vsel %vm4663, %v3106, %v4785
        %v4789 = vsel %vm4663, 0, %v4787
        %v4790 = vmul.f32 %v4788, %v4788
        %v4791 = vmul.f32 %v4790, -0.001358992
        %v4792 = vadd.f32 %v4791, 0.041655596
        %v4793 = vmul.f32 %v4790, %v4792
        %v4794 = vadd.f32 %v4793, -0.4999988
        %v4795 = vmul.f32 %v4790, %v4794
        %v4796 = vadd.f32 1.0, %v4795
        %v4797 = vmul.f32 %v4788, %v4788
        %v4798 = vmul.f32 %v4797, -0.00019511016
        %v4799 = vadd.f32 %v4798, 0.008332121
        %v4800 = vmul.f32 %v4797, %v4799
        %v4801 = vadd.f32 %v4800, -0.16666654
        %v4802 = vmul.f32 %v4797, %v4801
        %v4803 = vadd.f32 %v4802, 1.0
        %v4804 = vmul.f32 %v4803, %v4788
        %vm4805 = vweird.f32 %v3106
        %v4806 = vadd.s32 %v4789, 3
        %v4807 = vand.u32 %v4806, 3
        %vm4808 = vcmp.lt.s32.totalorder %v4807, 2
        %vm4809 = vcmp.eq.s32.totalorder %v4807, 0
        %v4810 = vxor.u32 %v4804, 2147483648
        %v4811 = vsel %vm4809, %v4796, %v4810
        %vm4812 = vcmp.eq.s32.totalorder %v4807, 2
        %v4813 = vxor.u32 %v4796, 2147483648
        %v4814 = vsel %vm4812, %v4813, %v4804
        %v4815 = vsel %vm4808, %v4811, %v4814
        %v4816 = vsel %vm4805, nan, %v4815
        %v4817 = vand.u32 2147483647, %v3107
        %vm4818 = vcmp.le.f32.partialorder %v4817, 0.7853982
        %vm4819 = vcmp.lt.s32.totalorder %v3107, 0
        %v4820 = vand.u32 %v3107, 2139095040
        %v4821 = vshrl.u32 %v4820, 23
        %v4822 = vsub.s32 %v4821, 127
        %v4823 = vand.u32 2147483647, %v3107
        %v4824 = vand.u32 %v4823, 8388607
        %v4825 = vor.u32 %v4824, 8388608
        %v4826 = vsub.s32 0, %v4825
        %v4827 = vadd.s32 %v4822, 1
        %vm4828 = vcmp.gt.s32.totalorder %v4827, 0
        %v4829 = vsel %vm4828, %v4827, 0
        %v4830 = vshrl.u32 %v4829, 5
        %v4831 = vand.u32 %v4829, 31
        %v4832 = vsub.s32 32, %v4831
        %v4833 = vshrl.u32 683565275, %v4832
        %v4834 = vshll.u32 683565275, %v4831
        %v4835 = vshrl.u32 2475754826, %v4832
        %v4836 = vor.u32 %v4834, %v4835
        %v4837 = vshll.u32 2475754826, %v4831
        %v4838 = vshrl.u32 2131351028, %v4832
        %v4839 = vor.u32 %v4837, %v4838
        %v4840 = vshll.u32 2131351028, %v4831
        %v4841 = vshrl.u32 2102212464, %v4832
        %v4842 = vor.u32 %v4840, %v4841
        %v4843 = vshll.u32 2102212464, %v4831
        %v4844 = vshrl.u32 920167782, %v4832
        %v4845 = vor.u32 %v4843, %v4844
        %v4846 = vshll.u32 920167782, %v4831
        %v4847 = vshrl.u32 1326507024, %v4832
        %v4848 = vor.u32 %v4846, %v4847
        %vm4849 = vcmp.lt.s32.totalorder %v4830, 1
        %vm4850 = vcmp.lt.s32.totalorder %v4830, 2
        %vm4851 = vcmp.lt.s32.totalorder %v4830, 3
        %vm4852 = vcmp.lt.s32.totalorder %v4830, 4
        %v4853 = vsel %vm4849, %v4833, %v4836
        %v4854 = vsel %vm4852, %v4842, 2102212464
        %v4855 = vsel %vm4851, %v4839, %v4854
        %v4856 = vsel %vm4850, %v4853, %v4855
        %v4857 = vsel %vm4849, %v4836, %v4839
        %v4858 = vsel %vm4852, %v4845, 920167782
        %v4859 = vsel %vm4851, %v4842, %v4858
        %v4860 = vsel %vm4850, %v4857, %v4859
        %v4861 = vsel %vm4849, %v4839, %v4842
        %v4862 = vsel %vm4852, %v4848, 1326507024
        %v4863 = vsel %vm4851, %v4845, %v4862
        %v4864 = vsel %vm4850, %v4861, %v4863
        %v4865 = vshll.u32 %v4825, 8
        %v4866 = vand.u32 %v4865, 65535
        %v4867 = vshrl.u32 %v4865, 16
        %v4868 = vand.u32 %v4864, 65535
        %v4869 = vshrl.u32 %v4864, 16
        %v4870 = vmul.u32 %v4866, %v4868
        %v4871 = vmul.u32 %v4866, %v4869
        %v4872 = vmul.u32 %v4867, %v4868
        %v4873 = vmul.u32 %v4867, %v4869
        %v4874 = vshll.u32 %v4871, 16
        %v4875 = vshrl.u32 %v4871, 16
        %v4876 = vshll.u32 %v4872, 16
        %v4877 = vshrl.u32 %v4872, 16
        %vm4878 = vc.u32 %v4870, %v4874
        %v4879 = vsel %vm4878, 1, 0
        %v4880 = vadd.s32 %v4870, %v4874
        %v4881 = vadd.s32 %v4873, %v4879
        %vm4882 = vc.u32 %v4880, %v4876
        %v4883 = vsel %vm4882, 1, 0
        %v4884 = vadd.s32 %v4880, %v4876
        %v4885 = vadd.s32 %v4881, %v4883
        %v4886 = vadd.s32 %v4885, %v4875
        %v4887 = vadd.s32 %v4886, %v4877
        %v4888 = vand.u32 %v4865, 65535
        %v4889 = vshrl.u32 %v4865, 16
        %v4890 = vand.u32 %v4860, 65535
        %v4891 = vshrl.u32 %v4860, 16
        %v4892 = vmul.u32 %v4888, %v4890
        %v4893 = vmul.u32 %v4888, %v4891
        %v4894 = vmul.u32 %v4889, %v4890
        %v4895 = vmul.u32 %v4889, %v4891
        %v4896 = vshll.u32 %v4893, 16
        %v4897 = vshrl.u32 %v4893, 16
        %v4898 = vshll.u32 %v4894, 16
        %v4899 = vshrl.u32 %v4894, 16
        %vm4900 = vc.u32 %v4892, %v4896
        %v4901 = vsel %vm4900, 1, 0
        %v4902 = vadd.s32 %v4892, %v4896
        %v4903 = vadd.s32 %v4895, %v4901
        %vm4904 = vc.u32 %v4902, %v4898
        %v4905 = vsel %vm4904, 1, 0
        %v4906 = vadd.s32 %v4902, %v4898
        %v4907 = vadd.s32 %v4903, %v4905
        %v4908 = vadd.s32 %v4907, %v4897
        %v4909 = vadd.s32 %v4908, %v4899
        %v4910 = vmul.u32 %v4865, %v4856
        %v4911 = vadd.s32 %v4887, %v4906
        %vm4912 = vc.u32 %v4887, %v4906
        %v4913 = vadd.s32 %v4909, 1
        %v4914 = vsel %vm4912, %v4913, %v4909
        %v4915 = vadd.s32 %v4910, %v4914
        %v4916 = vadd.s32 %v4915, 536870912
        %v4917 = vshrl.u32 %v4916, 30
        %v4918 = vshll.u32 %v4917, 30
        %v4919 = vsub.s32 %v4915, %v4918
        %vm4920 = vcmp.lt.s32.totalorder %v4919, 0
        %v4921 = vsub.s32 0, %v4919
        %v4922 = vsel %vm4920, %v4921, %v4919
        %v4923 = vclz %v4922
        %v4924 = vsub.s32 %v4923, 2
        %vm4925 = vcmp.gt.s32.totalorder 0, %v4924
        %v4926 = vsel %vm4925, 0, %v4924
        %v4927 = vsub.s32 32, %v4926
        %v4928 = vshll.u32 %v4919, %v4926
        %v4929 = vshrl.u32 %v4911, %v4927
        %v4930 = vor.u32 %v4928, %v4929
        %v4931 = vsub.s32 4294967266, %v4926
        %v4932 = vadd.s32 %v4931, 127
        %v4933 = vshll.u32 %v4932, 23
        %v4934 = vor.u32 4788187, %v4933
        %v4935 = vand.u32 2147483647, %v4934
        %v4937 = vcvt.s32.f32 %v4930
        %v4938 = vmul.f32 %v4937, %v4935
        %v4939 = vxor.u32 %v4938, 2147483648
        %v4940 = vsel %vm4819, %v4939, %v4938
        %v4941 = vsub.s32 4, %v4917
        %v4942 = vsel %vm4819, %v4941, %v4917
        %v4943 = vsel %vm4818, %v3107, %v4940
        %v4944 = vsel %vm4818, 0, %v4942
        %v4945 = vmul.f32 %v4943, %v4943
        %v4946 = vmul.f32 %v4945, -0.001358992
        %v4947 = vadd.f32 %v4946, 0.041655596
        %v4948 = vmul.f32 %v4945, %v4947
        %v4949 = vadd.f32 %v4948, -0.4999988
        %v4950 = vmul.f32 %v4945, %v4949
        %v4951 = vadd.f32 1.0, %v4950
        %v4952 = vmul.f32 %v4943, %v4943
        %v4953 = vmul.f32 %v4952, -0.00019511016
        %v4954 = vadd.f32 %v4953, 0.008332121
        %v4955 = vmul.f32 %v4952, %v4954
        %v4956 = vadd.f32 %v4955, -0.16666654
        %v4957 = vmul.f32 %v4952, %v4956
        %v4958 = vadd.f32 %v4957, 1.0
        %v4959 = vmul.f32 %v4958, %v4943
        %vm4960 = vweird.f32 %v3107
        %v4961 = vadd.s32 %v4944, 3
        %v4962 = vand.u32 %v4961, 3
        %vm4963 = vcmp.lt.s32.totalorder %v4962, 2
        %vm4964 = vcmp.eq.s32.totalorder %v4962, 0
        %v4965 = vxor.u32 %v4959, 2147483648
        %v4966 = vsel %vm4964, %v4951, %v4965
        %vm4967 = vcmp.eq.s32.totalorder %v4962, 2
        %v4968 = vxor.u32 %v4951, 2147483648
        %v4969 = vsel %vm4967, %v4968, %v4959
        %v4970 = vsel %vm4963, %v4966, %v4969
        %v4971 = vsel %vm4960, nan, %v4970
        %v4972 = vand.u32 2147483647, %v3108
        %vm4973 = vcmp.le.f32.partialorder %v4972, 0.7853982
        %vm4974 = vcmp.lt.s32.totalorder %v3108, 0
        %v4975 = vand.u32 %v3108, 2139095040
        %v4976 = vshrl.u32 %v4975, 23
        %v4977 = vsub.s32 %v4976, 127
        %v4978 = vand.u32 2147483647, %v3108
        %v4979 = vand.u32 %v4978, 8388607
        %v4980 = vor.u32 %v4979, 8388608
        %v4981 = vsub.s32 0, %v4980
        %v4982 = vadd.s32 %v4977, 1
        %vm4983 = vcmp.gt.s32.totalorder %v4982, 0
        %v4984 = vsel %vm4983, %v4982, 0
        %v4985 = vshrl.u32 %v4984, 5
        %v4986 = vand.u32 %v4984, 31
        %v4987 = vsub.s32 32, %v4986
        %v4988 = vshrl.u32 683565275, %v4987
        %v4989 = vshll.u32 683565275, %v4986
        %v4990 = vshrl.u32 2475754826, %v4987
        %v4991 = vor.u32 %v4989, %v4990
        %v4992 = vshll.u32 2475754826, %v4986
        %v4993 = vshrl.u32 2131351028, %v4987
        %v4994 = vor.u32 %v4992, %v4993
        %v4995 = vshll.u32 2131351028, %v4986
        %v4996 = vshrl.u32 2102212464, %v4987
        %v4997 = vor.u32 %v4995, %v4996
        %v4998 = vshll.u32 2102212464, %v4986
        %v4999 = vshrl.u32 920167782, %v4987
        %v5000 = vor.u32 %v4998, %v4999
        %v5001 = vshll.u32 920167782, %v4986
        %v5002 = vshrl.u32 1326507024, %v4987
        %v5003 = vor.u32 %v5001, %v5002
        %vm5004 = vcmp.lt.s32.totalorder %v4985, 1
        %vm5005 = vcmp.lt.s32.totalorder %v4985, 2
        %vm5006 = vcmp.lt.s32.totalorder %v4985, 3
        %vm5007 = vcmp.lt.s32.totalorder %v4985, 4
        %v5008 = vsel %vm5004, %v4988, %v4991
        %v5009 = vsel %vm5007, %v4997, 2102212464
        %v5010 = vsel %vm5006, %v4994, %v5009
        %v5011 = vsel %vm5005, %v5008, %v5010
        %v5012 = vsel %vm5004, %v4991, %v4994
        %v5013 = vsel %vm5007, %v5000, 920167782
        %v5014 = vsel %vm5006, %v4997, %v5013
        %v5015 = vsel %vm5005, %v5012, %v5014
        %v5016 = vsel %vm5004, %v4994, %v4997
        %v5017 = vsel %vm5007, %v5003, 1326507024
        %v5018 = vsel %vm5006, %v5000, %v5017
        %v5019 = vsel %vm5005, %v5016, %v5018
        %v5020 = vshll.u32 %v4980, 8
        %v5021 = vand.u32 %v5020, 65535
        %v5022 = vshrl.u32 %v5020, 16
        %v5023 = vand.u32 %v5019, 65535
        %v5024 = vshrl.u32 %v5019, 16
        %v5025 = vmul.u32 %v5021, %v5023
        %v5026 = vmul.u32 %v5021, %v5024
        %v5027 = vmul.u32 %v5022, %v5023
        %v5028 = vmul.u32 %v5022, %v5024
        %v5029 = vshll.u32 %v5026, 16
        %v5030 = vshrl.u32 %v5026, 16
        %v5031 = vshll.u32 %v5027, 16
        %v5032 = vshrl.u32 %v5027, 16
        %vm5033 = vc.u32 %v5025, %v5029
        %v5034 = vsel %vm5033, 1, 0
        %v5035 = vadd.s32 %v5025, %v5029
        %v5036 = vadd.s32 %v5028, %v5034
        %vm5037 = vc.u32 %v5035, %v5031
        %v5038 = vsel %vm5037, 1, 0
        %v5039 = vadd.s32 %v5035, %v5031
        %v5040 = vadd.s32 %v5036, %v5038
        %v5041 = vadd.s32 %v5040, %v5030
        %v5042 = vadd.s32 %v5041, %v5032
        %v5043 = vand.u32 %v5020, 65535
        %v5044 = vshrl.u32 %v5020, 16
        %v5045 = vand.u32 %v5015, 65535
        %v5046 = vshrl.u32 %v5015, 16
        %v5047 = vmul.u32 %v5043, %v5045
        %v5048 = vmul.u32 %v5043, %v5046
        %v5049 = vmul.u32 %v5044, %v5045
        %v5050 = vmul.u32 %v5044, %v5046
        %v5051 = vshll.u32 %v5048, 16
        %v5052 = vshrl.u32 %v5048, 16
        %v5053 = vshll.u32 %v5049, 16
        %v5054 = vshrl.u32 %v5049, 16
        %vm5055 = vc.u32 %v5047, %v5051
        %v5056 = vsel %vm5055, 1, 0
        %v5057 = vadd.s32 %v5047, %v5051
        %v5058 = vadd.s32 %v5050, %v5056
        %vm5059 = vc.u32 %v5057, %v5053
        %v5060 = vsel %vm5059, 1, 0
        %v5061 = vadd.s32 %v5057, %v5053
        %v5062 = vadd.s32 %v5058, %v5060
        %v5063 = vadd.s32 %v5062, %v5052
        %v5064 = vadd.s32 %v5063, %v5054
        %v5065 = vmul.u32 %v5020, %v5011
        %v5066 = vadd.s32 %v5042, %v5061
        %vm5067 = vc.u32 %v5042, %v5061
        %v5068 = vadd.s32 %v5064, 1
        %v5069 = vsel %vm5067, %v5068, %v5064
        %v5070 = vadd.s32 %v5065, %v5069
        %v5071 = vadd.s32 %v5070, 536870912
        %v5072 = vshrl.u32 %v5071, 30
        %v5073 = vshll.u32 %v5072, 30
        %v5074 = vsub.s32 %v5070, %v5073
        %vm5075 = vcmp.lt.s32.totalorder %v5074, 0
        %v5076 = vsub.s32 0, %v5074
        %v5077 = vsel %vm5075, %v5076, %v5074
        %v5078 = vclz %v5077
        %v5079 = vsub.s32 %v5078, 2
        %vm5080 = vcmp.gt.s32.totalorder 0, %v5079
        %v5081 = vsel %vm5080, 0, %v5079
        %v5082 = vsub.s32 32, %v5081
        %v5083 = vshll.u32 %v5074, %v5081
        %v5084 = vshrl.u32 %v5066, %v5082
        %v5085 = vor.u32 %v5083, %v5084
        %v5086 = vsub.s32 4294967266, %v5081
        %v5087 = vadd.s32 %v5086, 127
        %v5088 = vshll.u32 %v5087, 23
        %v5089 = vor.u32 4788187, %v5088
        %v5090 = vand.u32 2147483647, %v5089
        %v5092 = vcvt.s32.f32 %v5085
        %v5093 = vmul.f32 %v5092, %v5090
        %v5094 = vxor.u32 %v5093, 2147483648
        %v5095 = vsel %vm4974, %v5094, %v5093
        %v5096 = vsub.s32 4, %v5072
        %v5097 = vsel %vm4974, %v5096, %v5072
        %v5098 = vsel %vm4973, %v3108, %v5095
        %v5099 = vsel %vm4973, 0, %v5097
        %v5100 = vmul.f32 %v5098, %v5098
        %v5101 = vmul.f32 %v5100, -0.001358992
        %v5102 = vadd.f32 %v5101, 0.041655596
        %v5103 = vmul.f32 %v5100, %v5102
        %v5104 = vadd.f32 %v5103, -0.4999988
        %v5105 = vmul.f32 %v5100, %v5104
        %v5106 = vadd.f32 1.0, %v5105
        %v5107 = vmul.f32 %v5098, %v5098
        %v5108 = vmul.f32 %v5107, -0.00019511016
        %v5109 = vadd.f32 %v5108, 0.008332121
        %v5110 = vmul.f32 %v5107, %v5109
        %v5111 = vadd.f32 %v5110, -0.16666654
        %v5112 = vmul.f32 %v5107, %v5111
        %v5113 = vadd.f32 %v5112, 1.0
        %v5114 = vmul.f32 %v5113, %v5098
        %vm5115 = vweird.f32 %v3108
        %v5116 = vadd.s32 %v5099, 3
        %v5117 = vand.u32 %v5116, 3
        %vm5118 = vcmp.lt.s32.totalorder %v5117, 2
        %vm5119 = vcmp.eq.s32.totalorder %v5117, 0
        %v5120 = vxor.u32 %v5114, 2147483648
        %v5121 = vsel %vm5119, %v5106, %v5120
        %vm5122 = vcmp.eq.s32.totalorder %v5117, 2
        %v5123 = vxor.u32 %v5106, 2147483648
        %v5124 = vsel %vm5122, %v5123, %v5114
        %v5125 = vsel %vm5118, %v5121, %v5124
        %v5126 = vsel %vm5115, nan, %v5125
        %v5127 = vand.u32 2147483647, %v3109
        %vm5128 = vcmp.le.f32.partialorder %v5127, 0.7853982
        %vm5129 = vcmp.lt.s32.totalorder %v3109, 0
        %v5130 = vand.u32 %v3109, 2139095040
        %v5131 = vshrl.u32 %v5130, 23
        %v5132 = vsub.s32 %v5131, 127
        %v5133 = vand.u32 2147483647, %v3109
        %v5134 = vand.u32 %v5133, 8388607
        %v5135 = vor.u32 %v5134, 8388608
        %v5136 = vsub.s32 0, %v5135
        %v5137 = vadd.s32 %v5132, 1
        %vm5138 = vcmp.gt.s32.totalorder %v5137, 0
        %v5139 = vsel %vm5138, %v5137, 0
        %v5140 = vshrl.u32 %v5139, 5
        %v5141 = vand.u32 %v5139, 31
        %v5142 = vsub.s32 32, %v5141
        %v5143 = vshrl.u32 683565275, %v5142
        %v5144 = vshll.u32 683565275, %v5141
        %v5145 = vshrl.u32 2475754826, %v5142
        %v5146 = vor.u32 %v5144, %v5145
        %v5147 = vshll.u32 2475754826, %v5141
        %v5148 = vshrl.u32 2131351028, %v5142
        %v5149 = vor.u32 %v5147, %v5148
        %v5150 = vshll.u32 2131351028, %v5141
        %v5151 = vshrl.u32 2102212464, %v5142
        %v5152 = vor.u32 %v5150, %v5151
        %v5153 = vshll.u32 2102212464, %v5141
        %v5154 = vshrl.u32 920167782, %v5142
        %v5155 = vor.u32 %v5153, %v5154
        %v5156 = vshll.u32 920167782, %v5141
        %v5157 = vshrl.u32 1326507024, %v5142
        %v5158 = vor.u32 %v5156, %v5157
        %vm5159 = vcmp.lt.s32.totalorder %v5140, 1
        %vm5160 = vcmp.lt.s32.totalorder %v5140, 2
        %vm5161 = vcmp.lt.s32.totalorder %v5140, 3
        %vm5162 = vcmp.lt.s32.totalorder %v5140, 4
        %v5163 = vsel %vm5159, %v5143, %v5146
        %v5164 = vsel %vm5162, %v5152, 2102212464
        %v5165 = vsel %vm5161, %v5149, %v5164
        %v5166 = vsel %vm5160, %v5163, %v5165
        %v5167 = vsel %vm5159, %v5146, %v5149
        %v5168 = vsel %vm5162, %v5155, 920167782
        %v5169 = vsel %vm5161, %v5152, %v5168
        %v5170 = vsel %vm5160, %v5167, %v5169
        %v5171 = vsel %vm5159, %v5149, %v5152
        %v5172 = vsel %vm5162, %v5158, 1326507024
        %v5173 = vsel %vm5161, %v5155, %v5172
        %v5174 = vsel %vm5160, %v5171, %v5173
        %v5175 = vshll.u32 %v5135, 8
        %v5176 = vand.u32 %v5175, 65535
        %v5177 = vshrl.u32 %v5175, 16
        %v5178 = vand.u32 %v5174, 65535
        %v5179 = vshrl.u32 %v5174, 16
        %v5180 = vmul.u32 %v5176, %v5178
        %v5181 = vmul.u32 %v5176, %v5179
        %v5182 = vmul.u32 %v5177, %v5178
        %v5183 = vmul.u32 %v5177, %v5179
        %v5184 = vshll.u32 %v5181, 16
        %v5185 = vshrl.u32 %v5181, 16
        %v5186 = vshll.u32 %v5182, 16
        %v5187 = vshrl.u32 %v5182, 16
        %vm5188 = vc.u32 %v5180, %v5184
        %v5189 = vsel %vm5188, 1, 0
        %v5190 = vadd.s32 %v5180, %v5184
        %v5191 = vadd.s32 %v5183, %v5189
        %vm5192 = vc.u32 %v5190, %v5186
        %v5193 = vsel %vm5192, 1, 0
        %v5194 = vadd.s32 %v5190, %v5186
        %v5195 = vadd.s32 %v5191, %v5193
        %v5196 = vadd.s32 %v5195, %v5185
        %v5197 = vadd.s32 %v5196, %v5187
        %v5198 = vand.u32 %v5175, 65535
        %v5199 = vshrl.u32 %v5175, 16
        %v5200 = vand.u32 %v5170, 65535
        %v5201 = vshrl.u32 %v5170, 16
        %v5202 = vmul.u32 %v5198, %v5200
        %v5203 = vmul.u32 %v5198, %v5201
        %v5204 = vmul.u32 %v5199, %v5200
        %v5205 = vmul.u32 %v5199, %v5201
        %v5206 = vshll.u32 %v5203, 16
        %v5207 = vshrl.u32 %v5203, 16
        %v5208 = vshll.u32 %v5204, 16
        %v5209 = vshrl.u32 %v5204, 16
        %vm5210 = vc.u32 %v5202, %v5206
        %v5211 = vsel %vm5210, 1, 0
        %v5212 = vadd.s32 %v5202, %v5206
        %v5213 = vadd.s32 %v5205, %v5211
        %vm5214 = vc.u32 %v5212, %v5208
        %v5215 = vsel %vm5214, 1, 0
        %v5216 = vadd.s32 %v5212, %v5208
        %v5217 = vadd.s32 %v5213, %v5215
        %v5218 = vadd.s32 %v5217, %v5207
        %v5219 = vadd.s32 %v5218, %v5209
        %v5220 = vmul.u32 %v5175, %v5166
        %v5221 = vadd.s32 %v5197, %v5216
        %vm5222 = vc.u32 %v5197, %v5216
        %v5223 = vadd.s32 %v5219, 1
        %v5224 = vsel %vm5222, %v5223, %v5219
        %v5225 = vadd.s32 %v5220, %v5224
        %v5226 = vadd.s32 %v5225, 536870912
        %v5227 = vshrl.u32 %v5226, 30
        %v5228 = vshll.u32 %v5227, 30
        %v5229 = vsub.s32 %v5225, %v5228
        %vm5230 = vcmp.lt.s32.totalorder %v5229, 0
        %v5231 = vsub.s32 0, %v5229
        %v5232 = vsel %vm5230, %v5231, %v5229
        %v5233 = vclz %v5232
        %v5234 = vsub.s32 %v5233, 2
        %vm5235 = vcmp.gt.s32.totalorder 0, %v5234
        %v5236 = vsel %vm5235, 0, %v5234
        %v5237 = vsub.s32 32, %v5236
        %v5238 = vshll.u32 %v5229, %v5236
        %v5239 = vshrl.u32 %v5221, %v5237
        %v5240 = vor.u32 %v5238, %v5239
        %v5241 = vsub.s32 4294967266, %v5236
        %v5242 = vadd.s32 %v5241, 127
        %v5243 = vshll.u32 %v5242, 23
        %v5244 = vor.u32 4788187, %v5243
        %v5245 = vand.u32 2147483647, %v5244
        %v5247 = vcvt.s32.f32 %v5240
        %v5248 = vmul.f32 %v5247, %v5245
        %v5249 = vxor.u32 %v5248, 2147483648
        %v5250 = vsel %vm5129, %v5249, %v5248
        %v5251 = vsub.s32 4, %v5227
        %v5252 = vsel %vm5129, %v5251, %v5227
        %v5253 = vsel %vm5128, %v3109, %v5250
        %v5254 = vsel %vm5128, 0, %v5252
        %v5255 = vmul.f32 %v5253, %v5253
        %v5256 = vmul.f32 %v5255, -0.001358992
        %v5257 = vadd.f32 %v5256, 0.041655596
        %v5258 = vmul.f32 %v5255, %v5257
        %v5259 = vadd.f32 %v5258, -0.4999988
        %v5260 = vmul.f32 %v5255, %v5259
        %v5261 = vadd.f32 1.0, %v5260
        %v5262 = vmul.f32 %v5253, %v5253
        %v5263 = vmul.f32 %v5262, -0.00019511016
        %v5264 = vadd.f32 %v5263, 0.008332121
        %v5265 = vmul.f32 %v5262, %v5264
        %v5266 = vadd.f32 %v5265, -0.16666654
        %v5267 = vmul.f32 %v5262, %v5266
        %v5268 = vadd.f32 %v5267, 1.0
        %v5269 = vmul.f32 %v5268, %v5253
        %vm5270 = vweird.f32 %v3109
        %v5271 = vadd.s32 %v5254, 3
        %v5272 = vand.u32 %v5271, 3
        %vm5273 = vcmp.lt.s32.totalorder %v5272, 2
        %vm5274 = vcmp.eq.s32.totalorder %v5272, 0
        %v5275 = vxor.u32 %v5269, 2147483648
        %v5276 = vsel %vm5274, %v5261, %v5275
        %vm5277 = vcmp.eq.s32.totalorder %v5272, 2
        %v5278 = vxor.u32 %v5261, 2147483648
        %v5279 = vsel %vm5277, %v5278, %v5269
        %v5280 = vsel %vm5273, %v5276, %v5279
        %v5281 = vsel %vm5270, nan, %v5280
        %v5282 = vand.u32 2147483647, %v3110
        %vm5283 = vcmp.le.f32.partialorder %v5282, 0.7853982
        %vm5284 = vcmp.lt.s32.totalorder %v3110, 0
        %v5285 = vand.u32 %v3110, 2139095040
        %v5286 = vshrl.u32 %v5285, 23
        %v5287 = vsub.s32 %v5286, 127
        %v5288 = vand.u32 2147483647, %v3110
        %v5289 = vand.u32 %v5288, 8388607
        %v5290 = vor.u32 %v5289, 8388608
        %v5291 = vsub.s32 0, %v5290
        %v5292 = vadd.s32 %v5287, 1
        %vm5293 = vcmp.gt.s32.totalorder %v5292, 0
        %v5294 = vsel %vm5293, %v5292, 0
        %v5295 = vshrl.u32 %v5294, 5
        %v5296 = vand.u32 %v5294, 31
        %v5297 = vsub.s32 32, %v5296
        %v5298 = vshrl.u32 683565275, %v5297
        %v5299 = vshll.u32 683565275, %v5296
        %v5300 = vshrl.u32 2475754826, %v5297
        %v5301 = vor.u32 %v5299, %v5300
        %v5302 = vshll.u32 2475754826, %v5296
        %v5303 = vshrl.u32 2131351028, %v5297
        %v5304 = vor.u32 %v5302, %v5303
        %v5305 = vshll.u32 2131351028, %v5296
        %v5306 = vshrl.u32 2102212464, %v5297
        %v5307 = vor.u32 %v5305, %v5306
        %v5308 = vshll.u32 2102212464, %v5296
        %v5309 = vshrl.u32 920167782, %v5297
        %v5310 = vor.u32 %v5308, %v5309
        %v5311 = vshll.u32 920167782, %v5296
        %v5312 = vshrl.u32 1326507024, %v5297
        %v5313 = vor.u32 %v5311, %v5312
        %vm5314 = vcmp.lt.s32.totalorder %v5295, 1
        %vm5315 = vcmp.lt.s32.totalorder %v5295, 2
        %vm5316 = vcmp.lt.s32.totalorder %v5295, 3
        %vm5317 = vcmp.lt.s32.totalorder %v5295, 4
        %v5318 = vsel %vm5314, %v5298, %v5301
        %v5319 = vsel %vm5317, %v5307, 2102212464
        %v5320 = vsel %vm5316, %v5304, %v5319
        %v5321 = vsel %vm5315, %v5318, %v5320
        %v5322 = vsel %vm5314, %v5301, %v5304
        %v5323 = vsel %vm5317, %v5310, 920167782
        %v5324 = vsel %vm5316, %v5307, %v5323
        %v5325 = vsel %vm5315, %v5322, %v5324
        %v5326 = vsel %vm5314, %v5304, %v5307
        %v5327 = vsel %vm5317, %v5313, 1326507024
        %v5328 = vsel %vm5316, %v5310, %v5327
        %v5329 = vsel %vm5315, %v5326, %v5328
        %v5330 = vshll.u32 %v5290, 8
        %v5331 = vand.u32 %v5330, 65535
        %v5332 = vshrl.u32 %v5330, 16
        %v5333 = vand.u32 %v5329, 65535
        %v5334 = vshrl.u32 %v5329, 16
        %v5335 = vmul.u32 %v5331, %v5333
        %v5336 = vmul.u32 %v5331, %v5334
        %v5337 = vmul.u32 %v5332, %v5333
        %v5338 = vmul.u32 %v5332, %v5334
        %v5339 = vshll.u32 %v5336, 16
        %v5340 = vshrl.u32 %v5336, 16
        %v5341 = vshll.u32 %v5337, 16
        %v5342 = vshrl.u32 %v5337, 16
        %vm5343 = vc.u32 %v5335, %v5339
        %v5344 = vsel %vm5343, 1, 0
        %v5345 = vadd.s32 %v5335, %v5339
        %v5346 = vadd.s32 %v5338, %v5344
        %vm5347 = vc.u32 %v5345, %v5341
        %v5348 = vsel %vm5347, 1, 0
        %v5349 = vadd.s32 %v5345, %v5341
        %v5350 = vadd.s32 %v5346, %v5348
        %v5351 = vadd.s32 %v5350, %v5340
        %v5352 = vadd.s32 %v5351, %v5342
        %v5353 = vand.u32 %v5330, 65535
        %v5354 = vshrl.u32 %v5330, 16
        %v5355 = vand.u32 %v5325, 65535
        %v5356 = vshrl.u32 %v5325, 16
        %v5357 = vmul.u32 %v5353, %v5355
        %v5358 = vmul.u32 %v5353, %v5356
        %v5359 = vmul.u32 %v5354, %v5355
        %v5360 = vmul.u32 %v5354, %v5356
        %v5361 = vshll.u32 %v5358, 16
        %v5362 = vshrl.u32 %v5358, 16
        %v5363 = vshll.u32 %v5359, 16
        %v5364 = vshrl.u32 %v5359, 16
        %vm5365 = vc.u32 %v5357, %v5361
        %v5366 = vsel %vm5365, 1, 0
        %v5367 = vadd.s32 %v5357, %v5361
        %v5368 = vadd.s32 %v5360, %v5366
        %vm5369 = vc.u32 %v5367, %v5363
        %v5370 = vsel %vm5369, 1, 0
        %v5371 = vadd.s32 %v5367, %v5363
        %v5372 = vadd.s32 %v5368, %v5370
        %v5373 = vadd.s32 %v5372, %v5362
        %v5374 = vadd.s32 %v5373, %v5364
        %v5375 = vmul.u32 %v5330, %v5321
        %v5376 = vadd.s32 %v5352, %v5371
        %vm5377 = vc.u32 %v5352, %v5371
        %v5378 = vadd.s32 %v5374, 1
        %v5379 = vsel %vm5377, %v5378, %v5374
        %v5380 = vadd.s32 %v5375, %v5379
        %v5381 = vadd.s32 %v5380, 536870912
        %v5382 = vshrl.u32 %v5381, 30
        %v5383 = vshll.u32 %v5382, 30
        %v5384 = vsub.s32 %v5380, %v5383
        %vm5385 = vcmp.lt.s32.totalorder %v5384, 0
        %v5386 = vsub.s32 0, %v5384
        %v5387 = vsel %vm5385, %v5386, %v5384
        %v5388 = vclz %v5387
        %v5389 = vsub.s32 %v5388, 2
        %vm5390 = vcmp.gt.s32.totalorder 0, %v5389
        %v5391 = vsel %vm5390, 0, %v5389
        %v5392 = vsub.s32 32, %v5391
        %v5393 = vshll.u32 %v5384, %v5391
        %v5394 = vshrl.u32 %v5376, %v5392
        %v5395 = vor.u32 %v5393, %v5394
        %v5396 = vsub.s32 4294967266, %v5391
        %v5397 = vadd.s32 %v5396, 127
        %v5398 = vshll.u32 %v5397, 23
        %v5399 = vor.u32 4788187, %v5398
        %v5400 = vand.u32 2147483647, %v5399
        %v5402 = vcvt.s32.f32 %v5395
        %v5403 = vmul.f32 %v5402, %v5400
        %v5404 = vxor.u32 %v5403, 2147483648
        %v5405 = vsel %vm5284, %v5404, %v5403
        %v5406 = vsub.s32 4, %v5382
        %v5407 = vsel %vm5284, %v5406, %v5382
        %v5408 = vsel %vm5283, %v3110, %v5405
        %v5409 = vsel %vm5283, 0, %v5407
        %v5410 = vmul.f32 %v5408, %v5408
        %v5411 = vmul.f32 %v5410, -0.001358992
        %v5412 = vadd.f32 %v5411, 0.041655596
        %v5413 = vmul.f32 %v5410, %v5412
        %v5414 = vadd.f32 %v5413, -0.4999988
        %v5415 = vmul.f32 %v5410, %v5414
        %v5416 = vadd.f32 1.0, %v5415
        %v5417 = vmul.f32 %v5408, %v5408
        %v5418 = vmul.f32 %v5417, -0.00019511016
        %v5419 = vadd.f32 %v5418, 0.008332121
        %v5420 = vmul.f32 %v5417, %v5419
        %v5421 = vadd.f32 %v5420, -0.16666654
        %v5422 = vmul.f32 %v5417, %v5421
        %v5423 = vadd.f32 %v5422, 1.0
        %v5424 = vmul.f32 %v5423, %v5408
        %vm5425 = vweird.f32 %v3110
        %v5426 = vadd.s32 %v5409, 3
        %v5427 = vand.u32 %v5426, 3
        %vm5428 = vcmp.lt.s32.totalorder %v5427, 2
        %vm5429 = vcmp.eq.s32.totalorder %v5427, 0
        %v5430 = vxor.u32 %v5424, 2147483648
        %v5431 = vsel %vm5429, %v5416, %v5430
        %vm5432 = vcmp.eq.s32.totalorder %v5427, 2
        %v5433 = vxor.u32 %v5416, 2147483648
        %v5434 = vsel %vm5432, %v5433, %v5424
        %v5435 = vsel %vm5428, %v5431, %v5434
        %v5436 = vsel %vm5425, nan, %v5435
        %v5437 = vand.u32 2147483647, %v3111
        %vm5438 = vcmp.le.f32.partialorder %v5437, 0.7853982
        %vm5439 = vcmp.lt.s32.totalorder %v3111, 0
        %v5440 = vand.u32 %v3111, 2139095040
        %v5441 = vshrl.u32 %v5440, 23
        %v5442 = vsub.s32 %v5441, 127
        %v5443 = vand.u32 2147483647, %v3111
        %v5444 = vand.u32 %v5443, 8388607
        %v5445 = vor.u32 %v5444, 8388608
        %v5446 = vsub.s32 0, %v5445
        %v5447 = vadd.s32 %v5442, 1
        %vm5448 = vcmp.gt.s32.totalorder %v5447, 0
        %v5449 = vsel %vm5448, %v5447, 0
        %v5450 = vshrl.u32 %v5449, 5
        %v5451 = vand.u32 %v5449, 31
        %v5452 = vsub.s32 32, %v5451
        %v5453 = vshrl.u32 683565275, %v5452
        %v5454 = vshll.u32 683565275, %v5451
        %v5455 = vshrl.u32 2475754826, %v5452
        %v5456 = vor.u32 %v5454, %v5455
        %v5457 = vshll.u32 2475754826, %v5451
        %v5458 = vshrl.u32 2131351028, %v5452
        %v5459 = vor.u32 %v5457, %v5458
        %v5460 = vshll.u32 2131351028, %v5451
        %v5461 = vshrl.u32 2102212464, %v5452
        %v5462 = vor.u32 %v5460, %v5461
        %v5463 = vshll.u32 2102212464, %v5451
        %v5464 = vshrl.u32 920167782, %v5452
        %v5465 = vor.u32 %v5463, %v5464
        %v5466 = vshll.u32 920167782, %v5451
        %v5467 = vshrl.u32 1326507024, %v5452
        %v5468 = vor.u32 %v5466, %v5467
        %vm5469 = vcmp.lt.s32.totalorder %v5450, 1
        %vm5470 = vcmp.lt.s32.totalorder %v5450, 2
        %vm5471 = vcmp.lt.s32.totalorder %v5450, 3
        %vm5472 = vcmp.lt.s32.totalorder %v5450, 4
        %v5473 = vsel %vm5469, %v5453, %v5456
        %v5474 = vsel %vm5472, %v5462, 2102212464
        %v5475 = vsel %vm5471, %v5459, %v5474
        %v5476 = vsel %vm5470, %v5473, %v5475
        %v5477 = vsel %vm5469, %v5456, %v5459
        %v5478 = vsel %vm5472, %v5465, 920167782
        %v5479 = vsel %vm5471, %v5462, %v5478
        %v5480 = vsel %vm5470, %v5477, %v5479
        %v5481 = vsel %vm5469, %v5459, %v5462
        %v5482 = vsel %vm5472, %v5468, 1326507024
        %v5483 = vsel %vm5471, %v5465, %v5482
        %v5484 = vsel %vm5470, %v5481, %v5483
        %v5485 = vshll.u32 %v5445, 8
        %v5486 = vand.u32 %v5485, 65535
        %v5487 = vshrl.u32 %v5485, 16
        %v5488 = vand.u32 %v5484, 65535
        %v5489 = vshrl.u32 %v5484, 16
        %v5490 = vmul.u32 %v5486, %v5488
        %v5491 = vmul.u32 %v5486, %v5489
        %v5492 = vmul.u32 %v5487, %v5488
        %v5493 = vmul.u32 %v5487, %v5489
        %v5494 = vshll.u32 %v5491, 16
        %v5495 = vshrl.u32 %v5491, 16
        %v5496 = vshll.u32 %v5492, 16
        %v5497 = vshrl.u32 %v5492, 16
        %vm5498 = vc.u32 %v5490, %v5494
        %v5499 = vsel %vm5498, 1, 0
        %v5500 = vadd.s32 %v5490, %v5494
        %v5501 = vadd.s32 %v5493, %v5499
        %vm5502 = vc.u32 %v5500, %v5496
        %v5503 = vsel %vm5502, 1, 0
        %v5504 = vadd.s32 %v5500, %v5496
        %v5505 = vadd.s32 %v5501, %v5503
        %v5506 = vadd.s32 %v5505, %v5495
        %v5507 = vadd.s32 %v5506, %v5497
        %v5508 = vand.u32 %v5485, 65535
        %v5509 = vshrl.u32 %v5485, 16
        %v5510 = vand.u32 %v5480, 65535
        %v5511 = vshrl.u32 %v5480, 16
        %v5512 = vmul.u32 %v5508, %v5510
        %v5513 = vmul.u32 %v5508, %v5511
        %v5514 = vmul.u32 %v5509, %v5510
        %v5515 = vmul.u32 %v5509, %v5511
        %v5516 = vshll.u32 %v5513, 16
        %v5517 = vshrl.u32 %v5513, 16
        %v5518 = vshll.u32 %v5514, 16
        %v5519 = vshrl.u32 %v5514, 16
        %vm5520 = vc.u32 %v5512, %v5516
        %v5521 = vsel %vm5520, 1, 0
        %v5522 = vadd.s32 %v5512, %v5516
        %v5523 = vadd.s32 %v5515, %v5521
        %vm5524 = vc.u32 %v5522, %v5518
        %v5525 = vsel %vm5524, 1, 0
        %v5526 = vadd.s32 %v5522, %v5518
        %v5527 = vadd.s32 %v5523, %v5525
        %v5528 = vadd.s32 %v5527, %v5517
        %v5529 = vadd.s32 %v5528, %v5519
        %v5530 = vmul.u32 %v5485, %v5476
        %v5531 = vadd.s32 %v5507, %v5526
        %vm5532 = vc.u32 %v5507, %v5526
        %v5533 = vadd.s32 %v5529, 1
        %v5534 = vsel %vm5532, %v5533, %v5529
        %v5535 = vadd.s32 %v5530, %v5534
        %v5536 = vadd.s32 %v5535, 536870912
        %v5537 = vshrl.u32 %v5536, 30
        %v5538 = vshll.u32 %v5537, 30
        %v5539 = vsub.s32 %v5535, %v5538
        %vm5540 = vcmp.lt.s32.totalorder %v5539, 0
        %v5541 = vsub.s32 0, %v5539
        %v5542 = vsel %vm5540, %v5541, %v5539
        %v5543 = vclz %v5542
        %v5544 = vsub.s32 %v5543, 2
        %vm5545 = vcmp.gt.s32.totalorder 0, %v5544
        %v5546 = vsel %vm5545, 0, %v5544
        %v5547 = vsub.s32 32, %v5546
        %v5548 = vshll.u32 %v5539, %v5546
        %v5549 = vshrl.u32 %v5531, %v5547
        %v5550 = vor.u32 %v5548, %v5549
        %v5551 = vsub.s32 4294967266, %v5546
        %v5552 = vadd.s32 %v5551, 127
        %v5553 = vshll.u32 %v5552, 23
        %v5554 = vor.u32 4788187, %v5553
        %v5555 = vand.u32 2147483647, %v5554
        %v5557 = vcvt.s32.f32 %v5550
        %v5558 = vmul.f32 %v5557, %v5555
        %v5559 = vxor.u32 %v5558, 2147483648
        %v5560 = vsel %vm5439, %v5559, %v5558
        %v5561 = vsub.s32 4, %v5537
        %v5562 = vsel %vm5439, %v5561, %v5537
        %v5563 = vsel %vm5438, %v3111, %v5560
        %v5564 = vsel %vm5438, 0, %v5562
        %v5565 = vmul.f32 %v5563, %v5563
        %v5566 = vmul.f32 %v5565, -0.001358992
        %v5567 = vadd.f32 %v5566, 0.041655596
        %v5568 = vmul.f32 %v5565, %v5567
        %v5569 = vadd.f32 %v5568, -0.4999988
        %v5570 = vmul.f32 %v5565, %v5569
        %v5571 = vadd.f32 1.0, %v5570
        %v5572 = vmul.f32 %v5563, %v5563
        %v5573 = vmul.f32 %v5572, -0.00019511016
        %v5574 = vadd.f32 %v5573, 0.008332121
        %v5575 = vmul.f32 %v5572, %v5574
        %v5576 = vadd.f32 %v5575, -0.16666654
        %v5577 = vmul.f32 %v5572, %v5576
        %v5578 = vadd.f32 %v5577, 1.0
        %v5579 = vmul.f32 %v5578, %v5563
        %vm5580 = vweird.f32 %v3111
        %v5581 = vadd.s32 %v5564, 3
        %v5582 = vand.u32 %v5581, 3
        %vm5583 = vcmp.lt.s32.totalorder %v5582, 2
        %vm5584 = vcmp.eq.s32.totalorder %v5582, 0
        %v5585 = vxor.u32 %v5579, 2147483648
        %v5586 = vsel %vm5584, %v5571, %v5585
        %vm5587 = vcmp.eq.s32.totalorder %v5582, 2
        %v5588 = vxor.u32 %v5571, 2147483648
        %v5589 = vsel %vm5587, %v5588, %v5579
        %v5590 = vsel %vm5583, %v5586, %v5589
        %v5591 = vsel %vm5580, nan, %v5590
        %s5592 = scalar_lea.vmem %s1, 64
        %v5593 = vld [vmem:[%s5592] sm:$0xff]
        %v5594 = vld [vmem:[%s5592 + $0x8] sm:$0xff]
        %v5595 = vld [vmem:[%s5592 + $0x10] sm:$0xff]
        %v5596 = vld [vmem:[%s5592 + $0x18] sm:$0xff]
        %s5597 = scalar_lea.vmem %s2, 64
        %v5598 = vld [vmem:[%s5597] sm:$0xff]
        %v5599 = vld [vmem:[%s5597 + $0x8] sm:$0xff]
        %v5600 = vld [vmem:[%s5597 + $0x10] sm:$0xff]
        %v5601 = vld [vmem:[%s5597 + $0x18] sm:$0xff]
        %5603 = vset.pattern.permute.xlu0 0
        %5604 = vperm.xlu0 %5603, %v5598
        %v5605 = vpop.permute.xlu0 %5604
        %5608 = vset.pattern.permute.xlu0 0
        %5609 = vperm.xlu0 %5608, %v5599
        %v5610 = vpop.permute.xlu0 %5609
        %5613 = vset.pattern.permute.xlu0 0
        %5614 = vperm.xlu0 %5613, %v5600
        %v5615 = vpop.permute.xlu0 %5614
        %5618 = vset.pattern.permute.xlu0 0
        %5619 = vperm.xlu0 %5618, %v5601
        %v5620 = vpop.permute.xlu0 %5619
        %v5623 = vsel %vm2919, %v5593, 0
        %v5626 = vsel %vm2919, %v5594, 0
        %v5629 = vsel %vm2919, %v5595, 0
        %v5632 = vsel %vm2919, %v5596, 0
        %5634 = vmatpush.msra.mxu0 0.0
        %5635 = vmatpush.msra.mxu0 0.0
        %5636 = vmatpush.msra.mxu0 0.0
        %5637 = vmatpush.msra.mxu0 0.0
        %5638 = vmatpush.msra.mxu0 0.0
        %5639 = vmatpush.msra.mxu0 0.0
        %5640 = vmatpush.msra.mxu0 0.0
        %5641 = vmatpush.msra.mxu0 0.0
        %5642 = vmatpush.msra.mxu0 0.0
        %5643 = vmatpush.msra.mxu0 0.0
        %5644 = vmatpush.msra.mxu0 0.0
        %5645 = vmatpush.msra.mxu0 0.0
        %5646 = vmatpush.msra.mxu0 %v5126
        %5647 = vmatpush.msra.mxu0 %v4506
        %5648 = vmatpush.msra.mxu0 %v3886
        %5649 = vmatpush.msra.mxu0 %v3266
        %5650 = vmatmul.f32.gmra.mxu0 %v5623
        %v5651 = vpop.f32.mrf.mxu0
        %v5652 = vadd.f32 %v5605, %v5651
        %5653 = vmatmul.f32.gmra.mxu0 %v5626
        %v5654 = vpop.f32.mrf.mxu0
        %v5655 = vadd.f32 %v5610, %v5654
        %5656 = vmatmul.f32.gmra.mxu0 %v5629
        %v5657 = vpop.f32.mrf.mxu0
        %v5658 = vadd.f32 %v5615, %v5657
        %5659 = vmatmul.f32.gmra.mxu0 %v5632
        %v5660 = vpop.f32.mrf.mxu0
        %v5661 = vadd.f32 %v5620, %v5660
        %5662 = vdwg.mxu0
        %5663 = vmatpush.msra.mxu0 0.0
        %5664 = vmatpush.msra.mxu0 0.0
        %5665 = vmatpush.msra.mxu0 0.0
        %5666 = vmatpush.msra.mxu0 0.0
        %5667 = vmatpush.msra.mxu0 0.0
        %5668 = vmatpush.msra.mxu0 0.0
        %5669 = vmatpush.msra.mxu0 0.0
        %5670 = vmatpush.msra.mxu0 0.0
        %5671 = vmatpush.msra.mxu0 0.0
        %5672 = vmatpush.msra.mxu0 0.0
        %5673 = vmatpush.msra.mxu0 0.0
        %5674 = vmatpush.msra.mxu0 0.0
        %5675 = vmatpush.msra.mxu0 %v5281
        %5676 = vmatpush.msra.mxu0 %v4661
        %5677 = vmatpush.msra.mxu0 %v4041
        %5678 = vmatpush.msra.mxu0 %v3421
        %5679 = vmatmul.f32.gmra.mxu0 %v5623
        %v5680 = vpop.f32.mrf.mxu0
        %v5681 = vadd.f32 %v5605, %v5680
        %5682 = vmatmul.f32.gmra.mxu0 %v5626
        %v5683 = vpop.f32.mrf.mxu0
        %v5684 = vadd.f32 %v5610, %v5683
        %5685 = vmatmul.f32.gmra.mxu0 %v5629
        %v5686 = vpop.f32.mrf.mxu0
        %v5687 = vadd.f32 %v5615, %v5686
        %5688 = vmatmul.f32.gmra.mxu0 %v5632
        %v5689 = vpop.f32.mrf.mxu0
        %v5690 = vadd.f32 %v5620, %v5689
        %5691 = vdwg.mxu0
        %5692 = vmatpush.msra.mxu0 0.0
        %5693 = vmatpush.msra.mxu0 0.0
        %5694 = vmatpush.msra.mxu0 0.0
        %5695 = vmatpush.msra.mxu0 0.0
        %5696 = vmatpush.msra.mxu0 0.0
        %5697 = vmatpush.msra.mxu0 0.0
        %5698 = vmatpush.msra.mxu0 0.0
        %5699 = vmatpush.msra.mxu0 0.0
        %5700 = vmatpush.msra.mxu0 0.0
        %5701 = vmatpush.msra.mxu0 0.0
        %5702 = vmatpush.msra.mxu0 0.0
        %5703 = vmatpush.msra.mxu0 0.0
        %5704 = vmatpush.msra.mxu0 %v5436
        %5705 = vmatpush.msra.mxu0 %v4816
        %5706 = vmatpush.msra.mxu0 %v4196
        %5707 = vmatpush.msra.mxu0 %v3576
        %5708 = vmatmul.f32.gmra.mxu0 %v5623
        %v5709 = vpop.f32.mrf.mxu0
        %v5710 = vadd.f32 %v5605, %v5709
        %5711 = vmatmul.f32.gmra.mxu0 %v5626
        %v5712 = vpop.f32.mrf.mxu0
        %v5713 = vadd.f32 %v5610, %v5712
        %5714 = vmatmul.f32.gmra.mxu0 %v5629
        %v5715 = vpop.f32.mrf.mxu0
        %v5716 = vadd.f32 %v5615, %v5715
        %5717 = vmatmul.f32.gmra.mxu0 %v5632
        %v5718 = vpop.f32.mrf.mxu0
        %v5719 = vadd.f32 %v5620, %v5718
        %5720 = vdwg.mxu0
        %5721 = vmatpush.msra.mxu0 0.0
        %5722 = vmatpush.msra.mxu0 0.0
        %5723 = vmatpush.msra.mxu0 0.0
        %5724 = vmatpush.msra.mxu0 0.0
        %5725 = vmatpush.msra.mxu0 0.0
        %5726 = vmatpush.msra.mxu0 0.0
        %5727 = vmatpush.msra.mxu0 0.0
        %5728 = vmatpush.msra.mxu0 0.0
        %5729 = vmatpush.msra.mxu0 0.0
        %5730 = vmatpush.msra.mxu0 0.0
        %5731 = vmatpush.msra.mxu0 0.0
        %5732 = vmatpush.msra.mxu0 0.0
        %5733 = vmatpush.msra.mxu0 %v5591
        %5734 = vmatpush.msra.mxu0 %v4971
        %5735 = vmatpush.msra.mxu0 %v4351
        %5736 = vmatpush.msra.mxu0 %v3731
        %5737 = vmatmul.f32.gmra.mxu0 %v5623
        %v5738 = vpop.f32.mrf.mxu0
        %v5739 = vadd.f32 %v5605, %v5738
        %5740 = vmatmul.f32.gmra.mxu0 %v5626
        %v5741 = vpop.f32.mrf.mxu0
        %v5742 = vadd.f32 %v5610, %v5741
        %5743 = vmatmul.f32.gmra.mxu0 %v5629
        %v5744 = vpop.f32.mrf.mxu0
        %v5745 = vadd.f32 %v5615, %v5744
        %5746 = vmatmul.f32.gmra.mxu0 %v5632
        %v5747 = vpop.f32.mrf.mxu0
        %v5748 = vadd.f32 %v5620, %v5747
        %5749 = vdwg.mxu0
        %v5750 = vmul.f32 %v5652, 30.0
        %v5751 = vmul.f32 %v5681, 30.0
        %v5752 = vmul.f32 %v5710, 30.0
        %v5753 = vmul.f32 %v5739, 30.0
        %v5754 = vmul.f32 %v5655, 30.0
        %v5755 = vmul.f32 %v5684, 30.0
        %v5756 = vmul.f32 %v5713, 30.0
        %v5757 = vmul.f32 %v5742, 30.0
        %v5758 = vmul.f32 %v5658, 30.0
        %v5759 = vmul.f32 %v5687, 30.0
        %v5760 = vmul.f32 %v5716, 30.0
        %v5761 = vmul.f32 %v5745, 30.0
        %v5762 = vmul.f32 %v5661, 30.0
        %v5763 = vmul.f32 %v5690, 30.0
        %v5764 = vmul.f32 %v5719, 30.0
        %v5765 = vmul.f32 %v5748, 30.0
        %v5766 = vand.u32 2147483647, %v5652
        %v5767 = vand.u32 2147483647, %v5681
        %v5768 = vand.u32 2147483647, %v5710
        %v5769 = vand.u32 2147483647, %v5739
        %v5770 = vand.u32 2147483647, %v5655
        %v5771 = vand.u32 2147483647, %v5684
        %v5772 = vand.u32 2147483647, %v5713
        %v5773 = vand.u32 2147483647, %v5742
        %v5774 = vand.u32 2147483647, %v5658
        %v5775 = vand.u32 2147483647, %v5687
        %v5776 = vand.u32 2147483647, %v5716
        %v5777 = vand.u32 2147483647, %v5745
        %v5778 = vand.u32 2147483647, %v5661
        %v5779 = vand.u32 2147483647, %v5690
        %v5780 = vand.u32 2147483647, %v5719
        %v5781 = vand.u32 2147483647, %v5748
        %v5782 = vmul.f32 %v5750, %v5766
        %v5783 = vmul.f32 %v5751, %v5767
        %v5784 = vmul.f32 %v5752, %v5768
        %v5785 = vmul.f32 %v5753, %v5769
        %v5786 = vmul.f32 %v5754, %v5770
        %v5787 = vmul.f32 %v5755, %v5771
        %v5788 = vmul.f32 %v5756, %v5772
        %v5789 = vmul.f32 %v5757, %v5773
        %v5790 = vmul.f32 %v5758, %v5774
        %v5791 = vmul.f32 %v5759, %v5775
        %v5792 = vmul.f32 %v5760, %v5776
        %v5793 = vmul.f32 %v5761, %v5777
        %v5794 = vmul.f32 %v5762, %v5778
        %v5795 = vmul.f32 %v5763, %v5779
        %v5796 = vmul.f32 %v5764, %v5780
        %v5797 = vmul.f32 %v5765, %v5781
        %v5798 = vadd.f32 %v5782, %v5750
        %v5799 = vadd.f32 %v5783, %v5751
        %v5800 = vadd.f32 %v5784, %v5752
        %v5801 = vadd.f32 %v5785, %v5753
        %v5802 = vadd.f32 %v5786, %v5754
        %v5803 = vadd.f32 %v5787, %v5755
        %v5804 = vadd.f32 %v5788, %v5756
        %v5805 = vadd.f32 %v5789, %v5757
        %v5806 = vadd.f32 %v5790, %v5758
        %v5807 = vadd.f32 %v5791, %v5759
        %v5808 = vadd.f32 %v5792, %v5760
        %v5809 = vadd.f32 %v5793, %v5761
        %v5810 = vadd.f32 %v5794, %v5762
        %v5811 = vadd.f32 %v5795, %v5763
        %v5812 = vadd.f32 %v5796, %v5764
        %v5813 = vadd.f32 %v5797, %v5765
        %v5814 = vand.u32 2147483647, %v5798
        %vm5815 = vcmp.le.f32.partialorder %v5814, 0.7853982
        %vm5816 = vcmp.lt.s32.totalorder %v5798, 0
        %v5817 = vand.u32 %v5798, 2139095040
        %v5818 = vshrl.u32 %v5817, 23
        %v5819 = vsub.s32 %v5818, 127
        %v5820 = vand.u32 2147483647, %v5798
        %v5821 = vand.u32 %v5820, 8388607
        %v5822 = vor.u32 %v5821, 8388608
        %v5823 = vsub.s32 0, %v5822
        %v5824 = vadd.s32 %v5819, 1
        %vm5825 = vcmp.gt.s32.totalorder %v5824, 0
        %v5826 = vsel %vm5825, %v5824, 0
        %v5827 = vshrl.u32 %v5826, 5
        %v5828 = vand.u32 %v5826, 31
        %v5829 = vsub.s32 32, %v5828
        %v5830 = vshrl.u32 683565275, %v5829
        %v5831 = vshll.u32 683565275, %v5828
        %v5832 = vshrl.u32 2475754826, %v5829
        %v5833 = vor.u32 %v5831, %v5832
        %v5834 = vshll.u32 2475754826, %v5828
        %v5835 = vshrl.u32 2131351028, %v5829
        %v5836 = vor.u32 %v5834, %v5835
        %v5837 = vshll.u32 2131351028, %v5828
        %v5838 = vshrl.u32 2102212464, %v5829
        %v5839 = vor.u32 %v5837, %v5838
        %v5840 = vshll.u32 2102212464, %v5828
        %v5841 = vshrl.u32 920167782, %v5829
        %v5842 = vor.u32 %v5840, %v5841
        %v5843 = vshll.u32 920167782, %v5828
        %v5844 = vshrl.u32 1326507024, %v5829
        %v5845 = vor.u32 %v5843, %v5844
        %vm5846 = vcmp.lt.s32.totalorder %v5827, 1
        %vm5847 = vcmp.lt.s32.totalorder %v5827, 2
        %vm5848 = vcmp.lt.s32.totalorder %v5827, 3
        %vm5849 = vcmp.lt.s32.totalorder %v5827, 4
        %v5850 = vsel %vm5846, %v5830, %v5833
        %v5851 = vsel %vm5849, %v5839, 2102212464
        %v5852 = vsel %vm5848, %v5836, %v5851
        %v5853 = vsel %vm5847, %v5850, %v5852
        %v5854 = vsel %vm5846, %v5833, %v5836
        %v5855 = vsel %vm5849, %v5842, 920167782
        %v5856 = vsel %vm5848, %v5839, %v5855
        %v5857 = vsel %vm5847, %v5854, %v5856
        %v5858 = vsel %vm5846, %v5836, %v5839
        %v5859 = vsel %vm5849, %v5845, 1326507024
        %v5860 = vsel %vm5848, %v5842, %v5859
        %v5861 = vsel %vm5847, %v5858, %v5860
        %v5862 = vshll.u32 %v5822, 8
        %v5863 = vand.u32 %v5862, 65535
        %v5864 = vshrl.u32 %v5862, 16
        %v5865 = vand.u32 %v5861, 65535
        %v5866 = vshrl.u32 %v5861, 16
        %v5867 = vmul.u32 %v5863, %v5865
        %v5868 = vmul.u32 %v5863, %v5866
        %v5869 = vmul.u32 %v5864, %v5865
        %v5870 = vmul.u32 %v5864, %v5866
        %v5871 = vshll.u32 %v5868, 16
        %v5872 = vshrl.u32 %v5868, 16
        %v5873 = vshll.u32 %v5869, 16
        %v5874 = vshrl.u32 %v5869, 16
        %vm5875 = vc.u32 %v5867, %v5871
        %v5876 = vsel %vm5875, 1, 0
        %v5877 = vadd.s32 %v5867, %v5871
        %v5878 = vadd.s32 %v5870, %v5876
        %vm5879 = vc.u32 %v5877, %v5873
        %v5880 = vsel %vm5879, 1, 0
        %v5881 = vadd.s32 %v5877, %v5873
        %v5882 = vadd.s32 %v5878, %v5880
        %v5883 = vadd.s32 %v5882, %v5872
        %v5884 = vadd.s32 %v5883, %v5874
        %v5885 = vand.u32 %v5862, 65535
        %v5886 = vshrl.u32 %v5862, 16
        %v5887 = vand.u32 %v5857, 65535
        %v5888 = vshrl.u32 %v5857, 16
        %v5889 = vmul.u32 %v5885, %v5887
        %v5890 = vmul.u32 %v5885, %v5888
        %v5891 = vmul.u32 %v5886, %v5887
        %v5892 = vmul.u32 %v5886, %v5888
        %v5893 = vshll.u32 %v5890, 16
        %v5894 = vshrl.u32 %v5890, 16
        %v5895 = vshll.u32 %v5891, 16
        %v5896 = vshrl.u32 %v5891, 16
        %vm5897 = vc.u32 %v5889, %v5893
        %v5898 = vsel %vm5897, 1, 0
        %v5899 = vadd.s32 %v5889, %v5893
        %v5900 = vadd.s32 %v5892, %v5898
        %vm5901 = vc.u32 %v5899, %v5895
        %v5902 = vsel %vm5901, 1, 0
        %v5903 = vadd.s32 %v5899, %v5895
        %v5904 = vadd.s32 %v5900, %v5902
        %v5905 = vadd.s32 %v5904, %v5894
        %v5906 = vadd.s32 %v5905, %v5896
        %v5907 = vmul.u32 %v5862, %v5853
        %v5908 = vadd.s32 %v5884, %v5903
        %vm5909 = vc.u32 %v5884, %v5903
        %v5910 = vadd.s32 %v5906, 1
        %v5911 = vsel %vm5909, %v5910, %v5906
        %v5912 = vadd.s32 %v5907, %v5911
        %v5913 = vadd.s32 %v5912, 536870912
        %v5914 = vshrl.u32 %v5913, 30
        %v5915 = vshll.u32 %v5914, 30
        %v5916 = vsub.s32 %v5912, %v5915
        %vm5917 = vcmp.lt.s32.totalorder %v5916, 0
        %v5918 = vsub.s32 0, %v5916
        %v5919 = vsel %vm5917, %v5918, %v5916
        %v5920 = vclz %v5919
        %v5921 = vsub.s32 %v5920, 2
        %vm5922 = vcmp.gt.s32.totalorder 0, %v5921
        %v5923 = vsel %vm5922, 0, %v5921
        %v5924 = vsub.s32 32, %v5923
        %v5925 = vshll.u32 %v5916, %v5923
        %v5926 = vshrl.u32 %v5908, %v5924
        %v5927 = vor.u32 %v5925, %v5926
        %v5928 = vsub.s32 4294967266, %v5923
        %v5929 = vadd.s32 %v5928, 127
        %v5930 = vshll.u32 %v5929, 23
        %v5931 = vor.u32 4788187, %v5930
        %v5932 = vand.u32 2147483647, %v5931
        %v5934 = vcvt.s32.f32 %v5927
        %v5935 = vmul.f32 %v5934, %v5932
        %v5936 = vxor.u32 %v5935, 2147483648
        %v5937 = vsel %vm5816, %v5936, %v5935
        %v5938 = vsub.s32 4, %v5914
        %v5939 = vsel %vm5816, %v5938, %v5914
        %v5940 = vsel %vm5815, %v5798, %v5937
        %v5941 = vsel %vm5815, 0, %v5939
        %v5942 = vmul.f32 %v5940, %v5940
        %v5943 = vmul.f32 %v5942, -0.001358992
        %v5944 = vadd.f32 %v5943, 0.041655596
        %v5945 = vmul.f32 %v5942, %v5944
        %v5946 = vadd.f32 %v5945, -0.4999988
        %v5947 = vmul.f32 %v5942, %v5946
        %v5948 = vadd.f32 1.0, %v5947
        %v5949 = vmul.f32 %v5940, %v5940
        %v5950 = vmul.f32 %v5949, -0.00019511016
        %v5951 = vadd.f32 %v5950, 0.008332121
        %v5952 = vmul.f32 %v5949, %v5951
        %v5953 = vadd.f32 %v5952, -0.16666654
        %v5954 = vmul.f32 %v5949, %v5953
        %v5955 = vadd.f32 %v5954, 1.0
        %v5956 = vmul.f32 %v5955, %v5940
        %vm5957 = vweird.f32 %v5798
        %v5958 = vadd.s32 %v5941, 3
        %v5959 = vand.u32 %v5958, 3
        %vm5960 = vcmp.lt.s32.totalorder %v5959, 2
        %vm5961 = vcmp.eq.s32.totalorder %v5959, 0
        %v5962 = vxor.u32 %v5956, 2147483648
        %v5963 = vsel %vm5961, %v5948, %v5962
        %vm5964 = vcmp.eq.s32.totalorder %v5959, 2
        %v5965 = vxor.u32 %v5948, 2147483648
        %v5966 = vsel %vm5964, %v5965, %v5956
        %v5967 = vsel %vm5960, %v5963, %v5966
        %v5968 = vsel %vm5957, nan, %v5967
        %v5969 = vand.u32 2147483647, %v5799
        %vm5970 = vcmp.le.f32.partialorder %v5969, 0.7853982
        %vm5971 = vcmp.lt.s32.totalorder %v5799, 0
        %v5972 = vand.u32 %v5799, 2139095040
        %v5973 = vshrl.u32 %v5972, 23
        %v5974 = vsub.s32 %v5973, 127
        %v5975 = vand.u32 2147483647, %v5799
        %v5976 = vand.u32 %v5975, 8388607
        %v5977 = vor.u32 %v5976, 8388608
        %v5978 = vsub.s32 0, %v5977
        %v5979 = vadd.s32 %v5974, 1
        %vm5980 = vcmp.gt.s32.totalorder %v5979, 0
        %v5981 = vsel %vm5980, %v5979, 0
        %v5982 = vshrl.u32 %v5981, 5
        %v5983 = vand.u32 %v5981, 31
        %v5984 = vsub.s32 32, %v5983
        %v5985 = vshrl.u32 683565275, %v5984
        %v5986 = vshll.u32 683565275, %v5983
        %v5987 = vshrl.u32 2475754826, %v5984
        %v5988 = vor.u32 %v5986, %v5987
        %v5989 = vshll.u32 2475754826, %v5983
        %v5990 = vshrl.u32 2131351028, %v5984
        %v5991 = vor.u32 %v5989, %v5990
        %v5992 = vshll.u32 2131351028, %v5983
        %v5993 = vshrl.u32 2102212464, %v5984
        %v5994 = vor.u32 %v5992, %v5993
        %v5995 = vshll.u32 2102212464, %v5983
        %v5996 = vshrl.u32 920167782, %v5984
        %v5997 = vor.u32 %v5995, %v5996
        %v5998 = vshll.u32 920167782, %v5983
        %v5999 = vshrl.u32 1326507024, %v5984
        %v6000 = vor.u32 %v5998, %v5999
        %vm6001 = vcmp.lt.s32.totalorder %v5982, 1
        %vm6002 = vcmp.lt.s32.totalorder %v5982, 2
        %vm6003 = vcmp.lt.s32.totalorder %v5982, 3
        %vm6004 = vcmp.lt.s32.totalorder %v5982, 4
        %v6005 = vsel %vm6001, %v5985, %v5988
        %v6006 = vsel %vm6004, %v5994, 2102212464
        %v6007 = vsel %vm6003, %v5991, %v6006
        %v6008 = vsel %vm6002, %v6005, %v6007
        %v6009 = vsel %vm6001, %v5988, %v5991
        %v6010 = vsel %vm6004, %v5997, 920167782
        %v6011 = vsel %vm6003, %v5994, %v6010
        %v6012 = vsel %vm6002, %v6009, %v6011
        %v6013 = vsel %vm6001, %v5991, %v5994
        %v6014 = vsel %vm6004, %v6000, 1326507024
        %v6015 = vsel %vm6003, %v5997, %v6014
        %v6016 = vsel %vm6002, %v6013, %v6015
        %v6017 = vshll.u32 %v5977, 8
        %v6018 = vand.u32 %v6017, 65535
        %v6019 = vshrl.u32 %v6017, 16
        %v6020 = vand.u32 %v6016, 65535
        %v6021 = vshrl.u32 %v6016, 16
        %v6022 = vmul.u32 %v6018, %v6020
        %v6023 = vmul.u32 %v6018, %v6021
        %v6024 = vmul.u32 %v6019, %v6020
        %v6025 = vmul.u32 %v6019, %v6021
        %v6026 = vshll.u32 %v6023, 16
        %v6027 = vshrl.u32 %v6023, 16
        %v6028 = vshll.u32 %v6024, 16
        %v6029 = vshrl.u32 %v6024, 16
        %vm6030 = vc.u32 %v6022, %v6026
        %v6031 = vsel %vm6030, 1, 0
        %v6032 = vadd.s32 %v6022, %v6026
        %v6033 = vadd.s32 %v6025, %v6031
        %vm6034 = vc.u32 %v6032, %v6028
        %v6035 = vsel %vm6034, 1, 0
        %v6036 = vadd.s32 %v6032, %v6028
        %v6037 = vadd.s32 %v6033, %v6035
        %v6038 = vadd.s32 %v6037, %v6027
        %v6039 = vadd.s32 %v6038, %v6029
        %v6040 = vand.u32 %v6017, 65535
        %v6041 = vshrl.u32 %v6017, 16
        %v6042 = vand.u32 %v6012, 65535
        %v6043 = vshrl.u32 %v6012, 16
        %v6044 = vmul.u32 %v6040, %v6042
        %v6045 = vmul.u32 %v6040, %v6043
        %v6046 = vmul.u32 %v6041, %v6042
        %v6047 = vmul.u32 %v6041, %v6043
        %v6048 = vshll.u32 %v6045, 16
        %v6049 = vshrl.u32 %v6045, 16
        %v6050 = vshll.u32 %v6046, 16
        %v6051 = vshrl.u32 %v6046, 16
        %vm6052 = vc.u32 %v6044, %v6048
        %v6053 = vsel %vm6052, 1, 0
        %v6054 = vadd.s32 %v6044, %v6048
        %v6055 = vadd.s32 %v6047, %v6053
        %vm6056 = vc.u32 %v6054, %v6050
        %v6057 = vsel %vm6056, 1, 0
        %v6058 = vadd.s32 %v6054, %v6050
        %v6059 = vadd.s32 %v6055, %v6057
        %v6060 = vadd.s32 %v6059, %v6049
        %v6061 = vadd.s32 %v6060, %v6051
        %v6062 = vmul.u32 %v6017, %v6008
        %v6063 = vadd.s32 %v6039, %v6058
        %vm6064 = vc.u32 %v6039, %v6058
        %v6065 = vadd.s32 %v6061, 1
        %v6066 = vsel %vm6064, %v6065, %v6061
        %v6067 = vadd.s32 %v6062, %v6066
        %v6068 = vadd.s32 %v6067, 536870912
        %v6069 = vshrl.u32 %v6068, 30
        %v6070 = vshll.u32 %v6069, 30
        %v6071 = vsub.s32 %v6067, %v6070
        %vm6072 = vcmp.lt.s32.totalorder %v6071, 0
        %v6073 = vsub.s32 0, %v6071
        %v6074 = vsel %vm6072, %v6073, %v6071
        %v6075 = vclz %v6074
        %v6076 = vsub.s32 %v6075, 2
        %vm6077 = vcmp.gt.s32.totalorder 0, %v6076
        %v6078 = vsel %vm6077, 0, %v6076
        %v6079 = vsub.s32 32, %v6078
        %v6080 = vshll.u32 %v6071, %v6078
        %v6081 = vshrl.u32 %v6063, %v6079
        %v6082 = vor.u32 %v6080, %v6081
        %v6083 = vsub.s32 4294967266, %v6078
        %v6084 = vadd.s32 %v6083, 127
        %v6085 = vshll.u32 %v6084, 23
        %v6086 = vor.u32 4788187, %v6085
        %v6087 = vand.u32 2147483647, %v6086
        %v6089 = vcvt.s32.f32 %v6082
        %v6090 = vmul.f32 %v6089, %v6087
        %v6091 = vxor.u32 %v6090, 2147483648
        %v6092 = vsel %vm5971, %v6091, %v6090
        %v6093 = vsub.s32 4, %v6069
        %v6094 = vsel %vm5971, %v6093, %v6069
        %v6095 = vsel %vm5970, %v5799, %v6092
        %v6096 = vsel %vm5970, 0, %v6094
        %v6097 = vmul.f32 %v6095, %v6095
        %v6098 = vmul.f32 %v6097, -0.001358992
        %v6099 = vadd.f32 %v6098, 0.041655596
        %v6100 = vmul.f32 %v6097, %v6099
        %v6101 = vadd.f32 %v6100, -0.4999988
        %v6102 = vmul.f32 %v6097, %v6101
        %v6103 = vadd.f32 1.0, %v6102
        %v6104 = vmul.f32 %v6095, %v6095
        %v6105 = vmul.f32 %v6104, -0.00019511016
        %v6106 = vadd.f32 %v6105, 0.008332121
        %v6107 = vmul.f32 %v6104, %v6106
        %v6108 = vadd.f32 %v6107, -0.16666654
        %v6109 = vmul.f32 %v6104, %v6108
        %v6110 = vadd.f32 %v6109, 1.0
        %v6111 = vmul.f32 %v6110, %v6095
        %vm6112 = vweird.f32 %v5799
        %v6113 = vadd.s32 %v6096, 3
        %v6114 = vand.u32 %v6113, 3
        %vm6115 = vcmp.lt.s32.totalorder %v6114, 2
        %vm6116 = vcmp.eq.s32.totalorder %v6114, 0
        %v6117 = vxor.u32 %v6111, 2147483648
        %v6118 = vsel %vm6116, %v6103, %v6117
        %vm6119 = vcmp.eq.s32.totalorder %v6114, 2
        %v6120 = vxor.u32 %v6103, 2147483648
        %v6121 = vsel %vm6119, %v6120, %v6111
        %v6122 = vsel %vm6115, %v6118, %v6121
        %v6123 = vsel %vm6112, nan, %v6122
        %v6124 = vand.u32 2147483647, %v5800
        %vm6125 = vcmp.le.f32.partialorder %v6124, 0.7853982
        %vm6126 = vcmp.lt.s32.totalorder %v5800, 0
        %v6127 = vand.u32 %v5800, 2139095040
        %v6128 = vshrl.u32 %v6127, 23
        %v6129 = vsub.s32 %v6128, 127
        %v6130 = vand.u32 2147483647, %v5800
        %v6131 = vand.u32 %v6130, 8388607
        %v6132 = vor.u32 %v6131, 8388608
        %v6133 = vsub.s32 0, %v6132
        %v6134 = vadd.s32 %v6129, 1
        %vm6135 = vcmp.gt.s32.totalorder %v6134, 0
        %v6136 = vsel %vm6135, %v6134, 0
        %v6137 = vshrl.u32 %v6136, 5
        %v6138 = vand.u32 %v6136, 31
        %v6139 = vsub.s32 32, %v6138
        %v6140 = vshrl.u32 683565275, %v6139
        %v6141 = vshll.u32 683565275, %v6138
        %v6142 = vshrl.u32 2475754826, %v6139
        %v6143 = vor.u32 %v6141, %v6142
        %v6144 = vshll.u32 2475754826, %v6138
        %v6145 = vshrl.u32 2131351028, %v6139
        %v6146 = vor.u32 %v6144, %v6145
        %v6147 = vshll.u32 2131351028, %v6138
        %v6148 = vshrl.u32 2102212464, %v6139
        %v6149 = vor.u32 %v6147, %v6148
        %v6150 = vshll.u32 2102212464, %v6138
        %v6151 = vshrl.u32 920167782, %v6139
        %v6152 = vor.u32 %v6150, %v6151
        %v6153 = vshll.u32 920167782, %v6138
        %v6154 = vshrl.u32 1326507024, %v6139
        %v6155 = vor.u32 %v6153, %v6154
        %vm6156 = vcmp.lt.s32.totalorder %v6137, 1
        %vm6157 = vcmp.lt.s32.totalorder %v6137, 2
        %vm6158 = vcmp.lt.s32.totalorder %v6137, 3
        %vm6159 = vcmp.lt.s32.totalorder %v6137, 4
        %v6160 = vsel %vm6156, %v6140, %v6143
        %v6161 = vsel %vm6159, %v6149, 2102212464
        %v6162 = vsel %vm6158, %v6146, %v6161
        %v6163 = vsel %vm6157, %v6160, %v6162
        %v6164 = vsel %vm6156, %v6143, %v6146
        %v6165 = vsel %vm6159, %v6152, 920167782
        %v6166 = vsel %vm6158, %v6149, %v6165
        %v6167 = vsel %vm6157, %v6164, %v6166
        %v6168 = vsel %vm6156, %v6146, %v6149
        %v6169 = vsel %vm6159, %v6155, 1326507024
        %v6170 = vsel %vm6158, %v6152, %v6169
        %v6171 = vsel %vm6157, %v6168, %v6170
        %v6172 = vshll.u32 %v6132, 8
        %v6173 = vand.u32 %v6172, 65535
        %v6174 = vshrl.u32 %v6172, 16
        %v6175 = vand.u32 %v6171, 65535
        %v6176 = vshrl.u32 %v6171, 16
        %v6177 = vmul.u32 %v6173, %v6175
        %v6178 = vmul.u32 %v6173, %v6176
        %v6179 = vmul.u32 %v6174, %v6175
        %v6180 = vmul.u32 %v6174, %v6176
        %v6181 = vshll.u32 %v6178, 16
        %v6182 = vshrl.u32 %v6178, 16
        %v6183 = vshll.u32 %v6179, 16
        %v6184 = vshrl.u32 %v6179, 16
        %vm6185 = vc.u32 %v6177, %v6181
        %v6186 = vsel %vm6185, 1, 0
        %v6187 = vadd.s32 %v6177, %v6181
        %v6188 = vadd.s32 %v6180, %v6186
        %vm6189 = vc.u32 %v6187, %v6183
        %v6190 = vsel %vm6189, 1, 0
        %v6191 = vadd.s32 %v6187, %v6183
        %v6192 = vadd.s32 %v6188, %v6190
        %v6193 = vadd.s32 %v6192, %v6182
        %v6194 = vadd.s32 %v6193, %v6184
        %v6195 = vand.u32 %v6172, 65535
        %v6196 = vshrl.u32 %v6172, 16
        %v6197 = vand.u32 %v6167, 65535
        %v6198 = vshrl.u32 %v6167, 16
        %v6199 = vmul.u32 %v6195, %v6197
        %v6200 = vmul.u32 %v6195, %v6198
        %v6201 = vmul.u32 %v6196, %v6197
        %v6202 = vmul.u32 %v6196, %v6198
        %v6203 = vshll.u32 %v6200, 16
        %v6204 = vshrl.u32 %v6200, 16
        %v6205 = vshll.u32 %v6201, 16
        %v6206 = vshrl.u32 %v6201, 16
        %vm6207 = vc.u32 %v6199, %v6203
        %v6208 = vsel %vm6207, 1, 0
        %v6209 = vadd.s32 %v6199, %v6203
        %v6210 = vadd.s32 %v6202, %v6208
        %vm6211 = vc.u32 %v6209, %v6205
        %v6212 = vsel %vm6211, 1, 0
        %v6213 = vadd.s32 %v6209, %v6205
        %v6214 = vadd.s32 %v6210, %v6212
        %v6215 = vadd.s32 %v6214, %v6204
        %v6216 = vadd.s32 %v6215, %v6206
        %v6217 = vmul.u32 %v6172, %v6163
        %v6218 = vadd.s32 %v6194, %v6213
        %vm6219 = vc.u32 %v6194, %v6213
        %v6220 = vadd.s32 %v6216, 1
        %v6221 = vsel %vm6219, %v6220, %v6216
        %v6222 = vadd.s32 %v6217, %v6221
        %v6223 = vadd.s32 %v6222, 536870912
        %v6224 = vshrl.u32 %v6223, 30
        %v6225 = vshll.u32 %v6224, 30
        %v6226 = vsub.s32 %v6222, %v6225
        %vm6227 = vcmp.lt.s32.totalorder %v6226, 0
        %v6228 = vsub.s32 0, %v6226
        %v6229 = vsel %vm6227, %v6228, %v6226
        %v6230 = vclz %v6229
        %v6231 = vsub.s32 %v6230, 2
        %vm6232 = vcmp.gt.s32.totalorder 0, %v6231
        %v6233 = vsel %vm6232, 0, %v6231
        %v6234 = vsub.s32 32, %v6233
        %v6235 = vshll.u32 %v6226, %v6233
        %v6236 = vshrl.u32 %v6218, %v6234
        %v6237 = vor.u32 %v6235, %v6236
        %v6238 = vsub.s32 4294967266, %v6233
        %v6239 = vadd.s32 %v6238, 127
        %v6240 = vshll.u32 %v6239, 23
        %v6241 = vor.u32 4788187, %v6240
        %v6242 = vand.u32 2147483647, %v6241
        %v6244 = vcvt.s32.f32 %v6237
        %v6245 = vmul.f32 %v6244, %v6242
        %v6246 = vxor.u32 %v6245, 2147483648
        %v6247 = vsel %vm6126, %v6246, %v6245
        %v6248 = vsub.s32 4, %v6224
        %v6249 = vsel %vm6126, %v6248, %v6224
        %v6250 = vsel %vm6125, %v5800, %v6247
        %v6251 = vsel %vm6125, 0, %v6249
        %v6252 = vmul.f32 %v6250, %v6250
        %v6253 = vmul.f32 %v6252, -0.001358992
        %v6254 = vadd.f32 %v6253, 0.041655596
        %v6255 = vmul.f32 %v6252, %v6254
        %v6256 = vadd.f32 %v6255, -0.4999988
        %v6257 = vmul.f32 %v6252, %v6256
        %v6258 = vadd.f32 1.0, %v6257
        %v6259 = vmul.f32 %v6250, %v6250
        %v6260 = vmul.f32 %v6259, -0.00019511016
        %v6261 = vadd.f32 %v6260, 0.008332121
        %v6262 = vmul.f32 %v6259, %v6261
        %v6263 = vadd.f32 %v6262, -0.16666654
        %v6264 = vmul.f32 %v6259, %v6263
        %v6265 = vadd.f32 %v6264, 1.0
        %v6266 = vmul.f32 %v6265, %v6250
        %vm6267 = vweird.f32 %v5800
        %v6268 = vadd.s32 %v6251, 3
        %v6269 = vand.u32 %v6268, 3
        %vm6270 = vcmp.lt.s32.totalorder %v6269, 2
        %vm6271 = vcmp.eq.s32.totalorder %v6269, 0
        %v6272 = vxor.u32 %v6266, 2147483648
        %v6273 = vsel %vm6271, %v6258, %v6272
        %vm6274 = vcmp.eq.s32.totalorder %v6269, 2
        %v6275 = vxor.u32 %v6258, 2147483648
        %v6276 = vsel %vm6274, %v6275, %v6266
        %v6277 = vsel %vm6270, %v6273, %v6276
        %v6278 = vsel %vm6267, nan, %v6277
        %v6279 = vand.u32 2147483647, %v5801
        %vm6280 = vcmp.le.f32.partialorder %v6279, 0.7853982
        %vm6281 = vcmp.lt.s32.totalorder %v5801, 0
        %v6282 = vand.u32 %v5801, 2139095040
        %v6283 = vshrl.u32 %v6282, 23
        %v6284 = vsub.s32 %v6283, 127
        %v6285 = vand.u32 2147483647, %v5801
        %v6286 = vand.u32 %v6285, 8388607
        %v6287 = vor.u32 %v6286, 8388608
        %v6288 = vsub.s32 0, %v6287
        %v6289 = vadd.s32 %v6284, 1
        %vm6290 = vcmp.gt.s32.totalorder %v6289, 0
        %v6291 = vsel %vm6290, %v6289, 0
        %v6292 = vshrl.u32 %v6291, 5
        %v6293 = vand.u32 %v6291, 31
        %v6294 = vsub.s32 32, %v6293
        %v6295 = vshrl.u32 683565275, %v6294
        %v6296 = vshll.u32 683565275, %v6293
        %v6297 = vshrl.u32 2475754826, %v6294
        %v6298 = vor.u32 %v6296, %v6297
        %v6299 = vshll.u32 2475754826, %v6293
        %v6300 = vshrl.u32 2131351028, %v6294
        %v6301 = vor.u32 %v6299, %v6300
        %v6302 = vshll.u32 2131351028, %v6293
        %v6303 = vshrl.u32 2102212464, %v6294
        %v6304 = vor.u32 %v6302, %v6303
        %v6305 = vshll.u32 2102212464, %v6293
        %v6306 = vshrl.u32 920167782, %v6294
        %v6307 = vor.u32 %v6305, %v6306
        %v6308 = vshll.u32 920167782, %v6293
        %v6309 = vshrl.u32 1326507024, %v6294
        %v6310 = vor.u32 %v6308, %v6309
        %vm6311 = vcmp.lt.s32.totalorder %v6292, 1
        %vm6312 = vcmp.lt.s32.totalorder %v6292, 2
        %vm6313 = vcmp.lt.s32.totalorder %v6292, 3
        %vm6314 = vcmp.lt.s32.totalorder %v6292, 4
        %v6315 = vsel %vm6311, %v6295, %v6298
        %v6316 = vsel %vm6314, %v6304, 2102212464
        %v6317 = vsel %vm6313, %v6301, %v6316
        %v6318 = vsel %vm6312, %v6315, %v6317
        %v6319 = vsel %vm6311, %v6298, %v6301
        %v6320 = vsel %vm6314, %v6307, 920167782
        %v6321 = vsel %vm6313, %v6304, %v6320
        %v6322 = vsel %vm6312, %v6319, %v6321
        %v6323 = vsel %vm6311, %v6301, %v6304
        %v6324 = vsel %vm6314, %v6310, 1326507024
        %v6325 = vsel %vm6313, %v6307, %v6324
        %v6326 = vsel %vm6312, %v6323, %v6325
        %v6327 = vshll.u32 %v6287, 8
        %v6328 = vand.u32 %v6327, 65535
        %v6329 = vshrl.u32 %v6327, 16
        %v6330 = vand.u32 %v6326, 65535
        %v6331 = vshrl.u32 %v6326, 16
        %v6332 = vmul.u32 %v6328, %v6330
        %v6333 = vmul.u32 %v6328, %v6331
        %v6334 = vmul.u32 %v6329, %v6330
        %v6335 = vmul.u32 %v6329, %v6331
        %v6336 = vshll.u32 %v6333, 16
        %v6337 = vshrl.u32 %v6333, 16
        %v6338 = vshll.u32 %v6334, 16
        %v6339 = vshrl.u32 %v6334, 16
        %vm6340 = vc.u32 %v6332, %v6336
        %v6341 = vsel %vm6340, 1, 0
        %v6342 = vadd.s32 %v6332, %v6336
        %v6343 = vadd.s32 %v6335, %v6341
        %vm6344 = vc.u32 %v6342, %v6338
        %v6345 = vsel %vm6344, 1, 0
        %v6346 = vadd.s32 %v6342, %v6338
        %v6347 = vadd.s32 %v6343, %v6345
        %v6348 = vadd.s32 %v6347, %v6337
        %v6349 = vadd.s32 %v6348, %v6339
        %v6350 = vand.u32 %v6327, 65535
        %v6351 = vshrl.u32 %v6327, 16
        %v6352 = vand.u32 %v6322, 65535
        %v6353 = vshrl.u32 %v6322, 16
        %v6354 = vmul.u32 %v6350, %v6352
        %v6355 = vmul.u32 %v6350, %v6353
        %v6356 = vmul.u32 %v6351, %v6352
        %v6357 = vmul.u32 %v6351, %v6353
        %v6358 = vshll.u32 %v6355, 16
        %v6359 = vshrl.u32 %v6355, 16
        %v6360 = vshll.u32 %v6356, 16
        %v6361 = vshrl.u32 %v6356, 16
        %vm6362 = vc.u32 %v6354, %v6358
        %v6363 = vsel %vm6362, 1, 0
        %v6364 = vadd.s32 %v6354, %v6358
        %v6365 = vadd.s32 %v6357, %v6363
        %vm6366 = vc.u32 %v6364, %v6360
        %v6367 = vsel %vm6366, 1, 0
        %v6368 = vadd.s32 %v6364, %v6360
        %v6369 = vadd.s32 %v6365, %v6367
        %v6370 = vadd.s32 %v6369, %v6359
        %v6371 = vadd.s32 %v6370, %v6361
        %v6372 = vmul.u32 %v6327, %v6318
        %v6373 = vadd.s32 %v6349, %v6368
        %vm6374 = vc.u32 %v6349, %v6368
        %v6375 = vadd.s32 %v6371, 1
        %v6376 = vsel %vm6374, %v6375, %v6371
        %v6377 = vadd.s32 %v6372, %v6376
        %v6378 = vadd.s32 %v6377, 536870912
        %v6379 = vshrl.u32 %v6378, 30
        %v6380 = vshll.u32 %v6379, 30
        %v6381 = vsub.s32 %v6377, %v6380
        %vm6382 = vcmp.lt.s32.totalorder %v6381, 0
        %v6383 = vsub.s32 0, %v6381
        %v6384 = vsel %vm6382, %v6383, %v6381
        %v6385 = vclz %v6384
        %v6386 = vsub.s32 %v6385, 2
        %vm6387 = vcmp.gt.s32.totalorder 0, %v6386
        %v6388 = vsel %vm6387, 0, %v6386
        %v6389 = vsub.s32 32, %v6388
        %v6390 = vshll.u32 %v6381, %v6388
        %v6391 = vshrl.u32 %v6373, %v6389
        %v6392 = vor.u32 %v6390, %v6391
        %v6393 = vsub.s32 4294967266, %v6388
        %v6394 = vadd.s32 %v6393, 127
        %v6395 = vshll.u32 %v6394, 23
        %v6396 = vor.u32 4788187, %v6395
        %v6397 = vand.u32 2147483647, %v6396
        %v6399 = vcvt.s32.f32 %v6392
        %v6400 = vmul.f32 %v6399, %v6397
        %v6401 = vxor.u32 %v6400, 2147483648
        %v6402 = vsel %vm6281, %v6401, %v6400
        %v6403 = vsub.s32 4, %v6379
        %v6404 = vsel %vm6281, %v6403, %v6379
        %v6405 = vsel %vm6280, %v5801, %v6402
        %v6406 = vsel %vm6280, 0, %v6404
        %v6407 = vmul.f32 %v6405, %v6405
        %v6408 = vmul.f32 %v6407, -0.001358992
        %v6409 = vadd.f32 %v6408, 0.041655596
        %v6410 = vmul.f32 %v6407, %v6409
        %v6411 = vadd.f32 %v6410, -0.4999988
        %v6412 = vmul.f32 %v6407, %v6411
        %v6413 = vadd.f32 1.0, %v6412
        %v6414 = vmul.f32 %v6405, %v6405
        %v6415 = vmul.f32 %v6414, -0.00019511016
        %v6416 = vadd.f32 %v6415, 0.008332121
        %v6417 = vmul.f32 %v6414, %v6416
        %v6418 = vadd.f32 %v6417, -0.16666654
        %v6419 = vmul.f32 %v6414, %v6418
        %v6420 = vadd.f32 %v6419, 1.0
        %v6421 = vmul.f32 %v6420, %v6405
        %vm6422 = vweird.f32 %v5801
        %v6423 = vadd.s32 %v6406, 3
        %v6424 = vand.u32 %v6423, 3
        %vm6425 = vcmp.lt.s32.totalorder %v6424, 2
        %vm6426 = vcmp.eq.s32.totalorder %v6424, 0
        %v6427 = vxor.u32 %v6421, 2147483648
        %v6428 = vsel %vm6426, %v6413, %v6427
        %vm6429 = vcmp.eq.s32.totalorder %v6424, 2
        %v6430 = vxor.u32 %v6413, 2147483648
        %v6431 = vsel %vm6429, %v6430, %v6421
        %v6432 = vsel %vm6425, %v6428, %v6431
        %v6433 = vsel %vm6422, nan, %v6432
        %v6434 = vand.u32 2147483647, %v5802
        %vm6435 = vcmp.le.f32.partialorder %v6434, 0.7853982
        %vm6436 = vcmp.lt.s32.totalorder %v5802, 0
        %v6437 = vand.u32 %v5802, 2139095040
        %v6438 = vshrl.u32 %v6437, 23
        %v6439 = vsub.s32 %v6438, 127
        %v6440 = vand.u32 2147483647, %v5802
        %v6441 = vand.u32 %v6440, 8388607
        %v6442 = vor.u32 %v6441, 8388608
        %v6443 = vsub.s32 0, %v6442
        %v6444 = vadd.s32 %v6439, 1
        %vm6445 = vcmp.gt.s32.totalorder %v6444, 0
        %v6446 = vsel %vm6445, %v6444, 0
        %v6447 = vshrl.u32 %v6446, 5
        %v6448 = vand.u32 %v6446, 31
        %v6449 = vsub.s32 32, %v6448
        %v6450 = vshrl.u32 683565275, %v6449
        %v6451 = vshll.u32 683565275, %v6448
        %v6452 = vshrl.u32 2475754826, %v6449
        %v6453 = vor.u32 %v6451, %v6452
        %v6454 = vshll.u32 2475754826, %v6448
        %v6455 = vshrl.u32 2131351028, %v6449
        %v6456 = vor.u32 %v6454, %v6455
        %v6457 = vshll.u32 2131351028, %v6448
        %v6458 = vshrl.u32 2102212464, %v6449
        %v6459 = vor.u32 %v6457, %v6458
        %v6460 = vshll.u32 2102212464, %v6448
        %v6461 = vshrl.u32 920167782, %v6449
        %v6462 = vor.u32 %v6460, %v6461
        %v6463 = vshll.u32 920167782, %v6448
        %v6464 = vshrl.u32 1326507024, %v6449
        %v6465 = vor.u32 %v6463, %v6464
        %vm6466 = vcmp.lt.s32.totalorder %v6447, 1
        %vm6467 = vcmp.lt.s32.totalorder %v6447, 2
        %vm6468 = vcmp.lt.s32.totalorder %v6447, 3
        %vm6469 = vcmp.lt.s32.totalorder %v6447, 4
        %v6470 = vsel %vm6466, %v6450, %v6453
        %v6471 = vsel %vm6469, %v6459, 2102212464
        %v6472 = vsel %vm6468, %v6456, %v6471
        %v6473 = vsel %vm6467, %v6470, %v6472
        %v6474 = vsel %vm6466, %v6453, %v6456
        %v6475 = vsel %vm6469, %v6462, 920167782
        %v6476 = vsel %vm6468, %v6459, %v6475
        %v6477 = vsel %vm6467, %v6474, %v6476
        %v6478 = vsel %vm6466, %v6456, %v6459
        %v6479 = vsel %vm6469, %v6465, 1326507024
        %v6480 = vsel %vm6468, %v6462, %v6479
        %v6481 = vsel %vm6467, %v6478, %v6480
        %v6482 = vshll.u32 %v6442, 8
        %v6483 = vand.u32 %v6482, 65535
        %v6484 = vshrl.u32 %v6482, 16
        %v6485 = vand.u32 %v6481, 65535
        %v6486 = vshrl.u32 %v6481, 16
        %v6487 = vmul.u32 %v6483, %v6485
        %v6488 = vmul.u32 %v6483, %v6486
        %v6489 = vmul.u32 %v6484, %v6485
        %v6490 = vmul.u32 %v6484, %v6486
        %v6491 = vshll.u32 %v6488, 16
        %v6492 = vshrl.u32 %v6488, 16
        %v6493 = vshll.u32 %v6489, 16
        %v6494 = vshrl.u32 %v6489, 16
        %vm6495 = vc.u32 %v6487, %v6491
        %v6496 = vsel %vm6495, 1, 0
        %v6497 = vadd.s32 %v6487, %v6491
        %v6498 = vadd.s32 %v6490, %v6496
        %vm6499 = vc.u32 %v6497, %v6493
        %v6500 = vsel %vm6499, 1, 0
        %v6501 = vadd.s32 %v6497, %v6493
        %v6502 = vadd.s32 %v6498, %v6500
        %v6503 = vadd.s32 %v6502, %v6492
        %v6504 = vadd.s32 %v6503, %v6494
        %v6505 = vand.u32 %v6482, 65535
        %v6506 = vshrl.u32 %v6482, 16
        %v6507 = vand.u32 %v6477, 65535
        %v6508 = vshrl.u32 %v6477, 16
        %v6509 = vmul.u32 %v6505, %v6507
        %v6510 = vmul.u32 %v6505, %v6508
        %v6511 = vmul.u32 %v6506, %v6507
        %v6512 = vmul.u32 %v6506, %v6508
        %v6513 = vshll.u32 %v6510, 16
        %v6514 = vshrl.u32 %v6510, 16
        %v6515 = vshll.u32 %v6511, 16
        %v6516 = vshrl.u32 %v6511, 16
        %vm6517 = vc.u32 %v6509, %v6513
        %v6518 = vsel %vm6517, 1, 0
        %v6519 = vadd.s32 %v6509, %v6513
        %v6520 = vadd.s32 %v6512, %v6518
        %vm6521 = vc.u32 %v6519, %v6515
        %v6522 = vsel %vm6521, 1, 0
        %v6523 = vadd.s32 %v6519, %v6515
        %v6524 = vadd.s32 %v6520, %v6522
        %v6525 = vadd.s32 %v6524, %v6514
        %v6526 = vadd.s32 %v6525, %v6516
        %v6527 = vmul.u32 %v6482, %v6473
        %v6528 = vadd.s32 %v6504, %v6523
        %vm6529 = vc.u32 %v6504, %v6523
        %v6530 = vadd.s32 %v6526, 1
        %v6531 = vsel %vm6529, %v6530, %v6526
        %v6532 = vadd.s32 %v6527, %v6531
        %v6533 = vadd.s32 %v6532, 536870912
        %v6534 = vshrl.u32 %v6533, 30
        %v6535 = vshll.u32 %v6534, 30
        %v6536 = vsub.s32 %v6532, %v6535
        %vm6537 = vcmp.lt.s32.totalorder %v6536, 0
        %v6538 = vsub.s32 0, %v6536
        %v6539 = vsel %vm6537, %v6538, %v6536
        %v6540 = vclz %v6539
        %v6541 = vsub.s32 %v6540, 2
        %vm6542 = vcmp.gt.s32.totalorder 0, %v6541
        %v6543 = vsel %vm6542, 0, %v6541
        %v6544 = vsub.s32 32, %v6543
        %v6545 = vshll.u32 %v6536, %v6543
        %v6546 = vshrl.u32 %v6528, %v6544
        %v6547 = vor.u32 %v6545, %v6546
        %v6548 = vsub.s32 4294967266, %v6543
        %v6549 = vadd.s32 %v6548, 127
        %v6550 = vshll.u32 %v6549, 23
        %v6551 = vor.u32 4788187, %v6550
        %v6552 = vand.u32 2147483647, %v6551
        %v6554 = vcvt.s32.f32 %v6547
        %v6555 = vmul.f32 %v6554, %v6552
        %v6556 = vxor.u32 %v6555, 2147483648
        %v6557 = vsel %vm6436, %v6556, %v6555
        %v6558 = vsub.s32 4, %v6534
        %v6559 = vsel %vm6436, %v6558, %v6534
        %v6560 = vsel %vm6435, %v5802, %v6557
        %v6561 = vsel %vm6435, 0, %v6559
        %v6562 = vmul.f32 %v6560, %v6560
        %v6563 = vmul.f32 %v6562, -0.001358992
        %v6564 = vadd.f32 %v6563, 0.041655596
        %v6565 = vmul.f32 %v6562, %v6564
        %v6566 = vadd.f32 %v6565, -0.4999988
        %v6567 = vmul.f32 %v6562, %v6566
        %v6568 = vadd.f32 1.0, %v6567
        %v6569 = vmul.f32 %v6560, %v6560
        %v6570 = vmul.f32 %v6569, -0.00019511016
        %v6571 = vadd.f32 %v6570, 0.008332121
        %v6572 = vmul.f32 %v6569, %v6571
        %v6573 = vadd.f32 %v6572, -0.16666654
        %v6574 = vmul.f32 %v6569, %v6573
        %v6575 = vadd.f32 %v6574, 1.0
        %v6576 = vmul.f32 %v6575, %v6560
        %vm6577 = vweird.f32 %v5802
        %v6578 = vadd.s32 %v6561, 3
        %v6579 = vand.u32 %v6578, 3
        %vm6580 = vcmp.lt.s32.totalorder %v6579, 2
        %vm6581 = vcmp.eq.s32.totalorder %v6579, 0
        %v6582 = vxor.u32 %v6576, 2147483648
        %v6583 = vsel %vm6581, %v6568, %v6582
        %vm6584 = vcmp.eq.s32.totalorder %v6579, 2
        %v6585 = vxor.u32 %v6568, 2147483648
        %v6586 = vsel %vm6584, %v6585, %v6576
        %v6587 = vsel %vm6580, %v6583, %v6586
        %v6588 = vsel %vm6577, nan, %v6587
        %v6589 = vand.u32 2147483647, %v5803
        %vm6590 = vcmp.le.f32.partialorder %v6589, 0.7853982
        %vm6591 = vcmp.lt.s32.totalorder %v5803, 0
        %v6592 = vand.u32 %v5803, 2139095040
        %v6593 = vshrl.u32 %v6592, 23
        %v6594 = vsub.s32 %v6593, 127
        %v6595 = vand.u32 2147483647, %v5803
        %v6596 = vand.u32 %v6595, 8388607
        %v6597 = vor.u32 %v6596, 8388608
        %v6598 = vsub.s32 0, %v6597
        %v6599 = vadd.s32 %v6594, 1
        %vm6600 = vcmp.gt.s32.totalorder %v6599, 0
        %v6601 = vsel %vm6600, %v6599, 0
        %v6602 = vshrl.u32 %v6601, 5
        %v6603 = vand.u32 %v6601, 31
        %v6604 = vsub.s32 32, %v6603
        %v6605 = vshrl.u32 683565275, %v6604
        %v6606 = vshll.u32 683565275, %v6603
        %v6607 = vshrl.u32 2475754826, %v6604
        %v6608 = vor.u32 %v6606, %v6607
        %v6609 = vshll.u32 2475754826, %v6603
        %v6610 = vshrl.u32 2131351028, %v6604
        %v6611 = vor.u32 %v6609, %v6610
        %v6612 = vshll.u32 2131351028, %v6603
        %v6613 = vshrl.u32 2102212464, %v6604
        %v6614 = vor.u32 %v6612, %v6613
        %v6615 = vshll.u32 2102212464, %v6603
        %v6616 = vshrl.u32 920167782, %v6604
        %v6617 = vor.u32 %v6615, %v6616
        %v6618 = vshll.u32 920167782, %v6603
        %v6619 = vshrl.u32 1326507024, %v6604
        %v6620 = vor.u32 %v6618, %v6619
        %vm6621 = vcmp.lt.s32.totalorder %v6602, 1
        %vm6622 = vcmp.lt.s32.totalorder %v6602, 2
        %vm6623 = vcmp.lt.s32.totalorder %v6602, 3
        %vm6624 = vcmp.lt.s32.totalorder %v6602, 4
        %v6625 = vsel %vm6621, %v6605, %v6608
        %v6626 = vsel %vm6624, %v6614, 2102212464
        %v6627 = vsel %vm6623, %v6611, %v6626
        %v6628 = vsel %vm6622, %v6625, %v6627
        %v6629 = vsel %vm6621, %v6608, %v6611
        %v6630 = vsel %vm6624, %v6617, 920167782
        %v6631 = vsel %vm6623, %v6614, %v6630
        %v6632 = vsel %vm6622, %v6629, %v6631
        %v6633 = vsel %vm6621, %v6611, %v6614
        %v6634 = vsel %vm6624, %v6620, 1326507024
        %v6635 = vsel %vm6623, %v6617, %v6634
        %v6636 = vsel %vm6622, %v6633, %v6635
        %v6637 = vshll.u32 %v6597, 8
        %v6638 = vand.u32 %v6637, 65535
        %v6639 = vshrl.u32 %v6637, 16
        %v6640 = vand.u32 %v6636, 65535
        %v6641 = vshrl.u32 %v6636, 16
        %v6642 = vmul.u32 %v6638, %v6640
        %v6643 = vmul.u32 %v6638, %v6641
        %v6644 = vmul.u32 %v6639, %v6640
        %v6645 = vmul.u32 %v6639, %v6641
        %v6646 = vshll.u32 %v6643, 16
        %v6647 = vshrl.u32 %v6643, 16
        %v6648 = vshll.u32 %v6644, 16
        %v6649 = vshrl.u32 %v6644, 16
        %vm6650 = vc.u32 %v6642, %v6646
        %v6651 = vsel %vm6650, 1, 0
        %v6652 = vadd.s32 %v6642, %v6646
        %v6653 = vadd.s32 %v6645, %v6651
        %vm6654 = vc.u32 %v6652, %v6648
        %v6655 = vsel %vm6654, 1, 0
        %v6656 = vadd.s32 %v6652, %v6648
        %v6657 = vadd.s32 %v6653, %v6655
        %v6658 = vadd.s32 %v6657, %v6647
        %v6659 = vadd.s32 %v6658, %v6649
        %v6660 = vand.u32 %v6637, 65535
        %v6661 = vshrl.u32 %v6637, 16
        %v6662 = vand.u32 %v6632, 65535
        %v6663 = vshrl.u32 %v6632, 16
        %v6664 = vmul.u32 %v6660, %v6662
        %v6665 = vmul.u32 %v6660, %v6663
        %v6666 = vmul.u32 %v6661, %v6662
        %v6667 = vmul.u32 %v6661, %v6663
        %v6668 = vshll.u32 %v6665, 16
        %v6669 = vshrl.u32 %v6665, 16
        %v6670 = vshll.u32 %v6666, 16
        %v6671 = vshrl.u32 %v6666, 16
        %vm6672 = vc.u32 %v6664, %v6668
        %v6673 = vsel %vm6672, 1, 0
        %v6674 = vadd.s32 %v6664, %v6668
        %v6675 = vadd.s32 %v6667, %v6673
        %vm6676 = vc.u32 %v6674, %v6670
        %v6677 = vsel %vm6676, 1, 0
        %v6678 = vadd.s32 %v6674, %v6670
        %v6679 = vadd.s32 %v6675, %v6677
        %v6680 = vadd.s32 %v6679, %v6669
        %v6681 = vadd.s32 %v6680, %v6671
        %v6682 = vmul.u32 %v6637, %v6628
        %v6683 = vadd.s32 %v6659, %v6678
        %vm6684 = vc.u32 %v6659, %v6678
        %v6685 = vadd.s32 %v6681, 1
        %v6686 = vsel %vm6684, %v6685, %v6681
        %v6687 = vadd.s32 %v6682, %v6686
        %v6688 = vadd.s32 %v6687, 536870912
        %v6689 = vshrl.u32 %v6688, 30
        %v6690 = vshll.u32 %v6689, 30
        %v6691 = vsub.s32 %v6687, %v6690
        %vm6692 = vcmp.lt.s32.totalorder %v6691, 0
        %v6693 = vsub.s32 0, %v6691
        %v6694 = vsel %vm6692, %v6693, %v6691
        %v6695 = vclz %v6694
        %v6696 = vsub.s32 %v6695, 2
        %vm6697 = vcmp.gt.s32.totalorder 0, %v6696
        %v6698 = vsel %vm6697, 0, %v6696
        %v6699 = vsub.s32 32, %v6698
        %v6700 = vshll.u32 %v6691, %v6698
        %v6701 = vshrl.u32 %v6683, %v6699
        %v6702 = vor.u32 %v6700, %v6701
        %v6703 = vsub.s32 4294967266, %v6698
        %v6704 = vadd.s32 %v6703, 127
        %v6705 = vshll.u32 %v6704, 23
        %v6706 = vor.u32 4788187, %v6705
        %v6707 = vand.u32 2147483647, %v6706
        %v6709 = vcvt.s32.f32 %v6702
        %v6710 = vmul.f32 %v6709, %v6707
        %v6711 = vxor.u32 %v6710, 2147483648
        %v6712 = vsel %vm6591, %v6711, %v6710
        %v6713 = vsub.s32 4, %v6689
        %v6714 = vsel %vm6591, %v6713, %v6689
        %v6715 = vsel %vm6590, %v5803, %v6712
        %v6716 = vsel %vm6590, 0, %v6714
        %v6717 = vmul.f32 %v6715, %v6715
        %v6718 = vmul.f32 %v6717, -0.001358992
        %v6719 = vadd.f32 %v6718, 0.041655596
        %v6720 = vmul.f32 %v6717, %v6719
        %v6721 = vadd.f32 %v6720, -0.4999988
        %v6722 = vmul.f32 %v6717, %v6721
        %v6723 = vadd.f32 1.0, %v6722
        %v6724 = vmul.f32 %v6715, %v6715
        %v6725 = vmul.f32 %v6724, -0.00019511016
        %v6726 = vadd.f32 %v6725, 0.008332121
        %v6727 = vmul.f32 %v6724, %v6726
        %v6728 = vadd.f32 %v6727, -0.16666654
        %v6729 = vmul.f32 %v6724, %v6728
        %v6730 = vadd.f32 %v6729, 1.0
        %v6731 = vmul.f32 %v6730, %v6715
        %vm6732 = vweird.f32 %v5803
        %v6733 = vadd.s32 %v6716, 3
        %v6734 = vand.u32 %v6733, 3
        %vm6735 = vcmp.lt.s32.totalorder %v6734, 2
        %vm6736 = vcmp.eq.s32.totalorder %v6734, 0
        %v6737 = vxor.u32 %v6731, 2147483648
        %v6738 = vsel %vm6736, %v6723, %v6737
        %vm6739 = vcmp.eq.s32.totalorder %v6734, 2
        %v6740 = vxor.u32 %v6723, 2147483648
        %v6741 = vsel %vm6739, %v6740, %v6731
        %v6742 = vsel %vm6735, %v6738, %v6741
        %v6743 = vsel %vm6732, nan, %v6742
        %v6744 = vand.u32 2147483647, %v5804
        %vm6745 = vcmp.le.f32.partialorder %v6744, 0.7853982
        %vm6746 = vcmp.lt.s32.totalorder %v5804, 0
        %v6747 = vand.u32 %v5804, 2139095040
        %v6748 = vshrl.u32 %v6747, 23
        %v6749 = vsub.s32 %v6748, 127
        %v6750 = vand.u32 2147483647, %v5804
        %v6751 = vand.u32 %v6750, 8388607
        %v6752 = vor.u32 %v6751, 8388608
        %v6753 = vsub.s32 0, %v6752
        %v6754 = vadd.s32 %v6749, 1
        %vm6755 = vcmp.gt.s32.totalorder %v6754, 0
        %v6756 = vsel %vm6755, %v6754, 0
        %v6757 = vshrl.u32 %v6756, 5
        %v6758 = vand.u32 %v6756, 31
        %v6759 = vsub.s32 32, %v6758
        %v6760 = vshrl.u32 683565275, %v6759
        %v6761 = vshll.u32 683565275, %v6758
        %v6762 = vshrl.u32 2475754826, %v6759
        %v6763 = vor.u32 %v6761, %v6762
        %v6764 = vshll.u32 2475754826, %v6758
        %v6765 = vshrl.u32 2131351028, %v6759
        %v6766 = vor.u32 %v6764, %v6765
        %v6767 = vshll.u32 2131351028, %v6758
        %v6768 = vshrl.u32 2102212464, %v6759
        %v6769 = vor.u32 %v6767, %v6768
        %v6770 = vshll.u32 2102212464, %v6758
        %v6771 = vshrl.u32 920167782, %v6759
        %v6772 = vor.u32 %v6770, %v6771
        %v6773 = vshll.u32 920167782, %v6758
        %v6774 = vshrl.u32 1326507024, %v6759
        %v6775 = vor.u32 %v6773, %v6774
        %vm6776 = vcmp.lt.s32.totalorder %v6757, 1
        %vm6777 = vcmp.lt.s32.totalorder %v6757, 2
        %vm6778 = vcmp.lt.s32.totalorder %v6757, 3
        %vm6779 = vcmp.lt.s32.totalorder %v6757, 4
        %v6780 = vsel %vm6776, %v6760, %v6763
        %v6781 = vsel %vm6779, %v6769, 2102212464
        %v6782 = vsel %vm6778, %v6766, %v6781
        %v6783 = vsel %vm6777, %v6780, %v6782
        %v6784 = vsel %vm6776, %v6763, %v6766
        %v6785 = vsel %vm6779, %v6772, 920167782
        %v6786 = vsel %vm6778, %v6769, %v6785
        %v6787 = vsel %vm6777, %v6784, %v6786
        %v6788 = vsel %vm6776, %v6766, %v6769
        %v6789 = vsel %vm6779, %v6775, 1326507024
        %v6790 = vsel %vm6778, %v6772, %v6789
        %v6791 = vsel %vm6777, %v6788, %v6790
        %v6792 = vshll.u32 %v6752, 8
        %v6793 = vand.u32 %v6792, 65535
        %v6794 = vshrl.u32 %v6792, 16
        %v6795 = vand.u32 %v6791, 65535
        %v6796 = vshrl.u32 %v6791, 16
        %v6797 = vmul.u32 %v6793, %v6795
        %v6798 = vmul.u32 %v6793, %v6796
        %v6799 = vmul.u32 %v6794, %v6795
        %v6800 = vmul.u32 %v6794, %v6796
        %v6801 = vshll.u32 %v6798, 16
        %v6802 = vshrl.u32 %v6798, 16
        %v6803 = vshll.u32 %v6799, 16
        %v6804 = vshrl.u32 %v6799, 16
        %vm6805 = vc.u32 %v6797, %v6801
        %v6806 = vsel %vm6805, 1, 0
        %v6807 = vadd.s32 %v6797, %v6801
        %v6808 = vadd.s32 %v6800, %v6806
        %vm6809 = vc.u32 %v6807, %v6803
        %v6810 = vsel %vm6809, 1, 0
        %v6811 = vadd.s32 %v6807, %v6803
        %v6812 = vadd.s32 %v6808, %v6810
        %v6813 = vadd.s32 %v6812, %v6802
        %v6814 = vadd.s32 %v6813, %v6804
        %v6815 = vand.u32 %v6792, 65535
        %v6816 = vshrl.u32 %v6792, 16
        %v6817 = vand.u32 %v6787, 65535
        %v6818 = vshrl.u32 %v6787, 16
        %v6819 = vmul.u32 %v6815, %v6817
        %v6820 = vmul.u32 %v6815, %v6818
        %v6821 = vmul.u32 %v6816, %v6817
        %v6822 = vmul.u32 %v6816, %v6818
        %v6823 = vshll.u32 %v6820, 16
        %v6824 = vshrl.u32 %v6820, 16
        %v6825 = vshll.u32 %v6821, 16
        %v6826 = vshrl.u32 %v6821, 16
        %vm6827 = vc.u32 %v6819, %v6823
        %v6828 = vsel %vm6827, 1, 0
        %v6829 = vadd.s32 %v6819, %v6823
        %v6830 = vadd.s32 %v6822, %v6828
        %vm6831 = vc.u32 %v6829, %v6825
        %v6832 = vsel %vm6831, 1, 0
        %v6833 = vadd.s32 %v6829, %v6825
        %v6834 = vadd.s32 %v6830, %v6832
        %v6835 = vadd.s32 %v6834, %v6824
        %v6836 = vadd.s32 %v6835, %v6826
        %v6837 = vmul.u32 %v6792, %v6783
        %v6838 = vadd.s32 %v6814, %v6833
        %vm6839 = vc.u32 %v6814, %v6833
        %v6840 = vadd.s32 %v6836, 1
        %v6841 = vsel %vm6839, %v6840, %v6836
        %v6842 = vadd.s32 %v6837, %v6841
        %v6843 = vadd.s32 %v6842, 536870912
        %v6844 = vshrl.u32 %v6843, 30
        %v6845 = vshll.u32 %v6844, 30
        %v6846 = vsub.s32 %v6842, %v6845
        %vm6847 = vcmp.lt.s32.totalorder %v6846, 0
        %v6848 = vsub.s32 0, %v6846
        %v6849 = vsel %vm6847, %v6848, %v6846
        %v6850 = vclz %v6849
        %v6851 = vsub.s32 %v6850, 2
        %vm6852 = vcmp.gt.s32.totalorder 0, %v6851
        %v6853 = vsel %vm6852, 0, %v6851
        %v6854 = vsub.s32 32, %v6853
        %v6855 = vshll.u32 %v6846, %v6853
        %v6856 = vshrl.u32 %v6838, %v6854
        %v6857 = vor.u32 %v6855, %v6856
        %v6858 = vsub.s32 4294967266, %v6853
        %v6859 = vadd.s32 %v6858, 127
        %v6860 = vshll.u32 %v6859, 23
        %v6861 = vor.u32 4788187, %v6860
        %v6862 = vand.u32 2147483647, %v6861
        %v6864 = vcvt.s32.f32 %v6857
        %v6865 = vmul.f32 %v6864, %v6862
        %v6866 = vxor.u32 %v6865, 2147483648
        %v6867 = vsel %vm6746, %v6866, %v6865
        %v6868 = vsub.s32 4, %v6844
        %v6869 = vsel %vm6746, %v6868, %v6844
        %v6870 = vsel %vm6745, %v5804, %v6867
        %v6871 = vsel %vm6745, 0, %v6869
        %v6872 = vmul.f32 %v6870, %v6870
        %v6873 = vmul.f32 %v6872, -0.001358992
        %v6874 = vadd.f32 %v6873, 0.041655596
        %v6875 = vmul.f32 %v6872, %v6874
        %v6876 = vadd.f32 %v6875, -0.4999988
        %v6877 = vmul.f32 %v6872, %v6876
        %v6878 = vadd.f32 1.0, %v6877
        %v6879 = vmul.f32 %v6870, %v6870
        %v6880 = vmul.f32 %v6879, -0.00019511016
        %v6881 = vadd.f32 %v6880, 0.008332121
        %v6882 = vmul.f32 %v6879, %v6881
        %v6883 = vadd.f32 %v6882, -0.16666654
        %v6884 = vmul.f32 %v6879, %v6883
        %v6885 = vadd.f32 %v6884, 1.0
        %v6886 = vmul.f32 %v6885, %v6870
        %vm6887 = vweird.f32 %v5804
        %v6888 = vadd.s32 %v6871, 3
        %v6889 = vand.u32 %v6888, 3
        %vm6890 = vcmp.lt.s32.totalorder %v6889, 2
        %vm6891 = vcmp.eq.s32.totalorder %v6889, 0
        %v6892 = vxor.u32 %v6886, 2147483648
        %v6893 = vsel %vm6891, %v6878, %v6892
        %vm6894 = vcmp.eq.s32.totalorder %v6889, 2
        %v6895 = vxor.u32 %v6878, 2147483648
        %v6896 = vsel %vm6894, %v6895, %v6886
        %v6897 = vsel %vm6890, %v6893, %v6896
        %v6898 = vsel %vm6887, nan, %v6897
        %v6899 = vand.u32 2147483647, %v5805
        %vm6900 = vcmp.le.f32.partialorder %v6899, 0.7853982
        %vm6901 = vcmp.lt.s32.totalorder %v5805, 0
        %v6902 = vand.u32 %v5805, 2139095040
        %v6903 = vshrl.u32 %v6902, 23
        %v6904 = vsub.s32 %v6903, 127
        %v6905 = vand.u32 2147483647, %v5805
        %v6906 = vand.u32 %v6905, 8388607
        %v6907 = vor.u32 %v6906, 8388608
        %v6908 = vsub.s32 0, %v6907
        %v6909 = vadd.s32 %v6904, 1
        %vm6910 = vcmp.gt.s32.totalorder %v6909, 0
        %v6911 = vsel %vm6910, %v6909, 0
        %v6912 = vshrl.u32 %v6911, 5
        %v6913 = vand.u32 %v6911, 31
        %v6914 = vsub.s32 32, %v6913
        %v6915 = vshrl.u32 683565275, %v6914
        %v6916 = vshll.u32 683565275, %v6913
        %v6917 = vshrl.u32 2475754826, %v6914
        %v6918 = vor.u32 %v6916, %v6917
        %v6919 = vshll.u32 2475754826, %v6913
        %v6920 = vshrl.u32 2131351028, %v6914
        %v6921 = vor.u32 %v6919, %v6920
        %v6922 = vshll.u32 2131351028, %v6913
        %v6923 = vshrl.u32 2102212464, %v6914
        %v6924 = vor.u32 %v6922, %v6923
        %v6925 = vshll.u32 2102212464, %v6913
        %v6926 = vshrl.u32 920167782, %v6914
        %v6927 = vor.u32 %v6925, %v6926
        %v6928 = vshll.u32 920167782, %v6913
        %v6929 = vshrl.u32 1326507024, %v6914
        %v6930 = vor.u32 %v6928, %v6929
        %vm6931 = vcmp.lt.s32.totalorder %v6912, 1
        %vm6932 = vcmp.lt.s32.totalorder %v6912, 2
        %vm6933 = vcmp.lt.s32.totalorder %v6912, 3
        %vm6934 = vcmp.lt.s32.totalorder %v6912, 4
        %v6935 = vsel %vm6931, %v6915, %v6918
        %v6936 = vsel %vm6934, %v6924, 2102212464
        %v6937 = vsel %vm6933, %v6921, %v6936
        %v6938 = vsel %vm6932, %v6935, %v6937
        %v6939 = vsel %vm6931, %v6918, %v6921
        %v6940 = vsel %vm6934, %v6927, 920167782
        %v6941 = vsel %vm6933, %v6924, %v6940
        %v6942 = vsel %vm6932, %v6939, %v6941
        %v6943 = vsel %vm6931, %v6921, %v6924
        %v6944 = vsel %vm6934, %v6930, 1326507024
        %v6945 = vsel %vm6933, %v6927, %v6944
        %v6946 = vsel %vm6932, %v6943, %v6945
        %v6947 = vshll.u32 %v6907, 8
        %v6948 = vand.u32 %v6947, 65535
        %v6949 = vshrl.u32 %v6947, 16
        %v6950 = vand.u32 %v6946, 65535
        %v6951 = vshrl.u32 %v6946, 16
        %v6952 = vmul.u32 %v6948, %v6950
        %v6953 = vmul.u32 %v6948, %v6951
        %v6954 = vmul.u32 %v6949, %v6950
        %v6955 = vmul.u32 %v6949, %v6951
        %v6956 = vshll.u32 %v6953, 16
        %v6957 = vshrl.u32 %v6953, 16
        %v6958 = vshll.u32 %v6954, 16
        %v6959 = vshrl.u32 %v6954, 16
        %vm6960 = vc.u32 %v6952, %v6956
        %v6961 = vsel %vm6960, 1, 0
        %v6962 = vadd.s32 %v6952, %v6956
        %v6963 = vadd.s32 %v6955, %v6961
        %vm6964 = vc.u32 %v6962, %v6958
        %v6965 = vsel %vm6964, 1, 0
        %v6966 = vadd.s32 %v6962, %v6958
        %v6967 = vadd.s32 %v6963, %v6965
        %v6968 = vadd.s32 %v6967, %v6957
        %v6969 = vadd.s32 %v6968, %v6959
        %v6970 = vand.u32 %v6947, 65535
        %v6971 = vshrl.u32 %v6947, 16
        %v6972 = vand.u32 %v6942, 65535
        %v6973 = vshrl.u32 %v6942, 16
        %v6974 = vmul.u32 %v6970, %v6972
        %v6975 = vmul.u32 %v6970, %v6973
        %v6976 = vmul.u32 %v6971, %v6972
        %v6977 = vmul.u32 %v6971, %v6973
        %v6978 = vshll.u32 %v6975, 16
        %v6979 = vshrl.u32 %v6975, 16
        %v6980 = vshll.u32 %v6976, 16
        %v6981 = vshrl.u32 %v6976, 16
        %vm6982 = vc.u32 %v6974, %v6978
        %v6983 = vsel %vm6982, 1, 0
        %v6984 = vadd.s32 %v6974, %v6978
        %v6985 = vadd.s32 %v6977, %v6983
        %vm6986 = vc.u32 %v6984, %v6980
        %v6987 = vsel %vm6986, 1, 0
        %v6988 = vadd.s32 %v6984, %v6980
        %v6989 = vadd.s32 %v6985, %v6987
        %v6990 = vadd.s32 %v6989, %v6979
        %v6991 = vadd.s32 %v6990, %v6981
        %v6992 = vmul.u32 %v6947, %v6938
        %v6993 = vadd.s32 %v6969, %v6988
        %vm6994 = vc.u32 %v6969, %v6988
        %v6995 = vadd.s32 %v6991, 1
        %v6996 = vsel %vm6994, %v6995, %v6991
        %v6997 = vadd.s32 %v6992, %v6996
        %v6998 = vadd.s32 %v6997, 536870912
        %v6999 = vshrl.u32 %v6998, 30
        %v7000 = vshll.u32 %v6999, 30
        %v7001 = vsub.s32 %v6997, %v7000
        %vm7002 = vcmp.lt.s32.totalorder %v7001, 0
        %v7003 = vsub.s32 0, %v7001
        %v7004 = vsel %vm7002, %v7003, %v7001
        %v7005 = vclz %v7004
        %v7006 = vsub.s32 %v7005, 2
        %vm7007 = vcmp.gt.s32.totalorder 0, %v7006
        %v7008 = vsel %vm7007, 0, %v7006
        %v7009 = vsub.s32 32, %v7008
        %v7010 = vshll.u32 %v7001, %v7008
        %v7011 = vshrl.u32 %v6993, %v7009
        %v7012 = vor.u32 %v7010, %v7011
        %v7013 = vsub.s32 4294967266, %v7008
        %v7014 = vadd.s32 %v7013, 127
        %v7015 = vshll.u32 %v7014, 23
        %v7016 = vor.u32 4788187, %v7015
        %v7017 = vand.u32 2147483647, %v7016
        %v7019 = vcvt.s32.f32 %v7012
        %v7020 = vmul.f32 %v7019, %v7017
        %v7021 = vxor.u32 %v7020, 2147483648
        %v7022 = vsel %vm6901, %v7021, %v7020
        %v7023 = vsub.s32 4, %v6999
        %v7024 = vsel %vm6901, %v7023, %v6999
        %v7025 = vsel %vm6900, %v5805, %v7022
        %v7026 = vsel %vm6900, 0, %v7024
        %v7027 = vmul.f32 %v7025, %v7025
        %v7028 = vmul.f32 %v7027, -0.001358992
        %v7029 = vadd.f32 %v7028, 0.041655596
        %v7030 = vmul.f32 %v7027, %v7029
        %v7031 = vadd.f32 %v7030, -0.4999988
        %v7032 = vmul.f32 %v7027, %v7031
        %v7033 = vadd.f32 1.0, %v7032
        %v7034 = vmul.f32 %v7025, %v7025
        %v7035 = vmul.f32 %v7034, -0.00019511016
        %v7036 = vadd.f32 %v7035, 0.008332121
        %v7037 = vmul.f32 %v7034, %v7036
        %v7038 = vadd.f32 %v7037, -0.16666654
        %v7039 = vmul.f32 %v7034, %v7038
        %v7040 = vadd.f32 %v7039, 1.0
        %v7041 = vmul.f32 %v7040, %v7025
        %vm7042 = vweird.f32 %v5805
        %v7043 = vadd.s32 %v7026, 3
        %v7044 = vand.u32 %v7043, 3
        %vm7045 = vcmp.lt.s32.totalorder %v7044, 2
        %vm7046 = vcmp.eq.s32.totalorder %v7044, 0
        %v7047 = vxor.u32 %v7041, 2147483648
        %v7048 = vsel %vm7046, %v7033, %v7047
        %vm7049 = vcmp.eq.s32.totalorder %v7044, 2
        %v7050 = vxor.u32 %v7033, 2147483648
        %v7051 = vsel %vm7049, %v7050, %v7041
        %v7052 = vsel %vm7045, %v7048, %v7051
        %v7053 = vsel %vm7042, nan, %v7052
        %v7054 = vand.u32 2147483647, %v5806
        %vm7055 = vcmp.le.f32.partialorder %v7054, 0.7853982
        %vm7056 = vcmp.lt.s32.totalorder %v5806, 0
        %v7057 = vand.u32 %v5806, 2139095040
        %v7058 = vshrl.u32 %v7057, 23
        %v7059 = vsub.s32 %v7058, 127
        %v7060 = vand.u32 2147483647, %v5806
        %v7061 = vand.u32 %v7060, 8388607
        %v7062 = vor.u32 %v7061, 8388608
        %v7063 = vsub.s32 0, %v7062
        %v7064 = vadd.s32 %v7059, 1
        %vm7065 = vcmp.gt.s32.totalorder %v7064, 0
        %v7066 = vsel %vm7065, %v7064, 0
        %v7067 = vshrl.u32 %v7066, 5
        %v7068 = vand.u32 %v7066, 31
        %v7069 = vsub.s32 32, %v7068
        %v7070 = vshrl.u32 683565275, %v7069
        %v7071 = vshll.u32 683565275, %v7068
        %v7072 = vshrl.u32 2475754826, %v7069
        %v7073 = vor.u32 %v7071, %v7072
        %v7074 = vshll.u32 2475754826, %v7068
        %v7075 = vshrl.u32 2131351028, %v7069
        %v7076 = vor.u32 %v7074, %v7075
        %v7077 = vshll.u32 2131351028, %v7068
        %v7078 = vshrl.u32 2102212464, %v7069
        %v7079 = vor.u32 %v7077, %v7078
        %v7080 = vshll.u32 2102212464, %v7068
        %v7081 = vshrl.u32 920167782, %v7069
        %v7082 = vor.u32 %v7080, %v7081
        %v7083 = vshll.u32 920167782, %v7068
        %v7084 = vshrl.u32 1326507024, %v7069
        %v7085 = vor.u32 %v7083, %v7084
        %vm7086 = vcmp.lt.s32.totalorder %v7067, 1
        %vm7087 = vcmp.lt.s32.totalorder %v7067, 2
        %vm7088 = vcmp.lt.s32.totalorder %v7067, 3
        %vm7089 = vcmp.lt.s32.totalorder %v7067, 4
        %v7090 = vsel %vm7086, %v7070, %v7073
        %v7091 = vsel %vm7089, %v7079, 2102212464
        %v7092 = vsel %vm7088, %v7076, %v7091
        %v7093 = vsel %vm7087, %v7090, %v7092
        %v7094 = vsel %vm7086, %v7073, %v7076
        %v7095 = vsel %vm7089, %v7082, 920167782
        %v7096 = vsel %vm7088, %v7079, %v7095
        %v7097 = vsel %vm7087, %v7094, %v7096
        %v7098 = vsel %vm7086, %v7076, %v7079
        %v7099 = vsel %vm7089, %v7085, 1326507024
        %v7100 = vsel %vm7088, %v7082, %v7099
        %v7101 = vsel %vm7087, %v7098, %v7100
        %v7102 = vshll.u32 %v7062, 8
        %v7103 = vand.u32 %v7102, 65535
        %v7104 = vshrl.u32 %v7102, 16
        %v7105 = vand.u32 %v7101, 65535
        %v7106 = vshrl.u32 %v7101, 16
        %v7107 = vmul.u32 %v7103, %v7105
        %v7108 = vmul.u32 %v7103, %v7106
        %v7109 = vmul.u32 %v7104, %v7105
        %v7110 = vmul.u32 %v7104, %v7106
        %v7111 = vshll.u32 %v7108, 16
        %v7112 = vshrl.u32 %v7108, 16
        %v7113 = vshll.u32 %v7109, 16
        %v7114 = vshrl.u32 %v7109, 16
        %vm7115 = vc.u32 %v7107, %v7111
        %v7116 = vsel %vm7115, 1, 0
        %v7117 = vadd.s32 %v7107, %v7111
        %v7118 = vadd.s32 %v7110, %v7116
        %vm7119 = vc.u32 %v7117, %v7113
        %v7120 = vsel %vm7119, 1, 0
        %v7121 = vadd.s32 %v7117, %v7113
        %v7122 = vadd.s32 %v7118, %v7120
        %v7123 = vadd.s32 %v7122, %v7112
        %v7124 = vadd.s32 %v7123, %v7114
        %v7125 = vand.u32 %v7102, 65535
        %v7126 = vshrl.u32 %v7102, 16
        %v7127 = vand.u32 %v7097, 65535
        %v7128 = vshrl.u32 %v7097, 16
        %v7129 = vmul.u32 %v7125, %v7127
        %v7130 = vmul.u32 %v7125, %v7128
        %v7131 = vmul.u32 %v7126, %v7127
        %v7132 = vmul.u32 %v7126, %v7128
        %v7133 = vshll.u32 %v7130, 16
        %v7134 = vshrl.u32 %v7130, 16
        %v7135 = vshll.u32 %v7131, 16
        %v7136 = vshrl.u32 %v7131, 16
        %vm7137 = vc.u32 %v7129, %v7133
        %v7138 = vsel %vm7137, 1, 0
        %v7139 = vadd.s32 %v7129, %v7133
        %v7140 = vadd.s32 %v7132, %v7138
        %vm7141 = vc.u32 %v7139, %v7135
        %v7142 = vsel %vm7141, 1, 0
        %v7143 = vadd.s32 %v7139, %v7135
        %v7144 = vadd.s32 %v7140, %v7142
        %v7145 = vadd.s32 %v7144, %v7134
        %v7146 = vadd.s32 %v7145, %v7136
        %v7147 = vmul.u32 %v7102, %v7093
        %v7148 = vadd.s32 %v7124, %v7143
        %vm7149 = vc.u32 %v7124, %v7143
        %v7150 = vadd.s32 %v7146, 1
        %v7151 = vsel %vm7149, %v7150, %v7146
        %v7152 = vadd.s32 %v7147, %v7151
        %v7153 = vadd.s32 %v7152, 536870912
        %v7154 = vshrl.u32 %v7153, 30
        %v7155 = vshll.u32 %v7154, 30
        %v7156 = vsub.s32 %v7152, %v7155
        %vm7157 = vcmp.lt.s32.totalorder %v7156, 0
        %v7158 = vsub.s32 0, %v7156
        %v7159 = vsel %vm7157, %v7158, %v7156
        %v7160 = vclz %v7159
        %v7161 = vsub.s32 %v7160, 2
        %vm7162 = vcmp.gt.s32.totalorder 0, %v7161
        %v7163 = vsel %vm7162, 0, %v7161
        %v7164 = vsub.s32 32, %v7163
        %v7165 = vshll.u32 %v7156, %v7163
        %v7166 = vshrl.u32 %v7148, %v7164
        %v7167 = vor.u32 %v7165, %v7166
        %v7168 = vsub.s32 4294967266, %v7163
        %v7169 = vadd.s32 %v7168, 127
        %v7170 = vshll.u32 %v7169, 23
        %v7171 = vor.u32 4788187, %v7170
        %v7172 = vand.u32 2147483647, %v7171
        %v7174 = vcvt.s32.f32 %v7167
        %v7175 = vmul.f32 %v7174, %v7172
        %v7176 = vxor.u32 %v7175, 2147483648
        %v7177 = vsel %vm7056, %v7176, %v7175
        %v7178 = vsub.s32 4, %v7154
        %v7179 = vsel %vm7056, %v7178, %v7154
        %v7180 = vsel %vm7055, %v5806, %v7177
        %v7181 = vsel %vm7055, 0, %v7179
        %v7182 = vmul.f32 %v7180, %v7180
        %v7183 = vmul.f32 %v7182, -0.001358992
        %v7184 = vadd.f32 %v7183, 0.041655596
        %v7185 = vmul.f32 %v7182, %v7184
        %v7186 = vadd.f32 %v7185, -0.4999988
        %v7187 = vmul.f32 %v7182, %v7186
        %v7188 = vadd.f32 1.0, %v7187
        %v7189 = vmul.f32 %v7180, %v7180
        %v7190 = vmul.f32 %v7189, -0.00019511016
        %v7191 = vadd.f32 %v7190, 0.008332121
        %v7192 = vmul.f32 %v7189, %v7191
        %v7193 = vadd.f32 %v7192, -0.16666654
        %v7194 = vmul.f32 %v7189, %v7193
        %v7195 = vadd.f32 %v7194, 1.0
        %v7196 = vmul.f32 %v7195, %v7180
        %vm7197 = vweird.f32 %v5806
        %v7198 = vadd.s32 %v7181, 3
        %v7199 = vand.u32 %v7198, 3
        %vm7200 = vcmp.lt.s32.totalorder %v7199, 2
        %vm7201 = vcmp.eq.s32.totalorder %v7199, 0
        %v7202 = vxor.u32 %v7196, 2147483648
        %v7203 = vsel %vm7201, %v7188, %v7202
        %vm7204 = vcmp.eq.s32.totalorder %v7199, 2
        %v7205 = vxor.u32 %v7188, 2147483648
        %v7206 = vsel %vm7204, %v7205, %v7196
        %v7207 = vsel %vm7200, %v7203, %v7206
        %v7208 = vsel %vm7197, nan, %v7207
        %v7209 = vand.u32 2147483647, %v5807
        %vm7210 = vcmp.le.f32.partialorder %v7209, 0.7853982
        %vm7211 = vcmp.lt.s32.totalorder %v5807, 0
        %v7212 = vand.u32 %v5807, 2139095040
        %v7213 = vshrl.u32 %v7212, 23
        %v7214 = vsub.s32 %v7213, 127
        %v7215 = vand.u32 2147483647, %v5807
        %v7216 = vand.u32 %v7215, 8388607
        %v7217 = vor.u32 %v7216, 8388608
        %v7218 = vsub.s32 0, %v7217
        %v7219 = vadd.s32 %v7214, 1
        %vm7220 = vcmp.gt.s32.totalorder %v7219, 0
        %v7221 = vsel %vm7220, %v7219, 0
        %v7222 = vshrl.u32 %v7221, 5
        %v7223 = vand.u32 %v7221, 31
        %v7224 = vsub.s32 32, %v7223
        %v7225 = vshrl.u32 683565275, %v7224
        %v7226 = vshll.u32 683565275, %v7223
        %v7227 = vshrl.u32 2475754826, %v7224
        %v7228 = vor.u32 %v7226, %v7227
        %v7229 = vshll.u32 2475754826, %v7223
        %v7230 = vshrl.u32 2131351028, %v7224
        %v7231 = vor.u32 %v7229, %v7230
        %v7232 = vshll.u32 2131351028, %v7223
        %v7233 = vshrl.u32 2102212464, %v7224
        %v7234 = vor.u32 %v7232, %v7233
        %v7235 = vshll.u32 2102212464, %v7223
        %v7236 = vshrl.u32 920167782, %v7224
        %v7237 = vor.u32 %v7235, %v7236
        %v7238 = vshll.u32 920167782, %v7223
        %v7239 = vshrl.u32 1326507024, %v7224
        %v7240 = vor.u32 %v7238, %v7239
        %vm7241 = vcmp.lt.s32.totalorder %v7222, 1
        %vm7242 = vcmp.lt.s32.totalorder %v7222, 2
        %vm7243 = vcmp.lt.s32.totalorder %v7222, 3
        %vm7244 = vcmp.lt.s32.totalorder %v7222, 4
        %v7245 = vsel %vm7241, %v7225, %v7228
        %v7246 = vsel %vm7244, %v7234, 2102212464
        %v7247 = vsel %vm7243, %v7231, %v7246
        %v7248 = vsel %vm7242, %v7245, %v7247
        %v7249 = vsel %vm7241, %v7228, %v7231
        %v7250 = vsel %vm7244, %v7237, 920167782
        %v7251 = vsel %vm7243, %v7234, %v7250
        %v7252 = vsel %vm7242, %v7249, %v7251
        %v7253 = vsel %vm7241, %v7231, %v7234
        %v7254 = vsel %vm7244, %v7240, 1326507024
        %v7255 = vsel %vm7243, %v7237, %v7254
        %v7256 = vsel %vm7242, %v7253, %v7255
        %v7257 = vshll.u32 %v7217, 8
        %v7258 = vand.u32 %v7257, 65535
        %v7259 = vshrl.u32 %v7257, 16
        %v7260 = vand.u32 %v7256, 65535
        %v7261 = vshrl.u32 %v7256, 16
        %v7262 = vmul.u32 %v7258, %v7260
        %v7263 = vmul.u32 %v7258, %v7261
        %v7264 = vmul.u32 %v7259, %v7260
        %v7265 = vmul.u32 %v7259, %v7261
        %v7266 = vshll.u32 %v7263, 16
        %v7267 = vshrl.u32 %v7263, 16
        %v7268 = vshll.u32 %v7264, 16
        %v7269 = vshrl.u32 %v7264, 16
        %vm7270 = vc.u32 %v7262, %v7266
        %v7271 = vsel %vm7270, 1, 0
        %v7272 = vadd.s32 %v7262, %v7266
        %v7273 = vadd.s32 %v7265, %v7271
        %vm7274 = vc.u32 %v7272, %v7268
        %v7275 = vsel %vm7274, 1, 0
        %v7276 = vadd.s32 %v7272, %v7268
        %v7277 = vadd.s32 %v7273, %v7275
        %v7278 = vadd.s32 %v7277, %v7267
        %v7279 = vadd.s32 %v7278, %v7269
        %v7280 = vand.u32 %v7257, 65535
        %v7281 = vshrl.u32 %v7257, 16
        %v7282 = vand.u32 %v7252, 65535
        %v7283 = vshrl.u32 %v7252, 16
        %v7284 = vmul.u32 %v7280, %v7282
        %v7285 = vmul.u32 %v7280, %v7283
        %v7286 = vmul.u32 %v7281, %v7282
        %v7287 = vmul.u32 %v7281, %v7283
        %v7288 = vshll.u32 %v7285, 16
        %v7289 = vshrl.u32 %v7285, 16
        %v7290 = vshll.u32 %v7286, 16
        %v7291 = vshrl.u32 %v7286, 16
        %vm7292 = vc.u32 %v7284, %v7288
        %v7293 = vsel %vm7292, 1, 0
        %v7294 = vadd.s32 %v7284, %v7288
        %v7295 = vadd.s32 %v7287, %v7293
        %vm7296 = vc.u32 %v7294, %v7290
        %v7297 = vsel %vm7296, 1, 0
        %v7298 = vadd.s32 %v7294, %v7290
        %v7299 = vadd.s32 %v7295, %v7297
        %v7300 = vadd.s32 %v7299, %v7289
        %v7301 = vadd.s32 %v7300, %v7291
        %v7302 = vmul.u32 %v7257, %v7248
        %v7303 = vadd.s32 %v7279, %v7298
        %vm7304 = vc.u32 %v7279, %v7298
        %v7305 = vadd.s32 %v7301, 1
        %v7306 = vsel %vm7304, %v7305, %v7301
        %v7307 = vadd.s32 %v7302, %v7306
        %v7308 = vadd.s32 %v7307, 536870912
        %v7309 = vshrl.u32 %v7308, 30
        %v7310 = vshll.u32 %v7309, 30
        %v7311 = vsub.s32 %v7307, %v7310
        %vm7312 = vcmp.lt.s32.totalorder %v7311, 0
        %v7313 = vsub.s32 0, %v7311
        %v7314 = vsel %vm7312, %v7313, %v7311
        %v7315 = vclz %v7314
        %v7316 = vsub.s32 %v7315, 2
        %vm7317 = vcmp.gt.s32.totalorder 0, %v7316
        %v7318 = vsel %vm7317, 0, %v7316
        %v7319 = vsub.s32 32, %v7318
        %v7320 = vshll.u32 %v7311, %v7318
        %v7321 = vshrl.u32 %v7303, %v7319
        %v7322 = vor.u32 %v7320, %v7321
        %v7323 = vsub.s32 4294967266, %v7318
        %v7324 = vadd.s32 %v7323, 127
        %v7325 = vshll.u32 %v7324, 23
        %v7326 = vor.u32 4788187, %v7325
        %v7327 = vand.u32 2147483647, %v7326
        %v7329 = vcvt.s32.f32 %v7322
        %v7330 = vmul.f32 %v7329, %v7327
        %v7331 = vxor.u32 %v7330, 2147483648
        %v7332 = vsel %vm7211, %v7331, %v7330
        %v7333 = vsub.s32 4, %v7309
        %v7334 = vsel %vm7211, %v7333, %v7309
        %v7335 = vsel %vm7210, %v5807, %v7332
        %v7336 = vsel %vm7210, 0, %v7334
        %v7337 = vmul.f32 %v7335, %v7335
        %v7338 = vmul.f32 %v7337, -0.001358992
        %v7339 = vadd.f32 %v7338, 0.041655596
        %v7340 = vmul.f32 %v7337, %v7339
        %v7341 = vadd.f32 %v7340, -0.4999988
        %v7342 = vmul.f32 %v7337, %v7341
        %v7343 = vadd.f32 1.0, %v7342
        %v7344 = vmul.f32 %v7335, %v7335
        %v7345 = vmul.f32 %v7344, -0.00019511016
        %v7346 = vadd.f32 %v7345, 0.008332121
        %v7347 = vmul.f32 %v7344, %v7346
        %v7348 = vadd.f32 %v7347, -0.16666654
        %v7349 = vmul.f32 %v7344, %v7348
        %v7350 = vadd.f32 %v7349, 1.0
        %v7351 = vmul.f32 %v7350, %v7335
        %vm7352 = vweird.f32 %v5807
        %v7353 = vadd.s32 %v7336, 3
        %v7354 = vand.u32 %v7353, 3
        %vm7355 = vcmp.lt.s32.totalorder %v7354, 2
        %vm7356 = vcmp.eq.s32.totalorder %v7354, 0
        %v7357 = vxor.u32 %v7351, 2147483648
        %v7358 = vsel %vm7356, %v7343, %v7357
        %vm7359 = vcmp.eq.s32.totalorder %v7354, 2
        %v7360 = vxor.u32 %v7343, 2147483648
        %v7361 = vsel %vm7359, %v7360, %v7351
        %v7362 = vsel %vm7355, %v7358, %v7361
        %v7363 = vsel %vm7352, nan, %v7362
        %v7364 = vand.u32 2147483647, %v5808
        %vm7365 = vcmp.le.f32.partialorder %v7364, 0.7853982
        %vm7366 = vcmp.lt.s32.totalorder %v5808, 0
        %v7367 = vand.u32 %v5808, 2139095040
        %v7368 = vshrl.u32 %v7367, 23
        %v7369 = vsub.s32 %v7368, 127
        %v7370 = vand.u32 2147483647, %v5808
        %v7371 = vand.u32 %v7370, 8388607
        %v7372 = vor.u32 %v7371, 8388608
        %v7373 = vsub.s32 0, %v7372
        %v7374 = vadd.s32 %v7369, 1
        %vm7375 = vcmp.gt.s32.totalorder %v7374, 0
        %v7376 = vsel %vm7375, %v7374, 0
        %v7377 = vshrl.u32 %v7376, 5
        %v7378 = vand.u32 %v7376, 31
        %v7379 = vsub.s32 32, %v7378
        %v7380 = vshrl.u32 683565275, %v7379
        %v7381 = vshll.u32 683565275, %v7378
        %v7382 = vshrl.u32 2475754826, %v7379
        %v7383 = vor.u32 %v7381, %v7382
        %v7384 = vshll.u32 2475754826, %v7378
        %v7385 = vshrl.u32 2131351028, %v7379
        %v7386 = vor.u32 %v7384, %v7385
        %v7387 = vshll.u32 2131351028, %v7378
        %v7388 = vshrl.u32 2102212464, %v7379
        %v7389 = vor.u32 %v7387, %v7388
        %v7390 = vshll.u32 2102212464, %v7378
        %v7391 = vshrl.u32 920167782, %v7379
        %v7392 = vor.u32 %v7390, %v7391
        %v7393 = vshll.u32 920167782, %v7378
        %v7394 = vshrl.u32 1326507024, %v7379
        %v7395 = vor.u32 %v7393, %v7394
        %vm7396 = vcmp.lt.s32.totalorder %v7377, 1
        %vm7397 = vcmp.lt.s32.totalorder %v7377, 2
        %vm7398 = vcmp.lt.s32.totalorder %v7377, 3
        %vm7399 = vcmp.lt.s32.totalorder %v7377, 4
        %v7400 = vsel %vm7396, %v7380, %v7383
        %v7401 = vsel %vm7399, %v7389, 2102212464
        %v7402 = vsel %vm7398, %v7386, %v7401
        %v7403 = vsel %vm7397, %v7400, %v7402
        %v7404 = vsel %vm7396, %v7383, %v7386
        %v7405 = vsel %vm7399, %v7392, 920167782
        %v7406 = vsel %vm7398, %v7389, %v7405
        %v7407 = vsel %vm7397, %v7404, %v7406
        %v7408 = vsel %vm7396, %v7386, %v7389
        %v7409 = vsel %vm7399, %v7395, 1326507024
        %v7410 = vsel %vm7398, %v7392, %v7409
        %v7411 = vsel %vm7397, %v7408, %v7410
        %v7412 = vshll.u32 %v7372, 8
        %v7413 = vand.u32 %v7412, 65535
        %v7414 = vshrl.u32 %v7412, 16
        %v7415 = vand.u32 %v7411, 65535
        %v7416 = vshrl.u32 %v7411, 16
        %v7417 = vmul.u32 %v7413, %v7415
        %v7418 = vmul.u32 %v7413, %v7416
        %v7419 = vmul.u32 %v7414, %v7415
        %v7420 = vmul.u32 %v7414, %v7416
        %v7421 = vshll.u32 %v7418, 16
        %v7422 = vshrl.u32 %v7418, 16
        %v7423 = vshll.u32 %v7419, 16
        %v7424 = vshrl.u32 %v7419, 16
        %vm7425 = vc.u32 %v7417, %v7421
        %v7426 = vsel %vm7425, 1, 0
        %v7427 = vadd.s32 %v7417, %v7421
        %v7428 = vadd.s32 %v7420, %v7426
        %vm7429 = vc.u32 %v7427, %v7423
        %v7430 = vsel %vm7429, 1, 0
        %v7431 = vadd.s32 %v7427, %v7423
        %v7432 = vadd.s32 %v7428, %v7430
        %v7433 = vadd.s32 %v7432, %v7422
        %v7434 = vadd.s32 %v7433, %v7424
        %v7435 = vand.u32 %v7412, 65535
        %v7436 = vshrl.u32 %v7412, 16
        %v7437 = vand.u32 %v7407, 65535
        %v7438 = vshrl.u32 %v7407, 16
        %v7439 = vmul.u32 %v7435, %v7437
        %v7440 = vmul.u32 %v7435, %v7438
        %v7441 = vmul.u32 %v7436, %v7437
        %v7442 = vmul.u32 %v7436, %v7438
        %v7443 = vshll.u32 %v7440, 16
        %v7444 = vshrl.u32 %v7440, 16
        %v7445 = vshll.u32 %v7441, 16
        %v7446 = vshrl.u32 %v7441, 16
        %vm7447 = vc.u32 %v7439, %v7443
        %v7448 = vsel %vm7447, 1, 0
        %v7449 = vadd.s32 %v7439, %v7443
        %v7450 = vadd.s32 %v7442, %v7448
        %vm7451 = vc.u32 %v7449, %v7445
        %v7452 = vsel %vm7451, 1, 0
        %v7453 = vadd.s32 %v7449, %v7445
        %v7454 = vadd.s32 %v7450, %v7452
        %v7455 = vadd.s32 %v7454, %v7444
        %v7456 = vadd.s32 %v7455, %v7446
        %v7457 = vmul.u32 %v7412, %v7403
        %v7458 = vadd.s32 %v7434, %v7453
        %vm7459 = vc.u32 %v7434, %v7453
        %v7460 = vadd.s32 %v7456, 1
        %v7461 = vsel %vm7459, %v7460, %v7456
        %v7462 = vadd.s32 %v7457, %v7461
        %v7463 = vadd.s32 %v7462, 536870912
        %v7464 = vshrl.u32 %v7463, 30
        %v7465 = vshll.u32 %v7464, 30
        %v7466 = vsub.s32 %v7462, %v7465
        %vm7467 = vcmp.lt.s32.totalorder %v7466, 0
        %v7468 = vsub.s32 0, %v7466
        %v7469 = vsel %vm7467, %v7468, %v7466
        %v7470 = vclz %v7469
        %v7471 = vsub.s32 %v7470, 2
        %vm7472 = vcmp.gt.s32.totalorder 0, %v7471
        %v7473 = vsel %vm7472, 0, %v7471
        %v7474 = vsub.s32 32, %v7473
        %v7475 = vshll.u32 %v7466, %v7473
        %v7476 = vshrl.u32 %v7458, %v7474
        %v7477 = vor.u32 %v7475, %v7476
        %v7478 = vsub.s32 4294967266, %v7473
        %v7479 = vadd.s32 %v7478, 127
        %v7480 = vshll.u32 %v7479, 23
        %v7481 = vor.u32 4788187, %v7480
        %v7482 = vand.u32 2147483647, %v7481
        %v7484 = vcvt.s32.f32 %v7477
        %v7485 = vmul.f32 %v7484, %v7482
        %v7486 = vxor.u32 %v7485, 2147483648
        %v7487 = vsel %vm7366, %v7486, %v7485
        %v7488 = vsub.s32 4, %v7464
        %v7489 = vsel %vm7366, %v7488, %v7464
        %v7490 = vsel %vm7365, %v5808, %v7487
        %v7491 = vsel %vm7365, 0, %v7489
        %v7492 = vmul.f32 %v7490, %v7490
        %v7493 = vmul.f32 %v7492, -0.001358992
        %v7494 = vadd.f32 %v7493, 0.041655596
        %v7495 = vmul.f32 %v7492, %v7494
        %v7496 = vadd.f32 %v7495, -0.4999988
        %v7497 = vmul.f32 %v7492, %v7496
        %v7498 = vadd.f32 1.0, %v7497
        %v7499 = vmul.f32 %v7490, %v7490
        %v7500 = vmul.f32 %v7499, -0.00019511016
        %v7501 = vadd.f32 %v7500, 0.008332121
        %v7502 = vmul.f32 %v7499, %v7501
        %v7503 = vadd.f32 %v7502, -0.16666654
        %v7504 = vmul.f32 %v7499, %v7503
        %v7505 = vadd.f32 %v7504, 1.0
        %v7506 = vmul.f32 %v7505, %v7490
        %vm7507 = vweird.f32 %v5808
        %v7508 = vadd.s32 %v7491, 3
        %v7509 = vand.u32 %v7508, 3
        %vm7510 = vcmp.lt.s32.totalorder %v7509, 2
        %vm7511 = vcmp.eq.s32.totalorder %v7509, 0
        %v7512 = vxor.u32 %v7506, 2147483648
        %v7513 = vsel %vm7511, %v7498, %v7512
        %vm7514 = vcmp.eq.s32.totalorder %v7509, 2
        %v7515 = vxor.u32 %v7498, 2147483648
        %v7516 = vsel %vm7514, %v7515, %v7506
        %v7517 = vsel %vm7510, %v7513, %v7516
        %v7518 = vsel %vm7507, nan, %v7517
        %v7519 = vand.u32 2147483647, %v5809
        %vm7520 = vcmp.le.f32.partialorder %v7519, 0.7853982
        %vm7521 = vcmp.lt.s32.totalorder %v5809, 0
        %v7522 = vand.u32 %v5809, 2139095040
        %v7523 = vshrl.u32 %v7522, 23
        %v7524 = vsub.s32 %v7523, 127
        %v7525 = vand.u32 2147483647, %v5809
        %v7526 = vand.u32 %v7525, 8388607
        %v7527 = vor.u32 %v7526, 8388608
        %v7528 = vsub.s32 0, %v7527
        %v7529 = vadd.s32 %v7524, 1
        %vm7530 = vcmp.gt.s32.totalorder %v7529, 0
        %v7531 = vsel %vm7530, %v7529, 0
        %v7532 = vshrl.u32 %v7531, 5
        %v7533 = vand.u32 %v7531, 31
        %v7534 = vsub.s32 32, %v7533
        %v7535 = vshrl.u32 683565275, %v7534
        %v7536 = vshll.u32 683565275, %v7533
        %v7537 = vshrl.u32 2475754826, %v7534
        %v7538 = vor.u32 %v7536, %v7537
        %v7539 = vshll.u32 2475754826, %v7533
        %v7540 = vshrl.u32 2131351028, %v7534
        %v7541 = vor.u32 %v7539, %v7540
        %v7542 = vshll.u32 2131351028, %v7533
        %v7543 = vshrl.u32 2102212464, %v7534
        %v7544 = vor.u32 %v7542, %v7543
        %v7545 = vshll.u32 2102212464, %v7533
        %v7546 = vshrl.u32 920167782, %v7534
        %v7547 = vor.u32 %v7545, %v7546
        %v7548 = vshll.u32 920167782, %v7533
        %v7549 = vshrl.u32 1326507024, %v7534
        %v7550 = vor.u32 %v7548, %v7549
        %vm7551 = vcmp.lt.s32.totalorder %v7532, 1
        %vm7552 = vcmp.lt.s32.totalorder %v7532, 2
        %vm7553 = vcmp.lt.s32.totalorder %v7532, 3
        %vm7554 = vcmp.lt.s32.totalorder %v7532, 4
        %v7555 = vsel %vm7551, %v7535, %v7538
        %v7556 = vsel %vm7554, %v7544, 2102212464
        %v7557 = vsel %vm7553, %v7541, %v7556
        %v7558 = vsel %vm7552, %v7555, %v7557
        %v7559 = vsel %vm7551, %v7538, %v7541
        %v7560 = vsel %vm7554, %v7547, 920167782
        %v7561 = vsel %vm7553, %v7544, %v7560
        %v7562 = vsel %vm7552, %v7559, %v7561
        %v7563 = vsel %vm7551, %v7541, %v7544
        %v7564 = vsel %vm7554, %v7550, 1326507024
        %v7565 = vsel %vm7553, %v7547, %v7564
        %v7566 = vsel %vm7552, %v7563, %v7565
        %v7567 = vshll.u32 %v7527, 8
        %v7568 = vand.u32 %v7567, 65535
        %v7569 = vshrl.u32 %v7567, 16
        %v7570 = vand.u32 %v7566, 65535
        %v7571 = vshrl.u32 %v7566, 16
        %v7572 = vmul.u32 %v7568, %v7570
        %v7573 = vmul.u32 %v7568, %v7571
        %v7574 = vmul.u32 %v7569, %v7570
        %v7575 = vmul.u32 %v7569, %v7571
        %v7576 = vshll.u32 %v7573, 16
        %v7577 = vshrl.u32 %v7573, 16
        %v7578 = vshll.u32 %v7574, 16
        %v7579 = vshrl.u32 %v7574, 16
        %vm7580 = vc.u32 %v7572, %v7576
        %v7581 = vsel %vm7580, 1, 0
        %v7582 = vadd.s32 %v7572, %v7576
        %v7583 = vadd.s32 %v7575, %v7581
        %vm7584 = vc.u32 %v7582, %v7578
        %v7585 = vsel %vm7584, 1, 0
        %v7586 = vadd.s32 %v7582, %v7578
        %v7587 = vadd.s32 %v7583, %v7585
        %v7588 = vadd.s32 %v7587, %v7577
        %v7589 = vadd.s32 %v7588, %v7579
        %v7590 = vand.u32 %v7567, 65535
        %v7591 = vshrl.u32 %v7567, 16
        %v7592 = vand.u32 %v7562, 65535
        %v7593 = vshrl.u32 %v7562, 16
        %v7594 = vmul.u32 %v7590, %v7592
        %v7595 = vmul.u32 %v7590, %v7593
        %v7596 = vmul.u32 %v7591, %v7592
        %v7597 = vmul.u32 %v7591, %v7593
        %v7598 = vshll.u32 %v7595, 16
        %v7599 = vshrl.u32 %v7595, 16
        %v7600 = vshll.u32 %v7596, 16
        %v7601 = vshrl.u32 %v7596, 16
        %vm7602 = vc.u32 %v7594, %v7598
        %v7603 = vsel %vm7602, 1, 0
        %v7604 = vadd.s32 %v7594, %v7598
        %v7605 = vadd.s32 %v7597, %v7603
        %vm7606 = vc.u32 %v7604, %v7600
        %v7607 = vsel %vm7606, 1, 0
        %v7608 = vadd.s32 %v7604, %v7600
        %v7609 = vadd.s32 %v7605, %v7607
        %v7610 = vadd.s32 %v7609, %v7599
        %v7611 = vadd.s32 %v7610, %v7601
        %v7612 = vmul.u32 %v7567, %v7558
        %v7613 = vadd.s32 %v7589, %v7608
        %vm7614 = vc.u32 %v7589, %v7608
        %v7615 = vadd.s32 %v7611, 1
        %v7616 = vsel %vm7614, %v7615, %v7611
        %v7617 = vadd.s32 %v7612, %v7616
        %v7618 = vadd.s32 %v7617, 536870912
        %v7619 = vshrl.u32 %v7618, 30
        %v7620 = vshll.u32 %v7619, 30
        %v7621 = vsub.s32 %v7617, %v7620
        %vm7622 = vcmp.lt.s32.totalorder %v7621, 0
        %v7623 = vsub.s32 0, %v7621
        %v7624 = vsel %vm7622, %v7623, %v7621
        %v7625 = vclz %v7624
        %v7626 = vsub.s32 %v7625, 2
        %vm7627 = vcmp.gt.s32.totalorder 0, %v7626
        %v7628 = vsel %vm7627, 0, %v7626
        %v7629 = vsub.s32 32, %v7628
        %v7630 = vshll.u32 %v7621, %v7628
        %v7631 = vshrl.u32 %v7613, %v7629
        %v7632 = vor.u32 %v7630, %v7631
        %v7633 = vsub.s32 4294967266, %v7628
        %v7634 = vadd.s32 %v7633, 127
        %v7635 = vshll.u32 %v7634, 23
        %v7636 = vor.u32 4788187, %v7635
        %v7637 = vand.u32 2147483647, %v7636
        %v7639 = vcvt.s32.f32 %v7632
        %v7640 = vmul.f32 %v7639, %v7637
        %v7641 = vxor.u32 %v7640, 2147483648
        %v7642 = vsel %vm7521, %v7641, %v7640
        %v7643 = vsub.s32 4, %v7619
        %v7644 = vsel %vm7521, %v7643, %v7619
        %v7645 = vsel %vm7520, %v5809, %v7642
        %v7646 = vsel %vm7520, 0, %v7644
        %v7647 = vmul.f32 %v7645, %v7645
        %v7648 = vmul.f32 %v7647, -0.001358992
        %v7649 = vadd.f32 %v7648, 0.041655596
        %v7650 = vmul.f32 %v7647, %v7649
        %v7651 = vadd.f32 %v7650, -0.4999988
        %v7652 = vmul.f32 %v7647, %v7651
        %v7653 = vadd.f32 1.0, %v7652
        %v7654 = vmul.f32 %v7645, %v7645
        %v7655 = vmul.f32 %v7654, -0.00019511016
        %v7656 = vadd.f32 %v7655, 0.008332121
        %v7657 = vmul.f32 %v7654, %v7656
        %v7658 = vadd.f32 %v7657, -0.16666654
        %v7659 = vmul.f32 %v7654, %v7658
        %v7660 = vadd.f32 %v7659, 1.0
        %v7661 = vmul.f32 %v7660, %v7645
        %vm7662 = vweird.f32 %v5809
        %v7663 = vadd.s32 %v7646, 3
        %v7664 = vand.u32 %v7663, 3
        %vm7665 = vcmp.lt.s32.totalorder %v7664, 2
        %vm7666 = vcmp.eq.s32.totalorder %v7664, 0
        %v7667 = vxor.u32 %v7661, 2147483648
        %v7668 = vsel %vm7666, %v7653, %v7667
        %vm7669 = vcmp.eq.s32.totalorder %v7664, 2
        %v7670 = vxor.u32 %v7653, 2147483648
        %v7671 = vsel %vm7669, %v7670, %v7661
        %v7672 = vsel %vm7665, %v7668, %v7671
        %v7673 = vsel %vm7662, nan, %v7672
        %v7674 = vand.u32 2147483647, %v5810
        %vm7675 = vcmp.le.f32.partialorder %v7674, 0.7853982
        %vm7676 = vcmp.lt.s32.totalorder %v5810, 0
        %v7677 = vand.u32 %v5810, 2139095040
        %v7678 = vshrl.u32 %v7677, 23
        %v7679 = vsub.s32 %v7678, 127
        %v7680 = vand.u32 2147483647, %v5810
        %v7681 = vand.u32 %v7680, 8388607
        %v7682 = vor.u32 %v7681, 8388608
        %v7683 = vsub.s32 0, %v7682
        %v7684 = vadd.s32 %v7679, 1
        %vm7685 = vcmp.gt.s32.totalorder %v7684, 0
        %v7686 = vsel %vm7685, %v7684, 0
        %v7687 = vshrl.u32 %v7686, 5
        %v7688 = vand.u32 %v7686, 31
        %v7689 = vsub.s32 32, %v7688
        %v7690 = vshrl.u32 683565275, %v7689
        %v7691 = vshll.u32 683565275, %v7688
        %v7692 = vshrl.u32 2475754826, %v7689
        %v7693 = vor.u32 %v7691, %v7692
        %v7694 = vshll.u32 2475754826, %v7688
        %v7695 = vshrl.u32 2131351028, %v7689
        %v7696 = vor.u32 %v7694, %v7695
        %v7697 = vshll.u32 2131351028, %v7688
        %v7698 = vshrl.u32 2102212464, %v7689
        %v7699 = vor.u32 %v7697, %v7698
        %v7700 = vshll.u32 2102212464, %v7688
        %v7701 = vshrl.u32 920167782, %v7689
        %v7702 = vor.u32 %v7700, %v7701
        %v7703 = vshll.u32 920167782, %v7688
        %v7704 = vshrl.u32 1326507024, %v7689
        %v7705 = vor.u32 %v7703, %v7704
        %vm7706 = vcmp.lt.s32.totalorder %v7687, 1
        %vm7707 = vcmp.lt.s32.totalorder %v7687, 2
        %vm7708 = vcmp.lt.s32.totalorder %v7687, 3
        %vm7709 = vcmp.lt.s32.totalorder %v7687, 4
        %v7710 = vsel %vm7706, %v7690, %v7693
        %v7711 = vsel %vm7709, %v7699, 2102212464
        %v7712 = vsel %vm7708, %v7696, %v7711
        %v7713 = vsel %vm7707, %v7710, %v7712
        %v7714 = vsel %vm7706, %v7693, %v7696
        %v7715 = vsel %vm7709, %v7702, 920167782
        %v7716 = vsel %vm7708, %v7699, %v7715
        %v7717 = vsel %vm7707, %v7714, %v7716
        %v7718 = vsel %vm7706, %v7696, %v7699
        %v7719 = vsel %vm7709, %v7705, 1326507024
        %v7720 = vsel %vm7708, %v7702, %v7719
        %v7721 = vsel %vm7707, %v7718, %v7720
        %v7722 = vshll.u32 %v7682, 8
        %v7723 = vand.u32 %v7722, 65535
        %v7724 = vshrl.u32 %v7722, 16
        %v7725 = vand.u32 %v7721, 65535
        %v7726 = vshrl.u32 %v7721, 16
        %v7727 = vmul.u32 %v7723, %v7725
        %v7728 = vmul.u32 %v7723, %v7726
        %v7729 = vmul.u32 %v7724, %v7725
        %v7730 = vmul.u32 %v7724, %v7726
        %v7731 = vshll.u32 %v7728, 16
        %v7732 = vshrl.u32 %v7728, 16
        %v7733 = vshll.u32 %v7729, 16
        %v7734 = vshrl.u32 %v7729, 16
        %vm7735 = vc.u32 %v7727, %v7731
        %v7736 = vsel %vm7735, 1, 0
        %v7737 = vadd.s32 %v7727, %v7731
        %v7738 = vadd.s32 %v7730, %v7736
        %vm7739 = vc.u32 %v7737, %v7733
        %v7740 = vsel %vm7739, 1, 0
        %v7741 = vadd.s32 %v7737, %v7733
        %v7742 = vadd.s32 %v7738, %v7740
        %v7743 = vadd.s32 %v7742, %v7732
        %v7744 = vadd.s32 %v7743, %v7734
        %v7745 = vand.u32 %v7722, 65535
        %v7746 = vshrl.u32 %v7722, 16
        %v7747 = vand.u32 %v7717, 65535
        %v7748 = vshrl.u32 %v7717, 16
        %v7749 = vmul.u32 %v7745, %v7747
        %v7750 = vmul.u32 %v7745, %v7748
        %v7751 = vmul.u32 %v7746, %v7747
        %v7752 = vmul.u32 %v7746, %v7748
        %v7753 = vshll.u32 %v7750, 16
        %v7754 = vshrl.u32 %v7750, 16
        %v7755 = vshll.u32 %v7751, 16
        %v7756 = vshrl.u32 %v7751, 16
        %vm7757 = vc.u32 %v7749, %v7753
        %v7758 = vsel %vm7757, 1, 0
        %v7759 = vadd.s32 %v7749, %v7753
        %v7760 = vadd.s32 %v7752, %v7758
        %vm7761 = vc.u32 %v7759, %v7755
        %v7762 = vsel %vm7761, 1, 0
        %v7763 = vadd.s32 %v7759, %v7755
        %v7764 = vadd.s32 %v7760, %v7762
        %v7765 = vadd.s32 %v7764, %v7754
        %v7766 = vadd.s32 %v7765, %v7756
        %v7767 = vmul.u32 %v7722, %v7713
        %v7768 = vadd.s32 %v7744, %v7763
        %vm7769 = vc.u32 %v7744, %v7763
        %v7770 = vadd.s32 %v7766, 1
        %v7771 = vsel %vm7769, %v7770, %v7766
        %v7772 = vadd.s32 %v7767, %v7771
        %v7773 = vadd.s32 %v7772, 536870912
        %v7774 = vshrl.u32 %v7773, 30
        %v7775 = vshll.u32 %v7774, 30
        %v7776 = vsub.s32 %v7772, %v7775
        %vm7777 = vcmp.lt.s32.totalorder %v7776, 0
        %v7778 = vsub.s32 0, %v7776
        %v7779 = vsel %vm7777, %v7778, %v7776
        %v7780 = vclz %v7779
        %v7781 = vsub.s32 %v7780, 2
        %vm7782 = vcmp.gt.s32.totalorder 0, %v7781
        %v7783 = vsel %vm7782, 0, %v7781
        %v7784 = vsub.s32 32, %v7783
        %v7785 = vshll.u32 %v7776, %v7783
        %v7786 = vshrl.u32 %v7768, %v7784
        %v7787 = vor.u32 %v7785, %v7786
        %v7788 = vsub.s32 4294967266, %v7783
        %v7789 = vadd.s32 %v7788, 127
        %v7790 = vshll.u32 %v7789, 23
        %v7791 = vor.u32 4788187, %v7790
        %v7792 = vand.u32 2147483647, %v7791
        %v7794 = vcvt.s32.f32 %v7787
        %v7795 = vmul.f32 %v7794, %v7792
        %v7796 = vxor.u32 %v7795, 2147483648
        %v7797 = vsel %vm7676, %v7796, %v7795
        %v7798 = vsub.s32 4, %v7774
        %v7799 = vsel %vm7676, %v7798, %v7774
        %v7800 = vsel %vm7675, %v5810, %v7797
        %v7801 = vsel %vm7675, 0, %v7799
        %v7802 = vmul.f32 %v7800, %v7800
        %v7803 = vmul.f32 %v7802, -0.001358992
        %v7804 = vadd.f32 %v7803, 0.041655596
        %v7805 = vmul.f32 %v7802, %v7804
        %v7806 = vadd.f32 %v7805, -0.4999988
        %v7807 = vmul.f32 %v7802, %v7806
        %v7808 = vadd.f32 1.0, %v7807
        %v7809 = vmul.f32 %v7800, %v7800
        %v7810 = vmul.f32 %v7809, -0.00019511016
        %v7811 = vadd.f32 %v7810, 0.008332121
        %v7812 = vmul.f32 %v7809, %v7811
        %v7813 = vadd.f32 %v7812, -0.16666654
        %v7814 = vmul.f32 %v7809, %v7813
        %v7815 = vadd.f32 %v7814, 1.0
        %v7816 = vmul.f32 %v7815, %v7800
        %vm7817 = vweird.f32 %v5810
        %v7818 = vadd.s32 %v7801, 3
        %v7819 = vand.u32 %v7818, 3
        %vm7820 = vcmp.lt.s32.totalorder %v7819, 2
        %vm7821 = vcmp.eq.s32.totalorder %v7819, 0
        %v7822 = vxor.u32 %v7816, 2147483648
        %v7823 = vsel %vm7821, %v7808, %v7822
        %vm7824 = vcmp.eq.s32.totalorder %v7819, 2
        %v7825 = vxor.u32 %v7808, 2147483648
        %v7826 = vsel %vm7824, %v7825, %v7816
        %v7827 = vsel %vm7820, %v7823, %v7826
        %v7828 = vsel %vm7817, nan, %v7827
        %v7829 = vand.u32 2147483647, %v5811
        %vm7830 = vcmp.le.f32.partialorder %v7829, 0.7853982
        %vm7831 = vcmp.lt.s32.totalorder %v5811, 0
        %v7832 = vand.u32 %v5811, 2139095040
        %v7833 = vshrl.u32 %v7832, 23
        %v7834 = vsub.s32 %v7833, 127
        %v7835 = vand.u32 2147483647, %v5811
        %v7836 = vand.u32 %v7835, 8388607
        %v7837 = vor.u32 %v7836, 8388608
        %v7838 = vsub.s32 0, %v7837
        %v7839 = vadd.s32 %v7834, 1
        %vm7840 = vcmp.gt.s32.totalorder %v7839, 0
        %v7841 = vsel %vm7840, %v7839, 0
        %v7842 = vshrl.u32 %v7841, 5
        %v7843 = vand.u32 %v7841, 31
        %v7844 = vsub.s32 32, %v7843
        %v7845 = vshrl.u32 683565275, %v7844
        %v7846 = vshll.u32 683565275, %v7843
        %v7847 = vshrl.u32 2475754826, %v7844
        %v7848 = vor.u32 %v7846, %v7847
        %v7849 = vshll.u32 2475754826, %v7843
        %v7850 = vshrl.u32 2131351028, %v7844
        %v7851 = vor.u32 %v7849, %v7850
        %v7852 = vshll.u32 2131351028, %v7843
        %v7853 = vshrl.u32 2102212464, %v7844
        %v7854 = vor.u32 %v7852, %v7853
        %v7855 = vshll.u32 2102212464, %v7843
        %v7856 = vshrl.u32 920167782, %v7844
        %v7857 = vor.u32 %v7855, %v7856
        %v7858 = vshll.u32 920167782, %v7843
        %v7859 = vshrl.u32 1326507024, %v7844
        %v7860 = vor.u32 %v7858, %v7859
        %vm7861 = vcmp.lt.s32.totalorder %v7842, 1
        %vm7862 = vcmp.lt.s32.totalorder %v7842, 2
        %vm7863 = vcmp.lt.s32.totalorder %v7842, 3
        %vm7864 = vcmp.lt.s32.totalorder %v7842, 4
        %v7865 = vsel %vm7861, %v7845, %v7848
        %v7866 = vsel %vm7864, %v7854, 2102212464
        %v7867 = vsel %vm7863, %v7851, %v7866
        %v7868 = vsel %vm7862, %v7865, %v7867
        %v7869 = vsel %vm7861, %v7848, %v7851
        %v7870 = vsel %vm7864, %v7857, 920167782
        %v7871 = vsel %vm7863, %v7854, %v7870
        %v7872 = vsel %vm7862, %v7869, %v7871
        %v7873 = vsel %vm7861, %v7851, %v7854
        %v7874 = vsel %vm7864, %v7860, 1326507024
        %v7875 = vsel %vm7863, %v7857, %v7874
        %v7876 = vsel %vm7862, %v7873, %v7875
        %v7877 = vshll.u32 %v7837, 8
        %v7878 = vand.u32 %v7877, 65535
        %v7879 = vshrl.u32 %v7877, 16
        %v7880 = vand.u32 %v7876, 65535
        %v7881 = vshrl.u32 %v7876, 16
        %v7882 = vmul.u32 %v7878, %v7880
        %v7883 = vmul.u32 %v7878, %v7881
        %v7884 = vmul.u32 %v7879, %v7880
        %v7885 = vmul.u32 %v7879, %v7881
        %v7886 = vshll.u32 %v7883, 16
        %v7887 = vshrl.u32 %v7883, 16
        %v7888 = vshll.u32 %v7884, 16
        %v7889 = vshrl.u32 %v7884, 16
        %vm7890 = vc.u32 %v7882, %v7886
        %v7891 = vsel %vm7890, 1, 0
        %v7892 = vadd.s32 %v7882, %v7886
        %v7893 = vadd.s32 %v7885, %v7891
        %vm7894 = vc.u32 %v7892, %v7888
        %v7895 = vsel %vm7894, 1, 0
        %v7896 = vadd.s32 %v7892, %v7888
        %v7897 = vadd.s32 %v7893, %v7895
        %v7898 = vadd.s32 %v7897, %v7887
        %v7899 = vadd.s32 %v7898, %v7889
        %v7900 = vand.u32 %v7877, 65535
        %v7901 = vshrl.u32 %v7877, 16
        %v7902 = vand.u32 %v7872, 65535
        %v7903 = vshrl.u32 %v7872, 16
        %v7904 = vmul.u32 %v7900, %v7902
        %v7905 = vmul.u32 %v7900, %v7903
        %v7906 = vmul.u32 %v7901, %v7902
        %v7907 = vmul.u32 %v7901, %v7903
        %v7908 = vshll.u32 %v7905, 16
        %v7909 = vshrl.u32 %v7905, 16
        %v7910 = vshll.u32 %v7906, 16
        %v7911 = vshrl.u32 %v7906, 16
        %vm7912 = vc.u32 %v7904, %v7908
        %v7913 = vsel %vm7912, 1, 0
        %v7914 = vadd.s32 %v7904, %v7908
        %v7915 = vadd.s32 %v7907, %v7913
        %vm7916 = vc.u32 %v7914, %v7910
        %v7917 = vsel %vm7916, 1, 0
        %v7918 = vadd.s32 %v7914, %v7910
        %v7919 = vadd.s32 %v7915, %v7917
        %v7920 = vadd.s32 %v7919, %v7909
        %v7921 = vadd.s32 %v7920, %v7911
        %v7922 = vmul.u32 %v7877, %v7868
        %v7923 = vadd.s32 %v7899, %v7918
        %vm7924 = vc.u32 %v7899, %v7918
        %v7925 = vadd.s32 %v7921, 1
        %v7926 = vsel %vm7924, %v7925, %v7921
        %v7927 = vadd.s32 %v7922, %v7926
        %v7928 = vadd.s32 %v7927, 536870912
        %v7929 = vshrl.u32 %v7928, 30
        %v7930 = vshll.u32 %v7929, 30
        %v7931 = vsub.s32 %v7927, %v7930
        %vm7932 = vcmp.lt.s32.totalorder %v7931, 0
        %v7933 = vsub.s32 0, %v7931
        %v7934 = vsel %vm7932, %v7933, %v7931
        %v7935 = vclz %v7934
        %v7936 = vsub.s32 %v7935, 2
        %vm7937 = vcmp.gt.s32.totalorder 0, %v7936
        %v7938 = vsel %vm7937, 0, %v7936
        %v7939 = vsub.s32 32, %v7938
        %v7940 = vshll.u32 %v7931, %v7938
        %v7941 = vshrl.u32 %v7923, %v7939
        %v7942 = vor.u32 %v7940, %v7941
        %v7943 = vsub.s32 4294967266, %v7938
        %v7944 = vadd.s32 %v7943, 127
        %v7945 = vshll.u32 %v7944, 23
        %v7946 = vor.u32 4788187, %v7945
        %v7947 = vand.u32 2147483647, %v7946
        %v7949 = vcvt.s32.f32 %v7942
        %v7950 = vmul.f32 %v7949, %v7947
        %v7951 = vxor.u32 %v7950, 2147483648
        %v7952 = vsel %vm7831, %v7951, %v7950
        %v7953 = vsub.s32 4, %v7929
        %v7954 = vsel %vm7831, %v7953, %v7929
        %v7955 = vsel %vm7830, %v5811, %v7952
        %v7956 = vsel %vm7830, 0, %v7954
        %v7957 = vmul.f32 %v7955, %v7955
        %v7958 = vmul.f32 %v7957, -0.001358992
        %v7959 = vadd.f32 %v7958, 0.041655596
        %v7960 = vmul.f32 %v7957, %v7959
        %v7961 = vadd.f32 %v7960, -0.4999988
        %v7962 = vmul.f32 %v7957, %v7961
        %v7963 = vadd.f32 1.0, %v7962
        %v7964 = vmul.f32 %v7955, %v7955
        %v7965 = vmul.f32 %v7964, -0.00019511016
        %v7966 = vadd.f32 %v7965, 0.008332121
        %v7967 = vmul.f32 %v7964, %v7966
        %v7968 = vadd.f32 %v7967, -0.16666654
        %v7969 = vmul.f32 %v7964, %v7968
        %v7970 = vadd.f32 %v7969, 1.0
        %v7971 = vmul.f32 %v7970, %v7955
        %vm7972 = vweird.f32 %v5811
        %v7973 = vadd.s32 %v7956, 3
        %v7974 = vand.u32 %v7973, 3
        %vm7975 = vcmp.lt.s32.totalorder %v7974, 2
        %vm7976 = vcmp.eq.s32.totalorder %v7974, 0
        %v7977 = vxor.u32 %v7971, 2147483648
        %v7978 = vsel %vm7976, %v7963, %v7977
        %vm7979 = vcmp.eq.s32.totalorder %v7974, 2
        %v7980 = vxor.u32 %v7963, 2147483648
        %v7981 = vsel %vm7979, %v7980, %v7971
        %v7982 = vsel %vm7975, %v7978, %v7981
        %v7983 = vsel %vm7972, nan, %v7982
        %v7984 = vand.u32 2147483647, %v5812
        %vm7985 = vcmp.le.f32.partialorder %v7984, 0.7853982
        %vm7986 = vcmp.lt.s32.totalorder %v5812, 0
        %v7987 = vand.u32 %v5812, 2139095040
        %v7988 = vshrl.u32 %v7987, 23
        %v7989 = vsub.s32 %v7988, 127
        %v7990 = vand.u32 2147483647, %v5812
        %v7991 = vand.u32 %v7990, 8388607
        %v7992 = vor.u32 %v7991, 8388608
        %v7993 = vsub.s32 0, %v7992
        %v7994 = vadd.s32 %v7989, 1
        %vm7995 = vcmp.gt.s32.totalorder %v7994, 0
        %v7996 = vsel %vm7995, %v7994, 0
        %v7997 = vshrl.u32 %v7996, 5
        %v7998 = vand.u32 %v7996, 31
        %v7999 = vsub.s32 32, %v7998
        %v8000 = vshrl.u32 683565275, %v7999
        %v8001 = vshll.u32 683565275, %v7998
        %v8002 = vshrl.u32 2475754826, %v7999
        %v8003 = vor.u32 %v8001, %v8002
        %v8004 = vshll.u32 2475754826, %v7998
        %v8005 = vshrl.u32 2131351028, %v7999
        %v8006 = vor.u32 %v8004, %v8005
        %v8007 = vshll.u32 2131351028, %v7998
        %v8008 = vshrl.u32 2102212464, %v7999
        %v8009 = vor.u32 %v8007, %v8008
        %v8010 = vshll.u32 2102212464, %v7998
        %v8011 = vshrl.u32 920167782, %v7999
        %v8012 = vor.u32 %v8010, %v8011
        %v8013 = vshll.u32 920167782, %v7998
        %v8014 = vshrl.u32 1326507024, %v7999
        %v8015 = vor.u32 %v8013, %v8014
        %vm8016 = vcmp.lt.s32.totalorder %v7997, 1
        %vm8017 = vcmp.lt.s32.totalorder %v7997, 2
        %vm8018 = vcmp.lt.s32.totalorder %v7997, 3
        %vm8019 = vcmp.lt.s32.totalorder %v7997, 4
        %v8020 = vsel %vm8016, %v8000, %v8003
        %v8021 = vsel %vm8019, %v8009, 2102212464
        %v8022 = vsel %vm8018, %v8006, %v8021
        %v8023 = vsel %vm8017, %v8020, %v8022
        %v8024 = vsel %vm8016, %v8003, %v8006
        %v8025 = vsel %vm8019, %v8012, 920167782
        %v8026 = vsel %vm8018, %v8009, %v8025
        %v8027 = vsel %vm8017, %v8024, %v8026
        %v8028 = vsel %vm8016, %v8006, %v8009
        %v8029 = vsel %vm8019, %v8015, 1326507024
        %v8030 = vsel %vm8018, %v8012, %v8029
        %v8031 = vsel %vm8017, %v8028, %v8030
        %v8032 = vshll.u32 %v7992, 8
        %v8033 = vand.u32 %v8032, 65535
        %v8034 = vshrl.u32 %v8032, 16
        %v8035 = vand.u32 %v8031, 65535
        %v8036 = vshrl.u32 %v8031, 16
        %v8037 = vmul.u32 %v8033, %v8035
        %v8038 = vmul.u32 %v8033, %v8036
        %v8039 = vmul.u32 %v8034, %v8035
        %v8040 = vmul.u32 %v8034, %v8036
        %v8041 = vshll.u32 %v8038, 16
        %v8042 = vshrl.u32 %v8038, 16
        %v8043 = vshll.u32 %v8039, 16
        %v8044 = vshrl.u32 %v8039, 16
        %vm8045 = vc.u32 %v8037, %v8041
        %v8046 = vsel %vm8045, 1, 0
        %v8047 = vadd.s32 %v8037, %v8041
        %v8048 = vadd.s32 %v8040, %v8046
        %vm8049 = vc.u32 %v8047, %v8043
        %v8050 = vsel %vm8049, 1, 0
        %v8051 = vadd.s32 %v8047, %v8043
        %v8052 = vadd.s32 %v8048, %v8050
        %v8053 = vadd.s32 %v8052, %v8042
        %v8054 = vadd.s32 %v8053, %v8044
        %v8055 = vand.u32 %v8032, 65535
        %v8056 = vshrl.u32 %v8032, 16
        %v8057 = vand.u32 %v8027, 65535
        %v8058 = vshrl.u32 %v8027, 16
        %v8059 = vmul.u32 %v8055, %v8057
        %v8060 = vmul.u32 %v8055, %v8058
        %v8061 = vmul.u32 %v8056, %v8057
        %v8062 = vmul.u32 %v8056, %v8058
        %v8063 = vshll.u32 %v8060, 16
        %v8064 = vshrl.u32 %v8060, 16
        %v8065 = vshll.u32 %v8061, 16
        %v8066 = vshrl.u32 %v8061, 16
        %vm8067 = vc.u32 %v8059, %v8063
        %v8068 = vsel %vm8067, 1, 0
        %v8069 = vadd.s32 %v8059, %v8063
        %v8070 = vadd.s32 %v8062, %v8068
        %vm8071 = vc.u32 %v8069, %v8065
        %v8072 = vsel %vm8071, 1, 0
        %v8073 = vadd.s32 %v8069, %v8065
        %v8074 = vadd.s32 %v8070, %v8072
        %v8075 = vadd.s32 %v8074, %v8064
        %v8076 = vadd.s32 %v8075, %v8066
        %v8077 = vmul.u32 %v8032, %v8023
        %v8078 = vadd.s32 %v8054, %v8073
        %vm8079 = vc.u32 %v8054, %v8073
        %v8080 = vadd.s32 %v8076, 1
        %v8081 = vsel %vm8079, %v8080, %v8076
        %v8082 = vadd.s32 %v8077, %v8081
        %v8083 = vadd.s32 %v8082, 536870912
        %v8084 = vshrl.u32 %v8083, 30
        %v8085 = vshll.u32 %v8084, 30
        %v8086 = vsub.s32 %v8082, %v8085
        %vm8087 = vcmp.lt.s32.totalorder %v8086, 0
        %v8088 = vsub.s32 0, %v8086
        %v8089 = vsel %vm8087, %v8088, %v8086
        %v8090 = vclz %v8089
        %v8091 = vsub.s32 %v8090, 2
        %vm8092 = vcmp.gt.s32.totalorder 0, %v8091
        %v8093 = vsel %vm8092, 0, %v8091
        %v8094 = vsub.s32 32, %v8093
        %v8095 = vshll.u32 %v8086, %v8093
        %v8096 = vshrl.u32 %v8078, %v8094
        %v8097 = vor.u32 %v8095, %v8096
        %v8098 = vsub.s32 4294967266, %v8093
        %v8099 = vadd.s32 %v8098, 127
        %v8100 = vshll.u32 %v8099, 23
        %v8101 = vor.u32 4788187, %v8100
        %v8102 = vand.u32 2147483647, %v8101
        %v8104 = vcvt.s32.f32 %v8097
        %v8105 = vmul.f32 %v8104, %v8102
        %v8106 = vxor.u32 %v8105, 2147483648
        %v8107 = vsel %vm7986, %v8106, %v8105
        %v8108 = vsub.s32 4, %v8084
        %v8109 = vsel %vm7986, %v8108, %v8084
        %v8110 = vsel %vm7985, %v5812, %v8107
        %v8111 = vsel %vm7985, 0, %v8109
        %v8112 = vmul.f32 %v8110, %v8110
        %v8113 = vmul.f32 %v8112, -0.001358992
        %v8114 = vadd.f32 %v8113, 0.041655596
        %v8115 = vmul.f32 %v8112, %v8114
        %v8116 = vadd.f32 %v8115, -0.4999988
        %v8117 = vmul.f32 %v8112, %v8116
        %v8118 = vadd.f32 1.0, %v8117
        %v8119 = vmul.f32 %v8110, %v8110
        %v8120 = vmul.f32 %v8119, -0.00019511016
        %v8121 = vadd.f32 %v8120, 0.008332121
        %v8122 = vmul.f32 %v8119, %v8121
        %v8123 = vadd.f32 %v8122, -0.16666654
        %v8124 = vmul.f32 %v8119, %v8123
        %v8125 = vadd.f32 %v8124, 1.0
        %v8126 = vmul.f32 %v8125, %v8110
        %vm8127 = vweird.f32 %v5812
        %v8128 = vadd.s32 %v8111, 3
        %v8129 = vand.u32 %v8128, 3
        %vm8130 = vcmp.lt.s32.totalorder %v8129, 2
        %vm8131 = vcmp.eq.s32.totalorder %v8129, 0
        %v8132 = vxor.u32 %v8126, 2147483648
        %v8133 = vsel %vm8131, %v8118, %v8132
        %vm8134 = vcmp.eq.s32.totalorder %v8129, 2
        %v8135 = vxor.u32 %v8118, 2147483648
        %v8136 = vsel %vm8134, %v8135, %v8126
        %v8137 = vsel %vm8130, %v8133, %v8136
        %v8138 = vsel %vm8127, nan, %v8137
        %v8139 = vand.u32 2147483647, %v5813
        %vm8140 = vcmp.le.f32.partialorder %v8139, 0.7853982
        %vm8141 = vcmp.lt.s32.totalorder %v5813, 0
        %v8142 = vand.u32 %v5813, 2139095040
        %v8143 = vshrl.u32 %v8142, 23
        %v8144 = vsub.s32 %v8143, 127
        %v8145 = vand.u32 2147483647, %v5813
        %v8146 = vand.u32 %v8145, 8388607
        %v8147 = vor.u32 %v8146, 8388608
        %v8148 = vsub.s32 0, %v8147
        %v8149 = vadd.s32 %v8144, 1
        %vm8150 = vcmp.gt.s32.totalorder %v8149, 0
        %v8151 = vsel %vm8150, %v8149, 0
        %v8152 = vshrl.u32 %v8151, 5
        %v8153 = vand.u32 %v8151, 31
        %v8154 = vsub.s32 32, %v8153
        %v8155 = vshrl.u32 683565275, %v8154
        %v8156 = vshll.u32 683565275, %v8153
        %v8157 = vshrl.u32 2475754826, %v8154
        %v8158 = vor.u32 %v8156, %v8157
        %v8159 = vshll.u32 2475754826, %v8153
        %v8160 = vshrl.u32 2131351028, %v8154
        %v8161 = vor.u32 %v8159, %v8160
        %v8162 = vshll.u32 2131351028, %v8153
        %v8163 = vshrl.u32 2102212464, %v8154
        %v8164 = vor.u32 %v8162, %v8163
        %v8165 = vshll.u32 2102212464, %v8153
        %v8166 = vshrl.u32 920167782, %v8154
        %v8167 = vor.u32 %v8165, %v8166
        %v8168 = vshll.u32 920167782, %v8153
        %v8169 = vshrl.u32 1326507024, %v8154
        %v8170 = vor.u32 %v8168, %v8169
        %vm8171 = vcmp.lt.s32.totalorder %v8152, 1
        %vm8172 = vcmp.lt.s32.totalorder %v8152, 2
        %vm8173 = vcmp.lt.s32.totalorder %v8152, 3
        %vm8174 = vcmp.lt.s32.totalorder %v8152, 4
        %v8175 = vsel %vm8171, %v8155, %v8158
        %v8176 = vsel %vm8174, %v8164, 2102212464
        %v8177 = vsel %vm8173, %v8161, %v8176
        %v8178 = vsel %vm8172, %v8175, %v8177
        %v8179 = vsel %vm8171, %v8158, %v8161
        %v8180 = vsel %vm8174, %v8167, 920167782
        %v8181 = vsel %vm8173, %v8164, %v8180
        %v8182 = vsel %vm8172, %v8179, %v8181
        %v8183 = vsel %vm8171, %v8161, %v8164
        %v8184 = vsel %vm8174, %v8170, 1326507024
        %v8185 = vsel %vm8173, %v8167, %v8184
        %v8186 = vsel %vm8172, %v8183, %v8185
        %v8187 = vshll.u32 %v8147, 8
        %v8188 = vand.u32 %v8187, 65535
        %v8189 = vshrl.u32 %v8187, 16
        %v8190 = vand.u32 %v8186, 65535
        %v8191 = vshrl.u32 %v8186, 16
        %v8192 = vmul.u32 %v8188, %v8190
        %v8193 = vmul.u32 %v8188, %v8191
        %v8194 = vmul.u32 %v8189, %v8190
        %v8195 = vmul.u32 %v8189, %v8191
        %v8196 = vshll.u32 %v8193, 16
        %v8197 = vshrl.u32 %v8193, 16
        %v8198 = vshll.u32 %v8194, 16
        %v8199 = vshrl.u32 %v8194, 16
        %vm8200 = vc.u32 %v8192, %v8196
        %v8201 = vsel %vm8200, 1, 0
        %v8202 = vadd.s32 %v8192, %v8196
        %v8203 = vadd.s32 %v8195, %v8201
        %vm8204 = vc.u32 %v8202, %v8198
        %v8205 = vsel %vm8204, 1, 0
        %v8206 = vadd.s32 %v8202, %v8198
        %v8207 = vadd.s32 %v8203, %v8205
        %v8208 = vadd.s32 %v8207, %v8197
        %v8209 = vadd.s32 %v8208, %v8199
        %v8210 = vand.u32 %v8187, 65535
        %v8211 = vshrl.u32 %v8187, 16
        %v8212 = vand.u32 %v8182, 65535
        %v8213 = vshrl.u32 %v8182, 16
        %v8214 = vmul.u32 %v8210, %v8212
        %v8215 = vmul.u32 %v8210, %v8213
        %v8216 = vmul.u32 %v8211, %v8212
        %v8217 = vmul.u32 %v8211, %v8213
        %v8218 = vshll.u32 %v8215, 16
        %v8219 = vshrl.u32 %v8215, 16
        %v8220 = vshll.u32 %v8216, 16
        %v8221 = vshrl.u32 %v8216, 16
        %vm8222 = vc.u32 %v8214, %v8218
        %v8223 = vsel %vm8222, 1, 0
        %v8224 = vadd.s32 %v8214, %v8218
        %v8225 = vadd.s32 %v8217, %v8223
        %vm8226 = vc.u32 %v8224, %v8220
        %v8227 = vsel %vm8226, 1, 0
        %v8228 = vadd.s32 %v8224, %v8220
        %v8229 = vadd.s32 %v8225, %v8227
        %v8230 = vadd.s32 %v8229, %v8219
        %v8231 = vadd.s32 %v8230, %v8221
        %v8232 = vmul.u32 %v8187, %v8178
        %v8233 = vadd.s32 %v8209, %v8228
        %vm8234 = vc.u32 %v8209, %v8228
        %v8235 = vadd.s32 %v8231, 1
        %v8236 = vsel %vm8234, %v8235, %v8231
        %v8237 = vadd.s32 %v8232, %v8236
        %v8238 = vadd.s32 %v8237, 536870912
        %v8239 = vshrl.u32 %v8238, 30
        %v8240 = vshll.u32 %v8239, 30
        %v8241 = vsub.s32 %v8237, %v8240
        %vm8242 = vcmp.lt.s32.totalorder %v8241, 0
        %v8243 = vsub.s32 0, %v8241
        %v8244 = vsel %vm8242, %v8243, %v8241
        %v8245 = vclz %v8244
        %v8246 = vsub.s32 %v8245, 2
        %vm8247 = vcmp.gt.s32.totalorder 0, %v8246
        %v8248 = vsel %vm8247, 0, %v8246
        %v8249 = vsub.s32 32, %v8248
        %v8250 = vshll.u32 %v8241, %v8248
        %v8251 = vshrl.u32 %v8233, %v8249
        %v8252 = vor.u32 %v8250, %v8251
        %v8253 = vsub.s32 4294967266, %v8248
        %v8254 = vadd.s32 %v8253, 127
        %v8255 = vshll.u32 %v8254, 23
        %v8256 = vor.u32 4788187, %v8255
        %v8257 = vand.u32 2147483647, %v8256
        %v8259 = vcvt.s32.f32 %v8252
        %v8260 = vmul.f32 %v8259, %v8257
        %v8261 = vxor.u32 %v8260, 2147483648
        %v8262 = vsel %vm8141, %v8261, %v8260
        %v8263 = vsub.s32 4, %v8239
        %v8264 = vsel %vm8141, %v8263, %v8239
        %v8265 = vsel %vm8140, %v5813, %v8262
        %v8266 = vsel %vm8140, 0, %v8264
        %v8267 = vmul.f32 %v8265, %v8265
        %v8268 = vmul.f32 %v8267, -0.001358992
        %v8269 = vadd.f32 %v8268, 0.041655596
        %v8270 = vmul.f32 %v8267, %v8269
        %v8271 = vadd.f32 %v8270, -0.4999988
        %v8272 = vmul.f32 %v8267, %v8271
        %v8273 = vadd.f32 1.0, %v8272
        %v8274 = vmul.f32 %v8265, %v8265
        %v8275 = vmul.f32 %v8274, -0.00019511016
        %v8276 = vadd.f32 %v8275, 0.008332121
        %v8277 = vmul.f32 %v8274, %v8276
        %v8278 = vadd.f32 %v8277, -0.16666654
        %v8279 = vmul.f32 %v8274, %v8278
        %v8280 = vadd.f32 %v8279, 1.0
        %v8281 = vmul.f32 %v8280, %v8265
        %vm8282 = vweird.f32 %v5813
        %v8283 = vadd.s32 %v8266, 3
        %v8284 = vand.u32 %v8283, 3
        %vm8285 = vcmp.lt.s32.totalorder %v8284, 2
        %vm8286 = vcmp.eq.s32.totalorder %v8284, 0
        %v8287 = vxor.u32 %v8281, 2147483648
        %v8288 = vsel %vm8286, %v8273, %v8287
        %vm8289 = vcmp.eq.s32.totalorder %v8284, 2
        %v8290 = vxor.u32 %v8273, 2147483648
        %v8291 = vsel %vm8289, %v8290, %v8281
        %v8292 = vsel %vm8285, %v8288, %v8291
        %v8293 = vsel %vm8282, nan, %v8292
        %s8294 = scalar_lea.vmem %s1, 96
        %v8295 = vld [vmem:[%s8294] sm:$0xff]
        %v8296 = vld [vmem:[%s8294 + $0x8] sm:$0xff]
        %v8297 = vld [vmem:[%s8294 + $0x10] sm:$0xff]
        %v8298 = vld [vmem:[%s8294 + $0x18] sm:$0xff]
        %s8299 = scalar_lea.vmem %s2, 96
        %v8300 = vld [vmem:[%s8299] sm:$0xff]
        %v8301 = vld [vmem:[%s8299 + $0x8] sm:$0xff]
        %v8302 = vld [vmem:[%s8299 + $0x10] sm:$0xff]
        %v8303 = vld [vmem:[%s8299 + $0x18] sm:$0xff]
        %8305 = vset.pattern.permute.xlu0 0
        %8306 = vperm.xlu0 %8305, %v8300
        %v8307 = vpop.permute.xlu0 %8306
        %8310 = vset.pattern.permute.xlu0 0
        %8311 = vperm.xlu0 %8310, %v8301
        %v8312 = vpop.permute.xlu0 %8311
        %8315 = vset.pattern.permute.xlu0 0
        %8316 = vperm.xlu0 %8315, %v8302
        %v8317 = vpop.permute.xlu0 %8316
        %8320 = vset.pattern.permute.xlu0 0
        %8321 = vperm.xlu0 %8320, %v8303
        %v8322 = vpop.permute.xlu0 %8321
        %v8325 = vsel %vm2919, %v8295, 0
        %v8328 = vsel %vm2919, %v8296, 0
        %v8331 = vsel %vm2919, %v8297, 0
        %v8334 = vsel %vm2919, %v8298, 0
        %8336 = vmatpush.msra.mxu0 0.0
        %8337 = vmatpush.msra.mxu0 0.0
        %8338 = vmatpush.msra.mxu0 0.0
        %8339 = vmatpush.msra.mxu0 0.0
        %8340 = vmatpush.msra.mxu0 0.0
        %8341 = vmatpush.msra.mxu0 0.0
        %8342 = vmatpush.msra.mxu0 0.0
        %8343 = vmatpush.msra.mxu0 0.0
        %8344 = vmatpush.msra.mxu0 0.0
        %8345 = vmatpush.msra.mxu0 0.0
        %8346 = vmatpush.msra.mxu0 0.0
        %8347 = vmatpush.msra.mxu0 0.0
        %8348 = vmatpush.msra.mxu0 %v7828
        %8349 = vmatpush.msra.mxu0 %v7208
        %8350 = vmatpush.msra.mxu0 %v6588
        %8351 = vmatpush.msra.mxu0 %v5968
        %8352 = vmatmul.f32.gmra.mxu0 %v8325
        %v8353 = vpop.f32.mrf.mxu0
        %v8354 = vadd.f32 %v8307, %v8353
        %8355 = vmatmul.f32.gmra.mxu0 %v8328
        %v8356 = vpop.f32.mrf.mxu0
        %v8357 = vadd.f32 %v8312, %v8356
        %8358 = vmatmul.f32.gmra.mxu0 %v8331
        %v8359 = vpop.f32.mrf.mxu0
        %v8360 = vadd.f32 %v8317, %v8359
        %8361 = vmatmul.f32.gmra.mxu0 %v8334
        %v8362 = vpop.f32.mrf.mxu0
        %v8363 = vadd.f32 %v8322, %v8362
        %8364 = vdwg.mxu0
        %8365 = vmatpush.msra.mxu0 0.0
        %8366 = vmatpush.msra.mxu0 0.0
        %8367 = vmatpush.msra.mxu0 0.0
        %8368 = vmatpush.msra.mxu0 0.0
        %8369 = vmatpush.msra.mxu0 0.0
        %8370 = vmatpush.msra.mxu0 0.0
        %8371 = vmatpush.msra.mxu0 0.0
        %8372 = vmatpush.msra.mxu0 0.0
        %8373 = vmatpush.msra.mxu0 0.0
        %8374 = vmatpush.msra.mxu0 0.0
        %8375 = vmatpush.msra.mxu0 0.0
        %8376 = vmatpush.msra.mxu0 0.0
        %8377 = vmatpush.msra.mxu0 %v7983
        %8378 = vmatpush.msra.mxu0 %v7363
        %8379 = vmatpush.msra.mxu0 %v6743
        %8380 = vmatpush.msra.mxu0 %v6123
        %8381 = vmatmul.f32.gmra.mxu0 %v8325
        %v8382 = vpop.f32.mrf.mxu0
        %v8383 = vadd.f32 %v8307, %v8382
        %8384 = vmatmul.f32.gmra.mxu0 %v8328
        %v8385 = vpop.f32.mrf.mxu0
        %v8386 = vadd.f32 %v8312, %v8385
        %8387 = vmatmul.f32.gmra.mxu0 %v8331
        %v8388 = vpop.f32.mrf.mxu0
        %v8389 = vadd.f32 %v8317, %v8388
        %8390 = vmatmul.f32.gmra.mxu0 %v8334
        %v8391 = vpop.f32.mrf.mxu0
        %v8392 = vadd.f32 %v8322, %v8391
        %8393 = vdwg.mxu0
        %8394 = vmatpush.msra.mxu0 0.0
        %8395 = vmatpush.msra.mxu0 0.0
        %8396 = vmatpush.msra.mxu0 0.0
        %8397 = vmatpush.msra.mxu0 0.0
        %8398 = vmatpush.msra.mxu0 0.0
        %8399 = vmatpush.msra.mxu0 0.0
        %8400 = vmatpush.msra.mxu0 0.0
        %8401 = vmatpush.msra.mxu0 0.0
        %8402 = vmatpush.msra.mxu0 0.0
        %8403 = vmatpush.msra.mxu0 0.0
        %8404 = vmatpush.msra.mxu0 0.0
        %8405 = vmatpush.msra.mxu0 0.0
        %8406 = vmatpush.msra.mxu0 %v8138
        %8407 = vmatpush.msra.mxu0 %v7518
        %8408 = vmatpush.msra.mxu0 %v6898
        %8409 = vmatpush.msra.mxu0 %v6278
        %8410 = vmatmul.f32.gmra.mxu0 %v8325
        %v8411 = vpop.f32.mrf.mxu0
        %v8412 = vadd.f32 %v8307, %v8411
        %8413 = vmatmul.f32.gmra.mxu0 %v8328
        %v8414 = vpop.f32.mrf.mxu0
        %v8415 = vadd.f32 %v8312, %v8414
        %8416 = vmatmul.f32.gmra.mxu0 %v8331
        %v8417 = vpop.f32.mrf.mxu0
        %v8418 = vadd.f32 %v8317, %v8417
        %8419 = vmatmul.f32.gmra.mxu0 %v8334
        %v8420 = vpop.f32.mrf.mxu0
        %v8421 = vadd.f32 %v8322, %v8420
        %8422 = vdwg.mxu0
        %8423 = vmatpush.msra.mxu0 0.0
        %8424 = vmatpush.msra.mxu0 0.0
        %8425 = vmatpush.msra.mxu0 0.0
        %8426 = vmatpush.msra.mxu0 0.0
        %8427 = vmatpush.msra.mxu0 0.0
        %8428 = vmatpush.msra.mxu0 0.0
        %8429 = vmatpush.msra.mxu0 0.0
        %8430 = vmatpush.msra.mxu0 0.0
        %8431 = vmatpush.msra.mxu0 0.0
        %8432 = vmatpush.msra.mxu0 0.0
        %8433 = vmatpush.msra.mxu0 0.0
        %8434 = vmatpush.msra.mxu0 0.0
        %8435 = vmatpush.msra.mxu0 %v8293
        %8436 = vmatpush.msra.mxu0 %v7673
        %8437 = vmatpush.msra.mxu0 %v7053
        %8438 = vmatpush.msra.mxu0 %v6433
        %8439 = vmatmul.f32.gmra.mxu0 %v8325
        %v8440 = vpop.f32.mrf.mxu0
        %v8441 = vadd.f32 %v8307, %v8440
        %8442 = vmatmul.f32.gmra.mxu0 %v8328
        %v8443 = vpop.f32.mrf.mxu0
        %v8444 = vadd.f32 %v8312, %v8443
        %8445 = vmatmul.f32.gmra.mxu0 %v8331
        %v8446 = vpop.f32.mrf.mxu0
        %v8447 = vadd.f32 %v8317, %v8446
        %8448 = vmatmul.f32.gmra.mxu0 %v8334
        %v8449 = vpop.f32.mrf.mxu0
        %v8450 = vadd.f32 %v8322, %v8449
        %8451 = vdwg.mxu0
        %v8452 = vmul.f32 %v8354, 30.0
        %v8453 = vmul.f32 %v8383, 30.0
        %v8454 = vmul.f32 %v8412, 30.0
        %v8455 = vmul.f32 %v8441, 30.0
        %v8456 = vmul.f32 %v8357, 30.0
        %v8457 = vmul.f32 %v8386, 30.0
        %v8458 = vmul.f32 %v8415, 30.0
        %v8459 = vmul.f32 %v8444, 30.0
        %v8460 = vmul.f32 %v8360, 30.0
        %v8461 = vmul.f32 %v8389, 30.0
        %v8462 = vmul.f32 %v8418, 30.0
        %v8463 = vmul.f32 %v8447, 30.0
        %v8464 = vmul.f32 %v8363, 30.0
        %v8465 = vmul.f32 %v8392, 30.0
        %v8466 = vmul.f32 %v8421, 30.0
        %v8467 = vmul.f32 %v8450, 30.0
        %v8468 = vand.u32 2147483647, %v8354
        %v8469 = vand.u32 2147483647, %v8383
        %v8470 = vand.u32 2147483647, %v8412
        %v8471 = vand.u32 2147483647, %v8441
        %v8472 = vand.u32 2147483647, %v8357
        %v8473 = vand.u32 2147483647, %v8386
        %v8474 = vand.u32 2147483647, %v8415
        %v8475 = vand.u32 2147483647, %v8444
        %v8476 = vand.u32 2147483647, %v8360
        %v8477 = vand.u32 2147483647, %v8389
        %v8478 = vand.u32 2147483647, %v8418
        %v8479 = vand.u32 2147483647, %v8447
        %v8480 = vand.u32 2147483647, %v8363
        %v8481 = vand.u32 2147483647, %v8392
        %v8482 = vand.u32 2147483647, %v8421
        %v8483 = vand.u32 2147483647, %v8450
        %v8484 = vmul.f32 %v8452, %v8468
        %v8485 = vmul.f32 %v8453, %v8469
        %v8486 = vmul.f32 %v8454, %v8470
        %v8487 = vmul.f32 %v8455, %v8471
        %v8488 = vmul.f32 %v8456, %v8472
        %v8489 = vmul.f32 %v8457, %v8473
        %v8490 = vmul.f32 %v8458, %v8474
        %v8491 = vmul.f32 %v8459, %v8475
        %v8492 = vmul.f32 %v8460, %v8476
        %v8493 = vmul.f32 %v8461, %v8477
        %v8494 = vmul.f32 %v8462, %v8478
        %v8495 = vmul.f32 %v8463, %v8479
        %v8496 = vmul.f32 %v8464, %v8480
        %v8497 = vmul.f32 %v8465, %v8481
        %v8498 = vmul.f32 %v8466, %v8482
        %v8499 = vmul.f32 %v8467, %v8483
        %v8500 = vadd.f32 %v8484, %v8452
        %v8501 = vadd.f32 %v8485, %v8453
        %v8502 = vadd.f32 %v8486, %v8454
        %v8503 = vadd.f32 %v8487, %v8455
        %v8504 = vadd.f32 %v8488, %v8456
        %v8505 = vadd.f32 %v8489, %v8457
        %v8506 = vadd.f32 %v8490, %v8458
        %v8507 = vadd.f32 %v8491, %v8459
        %v8508 = vadd.f32 %v8492, %v8460
        %v8509 = vadd.f32 %v8493, %v8461
        %v8510 = vadd.f32 %v8494, %v8462
        %v8511 = vadd.f32 %v8495, %v8463
        %v8512 = vadd.f32 %v8496, %v8464
        %v8513 = vadd.f32 %v8497, %v8465
        %v8514 = vadd.f32 %v8498, %v8466
        %v8515 = vadd.f32 %v8499, %v8467
        %v8516 = vand.u32 2147483647, %v8500
        %vm8517 = vcmp.le.f32.partialorder %v8516, 0.7853982
        %vm8518 = vcmp.lt.s32.totalorder %v8500, 0
        %v8519 = vand.u32 %v8500, 2139095040
        %v8520 = vshrl.u32 %v8519, 23
        %v8521 = vsub.s32 %v8520, 127
        %v8522 = vand.u32 2147483647, %v8500
        %v8523 = vand.u32 %v8522, 8388607
        %v8524 = vor.u32 %v8523, 8388608
        %v8525 = vsub.s32 0, %v8524
        %v8526 = vadd.s32 %v8521, 1
        %vm8527 = vcmp.gt.s32.totalorder %v8526, 0
        %v8528 = vsel %vm8527, %v8526, 0
        %v8529 = vshrl.u32 %v8528, 5
        %v8530 = vand.u32 %v8528, 31
        %v8531 = vsub.s32 32, %v8530
        %v8532 = vshrl.u32 683565275, %v8531
        %v8533 = vshll.u32 683565275, %v8530
        %v8534 = vshrl.u32 2475754826, %v8531
        %v8535 = vor.u32 %v8533, %v8534
        %v8536 = vshll.u32 2475754826, %v8530
        %v8537 = vshrl.u32 2131351028, %v8531
        %v8538 = vor.u32 %v8536, %v8537
        %v8539 = vshll.u32 2131351028, %v8530
        %v8540 = vshrl.u32 2102212464, %v8531
        %v8541 = vor.u32 %v8539, %v8540
        %v8542 = vshll.u32 2102212464, %v8530
        %v8543 = vshrl.u32 920167782, %v8531
        %v8544 = vor.u32 %v8542, %v8543
        %v8545 = vshll.u32 920167782, %v8530
        %v8546 = vshrl.u32 1326507024, %v8531
        %v8547 = vor.u32 %v8545, %v8546
        %vm8548 = vcmp.lt.s32.totalorder %v8529, 1
        %vm8549 = vcmp.lt.s32.totalorder %v8529, 2
        %vm8550 = vcmp.lt.s32.totalorder %v8529, 3
        %vm8551 = vcmp.lt.s32.totalorder %v8529, 4
        %v8552 = vsel %vm8548, %v8532, %v8535
        %v8553 = vsel %vm8551, %v8541, 2102212464
        %v8554 = vsel %vm8550, %v8538, %v8553
        %v8555 = vsel %vm8549, %v8552, %v8554
        %v8556 = vsel %vm8548, %v8535, %v8538
        %v8557 = vsel %vm8551, %v8544, 920167782
        %v8558 = vsel %vm8550, %v8541, %v8557
        %v8559 = vsel %vm8549, %v8556, %v8558
        %v8560 = vsel %vm8548, %v8538, %v8541
        %v8561 = vsel %vm8551, %v8547, 1326507024
        %v8562 = vsel %vm8550, %v8544, %v8561
        %v8563 = vsel %vm8549, %v8560, %v8562
        %v8564 = vshll.u32 %v8524, 8
        %v8565 = vand.u32 %v8564, 65535
        %v8566 = vshrl.u32 %v8564, 16
        %v8567 = vand.u32 %v8563, 65535
        %v8568 = vshrl.u32 %v8563, 16
        %v8569 = vmul.u32 %v8565, %v8567
        %v8570 = vmul.u32 %v8565, %v8568
        %v8571 = vmul.u32 %v8566, %v8567
        %v8572 = vmul.u32 %v8566, %v8568
        %v8573 = vshll.u32 %v8570, 16
        %v8574 = vshrl.u32 %v8570, 16
        %v8575 = vshll.u32 %v8571, 16
        %v8576 = vshrl.u32 %v8571, 16
        %vm8577 = vc.u32 %v8569, %v8573
        %v8578 = vsel %vm8577, 1, 0
        %v8579 = vadd.s32 %v8569, %v8573
        %v8580 = vadd.s32 %v8572, %v8578
        %vm8581 = vc.u32 %v8579, %v8575
        %v8582 = vsel %vm8581, 1, 0
        %v8583 = vadd.s32 %v8579, %v8575
        %v8584 = vadd.s32 %v8580, %v8582
        %v8585 = vadd.s32 %v8584, %v8574
        %v8586 = vadd.s32 %v8585, %v8576
        %v8587 = vand.u32 %v8564, 65535
        %v8588 = vshrl.u32 %v8564, 16
        %v8589 = vand.u32 %v8559, 65535
        %v8590 = vshrl.u32 %v8559, 16
        %v8591 = vmul.u32 %v8587, %v8589
        %v8592 = vmul.u32 %v8587, %v8590
        %v8593 = vmul.u32 %v8588, %v8589
        %v8594 = vmul.u32 %v8588, %v8590
        %v8595 = vshll.u32 %v8592, 16
        %v8596 = vshrl.u32 %v8592, 16
        %v8597 = vshll.u32 %v8593, 16
        %v8598 = vshrl.u32 %v8593, 16
        %vm8599 = vc.u32 %v8591, %v8595
        %v8600 = vsel %vm8599, 1, 0
        %v8601 = vadd.s32 %v8591, %v8595
        %v8602 = vadd.s32 %v8594, %v8600
        %vm8603 = vc.u32 %v8601, %v8597
        %v8604 = vsel %vm8603, 1, 0
        %v8605 = vadd.s32 %v8601, %v8597
        %v8606 = vadd.s32 %v8602, %v8604
        %v8607 = vadd.s32 %v8606, %v8596
        %v8608 = vadd.s32 %v8607, %v8598
        %v8609 = vmul.u32 %v8564, %v8555
        %v8610 = vadd.s32 %v8586, %v8605
        %vm8611 = vc.u32 %v8586, %v8605
        %v8612 = vadd.s32 %v8608, 1
        %v8613 = vsel %vm8611, %v8612, %v8608
        %v8614 = vadd.s32 %v8609, %v8613
        %v8615 = vadd.s32 %v8614, 536870912
        %v8616 = vshrl.u32 %v8615, 30
        %v8617 = vshll.u32 %v8616, 30
        %v8618 = vsub.s32 %v8614, %v8617
        %vm8619 = vcmp.lt.s32.totalorder %v8618, 0
        %v8620 = vsub.s32 0, %v8618
        %v8621 = vsel %vm8619, %v8620, %v8618
        %v8622 = vclz %v8621
        %v8623 = vsub.s32 %v8622, 2
        %vm8624 = vcmp.gt.s32.totalorder 0, %v8623
        %v8625 = vsel %vm8624, 0, %v8623
        %v8626 = vsub.s32 32, %v8625
        %v8627 = vshll.u32 %v8618, %v8625
        %v8628 = vshrl.u32 %v8610, %v8626
        %v8629 = vor.u32 %v8627, %v8628
        %v8630 = vsub.s32 4294967266, %v8625
        %v8631 = vadd.s32 %v8630, 127
        %v8632 = vshll.u32 %v8631, 23
        %v8633 = vor.u32 4788187, %v8632
        %v8634 = vand.u32 2147483647, %v8633
        %v8636 = vcvt.s32.f32 %v8629
        %v8637 = vmul.f32 %v8636, %v8634
        %v8638 = vxor.u32 %v8637, 2147483648
        %v8639 = vsel %vm8518, %v8638, %v8637
        %v8640 = vsub.s32 4, %v8616
        %v8641 = vsel %vm8518, %v8640, %v8616
        %v8642 = vsel %vm8517, %v8500, %v8639
        %v8643 = vsel %vm8517, 0, %v8641
        %v8644 = vmul.f32 %v8642, %v8642
        %v8645 = vmul.f32 %v8644, -0.001358992
        %v8646 = vadd.f32 %v8645, 0.041655596
        %v8647 = vmul.f32 %v8644, %v8646
        %v8648 = vadd.f32 %v8647, -0.4999988
        %v8649 = vmul.f32 %v8644, %v8648
        %v8650 = vadd.f32 1.0, %v8649
        %v8651 = vmul.f32 %v8642, %v8642
        %v8652 = vmul.f32 %v8651, -0.00019511016
        %v8653 = vadd.f32 %v8652, 0.008332121
        %v8654 = vmul.f32 %v8651, %v8653
        %v8655 = vadd.f32 %v8654, -0.16666654
        %v8656 = vmul.f32 %v8651, %v8655
        %v8657 = vadd.f32 %v8656, 1.0
        %v8658 = vmul.f32 %v8657, %v8642
        %vm8659 = vweird.f32 %v8500
        %v8660 = vadd.s32 %v8643, 3
        %v8661 = vand.u32 %v8660, 3
        %vm8662 = vcmp.lt.s32.totalorder %v8661, 2
        %vm8663 = vcmp.eq.s32.totalorder %v8661, 0
        %v8664 = vxor.u32 %v8658, 2147483648
        %v8665 = vsel %vm8663, %v8650, %v8664
        %vm8666 = vcmp.eq.s32.totalorder %v8661, 2
        %v8667 = vxor.u32 %v8650, 2147483648
        %v8668 = vsel %vm8666, %v8667, %v8658
        %v8669 = vsel %vm8662, %v8665, %v8668
        %v8670 = vsel %vm8659, nan, %v8669
        %v8671 = vand.u32 2147483647, %v8501
        %vm8672 = vcmp.le.f32.partialorder %v8671, 0.7853982
        %vm8673 = vcmp.lt.s32.totalorder %v8501, 0
        %v8674 = vand.u32 %v8501, 2139095040
        %v8675 = vshrl.u32 %v8674, 23
        %v8676 = vsub.s32 %v8675, 127
        %v8677 = vand.u32 2147483647, %v8501
        %v8678 = vand.u32 %v8677, 8388607
        %v8679 = vor.u32 %v8678, 8388608
        %v8680 = vsub.s32 0, %v8679
        %v8681 = vadd.s32 %v8676, 1
        %vm8682 = vcmp.gt.s32.totalorder %v8681, 0
        %v8683 = vsel %vm8682, %v8681, 0
        %v8684 = vshrl.u32 %v8683, 5
        %v8685 = vand.u32 %v8683, 31
        %v8686 = vsub.s32 32, %v8685
        %v8687 = vshrl.u32 683565275, %v8686
        %v8688 = vshll.u32 683565275, %v8685
        %v8689 = vshrl.u32 2475754826, %v8686
        %v8690 = vor.u32 %v8688, %v8689
        %v8691 = vshll.u32 2475754826, %v8685
        %v8692 = vshrl.u32 2131351028, %v8686
        %v8693 = vor.u32 %v8691, %v8692
        %v8694 = vshll.u32 2131351028, %v8685
        %v8695 = vshrl.u32 2102212464, %v8686
        %v8696 = vor.u32 %v8694, %v8695
        %v8697 = vshll.u32 2102212464, %v8685
        %v8698 = vshrl.u32 920167782, %v8686
        %v8699 = vor.u32 %v8697, %v8698
        %v8700 = vshll.u32 920167782, %v8685
        %v8701 = vshrl.u32 1326507024, %v8686
        %v8702 = vor.u32 %v8700, %v8701
        %vm8703 = vcmp.lt.s32.totalorder %v8684, 1
        %vm8704 = vcmp.lt.s32.totalorder %v8684, 2
        %vm8705 = vcmp.lt.s32.totalorder %v8684, 3
        %vm8706 = vcmp.lt.s32.totalorder %v8684, 4
        %v8707 = vsel %vm8703, %v8687, %v8690
        %v8708 = vsel %vm8706, %v8696, 2102212464
        %v8709 = vsel %vm8705, %v8693, %v8708
        %v8710 = vsel %vm8704, %v8707, %v8709
        %v8711 = vsel %vm8703, %v8690, %v8693
        %v8712 = vsel %vm8706, %v8699, 920167782
        %v8713 = vsel %vm8705, %v8696, %v8712
        %v8714 = vsel %vm8704, %v8711, %v8713
        %v8715 = vsel %vm8703, %v8693, %v8696
        %v8716 = vsel %vm8706, %v8702, 1326507024
        %v8717 = vsel %vm8705, %v8699, %v8716
        %v8718 = vsel %vm8704, %v8715, %v8717
        %v8719 = vshll.u32 %v8679, 8
        %v8720 = vand.u32 %v8719, 65535
        %v8721 = vshrl.u32 %v8719, 16
        %v8722 = vand.u32 %v8718, 65535
        %v8723 = vshrl.u32 %v8718, 16
        %v8724 = vmul.u32 %v8720, %v8722
        %v8725 = vmul.u32 %v8720, %v8723
        %v8726 = vmul.u32 %v8721, %v8722
        %v8727 = vmul.u32 %v8721, %v8723
        %v8728 = vshll.u32 %v8725, 16
        %v8729 = vshrl.u32 %v8725, 16
        %v8730 = vshll.u32 %v8726, 16
        %v8731 = vshrl.u32 %v8726, 16
        %vm8732 = vc.u32 %v8724, %v8728
        %v8733 = vsel %vm8732, 1, 0
        %v8734 = vadd.s32 %v8724, %v8728
        %v8735 = vadd.s32 %v8727, %v8733
        %vm8736 = vc.u32 %v8734, %v8730
        %v8737 = vsel %vm8736, 1, 0
        %v8738 = vadd.s32 %v8734, %v8730
        %v8739 = vadd.s32 %v8735, %v8737
        %v8740 = vadd.s32 %v8739, %v8729
        %v8741 = vadd.s32 %v8740, %v8731
        %v8742 = vand.u32 %v8719, 65535
        %v8743 = vshrl.u32 %v8719, 16
        %v8744 = vand.u32 %v8714, 65535
        %v8745 = vshrl.u32 %v8714, 16
        %v8746 = vmul.u32 %v8742, %v8744
        %v8747 = vmul.u32 %v8742, %v8745
        %v8748 = vmul.u32 %v8743, %v8744
        %v8749 = vmul.u32 %v8743, %v8745
        %v8750 = vshll.u32 %v8747, 16
        %v8751 = vshrl.u32 %v8747, 16
        %v8752 = vshll.u32 %v8748, 16
        %v8753 = vshrl.u32 %v8748, 16
        %vm8754 = vc.u32 %v8746, %v8750
        %v8755 = vsel %vm8754, 1, 0
        %v8756 = vadd.s32 %v8746, %v8750
        %v8757 = vadd.s32 %v8749, %v8755
        %vm8758 = vc.u32 %v8756, %v8752
        %v8759 = vsel %vm8758, 1, 0
        %v8760 = vadd.s32 %v8756, %v8752
        %v8761 = vadd.s32 %v8757, %v8759
        %v8762 = vadd.s32 %v8761, %v8751
        %v8763 = vadd.s32 %v8762, %v8753
        %v8764 = vmul.u32 %v8719, %v8710
        %v8765 = vadd.s32 %v8741, %v8760
        %vm8766 = vc.u32 %v8741, %v8760
        %v8767 = vadd.s32 %v8763, 1
        %v8768 = vsel %vm8766, %v8767, %v8763
        %v8769 = vadd.s32 %v8764, %v8768
        %v8770 = vadd.s32 %v8769, 536870912
        %v8771 = vshrl.u32 %v8770, 30
        %v8772 = vshll.u32 %v8771, 30
        %v8773 = vsub.s32 %v8769, %v8772
        %vm8774 = vcmp.lt.s32.totalorder %v8773, 0
        %v8775 = vsub.s32 0, %v8773
        %v8776 = vsel %vm8774, %v8775, %v8773
        %v8777 = vclz %v8776
        %v8778 = vsub.s32 %v8777, 2
        %vm8779 = vcmp.gt.s32.totalorder 0, %v8778
        %v8780 = vsel %vm8779, 0, %v8778
        %v8781 = vsub.s32 32, %v8780
        %v8782 = vshll.u32 %v8773, %v8780
        %v8783 = vshrl.u32 %v8765, %v8781
        %v8784 = vor.u32 %v8782, %v8783
        %v8785 = vsub.s32 4294967266, %v8780
        %v8786 = vadd.s32 %v8785, 127
        %v8787 = vshll.u32 %v8786, 23
        %v8788 = vor.u32 4788187, %v8787
        %v8789 = vand.u32 2147483647, %v8788
        %v8791 = vcvt.s32.f32 %v8784
        %v8792 = vmul.f32 %v8791, %v8789
        %v8793 = vxor.u32 %v8792, 2147483648
        %v8794 = vsel %vm8673, %v8793, %v8792
        %v8795 = vsub.s32 4, %v8771
        %v8796 = vsel %vm8673, %v8795, %v8771
        %v8797 = vsel %vm8672, %v8501, %v8794
        %v8798 = vsel %vm8672, 0, %v8796
        %v8799 = vmul.f32 %v8797, %v8797
        %v8800 = vmul.f32 %v8799, -0.001358992
        %v8801 = vadd.f32 %v8800, 0.041655596
        %v8802 = vmul.f32 %v8799, %v8801
        %v8803 = vadd.f32 %v8802, -0.4999988
        %v8804 = vmul.f32 %v8799, %v8803
        %v8805 = vadd.f32 1.0, %v8804
        %v8806 = vmul.f32 %v8797, %v8797
        %v8807 = vmul.f32 %v8806, -0.00019511016
        %v8808 = vadd.f32 %v8807, 0.008332121
        %v8809 = vmul.f32 %v8806, %v8808
        %v8810 = vadd.f32 %v8809, -0.16666654
        %v8811 = vmul.f32 %v8806, %v8810
        %v8812 = vadd.f32 %v8811, 1.0
        %v8813 = vmul.f32 %v8812, %v8797
        %vm8814 = vweird.f32 %v8501
        %v8815 = vadd.s32 %v8798, 3
        %v8816 = vand.u32 %v8815, 3
        %vm8817 = vcmp.lt.s32.totalorder %v8816, 2
        %vm8818 = vcmp.eq.s32.totalorder %v8816, 0
        %v8819 = vxor.u32 %v8813, 2147483648
        %v8820 = vsel %vm8818, %v8805, %v8819
        %vm8821 = vcmp.eq.s32.totalorder %v8816, 2
        %v8822 = vxor.u32 %v8805, 2147483648
        %v8823 = vsel %vm8821, %v8822, %v8813
        %v8824 = vsel %vm8817, %v8820, %v8823
        %v8825 = vsel %vm8814, nan, %v8824
        %v8826 = vand.u32 2147483647, %v8502
        %vm8827 = vcmp.le.f32.partialorder %v8826, 0.7853982
        %vm8828 = vcmp.lt.s32.totalorder %v8502, 0
        %v8829 = vand.u32 %v8502, 2139095040
        %v8830 = vshrl.u32 %v8829, 23
        %v8831 = vsub.s32 %v8830, 127
        %v8832 = vand.u32 2147483647, %v8502
        %v8833 = vand.u32 %v8832, 8388607
        %v8834 = vor.u32 %v8833, 8388608
        %v8835 = vsub.s32 0, %v8834
        %v8836 = vadd.s32 %v8831, 1
        %vm8837 = vcmp.gt.s32.totalorder %v8836, 0
        %v8838 = vsel %vm8837, %v8836, 0
        %v8839 = vshrl.u32 %v8838, 5
        %v8840 = vand.u32 %v8838, 31
        %v8841 = vsub.s32 32, %v8840
        %v8842 = vshrl.u32 683565275, %v8841
        %v8843 = vshll.u32 683565275, %v8840
        %v8844 = vshrl.u32 2475754826, %v8841
        %v8845 = vor.u32 %v8843, %v8844
        %v8846 = vshll.u32 2475754826, %v8840
        %v8847 = vshrl.u32 2131351028, %v8841
        %v8848 = vor.u32 %v8846, %v8847
        %v8849 = vshll.u32 2131351028, %v8840
        %v8850 = vshrl.u32 2102212464, %v8841
        %v8851 = vor.u32 %v8849, %v8850
        %v8852 = vshll.u32 2102212464, %v8840
        %v8853 = vshrl.u32 920167782, %v8841
        %v8854 = vor.u32 %v8852, %v8853
        %v8855 = vshll.u32 920167782, %v8840
        %v8856 = vshrl.u32 1326507024, %v8841
        %v8857 = vor.u32 %v8855, %v8856
        %vm8858 = vcmp.lt.s32.totalorder %v8839, 1
        %vm8859 = vcmp.lt.s32.totalorder %v8839, 2
        %vm8860 = vcmp.lt.s32.totalorder %v8839, 3
        %vm8861 = vcmp.lt.s32.totalorder %v8839, 4
        %v8862 = vsel %vm8858, %v8842, %v8845
        %v8863 = vsel %vm8861, %v8851, 2102212464
        %v8864 = vsel %vm8860, %v8848, %v8863
        %v8865 = vsel %vm8859, %v8862, %v8864
        %v8866 = vsel %vm8858, %v8845, %v8848
        %v8867 = vsel %vm8861, %v8854, 920167782
        %v8868 = vsel %vm8860, %v8851, %v8867
        %v8869 = vsel %vm8859, %v8866, %v8868
        %v8870 = vsel %vm8858, %v8848, %v8851
        %v8871 = vsel %vm8861, %v8857, 1326507024
        %v8872 = vsel %vm8860, %v8854, %v8871
        %v8873 = vsel %vm8859, %v8870, %v8872
        %v8874 = vshll.u32 %v8834, 8
        %v8875 = vand.u32 %v8874, 65535
        %v8876 = vshrl.u32 %v8874, 16
        %v8877 = vand.u32 %v8873, 65535
        %v8878 = vshrl.u32 %v8873, 16
        %v8879 = vmul.u32 %v8875, %v8877
        %v8880 = vmul.u32 %v8875, %v8878
        %v8881 = vmul.u32 %v8876, %v8877
        %v8882 = vmul.u32 %v8876, %v8878
        %v8883 = vshll.u32 %v8880, 16
        %v8884 = vshrl.u32 %v8880, 16
        %v8885 = vshll.u32 %v8881, 16
        %v8886 = vshrl.u32 %v8881, 16
        %vm8887 = vc.u32 %v8879, %v8883
        %v8888 = vsel %vm8887, 1, 0
        %v8889 = vadd.s32 %v8879, %v8883
        %v8890 = vadd.s32 %v8882, %v8888
        %vm8891 = vc.u32 %v8889, %v8885
        %v8892 = vsel %vm8891, 1, 0
        %v8893 = vadd.s32 %v8889, %v8885
        %v8894 = vadd.s32 %v8890, %v8892
        %v8895 = vadd.s32 %v8894, %v8884
        %v8896 = vadd.s32 %v8895, %v8886
        %v8897 = vand.u32 %v8874, 65535
        %v8898 = vshrl.u32 %v8874, 16
        %v8899 = vand.u32 %v8869, 65535
        %v8900 = vshrl.u32 %v8869, 16
        %v8901 = vmul.u32 %v8897, %v8899
        %v8902 = vmul.u32 %v8897, %v8900
        %v8903 = vmul.u32 %v8898, %v8899
        %v8904 = vmul.u32 %v8898, %v8900
        %v8905 = vshll.u32 %v8902, 16
        %v8906 = vshrl.u32 %v8902, 16
        %v8907 = vshll.u32 %v8903, 16
        %v8908 = vshrl.u32 %v8903, 16
        %vm8909 = vc.u32 %v8901, %v8905
        %v8910 = vsel %vm8909, 1, 0
        %v8911 = vadd.s32 %v8901, %v8905
        %v8912 = vadd.s32 %v8904, %v8910
        %vm8913 = vc.u32 %v8911, %v8907
        %v8914 = vsel %vm8913, 1, 0
        %v8915 = vadd.s32 %v8911, %v8907
        %v8916 = vadd.s32 %v8912, %v8914
        %v8917 = vadd.s32 %v8916, %v8906
        %v8918 = vadd.s32 %v8917, %v8908
        %v8919 = vmul.u32 %v8874, %v8865
        %v8920 = vadd.s32 %v8896, %v8915
        %vm8921 = vc.u32 %v8896, %v8915
        %v8922 = vadd.s32 %v8918, 1
        %v8923 = vsel %vm8921, %v8922, %v8918
        %v8924 = vadd.s32 %v8919, %v8923
        %v8925 = vadd.s32 %v8924, 536870912
        %v8926 = vshrl.u32 %v8925, 30
        %v8927 = vshll.u32 %v8926, 30
        %v8928 = vsub.s32 %v8924, %v8927
        %vm8929 = vcmp.lt.s32.totalorder %v8928, 0
        %v8930 = vsub.s32 0, %v8928
        %v8931 = vsel %vm8929, %v8930, %v8928
        %v8932 = vclz %v8931
        %v8933 = vsub.s32 %v8932, 2
        %vm8934 = vcmp.gt.s32.totalorder 0, %v8933
        %v8935 = vsel %vm8934, 0, %v8933
        %v8936 = vsub.s32 32, %v8935
        %v8937 = vshll.u32 %v8928, %v8935
        %v8938 = vshrl.u32 %v8920, %v8936
        %v8939 = vor.u32 %v8937, %v8938
        %v8940 = vsub.s32 4294967266, %v8935
        %v8941 = vadd.s32 %v8940, 127
        %v8942 = vshll.u32 %v8941, 23
        %v8943 = vor.u32 4788187, %v8942
        %v8944 = vand.u32 2147483647, %v8943
        %v8946 = vcvt.s32.f32 %v8939
        %v8947 = vmul.f32 %v8946, %v8944
        %v8948 = vxor.u32 %v8947, 2147483648
        %v8949 = vsel %vm8828, %v8948, %v8947
        %v8950 = vsub.s32 4, %v8926
        %v8951 = vsel %vm8828, %v8950, %v8926
        %v8952 = vsel %vm8827, %v8502, %v8949
        %v8953 = vsel %vm8827, 0, %v8951
        %v8954 = vmul.f32 %v8952, %v8952
        %v8955 = vmul.f32 %v8954, -0.001358992
        %v8956 = vadd.f32 %v8955, 0.041655596
        %v8957 = vmul.f32 %v8954, %v8956
        %v8958 = vadd.f32 %v8957, -0.4999988
        %v8959 = vmul.f32 %v8954, %v8958
        %v8960 = vadd.f32 1.0, %v8959
        %v8961 = vmul.f32 %v8952, %v8952
        %v8962 = vmul.f32 %v8961, -0.00019511016
        %v8963 = vadd.f32 %v8962, 0.008332121
        %v8964 = vmul.f32 %v8961, %v8963
        %v8965 = vadd.f32 %v8964, -0.16666654
        %v8966 = vmul.f32 %v8961, %v8965
        %v8967 = vadd.f32 %v8966, 1.0
        %v8968 = vmul.f32 %v8967, %v8952
        %vm8969 = vweird.f32 %v8502
        %v8970 = vadd.s32 %v8953, 3
        %v8971 = vand.u32 %v8970, 3
        %vm8972 = vcmp.lt.s32.totalorder %v8971, 2
        %vm8973 = vcmp.eq.s32.totalorder %v8971, 0
        %v8974 = vxor.u32 %v8968, 2147483648
        %v8975 = vsel %vm8973, %v8960, %v8974
        %vm8976 = vcmp.eq.s32.totalorder %v8971, 2
        %v8977 = vxor.u32 %v8960, 2147483648
        %v8978 = vsel %vm8976, %v8977, %v8968
        %v8979 = vsel %vm8972, %v8975, %v8978
        %v8980 = vsel %vm8969, nan, %v8979
        %v8981 = vand.u32 2147483647, %v8503
        %vm8982 = vcmp.le.f32.partialorder %v8981, 0.7853982
        %vm8983 = vcmp.lt.s32.totalorder %v8503, 0
        %v8984 = vand.u32 %v8503, 2139095040
        %v8985 = vshrl.u32 %v8984, 23
        %v8986 = vsub.s32 %v8985, 127
        %v8987 = vand.u32 2147483647, %v8503
        %v8988 = vand.u32 %v8987, 8388607
        %v8989 = vor.u32 %v8988, 8388608
        %v8990 = vsub.s32 0, %v8989
        %v8991 = vadd.s32 %v8986, 1
        %vm8992 = vcmp.gt.s32.totalorder %v8991, 0
        %v8993 = vsel %vm8992, %v8991, 0
        %v8994 = vshrl.u32 %v8993, 5
        %v8995 = vand.u32 %v8993, 31
        %v8996 = vsub.s32 32, %v8995
        %v8997 = vshrl.u32 683565275, %v8996
        %v8998 = vshll.u32 683565275, %v8995
        %v8999 = vshrl.u32 2475754826, %v8996
        %v9000 = vor.u32 %v8998, %v8999
        %v9001 = vshll.u32 2475754826, %v8995
        %v9002 = vshrl.u32 2131351028, %v8996
        %v9003 = vor.u32 %v9001, %v9002
        %v9004 = vshll.u32 2131351028, %v8995
        %v9005 = vshrl.u32 2102212464, %v8996
        %v9006 = vor.u32 %v9004, %v9005
        %v9007 = vshll.u32 2102212464, %v8995
        %v9008 = vshrl.u32 920167782, %v8996
        %v9009 = vor.u32 %v9007, %v9008
        %v9010 = vshll.u32 920167782, %v8995
        %v9011 = vshrl.u32 1326507024, %v8996
        %v9012 = vor.u32 %v9010, %v9011
        %vm9013 = vcmp.lt.s32.totalorder %v8994, 1
        %vm9014 = vcmp.lt.s32.totalorder %v8994, 2
        %vm9015 = vcmp.lt.s32.totalorder %v8994, 3
        %vm9016 = vcmp.lt.s32.totalorder %v8994, 4
        %v9017 = vsel %vm9013, %v8997, %v9000
        %v9018 = vsel %vm9016, %v9006, 2102212464
        %v9019 = vsel %vm9015, %v9003, %v9018
        %v9020 = vsel %vm9014, %v9017, %v9019
        %v9021 = vsel %vm9013, %v9000, %v9003
        %v9022 = vsel %vm9016, %v9009, 920167782
        %v9023 = vsel %vm9015, %v9006, %v9022
        %v9024 = vsel %vm9014, %v9021, %v9023
        %v9025 = vsel %vm9013, %v9003, %v9006
        %v9026 = vsel %vm9016, %v9012, 1326507024
        %v9027 = vsel %vm9015, %v9009, %v9026
        %v9028 = vsel %vm9014, %v9025, %v9027
        %v9029 = vshll.u32 %v8989, 8
        %v9030 = vand.u32 %v9029, 65535
        %v9031 = vshrl.u32 %v9029, 16
        %v9032 = vand.u32 %v9028, 65535
        %v9033 = vshrl.u32 %v9028, 16
        %v9034 = vmul.u32 %v9030, %v9032
        %v9035 = vmul.u32 %v9030, %v9033
        %v9036 = vmul.u32 %v9031, %v9032
        %v9037 = vmul.u32 %v9031, %v9033
        %v9038 = vshll.u32 %v9035, 16
        %v9039 = vshrl.u32 %v9035, 16
        %v9040 = vshll.u32 %v9036, 16
        %v9041 = vshrl.u32 %v9036, 16
        %vm9042 = vc.u32 %v9034, %v9038
        %v9043 = vsel %vm9042, 1, 0
        %v9044 = vadd.s32 %v9034, %v9038
        %v9045 = vadd.s32 %v9037, %v9043
        %vm9046 = vc.u32 %v9044, %v9040
        %v9047 = vsel %vm9046, 1, 0
        %v9048 = vadd.s32 %v9044, %v9040
        %v9049 = vadd.s32 %v9045, %v9047
        %v9050 = vadd.s32 %v9049, %v9039
        %v9051 = vadd.s32 %v9050, %v9041
        %v9052 = vand.u32 %v9029, 65535
        %v9053 = vshrl.u32 %v9029, 16
        %v9054 = vand.u32 %v9024, 65535
        %v9055 = vshrl.u32 %v9024, 16
        %v9056 = vmul.u32 %v9052, %v9054
        %v9057 = vmul.u32 %v9052, %v9055
        %v9058 = vmul.u32 %v9053, %v9054
        %v9059 = vmul.u32 %v9053, %v9055
        %v9060 = vshll.u32 %v9057, 16
        %v9061 = vshrl.u32 %v9057, 16
        %v9062 = vshll.u32 %v9058, 16
        %v9063 = vshrl.u32 %v9058, 16
        %vm9064 = vc.u32 %v9056, %v9060
        %v9065 = vsel %vm9064, 1, 0
        %v9066 = vadd.s32 %v9056, %v9060
        %v9067 = vadd.s32 %v9059, %v9065
        %vm9068 = vc.u32 %v9066, %v9062
        %v9069 = vsel %vm9068, 1, 0
        %v9070 = vadd.s32 %v9066, %v9062
        %v9071 = vadd.s32 %v9067, %v9069
        %v9072 = vadd.s32 %v9071, %v9061
        %v9073 = vadd.s32 %v9072, %v9063
        %v9074 = vmul.u32 %v9029, %v9020
        %v9075 = vadd.s32 %v9051, %v9070
        %vm9076 = vc.u32 %v9051, %v9070
        %v9077 = vadd.s32 %v9073, 1
        %v9078 = vsel %vm9076, %v9077, %v9073
        %v9079 = vadd.s32 %v9074, %v9078
        %v9080 = vadd.s32 %v9079, 536870912
        %v9081 = vshrl.u32 %v9080, 30
        %v9082 = vshll.u32 %v9081, 30
        %v9083 = vsub.s32 %v9079, %v9082
        %vm9084 = vcmp.lt.s32.totalorder %v9083, 0
        %v9085 = vsub.s32 0, %v9083
        %v9086 = vsel %vm9084, %v9085, %v9083
        %v9087 = vclz %v9086
        %v9088 = vsub.s32 %v9087, 2
        %vm9089 = vcmp.gt.s32.totalorder 0, %v9088
        %v9090 = vsel %vm9089, 0, %v9088
        %v9091 = vsub.s32 32, %v9090
        %v9092 = vshll.u32 %v9083, %v9090
        %v9093 = vshrl.u32 %v9075, %v9091
        %v9094 = vor.u32 %v9092, %v9093
        %v9095 = vsub.s32 4294967266, %v9090
        %v9096 = vadd.s32 %v9095, 127
        %v9097 = vshll.u32 %v9096, 23
        %v9098 = vor.u32 4788187, %v9097
        %v9099 = vand.u32 2147483647, %v9098
        %v9101 = vcvt.s32.f32 %v9094
        %v9102 = vmul.f32 %v9101, %v9099
        %v9103 = vxor.u32 %v9102, 2147483648
        %v9104 = vsel %vm8983, %v9103, %v9102
        %v9105 = vsub.s32 4, %v9081
        %v9106 = vsel %vm8983, %v9105, %v9081
        %v9107 = vsel %vm8982, %v8503, %v9104
        %v9108 = vsel %vm8982, 0, %v9106
        %v9109 = vmul.f32 %v9107, %v9107
        %v9110 = vmul.f32 %v9109, -0.001358992
        %v9111 = vadd.f32 %v9110, 0.041655596
        %v9112 = vmul.f32 %v9109, %v9111
        %v9113 = vadd.f32 %v9112, -0.4999988
        %v9114 = vmul.f32 %v9109, %v9113
        %v9115 = vadd.f32 1.0, %v9114
        %v9116 = vmul.f32 %v9107, %v9107
        %v9117 = vmul.f32 %v9116, -0.00019511016
        %v9118 = vadd.f32 %v9117, 0.008332121
        %v9119 = vmul.f32 %v9116, %v9118
        %v9120 = vadd.f32 %v9119, -0.16666654
        %v9121 = vmul.f32 %v9116, %v9120
        %v9122 = vadd.f32 %v9121, 1.0
        %v9123 = vmul.f32 %v9122, %v9107
        %vm9124 = vweird.f32 %v8503
        %v9125 = vadd.s32 %v9108, 3
        %v9126 = vand.u32 %v9125, 3
        %vm9127 = vcmp.lt.s32.totalorder %v9126, 2
        %vm9128 = vcmp.eq.s32.totalorder %v9126, 0
        %v9129 = vxor.u32 %v9123, 2147483648
        %v9130 = vsel %vm9128, %v9115, %v9129
        %vm9131 = vcmp.eq.s32.totalorder %v9126, 2
        %v9132 = vxor.u32 %v9115, 2147483648
        %v9133 = vsel %vm9131, %v9132, %v9123
        %v9134 = vsel %vm9127, %v9130, %v9133
        %v9135 = vsel %vm9124, nan, %v9134
        %v9136 = vand.u32 2147483647, %v8504
        %vm9137 = vcmp.le.f32.partialorder %v9136, 0.7853982
        %vm9138 = vcmp.lt.s32.totalorder %v8504, 0
        %v9139 = vand.u32 %v8504, 2139095040
        %v9140 = vshrl.u32 %v9139, 23
        %v9141 = vsub.s32 %v9140, 127
        %v9142 = vand.u32 2147483647, %v8504
        %v9143 = vand.u32 %v9142, 8388607
        %v9144 = vor.u32 %v9143, 8388608
        %v9145 = vsub.s32 0, %v9144
        %v9146 = vadd.s32 %v9141, 1
        %vm9147 = vcmp.gt.s32.totalorder %v9146, 0
        %v9148 = vsel %vm9147, %v9146, 0
        %v9149 = vshrl.u32 %v9148, 5
        %v9150 = vand.u32 %v9148, 31
        %v9151 = vsub.s32 32, %v9150
        %v9152 = vshrl.u32 683565275, %v9151
        %v9153 = vshll.u32 683565275, %v9150
        %v9154 = vshrl.u32 2475754826, %v9151
        %v9155 = vor.u32 %v9153, %v9154
        %v9156 = vshll.u32 2475754826, %v9150
        %v9157 = vshrl.u32 2131351028, %v9151
        %v9158 = vor.u32 %v9156, %v9157
        %v9159 = vshll.u32 2131351028, %v9150
        %v9160 = vshrl.u32 2102212464, %v9151
        %v9161 = vor.u32 %v9159, %v9160
        %v9162 = vshll.u32 2102212464, %v9150
        %v9163 = vshrl.u32 920167782, %v9151
        %v9164 = vor.u32 %v9162, %v9163
        %v9165 = vshll.u32 920167782, %v9150
        %v9166 = vshrl.u32 1326507024, %v9151
        %v9167 = vor.u32 %v9165, %v9166
        %vm9168 = vcmp.lt.s32.totalorder %v9149, 1
        %vm9169 = vcmp.lt.s32.totalorder %v9149, 2
        %vm9170 = vcmp.lt.s32.totalorder %v9149, 3
        %vm9171 = vcmp.lt.s32.totalorder %v9149, 4
        %v9172 = vsel %vm9168, %v9152, %v9155
        %v9173 = vsel %vm9171, %v9161, 2102212464
        %v9174 = vsel %vm9170, %v9158, %v9173
        %v9175 = vsel %vm9169, %v9172, %v9174
        %v9176 = vsel %vm9168, %v9155, %v9158
        %v9177 = vsel %vm9171, %v9164, 920167782
        %v9178 = vsel %vm9170, %v9161, %v9177
        %v9179 = vsel %vm9169, %v9176, %v9178
        %v9180 = vsel %vm9168, %v9158, %v9161
        %v9181 = vsel %vm9171, %v9167, 1326507024
        %v9182 = vsel %vm9170, %v9164, %v9181
        %v9183 = vsel %vm9169, %v9180, %v9182
        %v9184 = vshll.u32 %v9144, 8
        %v9185 = vand.u32 %v9184, 65535
        %v9186 = vshrl.u32 %v9184, 16
        %v9187 = vand.u32 %v9183, 65535
        %v9188 = vshrl.u32 %v9183, 16
        %v9189 = vmul.u32 %v9185, %v9187
        %v9190 = vmul.u32 %v9185, %v9188
        %v9191 = vmul.u32 %v9186, %v9187
        %v9192 = vmul.u32 %v9186, %v9188
        %v9193 = vshll.u32 %v9190, 16
        %v9194 = vshrl.u32 %v9190, 16
        %v9195 = vshll.u32 %v9191, 16
        %v9196 = vshrl.u32 %v9191, 16
        %vm9197 = vc.u32 %v9189, %v9193
        %v9198 = vsel %vm9197, 1, 0
        %v9199 = vadd.s32 %v9189, %v9193
        %v9200 = vadd.s32 %v9192, %v9198
        %vm9201 = vc.u32 %v9199, %v9195
        %v9202 = vsel %vm9201, 1, 0
        %v9203 = vadd.s32 %v9199, %v9195
        %v9204 = vadd.s32 %v9200, %v9202
        %v9205 = vadd.s32 %v9204, %v9194
        %v9206 = vadd.s32 %v9205, %v9196
        %v9207 = vand.u32 %v9184, 65535
        %v9208 = vshrl.u32 %v9184, 16
        %v9209 = vand.u32 %v9179, 65535
        %v9210 = vshrl.u32 %v9179, 16
        %v9211 = vmul.u32 %v9207, %v9209
        %v9212 = vmul.u32 %v9207, %v9210
        %v9213 = vmul.u32 %v9208, %v9209
        %v9214 = vmul.u32 %v9208, %v9210
        %v9215 = vshll.u32 %v9212, 16
        %v9216 = vshrl.u32 %v9212, 16
        %v9217 = vshll.u32 %v9213, 16
        %v9218 = vshrl.u32 %v9213, 16
        %vm9219 = vc.u32 %v9211, %v9215
        %v9220 = vsel %vm9219, 1, 0
        %v9221 = vadd.s32 %v9211, %v9215
        %v9222 = vadd.s32 %v9214, %v9220
        %vm9223 = vc.u32 %v9221, %v9217
        %v9224 = vsel %vm9223, 1, 0
        %v9225 = vadd.s32 %v9221, %v9217
        %v9226 = vadd.s32 %v9222, %v9224
        %v9227 = vadd.s32 %v9226, %v9216
        %v9228 = vadd.s32 %v9227, %v9218
        %v9229 = vmul.u32 %v9184, %v9175
        %v9230 = vadd.s32 %v9206, %v9225
        %vm9231 = vc.u32 %v9206, %v9225
        %v9232 = vadd.s32 %v9228, 1
        %v9233 = vsel %vm9231, %v9232, %v9228
        %v9234 = vadd.s32 %v9229, %v9233
        %v9235 = vadd.s32 %v9234, 536870912
        %v9236 = vshrl.u32 %v9235, 30
        %v9237 = vshll.u32 %v9236, 30
        %v9238 = vsub.s32 %v9234, %v9237
        %vm9239 = vcmp.lt.s32.totalorder %v9238, 0
        %v9240 = vsub.s32 0, %v9238
        %v9241 = vsel %vm9239, %v9240, %v9238
        %v9242 = vclz %v9241
        %v9243 = vsub.s32 %v9242, 2
        %vm9244 = vcmp.gt.s32.totalorder 0, %v9243
        %v9245 = vsel %vm9244, 0, %v9243
        %v9246 = vsub.s32 32, %v9245
        %v9247 = vshll.u32 %v9238, %v9245
        %v9248 = vshrl.u32 %v9230, %v9246
        %v9249 = vor.u32 %v9247, %v9248
        %v9250 = vsub.s32 4294967266, %v9245
        %v9251 = vadd.s32 %v9250, 127
        %v9252 = vshll.u32 %v9251, 23
        %v9253 = vor.u32 4788187, %v9252
        %v9254 = vand.u32 2147483647, %v9253
        %v9256 = vcvt.s32.f32 %v9249
        %v9257 = vmul.f32 %v9256, %v9254
        %v9258 = vxor.u32 %v9257, 2147483648
        %v9259 = vsel %vm9138, %v9258, %v9257
        %v9260 = vsub.s32 4, %v9236
        %v9261 = vsel %vm9138, %v9260, %v9236
        %v9262 = vsel %vm9137, %v8504, %v9259
        %v9263 = vsel %vm9137, 0, %v9261
        %v9264 = vmul.f32 %v9262, %v9262
        %v9265 = vmul.f32 %v9264, -0.001358992
        %v9266 = vadd.f32 %v9265, 0.041655596
        %v9267 = vmul.f32 %v9264, %v9266
        %v9268 = vadd.f32 %v9267, -0.4999988
        %v9269 = vmul.f32 %v9264, %v9268
        %v9270 = vadd.f32 1.0, %v9269
        %v9271 = vmul.f32 %v9262, %v9262
        %v9272 = vmul.f32 %v9271, -0.00019511016
        %v9273 = vadd.f32 %v9272, 0.008332121
        %v9274 = vmul.f32 %v9271, %v9273
        %v9275 = vadd.f32 %v9274, -0.16666654
        %v9276 = vmul.f32 %v9271, %v9275
        %v9277 = vadd.f32 %v9276, 1.0
        %v9278 = vmul.f32 %v9277, %v9262
        %vm9279 = vweird.f32 %v8504
        %v9280 = vadd.s32 %v9263, 3
        %v9281 = vand.u32 %v9280, 3
        %vm9282 = vcmp.lt.s32.totalorder %v9281, 2
        %vm9283 = vcmp.eq.s32.totalorder %v9281, 0
        %v9284 = vxor.u32 %v9278, 2147483648
        %v9285 = vsel %vm9283, %v9270, %v9284
        %vm9286 = vcmp.eq.s32.totalorder %v9281, 2
        %v9287 = vxor.u32 %v9270, 2147483648
        %v9288 = vsel %vm9286, %v9287, %v9278
        %v9289 = vsel %vm9282, %v9285, %v9288
        %v9290 = vsel %vm9279, nan, %v9289
        %v9291 = vand.u32 2147483647, %v8505
        %vm9292 = vcmp.le.f32.partialorder %v9291, 0.7853982
        %vm9293 = vcmp.lt.s32.totalorder %v8505, 0
        %v9294 = vand.u32 %v8505, 2139095040
        %v9295 = vshrl.u32 %v9294, 23
        %v9296 = vsub.s32 %v9295, 127
        %v9297 = vand.u32 2147483647, %v8505
        %v9298 = vand.u32 %v9297, 8388607
        %v9299 = vor.u32 %v9298, 8388608
        %v9300 = vsub.s32 0, %v9299
        %v9301 = vadd.s32 %v9296, 1
        %vm9302 = vcmp.gt.s32.totalorder %v9301, 0
        %v9303 = vsel %vm9302, %v9301, 0
        %v9304 = vshrl.u32 %v9303, 5
        %v9305 = vand.u32 %v9303, 31
        %v9306 = vsub.s32 32, %v9305
        %v9307 = vshrl.u32 683565275, %v9306
        %v9308 = vshll.u32 683565275, %v9305
        %v9309 = vshrl.u32 2475754826, %v9306
        %v9310 = vor.u32 %v9308, %v9309
        %v9311 = vshll.u32 2475754826, %v9305
        %v9312 = vshrl.u32 2131351028, %v9306
        %v9313 = vor.u32 %v9311, %v9312
        %v9314 = vshll.u32 2131351028, %v9305
        %v9315 = vshrl.u32 2102212464, %v9306
        %v9316 = vor.u32 %v9314, %v9315
        %v9317 = vshll.u32 2102212464, %v9305
        %v9318 = vshrl.u32 920167782, %v9306
        %v9319 = vor.u32 %v9317, %v9318
        %v9320 = vshll.u32 920167782, %v9305
        %v9321 = vshrl.u32 1326507024, %v9306
        %v9322 = vor.u32 %v9320, %v9321
        %vm9323 = vcmp.lt.s32.totalorder %v9304, 1
        %vm9324 = vcmp.lt.s32.totalorder %v9304, 2
        %vm9325 = vcmp.lt.s32.totalorder %v9304, 3
        %vm9326 = vcmp.lt.s32.totalorder %v9304, 4
        %v9327 = vsel %vm9323, %v9307, %v9310
        %v9328 = vsel %vm9326, %v9316, 2102212464
        %v9329 = vsel %vm9325, %v9313, %v9328
        %v9330 = vsel %vm9324, %v9327, %v9329
        %v9331 = vsel %vm9323, %v9310, %v9313
        %v9332 = vsel %vm9326, %v9319, 920167782
        %v9333 = vsel %vm9325, %v9316, %v9332
        %v9334 = vsel %vm9324, %v9331, %v9333
        %v9335 = vsel %vm9323, %v9313, %v9316
        %v9336 = vsel %vm9326, %v9322, 1326507024
        %v9337 = vsel %vm9325, %v9319, %v9336
        %v9338 = vsel %vm9324, %v9335, %v9337
        %v9339 = vshll.u32 %v9299, 8
        %v9340 = vand.u32 %v9339, 65535
        %v9341 = vshrl.u32 %v9339, 16
        %v9342 = vand.u32 %v9338, 65535
        %v9343 = vshrl.u32 %v9338, 16
        %v9344 = vmul.u32 %v9340, %v9342
        %v9345 = vmul.u32 %v9340, %v9343
        %v9346 = vmul.u32 %v9341, %v9342
        %v9347 = vmul.u32 %v9341, %v9343
        %v9348 = vshll.u32 %v9345, 16
        %v9349 = vshrl.u32 %v9345, 16
        %v9350 = vshll.u32 %v9346, 16
        %v9351 = vshrl.u32 %v9346, 16
        %vm9352 = vc.u32 %v9344, %v9348
        %v9353 = vsel %vm9352, 1, 0
        %v9354 = vadd.s32 %v9344, %v9348
        %v9355 = vadd.s32 %v9347, %v9353
        %vm9356 = vc.u32 %v9354, %v9350
        %v9357 = vsel %vm9356, 1, 0
        %v9358 = vadd.s32 %v9354, %v9350
        %v9359 = vadd.s32 %v9355, %v9357
        %v9360 = vadd.s32 %v9359, %v9349
        %v9361 = vadd.s32 %v9360, %v9351
        %v9362 = vand.u32 %v9339, 65535
        %v9363 = vshrl.u32 %v9339, 16
        %v9364 = vand.u32 %v9334, 65535
        %v9365 = vshrl.u32 %v9334, 16
        %v9366 = vmul.u32 %v9362, %v9364
        %v9367 = vmul.u32 %v9362, %v9365
        %v9368 = vmul.u32 %v9363, %v9364
        %v9369 = vmul.u32 %v9363, %v9365
        %v9370 = vshll.u32 %v9367, 16
        %v9371 = vshrl.u32 %v9367, 16
        %v9372 = vshll.u32 %v9368, 16
        %v9373 = vshrl.u32 %v9368, 16
        %vm9374 = vc.u32 %v9366, %v9370
        %v9375 = vsel %vm9374, 1, 0
        %v9376 = vadd.s32 %v9366, %v9370
        %v9377 = vadd.s32 %v9369, %v9375
        %vm9378 = vc.u32 %v9376, %v9372
        %v9379 = vsel %vm9378, 1, 0
        %v9380 = vadd.s32 %v9376, %v9372
        %v9381 = vadd.s32 %v9377, %v9379
        %v9382 = vadd.s32 %v9381, %v9371
        %v9383 = vadd.s32 %v9382, %v9373
        %v9384 = vmul.u32 %v9339, %v9330
        %v9385 = vadd.s32 %v9361, %v9380
        %vm9386 = vc.u32 %v9361, %v9380
        %v9387 = vadd.s32 %v9383, 1
        %v9388 = vsel %vm9386, %v9387, %v9383
        %v9389 = vadd.s32 %v9384, %v9388
        %v9390 = vadd.s32 %v9389, 536870912
        %v9391 = vshrl.u32 %v9390, 30
        %v9392 = vshll.u32 %v9391, 30
        %v9393 = vsub.s32 %v9389, %v9392
        %vm9394 = vcmp.lt.s32.totalorder %v9393, 0
        %v9395 = vsub.s32 0, %v9393
        %v9396 = vsel %vm9394, %v9395, %v9393
        %v9397 = vclz %v9396
        %v9398 = vsub.s32 %v9397, 2
        %vm9399 = vcmp.gt.s32.totalorder 0, %v9398
        %v9400 = vsel %vm9399, 0, %v9398
        %v9401 = vsub.s32 32, %v9400
        %v9402 = vshll.u32 %v9393, %v9400
        %v9403 = vshrl.u32 %v9385, %v9401
        %v9404 = vor.u32 %v9402, %v9403
        %v9405 = vsub.s32 4294967266, %v9400
        %v9406 = vadd.s32 %v9405, 127
        %v9407 = vshll.u32 %v9406, 23
        %v9408 = vor.u32 4788187, %v9407
        %v9409 = vand.u32 2147483647, %v9408
        %v9411 = vcvt.s32.f32 %v9404
        %v9412 = vmul.f32 %v9411, %v9409
        %v9413 = vxor.u32 %v9412, 2147483648
        %v9414 = vsel %vm9293, %v9413, %v9412
        %v9415 = vsub.s32 4, %v9391
        %v9416 = vsel %vm9293, %v9415, %v9391
        %v9417 = vsel %vm9292, %v8505, %v9414
        %v9418 = vsel %vm9292, 0, %v9416
        %v9419 = vmul.f32 %v9417, %v9417
        %v9420 = vmul.f32 %v9419, -0.001358992
        %v9421 = vadd.f32 %v9420, 0.041655596
        %v9422 = vmul.f32 %v9419, %v9421
        %v9423 = vadd.f32 %v9422, -0.4999988
        %v9424 = vmul.f32 %v9419, %v9423
        %v9425 = vadd.f32 1.0, %v9424
        %v9426 = vmul.f32 %v9417, %v9417
        %v9427 = vmul.f32 %v9426, -0.00019511016
        %v9428 = vadd.f32 %v9427, 0.008332121
        %v9429 = vmul.f32 %v9426, %v9428
        %v9430 = vadd.f32 %v9429, -0.16666654
        %v9431 = vmul.f32 %v9426, %v9430
        %v9432 = vadd.f32 %v9431, 1.0
        %v9433 = vmul.f32 %v9432, %v9417
        %vm9434 = vweird.f32 %v8505
        %v9435 = vadd.s32 %v9418, 3
        %v9436 = vand.u32 %v9435, 3
        %vm9437 = vcmp.lt.s32.totalorder %v9436, 2
        %vm9438 = vcmp.eq.s32.totalorder %v9436, 0
        %v9439 = vxor.u32 %v9433, 2147483648
        %v9440 = vsel %vm9438, %v9425, %v9439
        %vm9441 = vcmp.eq.s32.totalorder %v9436, 2
        %v9442 = vxor.u32 %v9425, 2147483648
        %v9443 = vsel %vm9441, %v9442, %v9433
        %v9444 = vsel %vm9437, %v9440, %v9443
        %v9445 = vsel %vm9434, nan, %v9444
        %v9446 = vand.u32 2147483647, %v8506
        %vm9447 = vcmp.le.f32.partialorder %v9446, 0.7853982
        %vm9448 = vcmp.lt.s32.totalorder %v8506, 0
        %v9449 = vand.u32 %v8506, 2139095040
        %v9450 = vshrl.u32 %v9449, 23
        %v9451 = vsub.s32 %v9450, 127
        %v9452 = vand.u32 2147483647, %v8506
        %v9453 = vand.u32 %v9452, 8388607
        %v9454 = vor.u32 %v9453, 8388608
        %v9455 = vsub.s32 0, %v9454
        %v9456 = vadd.s32 %v9451, 1
        %vm9457 = vcmp.gt.s32.totalorder %v9456, 0
        %v9458 = vsel %vm9457, %v9456, 0
        %v9459 = vshrl.u32 %v9458, 5
        %v9460 = vand.u32 %v9458, 31
        %v9461 = vsub.s32 32, %v9460
        %v9462 = vshrl.u32 683565275, %v9461
        %v9463 = vshll.u32 683565275, %v9460
        %v9464 = vshrl.u32 2475754826, %v9461
        %v9465 = vor.u32 %v9463, %v9464
        %v9466 = vshll.u32 2475754826, %v9460
        %v9467 = vshrl.u32 2131351028, %v9461
        %v9468 = vor.u32 %v9466, %v9467
        %v9469 = vshll.u32 2131351028, %v9460
        %v9470 = vshrl.u32 2102212464, %v9461
        %v9471 = vor.u32 %v9469, %v9470
        %v9472 = vshll.u32 2102212464, %v9460
        %v9473 = vshrl.u32 920167782, %v9461
        %v9474 = vor.u32 %v9472, %v9473
        %v9475 = vshll.u32 920167782, %v9460
        %v9476 = vshrl.u32 1326507024, %v9461
        %v9477 = vor.u32 %v9475, %v9476
        %vm9478 = vcmp.lt.s32.totalorder %v9459, 1
        %vm9479 = vcmp.lt.s32.totalorder %v9459, 2
        %vm9480 = vcmp.lt.s32.totalorder %v9459, 3
        %vm9481 = vcmp.lt.s32.totalorder %v9459, 4
        %v9482 = vsel %vm9478, %v9462, %v9465
        %v9483 = vsel %vm9481, %v9471, 2102212464
        %v9484 = vsel %vm9480, %v9468, %v9483
        %v9485 = vsel %vm9479, %v9482, %v9484
        %v9486 = vsel %vm9478, %v9465, %v9468
        %v9487 = vsel %vm9481, %v9474, 920167782
        %v9488 = vsel %vm9480, %v9471, %v9487
        %v9489 = vsel %vm9479, %v9486, %v9488
        %v9490 = vsel %vm9478, %v9468, %v9471
        %v9491 = vsel %vm9481, %v9477, 1326507024
        %v9492 = vsel %vm9480, %v9474, %v9491
        %v9493 = vsel %vm9479, %v9490, %v9492
        %v9494 = vshll.u32 %v9454, 8
        %v9495 = vand.u32 %v9494, 65535
        %v9496 = vshrl.u32 %v9494, 16
        %v9497 = vand.u32 %v9493, 65535
        %v9498 = vshrl.u32 %v9493, 16
        %v9499 = vmul.u32 %v9495, %v9497
        %v9500 = vmul.u32 %v9495, %v9498
        %v9501 = vmul.u32 %v9496, %v9497
        %v9502 = vmul.u32 %v9496, %v9498
        %v9503 = vshll.u32 %v9500, 16
        %v9504 = vshrl.u32 %v9500, 16
        %v9505 = vshll.u32 %v9501, 16
        %v9506 = vshrl.u32 %v9501, 16
        %vm9507 = vc.u32 %v9499, %v9503
        %v9508 = vsel %vm9507, 1, 0
        %v9509 = vadd.s32 %v9499, %v9503
        %v9510 = vadd.s32 %v9502, %v9508
        %vm9511 = vc.u32 %v9509, %v9505
        %v9512 = vsel %vm9511, 1, 0
        %v9513 = vadd.s32 %v9509, %v9505
        %v9514 = vadd.s32 %v9510, %v9512
        %v9515 = vadd.s32 %v9514, %v9504
        %v9516 = vadd.s32 %v9515, %v9506
        %v9517 = vand.u32 %v9494, 65535
        %v9518 = vshrl.u32 %v9494, 16
        %v9519 = vand.u32 %v9489, 65535
        %v9520 = vshrl.u32 %v9489, 16
        %v9521 = vmul.u32 %v9517, %v9519
        %v9522 = vmul.u32 %v9517, %v9520
        %v9523 = vmul.u32 %v9518, %v9519
        %v9524 = vmul.u32 %v9518, %v9520
        %v9525 = vshll.u32 %v9522, 16
        %v9526 = vshrl.u32 %v9522, 16
        %v9527 = vshll.u32 %v9523, 16
        %v9528 = vshrl.u32 %v9523, 16
        %vm9529 = vc.u32 %v9521, %v9525
        %v9530 = vsel %vm9529, 1, 0
        %v9531 = vadd.s32 %v9521, %v9525
        %v9532 = vadd.s32 %v9524, %v9530
        %vm9533 = vc.u32 %v9531, %v9527
        %v9534 = vsel %vm9533, 1, 0
        %v9535 = vadd.s32 %v9531, %v9527
        %v9536 = vadd.s32 %v9532, %v9534
        %v9537 = vadd.s32 %v9536, %v9526
        %v9538 = vadd.s32 %v9537, %v9528
        %v9539 = vmul.u32 %v9494, %v9485
        %v9540 = vadd.s32 %v9516, %v9535
        %vm9541 = vc.u32 %v9516, %v9535
        %v9542 = vadd.s32 %v9538, 1
        %v9543 = vsel %vm9541, %v9542, %v9538
        %v9544 = vadd.s32 %v9539, %v9543
        %v9545 = vadd.s32 %v9544, 536870912
        %v9546 = vshrl.u32 %v9545, 30
        %v9547 = vshll.u32 %v9546, 30
        %v9548 = vsub.s32 %v9544, %v9547
        %vm9549 = vcmp.lt.s32.totalorder %v9548, 0
        %v9550 = vsub.s32 0, %v9548
        %v9551 = vsel %vm9549, %v9550, %v9548
        %v9552 = vclz %v9551
        %v9553 = vsub.s32 %v9552, 2
        %vm9554 = vcmp.gt.s32.totalorder 0, %v9553
        %v9555 = vsel %vm9554, 0, %v9553
        %v9556 = vsub.s32 32, %v9555
        %v9557 = vshll.u32 %v9548, %v9555
        %v9558 = vshrl.u32 %v9540, %v9556
        %v9559 = vor.u32 %v9557, %v9558
        %v9560 = vsub.s32 4294967266, %v9555
        %v9561 = vadd.s32 %v9560, 127
        %v9562 = vshll.u32 %v9561, 23
        %v9563 = vor.u32 4788187, %v9562
        %v9564 = vand.u32 2147483647, %v9563
        %v9566 = vcvt.s32.f32 %v9559
        %v9567 = vmul.f32 %v9566, %v9564
        %v9568 = vxor.u32 %v9567, 2147483648
        %v9569 = vsel %vm9448, %v9568, %v9567
        %v9570 = vsub.s32 4, %v9546
        %v9571 = vsel %vm9448, %v9570, %v9546
        %v9572 = vsel %vm9447, %v8506, %v9569
        %v9573 = vsel %vm9447, 0, %v9571
        %v9574 = vmul.f32 %v9572, %v9572
        %v9575 = vmul.f32 %v9574, -0.001358992
        %v9576 = vadd.f32 %v9575, 0.041655596
        %v9577 = vmul.f32 %v9574, %v9576
        %v9578 = vadd.f32 %v9577, -0.4999988
        %v9579 = vmul.f32 %v9574, %v9578
        %v9580 = vadd.f32 1.0, %v9579
        %v9581 = vmul.f32 %v9572, %v9572
        %v9582 = vmul.f32 %v9581, -0.00019511016
        %v9583 = vadd.f32 %v9582, 0.008332121
        %v9584 = vmul.f32 %v9581, %v9583
        %v9585 = vadd.f32 %v9584, -0.16666654
        %v9586 = vmul.f32 %v9581, %v9585
        %v9587 = vadd.f32 %v9586, 1.0
        %v9588 = vmul.f32 %v9587, %v9572
        %vm9589 = vweird.f32 %v8506
        %v9590 = vadd.s32 %v9573, 3
        %v9591 = vand.u32 %v9590, 3
        %vm9592 = vcmp.lt.s32.totalorder %v9591, 2
        %vm9593 = vcmp.eq.s32.totalorder %v9591, 0
        %v9594 = vxor.u32 %v9588, 2147483648
        %v9595 = vsel %vm9593, %v9580, %v9594
        %vm9596 = vcmp.eq.s32.totalorder %v9591, 2
        %v9597 = vxor.u32 %v9580, 2147483648
        %v9598 = vsel %vm9596, %v9597, %v9588
        %v9599 = vsel %vm9592, %v9595, %v9598
        %v9600 = vsel %vm9589, nan, %v9599
        %v9601 = vand.u32 2147483647, %v8507
        %vm9602 = vcmp.le.f32.partialorder %v9601, 0.7853982
        %vm9603 = vcmp.lt.s32.totalorder %v8507, 0
        %v9604 = vand.u32 %v8507, 2139095040
        %v9605 = vshrl.u32 %v9604, 23
        %v9606 = vsub.s32 %v9605, 127
        %v9607 = vand.u32 2147483647, %v8507
        %v9608 = vand.u32 %v9607, 8388607
        %v9609 = vor.u32 %v9608, 8388608
        %v9610 = vsub.s32 0, %v9609
        %v9611 = vadd.s32 %v9606, 1
        %vm9612 = vcmp.gt.s32.totalorder %v9611, 0
        %v9613 = vsel %vm9612, %v9611, 0
        %v9614 = vshrl.u32 %v9613, 5
        %v9615 = vand.u32 %v9613, 31
        %v9616 = vsub.s32 32, %v9615
        %v9617 = vshrl.u32 683565275, %v9616
        %v9618 = vshll.u32 683565275, %v9615
        %v9619 = vshrl.u32 2475754826, %v9616
        %v9620 = vor.u32 %v9618, %v9619
        %v9621 = vshll.u32 2475754826, %v9615
        %v9622 = vshrl.u32 2131351028, %v9616
        %v9623 = vor.u32 %v9621, %v9622
        %v9624 = vshll.u32 2131351028, %v9615
        %v9625 = vshrl.u32 2102212464, %v9616
        %v9626 = vor.u32 %v9624, %v9625
        %v9627 = vshll.u32 2102212464, %v9615
        %v9628 = vshrl.u32 920167782, %v9616
        %v9629 = vor.u32 %v9627, %v9628
        %v9630 = vshll.u32 920167782, %v9615
        %v9631 = vshrl.u32 1326507024, %v9616
        %v9632 = vor.u32 %v9630, %v9631
        %vm9633 = vcmp.lt.s32.totalorder %v9614, 1
        %vm9634 = vcmp.lt.s32.totalorder %v9614, 2
        %vm9635 = vcmp.lt.s32.totalorder %v9614, 3
        %vm9636 = vcmp.lt.s32.totalorder %v9614, 4
        %v9637 = vsel %vm9633, %v9617, %v9620
        %v9638 = vsel %vm9636, %v9626, 2102212464
        %v9639 = vsel %vm9635, %v9623, %v9638
        %v9640 = vsel %vm9634, %v9637, %v9639
        %v9641 = vsel %vm9633, %v9620, %v9623
        %v9642 = vsel %vm9636, %v9629, 920167782
        %v9643 = vsel %vm9635, %v9626, %v9642
        %v9644 = vsel %vm9634, %v9641, %v9643
        %v9645 = vsel %vm9633, %v9623, %v9626
        %v9646 = vsel %vm9636, %v9632, 1326507024
        %v9647 = vsel %vm9635, %v9629, %v9646
        %v9648 = vsel %vm9634, %v9645, %v9647
        %v9649 = vshll.u32 %v9609, 8
        %v9650 = vand.u32 %v9649, 65535
        %v9651 = vshrl.u32 %v9649, 16
        %v9652 = vand.u32 %v9648, 65535
        %v9653 = vshrl.u32 %v9648, 16
        %v9654 = vmul.u32 %v9650, %v9652
        %v9655 = vmul.u32 %v9650, %v9653
        %v9656 = vmul.u32 %v9651, %v9652
        %v9657 = vmul.u32 %v9651, %v9653
        %v9658 = vshll.u32 %v9655, 16
        %v9659 = vshrl.u32 %v9655, 16
        %v9660 = vshll.u32 %v9656, 16
        %v9661 = vshrl.u32 %v9656, 16
        %vm9662 = vc.u32 %v9654, %v9658
        %v9663 = vsel %vm9662, 1, 0
        %v9664 = vadd.s32 %v9654, %v9658
        %v9665 = vadd.s32 %v9657, %v9663
        %vm9666 = vc.u32 %v9664, %v9660
        %v9667 = vsel %vm9666, 1, 0
        %v9668 = vadd.s32 %v9664, %v9660
        %v9669 = vadd.s32 %v9665, %v9667
        %v9670 = vadd.s32 %v9669, %v9659
        %v9671 = vadd.s32 %v9670, %v9661
        %v9672 = vand.u32 %v9649, 65535
        %v9673 = vshrl.u32 %v9649, 16
        %v9674 = vand.u32 %v9644, 65535
        %v9675 = vshrl.u32 %v9644, 16
        %v9676 = vmul.u32 %v9672, %v9674
        %v9677 = vmul.u32 %v9672, %v9675
        %v9678 = vmul.u32 %v9673, %v9674
        %v9679 = vmul.u32 %v9673, %v9675
        %v9680 = vshll.u32 %v9677, 16
        %v9681 = vshrl.u32 %v9677, 16
        %v9682 = vshll.u32 %v9678, 16
        %v9683 = vshrl.u32 %v9678, 16
        %vm9684 = vc.u32 %v9676, %v9680
        %v9685 = vsel %vm9684, 1, 0
        %v9686 = vadd.s32 %v9676, %v9680
        %v9687 = vadd.s32 %v9679, %v9685
        %vm9688 = vc.u32 %v9686, %v9682
        %v9689 = vsel %vm9688, 1, 0
        %v9690 = vadd.s32 %v9686, %v9682
        %v9691 = vadd.s32 %v9687, %v9689
        %v9692 = vadd.s32 %v9691, %v9681
        %v9693 = vadd.s32 %v9692, %v9683
        %v9694 = vmul.u32 %v9649, %v9640
        %v9695 = vadd.s32 %v9671, %v9690
        %vm9696 = vc.u32 %v9671, %v9690
        %v9697 = vadd.s32 %v9693, 1
        %v9698 = vsel %vm9696, %v9697, %v9693
        %v9699 = vadd.s32 %v9694, %v9698
        %v9700 = vadd.s32 %v9699, 536870912
        %v9701 = vshrl.u32 %v9700, 30
        %v9702 = vshll.u32 %v9701, 30
        %v9703 = vsub.s32 %v9699, %v9702
        %vm9704 = vcmp.lt.s32.totalorder %v9703, 0
        %v9705 = vsub.s32 0, %v9703
        %v9706 = vsel %vm9704, %v9705, %v9703
        %v9707 = vclz %v9706
        %v9708 = vsub.s32 %v9707, 2
        %vm9709 = vcmp.gt.s32.totalorder 0, %v9708
        %v9710 = vsel %vm9709, 0, %v9708
        %v9711 = vsub.s32 32, %v9710
        %v9712 = vshll.u32 %v9703, %v9710
        %v9713 = vshrl.u32 %v9695, %v9711
        %v9714 = vor.u32 %v9712, %v9713
        %v9715 = vsub.s32 4294967266, %v9710
        %v9716 = vadd.s32 %v9715, 127
        %v9717 = vshll.u32 %v9716, 23
        %v9718 = vor.u32 4788187, %v9717
        %v9719 = vand.u32 2147483647, %v9718
        %v9721 = vcvt.s32.f32 %v9714
        %v9722 = vmul.f32 %v9721, %v9719
        %v9723 = vxor.u32 %v9722, 2147483648
        %v9724 = vsel %vm9603, %v9723, %v9722
        %v9725 = vsub.s32 4, %v9701
        %v9726 = vsel %vm9603, %v9725, %v9701
        %v9727 = vsel %vm9602, %v8507, %v9724
        %v9728 = vsel %vm9602, 0, %v9726
        %v9729 = vmul.f32 %v9727, %v9727
        %v9730 = vmul.f32 %v9729, -0.001358992
        %v9731 = vadd.f32 %v9730, 0.041655596
        %v9732 = vmul.f32 %v9729, %v9731
        %v9733 = vadd.f32 %v9732, -0.4999988
        %v9734 = vmul.f32 %v9729, %v9733
        %v9735 = vadd.f32 1.0, %v9734
        %v9736 = vmul.f32 %v9727, %v9727
        %v9737 = vmul.f32 %v9736, -0.00019511016
        %v9738 = vadd.f32 %v9737, 0.008332121
        %v9739 = vmul.f32 %v9736, %v9738
        %v9740 = vadd.f32 %v9739, -0.16666654
        %v9741 = vmul.f32 %v9736, %v9740
        %v9742 = vadd.f32 %v9741, 1.0
        %v9743 = vmul.f32 %v9742, %v9727
        %vm9744 = vweird.f32 %v8507
        %v9745 = vadd.s32 %v9728, 3
        %v9746 = vand.u32 %v9745, 3
        %vm9747 = vcmp.lt.s32.totalorder %v9746, 2
        %vm9748 = vcmp.eq.s32.totalorder %v9746, 0
        %v9749 = vxor.u32 %v9743, 2147483648
        %v9750 = vsel %vm9748, %v9735, %v9749
        %vm9751 = vcmp.eq.s32.totalorder %v9746, 2
        %v9752 = vxor.u32 %v9735, 2147483648
        %v9753 = vsel %vm9751, %v9752, %v9743
        %v9754 = vsel %vm9747, %v9750, %v9753
        %v9755 = vsel %vm9744, nan, %v9754
        %v9756 = vand.u32 2147483647, %v8508
        %vm9757 = vcmp.le.f32.partialorder %v9756, 0.7853982
        %vm9758 = vcmp.lt.s32.totalorder %v8508, 0
        %v9759 = vand.u32 %v8508, 2139095040
        %v9760 = vshrl.u32 %v9759, 23
        %v9761 = vsub.s32 %v9760, 127
        %v9762 = vand.u32 2147483647, %v8508
        %v9763 = vand.u32 %v9762, 8388607
        %v9764 = vor.u32 %v9763, 8388608
        %v9765 = vsub.s32 0, %v9764
        %v9766 = vadd.s32 %v9761, 1
        %vm9767 = vcmp.gt.s32.totalorder %v9766, 0
        %v9768 = vsel %vm9767, %v9766, 0
        %v9769 = vshrl.u32 %v9768, 5
        %v9770 = vand.u32 %v9768, 31
        %v9771 = vsub.s32 32, %v9770
        %v9772 = vshrl.u32 683565275, %v9771
        %v9773 = vshll.u32 683565275, %v9770
        %v9774 = vshrl.u32 2475754826, %v9771
        %v9775 = vor.u32 %v9773, %v9774
        %v9776 = vshll.u32 2475754826, %v9770
        %v9777 = vshrl.u32 2131351028, %v9771
        %v9778 = vor.u32 %v9776, %v9777
        %v9779 = vshll.u32 2131351028, %v9770
        %v9780 = vshrl.u32 2102212464, %v9771
        %v9781 = vor.u32 %v9779, %v9780
        %v9782 = vshll.u32 2102212464, %v9770
        %v9783 = vshrl.u32 920167782, %v9771
        %v9784 = vor.u32 %v9782, %v9783
        %v9785 = vshll.u32 920167782, %v9770
        %v9786 = vshrl.u32 1326507024, %v9771
        %v9787 = vor.u32 %v9785, %v9786
        %vm9788 = vcmp.lt.s32.totalorder %v9769, 1
        %vm9789 = vcmp.lt.s32.totalorder %v9769, 2
        %vm9790 = vcmp.lt.s32.totalorder %v9769, 3
        %vm9791 = vcmp.lt.s32.totalorder %v9769, 4
        %v9792 = vsel %vm9788, %v9772, %v9775
        %v9793 = vsel %vm9791, %v9781, 2102212464
        %v9794 = vsel %vm9790, %v9778, %v9793
        %v9795 = vsel %vm9789, %v9792, %v9794
        %v9796 = vsel %vm9788, %v9775, %v9778
        %v9797 = vsel %vm9791, %v9784, 920167782
        %v9798 = vsel %vm9790, %v9781, %v9797
        %v9799 = vsel %vm9789, %v9796, %v9798
        %v9800 = vsel %vm9788, %v9778, %v9781
        %v9801 = vsel %vm9791, %v9787, 1326507024
        %v9802 = vsel %vm9790, %v9784, %v9801
        %v9803 = vsel %vm9789, %v9800, %v9802
        %v9804 = vshll.u32 %v9764, 8
        %v9805 = vand.u32 %v9804, 65535
        %v9806 = vshrl.u32 %v9804, 16
        %v9807 = vand.u32 %v9803, 65535
        %v9808 = vshrl.u32 %v9803, 16
        %v9809 = vmul.u32 %v9805, %v9807
        %v9810 = vmul.u32 %v9805, %v9808
        %v9811 = vmul.u32 %v9806, %v9807
        %v9812 = vmul.u32 %v9806, %v9808
        %v9813 = vshll.u32 %v9810, 16
        %v9814 = vshrl.u32 %v9810, 16
        %v9815 = vshll.u32 %v9811, 16
        %v9816 = vshrl.u32 %v9811, 16
        %vm9817 = vc.u32 %v9809, %v9813
        %v9818 = vsel %vm9817, 1, 0
        %v9819 = vadd.s32 %v9809, %v9813
        %v9820 = vadd.s32 %v9812, %v9818
        %vm9821 = vc.u32 %v9819, %v9815
        %v9822 = vsel %vm9821, 1, 0
        %v9823 = vadd.s32 %v9819, %v9815
        %v9824 = vadd.s32 %v9820, %v9822
        %v9825 = vadd.s32 %v9824, %v9814
        %v9826 = vadd.s32 %v9825, %v9816
        %v9827 = vand.u32 %v9804, 65535
        %v9828 = vshrl.u32 %v9804, 16
        %v9829 = vand.u32 %v9799, 65535
        %v9830 = vshrl.u32 %v9799, 16
        %v9831 = vmul.u32 %v9827, %v9829
        %v9832 = vmul.u32 %v9827, %v9830
        %v9833 = vmul.u32 %v9828, %v9829
        %v9834 = vmul.u32 %v9828, %v9830
        %v9835 = vshll.u32 %v9832, 16
        %v9836 = vshrl.u32 %v9832, 16
        %v9837 = vshll.u32 %v9833, 16
        %v9838 = vshrl.u32 %v9833, 16
        %vm9839 = vc.u32 %v9831, %v9835
        %v9840 = vsel %vm9839, 1, 0
        %v9841 = vadd.s32 %v9831, %v9835
        %v9842 = vadd.s32 %v9834, %v9840
        %vm9843 = vc.u32 %v9841, %v9837
        %v9844 = vsel %vm9843, 1, 0
        %v9845 = vadd.s32 %v9841, %v9837
        %v9846 = vadd.s32 %v9842, %v9844
        %v9847 = vadd.s32 %v9846, %v9836
        %v9848 = vadd.s32 %v9847, %v9838
        %v9849 = vmul.u32 %v9804, %v9795
        %v9850 = vadd.s32 %v9826, %v9845
        %vm9851 = vc.u32 %v9826, %v9845
        %v9852 = vadd.s32 %v9848, 1
        %v9853 = vsel %vm9851, %v9852, %v9848
        %v9854 = vadd.s32 %v9849, %v9853
        %v9855 = vadd.s32 %v9854, 536870912
        %v9856 = vshrl.u32 %v9855, 30
        %v9857 = vshll.u32 %v9856, 30
        %v9858 = vsub.s32 %v9854, %v9857
        %vm9859 = vcmp.lt.s32.totalorder %v9858, 0
        %v9860 = vsub.s32 0, %v9858
        %v9861 = vsel %vm9859, %v9860, %v9858
        %v9862 = vclz %v9861
        %v9863 = vsub.s32 %v9862, 2
        %vm9864 = vcmp.gt.s32.totalorder 0, %v9863
        %v9865 = vsel %vm9864, 0, %v9863
        %v9866 = vsub.s32 32, %v9865
        %v9867 = vshll.u32 %v9858, %v9865
        %v9868 = vshrl.u32 %v9850, %v9866
        %v9869 = vor.u32 %v9867, %v9868
        %v9870 = vsub.s32 4294967266, %v9865
        %v9871 = vadd.s32 %v9870, 127
        %v9872 = vshll.u32 %v9871, 23
        %v9873 = vor.u32 4788187, %v9872
        %v9874 = vand.u32 2147483647, %v9873
        %v9876 = vcvt.s32.f32 %v9869
        %v9877 = vmul.f32 %v9876, %v9874
        %v9878 = vxor.u32 %v9877, 2147483648
        %v9879 = vsel %vm9758, %v9878, %v9877
        %v9880 = vsub.s32 4, %v9856
        %v9881 = vsel %vm9758, %v9880, %v9856
        %v9882 = vsel %vm9757, %v8508, %v9879
        %v9883 = vsel %vm9757, 0, %v9881
        %v9884 = vmul.f32 %v9882, %v9882
        %v9885 = vmul.f32 %v9884, -0.001358992
        %v9886 = vadd.f32 %v9885, 0.041655596
        %v9887 = vmul.f32 %v9884, %v9886
        %v9888 = vadd.f32 %v9887, -0.4999988
        %v9889 = vmul.f32 %v9884, %v9888
        %v9890 = vadd.f32 1.0, %v9889
        %v9891 = vmul.f32 %v9882, %v9882
        %v9892 = vmul.f32 %v9891, -0.00019511016
        %v9893 = vadd.f32 %v9892, 0.008332121
        %v9894 = vmul.f32 %v9891, %v9893
        %v9895 = vadd.f32 %v9894, -0.16666654
        %v9896 = vmul.f32 %v9891, %v9895
        %v9897 = vadd.f32 %v9896, 1.0
        %v9898 = vmul.f32 %v9897, %v9882
        %vm9899 = vweird.f32 %v8508
        %v9900 = vadd.s32 %v9883, 3
        %v9901 = vand.u32 %v9900, 3
        %vm9902 = vcmp.lt.s32.totalorder %v9901, 2
        %vm9903 = vcmp.eq.s32.totalorder %v9901, 0
        %v9904 = vxor.u32 %v9898, 2147483648
        %v9905 = vsel %vm9903, %v9890, %v9904
        %vm9906 = vcmp.eq.s32.totalorder %v9901, 2
        %v9907 = vxor.u32 %v9890, 2147483648
        %v9908 = vsel %vm9906, %v9907, %v9898
        %v9909 = vsel %vm9902, %v9905, %v9908
        %v9910 = vsel %vm9899, nan, %v9909
        %v9911 = vand.u32 2147483647, %v8509
        %vm9912 = vcmp.le.f32.partialorder %v9911, 0.7853982
        %vm9913 = vcmp.lt.s32.totalorder %v8509, 0
        %v9914 = vand.u32 %v8509, 2139095040
        %v9915 = vshrl.u32 %v9914, 23
        %v9916 = vsub.s32 %v9915, 127
        %v9917 = vand.u32 2147483647, %v8509
        %v9918 = vand.u32 %v9917, 8388607
        %v9919 = vor.u32 %v9918, 8388608
        %v9920 = vsub.s32 0, %v9919
        %v9921 = vadd.s32 %v9916, 1
        %vm9922 = vcmp.gt.s32.totalorder %v9921, 0
        %v9923 = vsel %vm9922, %v9921, 0
        %v9924 = vshrl.u32 %v9923, 5
        %v9925 = vand.u32 %v9923, 31
        %v9926 = vsub.s32 32, %v9925
        %v9927 = vshrl.u32 683565275, %v9926
        %v9928 = vshll.u32 683565275, %v9925
        %v9929 = vshrl.u32 2475754826, %v9926
        %v9930 = vor.u32 %v9928, %v9929
        %v9931 = vshll.u32 2475754826, %v9925
        %v9932 = vshrl.u32 2131351028, %v9926
        %v9933 = vor.u32 %v9931, %v9932
        %v9934 = vshll.u32 2131351028, %v9925
        %v9935 = vshrl.u32 2102212464, %v9926
        %v9936 = vor.u32 %v9934, %v9935
        %v9937 = vshll.u32 2102212464, %v9925
        %v9938 = vshrl.u32 920167782, %v9926
        %v9939 = vor.u32 %v9937, %v9938
        %v9940 = vshll.u32 920167782, %v9925
        %v9941 = vshrl.u32 1326507024, %v9926
        %v9942 = vor.u32 %v9940, %v9941
        %vm9943 = vcmp.lt.s32.totalorder %v9924, 1
        %vm9944 = vcmp.lt.s32.totalorder %v9924, 2
        %vm9945 = vcmp.lt.s32.totalorder %v9924, 3
        %vm9946 = vcmp.lt.s32.totalorder %v9924, 4
        %v9947 = vsel %vm9943, %v9927, %v9930
        %v9948 = vsel %vm9946, %v9936, 2102212464
        %v9949 = vsel %vm9945, %v9933, %v9948
        %v9950 = vsel %vm9944, %v9947, %v9949
        %v9951 = vsel %vm9943, %v9930, %v9933
        %v9952 = vsel %vm9946, %v9939, 920167782
        %v9953 = vsel %vm9945, %v9936, %v9952
        %v9954 = vsel %vm9944, %v9951, %v9953
        %v9955 = vsel %vm9943, %v9933, %v9936
        %v9956 = vsel %vm9946, %v9942, 1326507024
        %v9957 = vsel %vm9945, %v9939, %v9956
        %v9958 = vsel %vm9944, %v9955, %v9957
        %v9959 = vshll.u32 %v9919, 8
        %v9960 = vand.u32 %v9959, 65535
        %v9961 = vshrl.u32 %v9959, 16
        %v9962 = vand.u32 %v9958, 65535
        %v9963 = vshrl.u32 %v9958, 16
        %v9964 = vmul.u32 %v9960, %v9962
        %v9965 = vmul.u32 %v9960, %v9963
        %v9966 = vmul.u32 %v9961, %v9962
        %v9967 = vmul.u32 %v9961, %v9963
        %v9968 = vshll.u32 %v9965, 16
        %v9969 = vshrl.u32 %v9965, 16
        %v9970 = vshll.u32 %v9966, 16
        %v9971 = vshrl.u32 %v9966, 16
        %vm9972 = vc.u32 %v9964, %v9968
        %v9973 = vsel %vm9972, 1, 0
        %v9974 = vadd.s32 %v9964, %v9968
        %v9975 = vadd.s32 %v9967, %v9973
        %vm9976 = vc.u32 %v9974, %v9970
        %v9977 = vsel %vm9976, 1, 0
        %v9978 = vadd.s32 %v9974, %v9970
        %v9979 = vadd.s32 %v9975, %v9977
        %v9980 = vadd.s32 %v9979, %v9969
        %v9981 = vadd.s32 %v9980, %v9971
        %v9982 = vand.u32 %v9959, 65535
        %v9983 = vshrl.u32 %v9959, 16
        %v9984 = vand.u32 %v9954, 65535
        %v9985 = vshrl.u32 %v9954, 16
        %v9986 = vmul.u32 %v9982, %v9984
        %v9987 = vmul.u32 %v9982, %v9985
        %v9988 = vmul.u32 %v9983, %v9984
        %v9989 = vmul.u32 %v9983, %v9985
        %v9990 = vshll.u32 %v9987, 16
        %v9991 = vshrl.u32 %v9987, 16
        %v9992 = vshll.u32 %v9988, 16
        %v9993 = vshrl.u32 %v9988, 16
        %vm9994 = vc.u32 %v9986, %v9990
        %v9995 = vsel %vm9994, 1, 0
        %v9996 = vadd.s32 %v9986, %v9990
        %v9997 = vadd.s32 %v9989, %v9995
        %vm9998 = vc.u32 %v9996, %v9992
        %v9999 = vsel %vm9998, 1, 0
        %v10000 = vadd.s32 %v9996, %v9992
        %v10001 = vadd.s32 %v9997, %v9999
        %v10002 = vadd.s32 %v10001, %v9991
        %v10003 = vadd.s32 %v10002, %v9993
        %v10004 = vmul.u32 %v9959, %v9950
        %v10005 = vadd.s32 %v9981, %v10000
        %vm10006 = vc.u32 %v9981, %v10000
        %v10007 = vadd.s32 %v10003, 1
        %v10008 = vsel %vm10006, %v10007, %v10003
        %v10009 = vadd.s32 %v10004, %v10008
        %v10010 = vadd.s32 %v10009, 536870912
        %v10011 = vshrl.u32 %v10010, 30
        %v10012 = vshll.u32 %v10011, 30
        %v10013 = vsub.s32 %v10009, %v10012
        %vm10014 = vcmp.lt.s32.totalorder %v10013, 0
        %v10015 = vsub.s32 0, %v10013
        %v10016 = vsel %vm10014, %v10015, %v10013
        %v10017 = vclz %v10016
        %v10018 = vsub.s32 %v10017, 2
        %vm10019 = vcmp.gt.s32.totalorder 0, %v10018
        %v10020 = vsel %vm10019, 0, %v10018
        %v10021 = vsub.s32 32, %v10020
        %v10022 = vshll.u32 %v10013, %v10020
        %v10023 = vshrl.u32 %v10005, %v10021
        %v10024 = vor.u32 %v10022, %v10023
        %v10025 = vsub.s32 4294967266, %v10020
        %v10026 = vadd.s32 %v10025, 127
        %v10027 = vshll.u32 %v10026, 23
        %v10028 = vor.u32 4788187, %v10027
        %v10029 = vand.u32 2147483647, %v10028
        %v10031 = vcvt.s32.f32 %v10024
        %v10032 = vmul.f32 %v10031, %v10029
        %v10033 = vxor.u32 %v10032, 2147483648
        %v10034 = vsel %vm9913, %v10033, %v10032
        %v10035 = vsub.s32 4, %v10011
        %v10036 = vsel %vm9913, %v10035, %v10011
        %v10037 = vsel %vm9912, %v8509, %v10034
        %v10038 = vsel %vm9912, 0, %v10036
        %v10039 = vmul.f32 %v10037, %v10037
        %v10040 = vmul.f32 %v10039, -0.001358992
        %v10041 = vadd.f32 %v10040, 0.041655596
        %v10042 = vmul.f32 %v10039, %v10041
        %v10043 = vadd.f32 %v10042, -0.4999988
        %v10044 = vmul.f32 %v10039, %v10043
        %v10045 = vadd.f32 1.0, %v10044
        %v10046 = vmul.f32 %v10037, %v10037
        %v10047 = vmul.f32 %v10046, -0.00019511016
        %v10048 = vadd.f32 %v10047, 0.008332121
        %v10049 = vmul.f32 %v10046, %v10048
        %v10050 = vadd.f32 %v10049, -0.16666654
        %v10051 = vmul.f32 %v10046, %v10050
        %v10052 = vadd.f32 %v10051, 1.0
        %v10053 = vmul.f32 %v10052, %v10037
        %vm10054 = vweird.f32 %v8509
        %v10055 = vadd.s32 %v10038, 3
        %v10056 = vand.u32 %v10055, 3
        %vm10057 = vcmp.lt.s32.totalorder %v10056, 2
        %vm10058 = vcmp.eq.s32.totalorder %v10056, 0
        %v10059 = vxor.u32 %v10053, 2147483648
        %v10060 = vsel %vm10058, %v10045, %v10059
        %vm10061 = vcmp.eq.s32.totalorder %v10056, 2
        %v10062 = vxor.u32 %v10045, 2147483648
        %v10063 = vsel %vm10061, %v10062, %v10053
        %v10064 = vsel %vm10057, %v10060, %v10063
        %v10065 = vsel %vm10054, nan, %v10064
        %v10066 = vand.u32 2147483647, %v8510
        %vm10067 = vcmp.le.f32.partialorder %v10066, 0.7853982
        %vm10068 = vcmp.lt.s32.totalorder %v8510, 0
        %v10069 = vand.u32 %v8510, 2139095040
        %v10070 = vshrl.u32 %v10069, 23
        %v10071 = vsub.s32 %v10070, 127
        %v10072 = vand.u32 2147483647, %v8510
        %v10073 = vand.u32 %v10072, 8388607
        %v10074 = vor.u32 %v10073, 8388608
        %v10075 = vsub.s32 0, %v10074
        %v10076 = vadd.s32 %v10071, 1
        %vm10077 = vcmp.gt.s32.totalorder %v10076, 0
        %v10078 = vsel %vm10077, %v10076, 0
        %v10079 = vshrl.u32 %v10078, 5
        %v10080 = vand.u32 %v10078, 31
        %v10081 = vsub.s32 32, %v10080
        %v10082 = vshrl.u32 683565275, %v10081
        %v10083 = vshll.u32 683565275, %v10080
        %v10084 = vshrl.u32 2475754826, %v10081
        %v10085 = vor.u32 %v10083, %v10084
        %v10086 = vshll.u32 2475754826, %v10080
        %v10087 = vshrl.u32 2131351028, %v10081
        %v10088 = vor.u32 %v10086, %v10087
        %v10089 = vshll.u32 2131351028, %v10080
        %v10090 = vshrl.u32 2102212464, %v10081
        %v10091 = vor.u32 %v10089, %v10090
        %v10092 = vshll.u32 2102212464, %v10080
        %v10093 = vshrl.u32 920167782, %v10081
        %v10094 = vor.u32 %v10092, %v10093
        %v10095 = vshll.u32 920167782, %v10080
        %v10096 = vshrl.u32 1326507024, %v10081
        %v10097 = vor.u32 %v10095, %v10096
        %vm10098 = vcmp.lt.s32.totalorder %v10079, 1
        %vm10099 = vcmp.lt.s32.totalorder %v10079, 2
        %vm10100 = vcmp.lt.s32.totalorder %v10079, 3
        %vm10101 = vcmp.lt.s32.totalorder %v10079, 4
        %v10102 = vsel %vm10098, %v10082, %v10085
        %v10103 = vsel %vm10101, %v10091, 2102212464
        %v10104 = vsel %vm10100, %v10088, %v10103
        %v10105 = vsel %vm10099, %v10102, %v10104
        %v10106 = vsel %vm10098, %v10085, %v10088
        %v10107 = vsel %vm10101, %v10094, 920167782
        %v10108 = vsel %vm10100, %v10091, %v10107
        %v10109 = vsel %vm10099, %v10106, %v10108
        %v10110 = vsel %vm10098, %v10088, %v10091
        %v10111 = vsel %vm10101, %v10097, 1326507024
        %v10112 = vsel %vm10100, %v10094, %v10111
        %v10113 = vsel %vm10099, %v10110, %v10112
        %v10114 = vshll.u32 %v10074, 8
        %v10115 = vand.u32 %v10114, 65535
        %v10116 = vshrl.u32 %v10114, 16
        %v10117 = vand.u32 %v10113, 65535
        %v10118 = vshrl.u32 %v10113, 16
        %v10119 = vmul.u32 %v10115, %v10117
        %v10120 = vmul.u32 %v10115, %v10118
        %v10121 = vmul.u32 %v10116, %v10117
        %v10122 = vmul.u32 %v10116, %v10118
        %v10123 = vshll.u32 %v10120, 16
        %v10124 = vshrl.u32 %v10120, 16
        %v10125 = vshll.u32 %v10121, 16
        %v10126 = vshrl.u32 %v10121, 16
        %vm10127 = vc.u32 %v10119, %v10123
        %v10128 = vsel %vm10127, 1, 0
        %v10129 = vadd.s32 %v10119, %v10123
        %v10130 = vadd.s32 %v10122, %v10128
        %vm10131 = vc.u32 %v10129, %v10125
        %v10132 = vsel %vm10131, 1, 0
        %v10133 = vadd.s32 %v10129, %v10125
        %v10134 = vadd.s32 %v10130, %v10132
        %v10135 = vadd.s32 %v10134, %v10124
        %v10136 = vadd.s32 %v10135, %v10126
        %v10137 = vand.u32 %v10114, 65535
        %v10138 = vshrl.u32 %v10114, 16
        %v10139 = vand.u32 %v10109, 65535
        %v10140 = vshrl.u32 %v10109, 16
        %v10141 = vmul.u32 %v10137, %v10139
        %v10142 = vmul.u32 %v10137, %v10140
        %v10143 = vmul.u32 %v10138, %v10139
        %v10144 = vmul.u32 %v10138, %v10140
        %v10145 = vshll.u32 %v10142, 16
        %v10146 = vshrl.u32 %v10142, 16
        %v10147 = vshll.u32 %v10143, 16
        %v10148 = vshrl.u32 %v10143, 16
        %vm10149 = vc.u32 %v10141, %v10145
        %v10150 = vsel %vm10149, 1, 0
        %v10151 = vadd.s32 %v10141, %v10145
        %v10152 = vadd.s32 %v10144, %v10150
        %vm10153 = vc.u32 %v10151, %v10147
        %v10154 = vsel %vm10153, 1, 0
        %v10155 = vadd.s32 %v10151, %v10147
        %v10156 = vadd.s32 %v10152, %v10154
        %v10157 = vadd.s32 %v10156, %v10146
        %v10158 = vadd.s32 %v10157, %v10148
        %v10159 = vmul.u32 %v10114, %v10105
        %v10160 = vadd.s32 %v10136, %v10155
        %vm10161 = vc.u32 %v10136, %v10155
        %v10162 = vadd.s32 %v10158, 1
        %v10163 = vsel %vm10161, %v10162, %v10158
        %v10164 = vadd.s32 %v10159, %v10163
        %v10165 = vadd.s32 %v10164, 536870912
        %v10166 = vshrl.u32 %v10165, 30
        %v10167 = vshll.u32 %v10166, 30
        %v10168 = vsub.s32 %v10164, %v10167
        %vm10169 = vcmp.lt.s32.totalorder %v10168, 0
        %v10170 = vsub.s32 0, %v10168
        %v10171 = vsel %vm10169, %v10170, %v10168
        %v10172 = vclz %v10171
        %v10173 = vsub.s32 %v10172, 2
        %vm10174 = vcmp.gt.s32.totalorder 0, %v10173
        %v10175 = vsel %vm10174, 0, %v10173
        %v10176 = vsub.s32 32, %v10175
        %v10177 = vshll.u32 %v10168, %v10175
        %v10178 = vshrl.u32 %v10160, %v10176
        %v10179 = vor.u32 %v10177, %v10178
        %v10180 = vsub.s32 4294967266, %v10175
        %v10181 = vadd.s32 %v10180, 127
        %v10182 = vshll.u32 %v10181, 23
        %v10183 = vor.u32 4788187, %v10182
        %v10184 = vand.u32 2147483647, %v10183
        %v10186 = vcvt.s32.f32 %v10179
        %v10187 = vmul.f32 %v10186, %v10184
        %v10188 = vxor.u32 %v10187, 2147483648
        %v10189 = vsel %vm10068, %v10188, %v10187
        %v10190 = vsub.s32 4, %v10166
        %v10191 = vsel %vm10068, %v10190, %v10166
        %v10192 = vsel %vm10067, %v8510, %v10189
        %v10193 = vsel %vm10067, 0, %v10191
        %v10194 = vmul.f32 %v10192, %v10192
        %v10195 = vmul.f32 %v10194, -0.001358992
        %v10196 = vadd.f32 %v10195, 0.041655596
        %v10197 = vmul.f32 %v10194, %v10196
        %v10198 = vadd.f32 %v10197, -0.4999988
        %v10199 = vmul.f32 %v10194, %v10198
        %v10200 = vadd.f32 1.0, %v10199
        %v10201 = vmul.f32 %v10192, %v10192
        %v10202 = vmul.f32 %v10201, -0.00019511016
        %v10203 = vadd.f32 %v10202, 0.008332121
        %v10204 = vmul.f32 %v10201, %v10203
        %v10205 = vadd.f32 %v10204, -0.16666654
        %v10206 = vmul.f32 %v10201, %v10205
        %v10207 = vadd.f32 %v10206, 1.0
        %v10208 = vmul.f32 %v10207, %v10192
        %vm10209 = vweird.f32 %v8510
        %v10210 = vadd.s32 %v10193, 3
        %v10211 = vand.u32 %v10210, 3
        %vm10212 = vcmp.lt.s32.totalorder %v10211, 2
        %vm10213 = vcmp.eq.s32.totalorder %v10211, 0
        %v10214 = vxor.u32 %v10208, 2147483648
        %v10215 = vsel %vm10213, %v10200, %v10214
        %vm10216 = vcmp.eq.s32.totalorder %v10211, 2
        %v10217 = vxor.u32 %v10200, 2147483648
        %v10218 = vsel %vm10216, %v10217, %v10208
        %v10219 = vsel %vm10212, %v10215, %v10218
        %v10220 = vsel %vm10209, nan, %v10219
        %v10221 = vand.u32 2147483647, %v8511
        %vm10222 = vcmp.le.f32.partialorder %v10221, 0.7853982
        %vm10223 = vcmp.lt.s32.totalorder %v8511, 0
        %v10224 = vand.u32 %v8511, 2139095040
        %v10225 = vshrl.u32 %v10224, 23
        %v10226 = vsub.s32 %v10225, 127
        %v10227 = vand.u32 2147483647, %v8511
        %v10228 = vand.u32 %v10227, 8388607
        %v10229 = vor.u32 %v10228, 8388608
        %v10230 = vsub.s32 0, %v10229
        %v10231 = vadd.s32 %v10226, 1
        %vm10232 = vcmp.gt.s32.totalorder %v10231, 0
        %v10233 = vsel %vm10232, %v10231, 0
        %v10234 = vshrl.u32 %v10233, 5
        %v10235 = vand.u32 %v10233, 31
        %v10236 = vsub.s32 32, %v10235
        %v10237 = vshrl.u32 683565275, %v10236
        %v10238 = vshll.u32 683565275, %v10235
        %v10239 = vshrl.u32 2475754826, %v10236
        %v10240 = vor.u32 %v10238, %v10239
        %v10241 = vshll.u32 2475754826, %v10235
        %v10242 = vshrl.u32 2131351028, %v10236
        %v10243 = vor.u32 %v10241, %v10242
        %v10244 = vshll.u32 2131351028, %v10235
        %v10245 = vshrl.u32 2102212464, %v10236
        %v10246 = vor.u32 %v10244, %v10245
        %v10247 = vshll.u32 2102212464, %v10235
        %v10248 = vshrl.u32 920167782, %v10236
        %v10249 = vor.u32 %v10247, %v10248
        %v10250 = vshll.u32 920167782, %v10235
        %v10251 = vshrl.u32 1326507024, %v10236
        %v10252 = vor.u32 %v10250, %v10251
        %vm10253 = vcmp.lt.s32.totalorder %v10234, 1
        %vm10254 = vcmp.lt.s32.totalorder %v10234, 2
        %vm10255 = vcmp.lt.s32.totalorder %v10234, 3
        %vm10256 = vcmp.lt.s32.totalorder %v10234, 4
        %v10257 = vsel %vm10253, %v10237, %v10240
        %v10258 = vsel %vm10256, %v10246, 2102212464
        %v10259 = vsel %vm10255, %v10243, %v10258
        %v10260 = vsel %vm10254, %v10257, %v10259
        %v10261 = vsel %vm10253, %v10240, %v10243
        %v10262 = vsel %vm10256, %v10249, 920167782
        %v10263 = vsel %vm10255, %v10246, %v10262
        %v10264 = vsel %vm10254, %v10261, %v10263
        %v10265 = vsel %vm10253, %v10243, %v10246
        %v10266 = vsel %vm10256, %v10252, 1326507024
        %v10267 = vsel %vm10255, %v10249, %v10266
        %v10268 = vsel %vm10254, %v10265, %v10267
        %v10269 = vshll.u32 %v10229, 8
        %v10270 = vand.u32 %v10269, 65535
        %v10271 = vshrl.u32 %v10269, 16
        %v10272 = vand.u32 %v10268, 65535
        %v10273 = vshrl.u32 %v10268, 16
        %v10274 = vmul.u32 %v10270, %v10272
        %v10275 = vmul.u32 %v10270, %v10273
        %v10276 = vmul.u32 %v10271, %v10272
        %v10277 = vmul.u32 %v10271, %v10273
        %v10278 = vshll.u32 %v10275, 16
        %v10279 = vshrl.u32 %v10275, 16
        %v10280 = vshll.u32 %v10276, 16
        %v10281 = vshrl.u32 %v10276, 16
        %vm10282 = vc.u32 %v10274, %v10278
        %v10283 = vsel %vm10282, 1, 0
        %v10284 = vadd.s32 %v10274, %v10278
        %v10285 = vadd.s32 %v10277, %v10283
        %vm10286 = vc.u32 %v10284, %v10280
        %v10287 = vsel %vm10286, 1, 0
        %v10288 = vadd.s32 %v10284, %v10280
        %v10289 = vadd.s32 %v10285, %v10287
        %v10290 = vadd.s32 %v10289, %v10279
        %v10291 = vadd.s32 %v10290, %v10281
        %v10292 = vand.u32 %v10269, 65535
        %v10293 = vshrl.u32 %v10269, 16
        %v10294 = vand.u32 %v10264, 65535
        %v10295 = vshrl.u32 %v10264, 16
        %v10296 = vmul.u32 %v10292, %v10294
        %v10297 = vmul.u32 %v10292, %v10295
        %v10298 = vmul.u32 %v10293, %v10294
        %v10299 = vmul.u32 %v10293, %v10295
        %v10300 = vshll.u32 %v10297, 16
        %v10301 = vshrl.u32 %v10297, 16
        %v10302 = vshll.u32 %v10298, 16
        %v10303 = vshrl.u32 %v10298, 16
        %vm10304 = vc.u32 %v10296, %v10300
        %v10305 = vsel %vm10304, 1, 0
        %v10306 = vadd.s32 %v10296, %v10300
        %v10307 = vadd.s32 %v10299, %v10305
        %vm10308 = vc.u32 %v10306, %v10302
        %v10309 = vsel %vm10308, 1, 0
        %v10310 = vadd.s32 %v10306, %v10302
        %v10311 = vadd.s32 %v10307, %v10309
        %v10312 = vadd.s32 %v10311, %v10301
        %v10313 = vadd.s32 %v10312, %v10303
        %v10314 = vmul.u32 %v10269, %v10260
        %v10315 = vadd.s32 %v10291, %v10310
        %vm10316 = vc.u32 %v10291, %v10310
        %v10317 = vadd.s32 %v10313, 1
        %v10318 = vsel %vm10316, %v10317, %v10313
        %v10319 = vadd.s32 %v10314, %v10318
        %v10320 = vadd.s32 %v10319, 536870912
        %v10321 = vshrl.u32 %v10320, 30
        %v10322 = vshll.u32 %v10321, 30
        %v10323 = vsub.s32 %v10319, %v10322
        %vm10324 = vcmp.lt.s32.totalorder %v10323, 0
        %v10325 = vsub.s32 0, %v10323
        %v10326 = vsel %vm10324, %v10325, %v10323
        %v10327 = vclz %v10326
        %v10328 = vsub.s32 %v10327, 2
        %vm10329 = vcmp.gt.s32.totalorder 0, %v10328
        %v10330 = vsel %vm10329, 0, %v10328
        %v10331 = vsub.s32 32, %v10330
        %v10332 = vshll.u32 %v10323, %v10330
        %v10333 = vshrl.u32 %v10315, %v10331
        %v10334 = vor.u32 %v10332, %v10333
        %v10335 = vsub.s32 4294967266, %v10330
        %v10336 = vadd.s32 %v10335, 127
        %v10337 = vshll.u32 %v10336, 23
        %v10338 = vor.u32 4788187, %v10337
        %v10339 = vand.u32 2147483647, %v10338
        %v10341 = vcvt.s32.f32 %v10334
        %v10342 = vmul.f32 %v10341, %v10339
        %v10343 = vxor.u32 %v10342, 2147483648
        %v10344 = vsel %vm10223, %v10343, %v10342
        %v10345 = vsub.s32 4, %v10321
        %v10346 = vsel %vm10223, %v10345, %v10321
        %v10347 = vsel %vm10222, %v8511, %v10344
        %v10348 = vsel %vm10222, 0, %v10346
        %v10349 = vmul.f32 %v10347, %v10347
        %v10350 = vmul.f32 %v10349, -0.001358992
        %v10351 = vadd.f32 %v10350, 0.041655596
        %v10352 = vmul.f32 %v10349, %v10351
        %v10353 = vadd.f32 %v10352, -0.4999988
        %v10354 = vmul.f32 %v10349, %v10353
        %v10355 = vadd.f32 1.0, %v10354
        %v10356 = vmul.f32 %v10347, %v10347
        %v10357 = vmul.f32 %v10356, -0.00019511016
        %v10358 = vadd.f32 %v10357, 0.008332121
        %v10359 = vmul.f32 %v10356, %v10358
        %v10360 = vadd.f32 %v10359, -0.16666654
        %v10361 = vmul.f32 %v10356, %v10360
        %v10362 = vadd.f32 %v10361, 1.0
        %v10363 = vmul.f32 %v10362, %v10347
        %vm10364 = vweird.f32 %v8511
        %v10365 = vadd.s32 %v10348, 3
        %v10366 = vand.u32 %v10365, 3
        %vm10367 = vcmp.lt.s32.totalorder %v10366, 2
        %vm10368 = vcmp.eq.s32.totalorder %v10366, 0
        %v10369 = vxor.u32 %v10363, 2147483648
        %v10370 = vsel %vm10368, %v10355, %v10369
        %vm10371 = vcmp.eq.s32.totalorder %v10366, 2
        %v10372 = vxor.u32 %v10355, 2147483648
        %v10373 = vsel %vm10371, %v10372, %v10363
        %v10374 = vsel %vm10367, %v10370, %v10373
        %v10375 = vsel %vm10364, nan, %v10374
        %v10376 = vand.u32 2147483647, %v8512
        %vm10377 = vcmp.le.f32.partialorder %v10376, 0.7853982
        %vm10378 = vcmp.lt.s32.totalorder %v8512, 0
        %v10379 = vand.u32 %v8512, 2139095040
        %v10380 = vshrl.u32 %v10379, 23
        %v10381 = vsub.s32 %v10380, 127
        %v10382 = vand.u32 2147483647, %v8512
        %v10383 = vand.u32 %v10382, 8388607
        %v10384 = vor.u32 %v10383, 8388608
        %v10385 = vsub.s32 0, %v10384
        %v10386 = vadd.s32 %v10381, 1
        %vm10387 = vcmp.gt.s32.totalorder %v10386, 0
        %v10388 = vsel %vm10387, %v10386, 0
        %v10389 = vshrl.u32 %v10388, 5
        %v10390 = vand.u32 %v10388, 31
        %v10391 = vsub.s32 32, %v10390
        %v10392 = vshrl.u32 683565275, %v10391
        %v10393 = vshll.u32 683565275, %v10390
        %v10394 = vshrl.u32 2475754826, %v10391
        %v10395 = vor.u32 %v10393, %v10394
        %v10396 = vshll.u32 2475754826, %v10390
        %v10397 = vshrl.u32 2131351028, %v10391
        %v10398 = vor.u32 %v10396, %v10397
        %v10399 = vshll.u32 2131351028, %v10390
        %v10400 = vshrl.u32 2102212464, %v10391
        %v10401 = vor.u32 %v10399, %v10400
        %v10402 = vshll.u32 2102212464, %v10390
        %v10403 = vshrl.u32 920167782, %v10391
        %v10404 = vor.u32 %v10402, %v10403
        %v10405 = vshll.u32 920167782, %v10390
        %v10406 = vshrl.u32 1326507024, %v10391
        %v10407 = vor.u32 %v10405, %v10406
        %vm10408 = vcmp.lt.s32.totalorder %v10389, 1
        %vm10409 = vcmp.lt.s32.totalorder %v10389, 2
        %vm10410 = vcmp.lt.s32.totalorder %v10389, 3
        %vm10411 = vcmp.lt.s32.totalorder %v10389, 4
        %v10412 = vsel %vm10408, %v10392, %v10395
        %v10413 = vsel %vm10411, %v10401, 2102212464
        %v10414 = vsel %vm10410, %v10398, %v10413
        %v10415 = vsel %vm10409, %v10412, %v10414
        %v10416 = vsel %vm10408, %v10395, %v10398
        %v10417 = vsel %vm10411, %v10404, 920167782
        %v10418 = vsel %vm10410, %v10401, %v10417
        %v10419 = vsel %vm10409, %v10416, %v10418
        %v10420 = vsel %vm10408, %v10398, %v10401
        %v10421 = vsel %vm10411, %v10407, 1326507024
        %v10422 = vsel %vm10410, %v10404, %v10421
        %v10423 = vsel %vm10409, %v10420, %v10422
        %v10424 = vshll.u32 %v10384, 8
        %v10425 = vand.u32 %v10424, 65535
        %v10426 = vshrl.u32 %v10424, 16
        %v10427 = vand.u32 %v10423, 65535
        %v10428 = vshrl.u32 %v10423, 16
        %v10429 = vmul.u32 %v10425, %v10427
        %v10430 = vmul.u32 %v10425, %v10428
        %v10431 = vmul.u32 %v10426, %v10427
        %v10432 = vmul.u32 %v10426, %v10428
        %v10433 = vshll.u32 %v10430, 16
        %v10434 = vshrl.u32 %v10430, 16
        %v10435 = vshll.u32 %v10431, 16
        %v10436 = vshrl.u32 %v10431, 16
        %vm10437 = vc.u32 %v10429, %v10433
        %v10438 = vsel %vm10437, 1, 0
        %v10439 = vadd.s32 %v10429, %v10433
        %v10440 = vadd.s32 %v10432, %v10438
        %vm10441 = vc.u32 %v10439, %v10435
        %v10442 = vsel %vm10441, 1, 0
        %v10443 = vadd.s32 %v10439, %v10435
        %v10444 = vadd.s32 %v10440, %v10442
        %v10445 = vadd.s32 %v10444, %v10434
        %v10446 = vadd.s32 %v10445, %v10436
        %v10447 = vand.u32 %v10424, 65535
        %v10448 = vshrl.u32 %v10424, 16
        %v10449 = vand.u32 %v10419, 65535
        %v10450 = vshrl.u32 %v10419, 16
        %v10451 = vmul.u32 %v10447, %v10449
        %v10452 = vmul.u32 %v10447, %v10450
        %v10453 = vmul.u32 %v10448, %v10449
        %v10454 = vmul.u32 %v10448, %v10450
        %v10455 = vshll.u32 %v10452, 16
        %v10456 = vshrl.u32 %v10452, 16
        %v10457 = vshll.u32 %v10453, 16
        %v10458 = vshrl.u32 %v10453, 16
        %vm10459 = vc.u32 %v10451, %v10455
        %v10460 = vsel %vm10459, 1, 0
        %v10461 = vadd.s32 %v10451, %v10455
        %v10462 = vadd.s32 %v10454, %v10460
        %vm10463 = vc.u32 %v10461, %v10457
        %v10464 = vsel %vm10463, 1, 0
        %v10465 = vadd.s32 %v10461, %v10457
        %v10466 = vadd.s32 %v10462, %v10464
        %v10467 = vadd.s32 %v10466, %v10456
        %v10468 = vadd.s32 %v10467, %v10458
        %v10469 = vmul.u32 %v10424, %v10415
        %v10470 = vadd.s32 %v10446, %v10465
        %vm10471 = vc.u32 %v10446, %v10465
        %v10472 = vadd.s32 %v10468, 1
        %v10473 = vsel %vm10471, %v10472, %v10468
        %v10474 = vadd.s32 %v10469, %v10473
        %v10475 = vadd.s32 %v10474, 536870912
        %v10476 = vshrl.u32 %v10475, 30
        %v10477 = vshll.u32 %v10476, 30
        %v10478 = vsub.s32 %v10474, %v10477
        %vm10479 = vcmp.lt.s32.totalorder %v10478, 0
        %v10480 = vsub.s32 0, %v10478
        %v10481 = vsel %vm10479, %v10480, %v10478
        %v10482 = vclz %v10481
        %v10483 = vsub.s32 %v10482, 2
        %vm10484 = vcmp.gt.s32.totalorder 0, %v10483
        %v10485 = vsel %vm10484, 0, %v10483
        %v10486 = vsub.s32 32, %v10485
        %v10487 = vshll.u32 %v10478, %v10485
        %v10488 = vshrl.u32 %v10470, %v10486
        %v10489 = vor.u32 %v10487, %v10488
        %v10490 = vsub.s32 4294967266, %v10485
        %v10491 = vadd.s32 %v10490, 127
        %v10492 = vshll.u32 %v10491, 23
        %v10493 = vor.u32 4788187, %v10492
        %v10494 = vand.u32 2147483647, %v10493
        %v10496 = vcvt.s32.f32 %v10489
        %v10497 = vmul.f32 %v10496, %v10494
        %v10498 = vxor.u32 %v10497, 2147483648
        %v10499 = vsel %vm10378, %v10498, %v10497
        %v10500 = vsub.s32 4, %v10476
        %v10501 = vsel %vm10378, %v10500, %v10476
        %v10502 = vsel %vm10377, %v8512, %v10499
        %v10503 = vsel %vm10377, 0, %v10501
        %v10504 = vmul.f32 %v10502, %v10502
        %v10505 = vmul.f32 %v10504, -0.001358992
        %v10506 = vadd.f32 %v10505, 0.041655596
        %v10507 = vmul.f32 %v10504, %v10506
        %v10508 = vadd.f32 %v10507, -0.4999988
        %v10509 = vmul.f32 %v10504, %v10508
        %v10510 = vadd.f32 1.0, %v10509
        %v10511 = vmul.f32 %v10502, %v10502
        %v10512 = vmul.f32 %v10511, -0.00019511016
        %v10513 = vadd.f32 %v10512, 0.008332121
        %v10514 = vmul.f32 %v10511, %v10513
        %v10515 = vadd.f32 %v10514, -0.16666654
        %v10516 = vmul.f32 %v10511, %v10515
        %v10517 = vadd.f32 %v10516, 1.0
        %v10518 = vmul.f32 %v10517, %v10502
        %vm10519 = vweird.f32 %v8512
        %v10520 = vadd.s32 %v10503, 3
        %v10521 = vand.u32 %v10520, 3
        %vm10522 = vcmp.lt.s32.totalorder %v10521, 2
        %vm10523 = vcmp.eq.s32.totalorder %v10521, 0
        %v10524 = vxor.u32 %v10518, 2147483648
        %v10525 = vsel %vm10523, %v10510, %v10524
        %vm10526 = vcmp.eq.s32.totalorder %v10521, 2
        %v10527 = vxor.u32 %v10510, 2147483648
        %v10528 = vsel %vm10526, %v10527, %v10518
        %v10529 = vsel %vm10522, %v10525, %v10528
        %v10530 = vsel %vm10519, nan, %v10529
        %v10531 = vand.u32 2147483647, %v8513
        %vm10532 = vcmp.le.f32.partialorder %v10531, 0.7853982
        %vm10533 = vcmp.lt.s32.totalorder %v8513, 0
        %v10534 = vand.u32 %v8513, 2139095040
        %v10535 = vshrl.u32 %v10534, 23
        %v10536 = vsub.s32 %v10535, 127
        %v10537 = vand.u32 2147483647, %v8513
        %v10538 = vand.u32 %v10537, 8388607
        %v10539 = vor.u32 %v10538, 8388608
        %v10540 = vsub.s32 0, %v10539
        %v10541 = vadd.s32 %v10536, 1
        %vm10542 = vcmp.gt.s32.totalorder %v10541, 0
        %v10543 = vsel %vm10542, %v10541, 0
        %v10544 = vshrl.u32 %v10543, 5
        %v10545 = vand.u32 %v10543, 31
        %v10546 = vsub.s32 32, %v10545
        %v10547 = vshrl.u32 683565275, %v10546
        %v10548 = vshll.u32 683565275, %v10545
        %v10549 = vshrl.u32 2475754826, %v10546
        %v10550 = vor.u32 %v10548, %v10549
        %v10551 = vshll.u32 2475754826, %v10545
        %v10552 = vshrl.u32 2131351028, %v10546
        %v10553 = vor.u32 %v10551, %v10552
        %v10554 = vshll.u32 2131351028, %v10545
        %v10555 = vshrl.u32 2102212464, %v10546
        %v10556 = vor.u32 %v10554, %v10555
        %v10557 = vshll.u32 2102212464, %v10545
        %v10558 = vshrl.u32 920167782, %v10546
        %v10559 = vor.u32 %v10557, %v10558
        %v10560 = vshll.u32 920167782, %v10545
        %v10561 = vshrl.u32 1326507024, %v10546
        %v10562 = vor.u32 %v10560, %v10561
        %vm10563 = vcmp.lt.s32.totalorder %v10544, 1
        %vm10564 = vcmp.lt.s32.totalorder %v10544, 2
        %vm10565 = vcmp.lt.s32.totalorder %v10544, 3
        %vm10566 = vcmp.lt.s32.totalorder %v10544, 4
        %v10567 = vsel %vm10563, %v10547, %v10550
        %v10568 = vsel %vm10566, %v10556, 2102212464
        %v10569 = vsel %vm10565, %v10553, %v10568
        %v10570 = vsel %vm10564, %v10567, %v10569
        %v10571 = vsel %vm10563, %v10550, %v10553
        %v10572 = vsel %vm10566, %v10559, 920167782
        %v10573 = vsel %vm10565, %v10556, %v10572
        %v10574 = vsel %vm10564, %v10571, %v10573
        %v10575 = vsel %vm10563, %v10553, %v10556
        %v10576 = vsel %vm10566, %v10562, 1326507024
        %v10577 = vsel %vm10565, %v10559, %v10576
        %v10578 = vsel %vm10564, %v10575, %v10577
        %v10579 = vshll.u32 %v10539, 8
        %v10580 = vand.u32 %v10579, 65535
        %v10581 = vshrl.u32 %v10579, 16
        %v10582 = vand.u32 %v10578, 65535
        %v10583 = vshrl.u32 %v10578, 16
        %v10584 = vmul.u32 %v10580, %v10582
        %v10585 = vmul.u32 %v10580, %v10583
        %v10586 = vmul.u32 %v10581, %v10582
        %v10587 = vmul.u32 %v10581, %v10583
        %v10588 = vshll.u32 %v10585, 16
        %v10589 = vshrl.u32 %v10585, 16
        %v10590 = vshll.u32 %v10586, 16
        %v10591 = vshrl.u32 %v10586, 16
        %vm10592 = vc.u32 %v10584, %v10588
        %v10593 = vsel %vm10592, 1, 0
        %v10594 = vadd.s32 %v10584, %v10588
        %v10595 = vadd.s32 %v10587, %v10593
        %vm10596 = vc.u32 %v10594, %v10590
        %v10597 = vsel %vm10596, 1, 0
        %v10598 = vadd.s32 %v10594, %v10590
        %v10599 = vadd.s32 %v10595, %v10597
        %v10600 = vadd.s32 %v10599, %v10589
        %v10601 = vadd.s32 %v10600, %v10591
        %v10602 = vand.u32 %v10579, 65535
        %v10603 = vshrl.u32 %v10579, 16
        %v10604 = vand.u32 %v10574, 65535
        %v10605 = vshrl.u32 %v10574, 16
        %v10606 = vmul.u32 %v10602, %v10604
        %v10607 = vmul.u32 %v10602, %v10605
        %v10608 = vmul.u32 %v10603, %v10604
        %v10609 = vmul.u32 %v10603, %v10605
        %v10610 = vshll.u32 %v10607, 16
        %v10611 = vshrl.u32 %v10607, 16
        %v10612 = vshll.u32 %v10608, 16
        %v10613 = vshrl.u32 %v10608, 16
        %vm10614 = vc.u32 %v10606, %v10610
        %v10615 = vsel %vm10614, 1, 0
        %v10616 = vadd.s32 %v10606, %v10610
        %v10617 = vadd.s32 %v10609, %v10615
        %vm10618 = vc.u32 %v10616, %v10612
        %v10619 = vsel %vm10618, 1, 0
        %v10620 = vadd.s32 %v10616, %v10612
        %v10621 = vadd.s32 %v10617, %v10619
        %v10622 = vadd.s32 %v10621, %v10611
        %v10623 = vadd.s32 %v10622, %v10613
        %v10624 = vmul.u32 %v10579, %v10570
        %v10625 = vadd.s32 %v10601, %v10620
        %vm10626 = vc.u32 %v10601, %v10620
        %v10627 = vadd.s32 %v10623, 1
        %v10628 = vsel %vm10626, %v10627, %v10623
        %v10629 = vadd.s32 %v10624, %v10628
        %v10630 = vadd.s32 %v10629, 536870912
        %v10631 = vshrl.u32 %v10630, 30
        %v10632 = vshll.u32 %v10631, 30
        %v10633 = vsub.s32 %v10629, %v10632
        %vm10634 = vcmp.lt.s32.totalorder %v10633, 0
        %v10635 = vsub.s32 0, %v10633
        %v10636 = vsel %vm10634, %v10635, %v10633
        %v10637 = vclz %v10636
        %v10638 = vsub.s32 %v10637, 2
        %vm10639 = vcmp.gt.s32.totalorder 0, %v10638
        %v10640 = vsel %vm10639, 0, %v10638
        %v10641 = vsub.s32 32, %v10640
        %v10642 = vshll.u32 %v10633, %v10640
        %v10643 = vshrl.u32 %v10625, %v10641
        %v10644 = vor.u32 %v10642, %v10643
        %v10645 = vsub.s32 4294967266, %v10640
        %v10646 = vadd.s32 %v10645, 127
        %v10647 = vshll.u32 %v10646, 23
        %v10648 = vor.u32 4788187, %v10647
        %v10649 = vand.u32 2147483647, %v10648
        %v10651 = vcvt.s32.f32 %v10644
        %v10652 = vmul.f32 %v10651, %v10649
        %v10653 = vxor.u32 %v10652, 2147483648
        %v10654 = vsel %vm10533, %v10653, %v10652
        %v10655 = vsub.s32 4, %v10631
        %v10656 = vsel %vm10533, %v10655, %v10631
        %v10657 = vsel %vm10532, %v8513, %v10654
        %v10658 = vsel %vm10532, 0, %v10656
        %v10659 = vmul.f32 %v10657, %v10657
        %v10660 = vmul.f32 %v10659, -0.001358992
        %v10661 = vadd.f32 %v10660, 0.041655596
        %v10662 = vmul.f32 %v10659, %v10661
        %v10663 = vadd.f32 %v10662, -0.4999988
        %v10664 = vmul.f32 %v10659, %v10663
        %v10665 = vadd.f32 1.0, %v10664
        %v10666 = vmul.f32 %v10657, %v10657
        %v10667 = vmul.f32 %v10666, -0.00019511016
        %v10668 = vadd.f32 %v10667, 0.008332121
        %v10669 = vmul.f32 %v10666, %v10668
        %v10670 = vadd.f32 %v10669, -0.16666654
        %v10671 = vmul.f32 %v10666, %v10670
        %v10672 = vadd.f32 %v10671, 1.0
        %v10673 = vmul.f32 %v10672, %v10657
        %vm10674 = vweird.f32 %v8513
        %v10675 = vadd.s32 %v10658, 3
        %v10676 = vand.u32 %v10675, 3
        %vm10677 = vcmp.lt.s32.totalorder %v10676, 2
        %vm10678 = vcmp.eq.s32.totalorder %v10676, 0
        %v10679 = vxor.u32 %v10673, 2147483648
        %v10680 = vsel %vm10678, %v10665, %v10679
        %vm10681 = vcmp.eq.s32.totalorder %v10676, 2
        %v10682 = vxor.u32 %v10665, 2147483648
        %v10683 = vsel %vm10681, %v10682, %v10673
        %v10684 = vsel %vm10677, %v10680, %v10683
        %v10685 = vsel %vm10674, nan, %v10684
        %v10686 = vand.u32 2147483647, %v8514
        %vm10687 = vcmp.le.f32.partialorder %v10686, 0.7853982
        %vm10688 = vcmp.lt.s32.totalorder %v8514, 0
        %v10689 = vand.u32 %v8514, 2139095040
        %v10690 = vshrl.u32 %v10689, 23
        %v10691 = vsub.s32 %v10690, 127
        %v10692 = vand.u32 2147483647, %v8514
        %v10693 = vand.u32 %v10692, 8388607
        %v10694 = vor.u32 %v10693, 8388608
        %v10695 = vsub.s32 0, %v10694
        %v10696 = vadd.s32 %v10691, 1
        %vm10697 = vcmp.gt.s32.totalorder %v10696, 0
        %v10698 = vsel %vm10697, %v10696, 0
        %v10699 = vshrl.u32 %v10698, 5
        %v10700 = vand.u32 %v10698, 31
        %v10701 = vsub.s32 32, %v10700
        %v10702 = vshrl.u32 683565275, %v10701
        %v10703 = vshll.u32 683565275, %v10700
        %v10704 = vshrl.u32 2475754826, %v10701
        %v10705 = vor.u32 %v10703, %v10704
        %v10706 = vshll.u32 2475754826, %v10700
        %v10707 = vshrl.u32 2131351028, %v10701
        %v10708 = vor.u32 %v10706, %v10707
        %v10709 = vshll.u32 2131351028, %v10700
        %v10710 = vshrl.u32 2102212464, %v10701
        %v10711 = vor.u32 %v10709, %v10710
        %v10712 = vshll.u32 2102212464, %v10700
        %v10713 = vshrl.u32 920167782, %v10701
        %v10714 = vor.u32 %v10712, %v10713
        %v10715 = vshll.u32 920167782, %v10700
        %v10716 = vshrl.u32 1326507024, %v10701
        %v10717 = vor.u32 %v10715, %v10716
        %vm10718 = vcmp.lt.s32.totalorder %v10699, 1
        %vm10719 = vcmp.lt.s32.totalorder %v10699, 2
        %vm10720 = vcmp.lt.s32.totalorder %v10699, 3
        %vm10721 = vcmp.lt.s32.totalorder %v10699, 4
        %v10722 = vsel %vm10718, %v10702, %v10705
        %v10723 = vsel %vm10721, %v10711, 2102212464
        %v10724 = vsel %vm10720, %v10708, %v10723
        %v10725 = vsel %vm10719, %v10722, %v10724
        %v10726 = vsel %vm10718, %v10705, %v10708
        %v10727 = vsel %vm10721, %v10714, 920167782
        %v10728 = vsel %vm10720, %v10711, %v10727
        %v10729 = vsel %vm10719, %v10726, %v10728
        %v10730 = vsel %vm10718, %v10708, %v10711
        %v10731 = vsel %vm10721, %v10717, 1326507024
        %v10732 = vsel %vm10720, %v10714, %v10731
        %v10733 = vsel %vm10719, %v10730, %v10732
        %v10734 = vshll.u32 %v10694, 8
        %v10735 = vand.u32 %v10734, 65535
        %v10736 = vshrl.u32 %v10734, 16
        %v10737 = vand.u32 %v10733, 65535
        %v10738 = vshrl.u32 %v10733, 16
        %v10739 = vmul.u32 %v10735, %v10737
        %v10740 = vmul.u32 %v10735, %v10738
        %v10741 = vmul.u32 %v10736, %v10737
        %v10742 = vmul.u32 %v10736, %v10738
        %v10743 = vshll.u32 %v10740, 16
        %v10744 = vshrl.u32 %v10740, 16
        %v10745 = vshll.u32 %v10741, 16
        %v10746 = vshrl.u32 %v10741, 16
        %vm10747 = vc.u32 %v10739, %v10743
        %v10748 = vsel %vm10747, 1, 0
        %v10749 = vadd.s32 %v10739, %v10743
        %v10750 = vadd.s32 %v10742, %v10748
        %vm10751 = vc.u32 %v10749, %v10745
        %v10752 = vsel %vm10751, 1, 0
        %v10753 = vadd.s32 %v10749, %v10745
        %v10754 = vadd.s32 %v10750, %v10752
        %v10755 = vadd.s32 %v10754, %v10744
        %v10756 = vadd.s32 %v10755, %v10746
        %v10757 = vand.u32 %v10734, 65535
        %v10758 = vshrl.u32 %v10734, 16
        %v10759 = vand.u32 %v10729, 65535
        %v10760 = vshrl.u32 %v10729, 16
        %v10761 = vmul.u32 %v10757, %v10759
        %v10762 = vmul.u32 %v10757, %v10760
        %v10763 = vmul.u32 %v10758, %v10759
        %v10764 = vmul.u32 %v10758, %v10760
        %v10765 = vshll.u32 %v10762, 16
        %v10766 = vshrl.u32 %v10762, 16
        %v10767 = vshll.u32 %v10763, 16
        %v10768 = vshrl.u32 %v10763, 16
        %vm10769 = vc.u32 %v10761, %v10765
        %v10770 = vsel %vm10769, 1, 0
        %v10771 = vadd.s32 %v10761, %v10765
        %v10772 = vadd.s32 %v10764, %v10770
        %vm10773 = vc.u32 %v10771, %v10767
        %v10774 = vsel %vm10773, 1, 0
        %v10775 = vadd.s32 %v10771, %v10767
        %v10776 = vadd.s32 %v10772, %v10774
        %v10777 = vadd.s32 %v10776, %v10766
        %v10778 = vadd.s32 %v10777, %v10768
        %v10779 = vmul.u32 %v10734, %v10725
        %v10780 = vadd.s32 %v10756, %v10775
        %vm10781 = vc.u32 %v10756, %v10775
        %v10782 = vadd.s32 %v10778, 1
        %v10783 = vsel %vm10781, %v10782, %v10778
        %v10784 = vadd.s32 %v10779, %v10783
        %v10785 = vadd.s32 %v10784, 536870912
        %v10786 = vshrl.u32 %v10785, 30
        %v10787 = vshll.u32 %v10786, 30
        %v10788 = vsub.s32 %v10784, %v10787
        %vm10789 = vcmp.lt.s32.totalorder %v10788, 0
        %v10790 = vsub.s32 0, %v10788
        %v10791 = vsel %vm10789, %v10790, %v10788
        %v10792 = vclz %v10791
        %v10793 = vsub.s32 %v10792, 2
        %vm10794 = vcmp.gt.s32.totalorder 0, %v10793
        %v10795 = vsel %vm10794, 0, %v10793
        %v10796 = vsub.s32 32, %v10795
        %v10797 = vshll.u32 %v10788, %v10795
        %v10798 = vshrl.u32 %v10780, %v10796
        %v10799 = vor.u32 %v10797, %v10798
        %v10800 = vsub.s32 4294967266, %v10795
        %v10801 = vadd.s32 %v10800, 127
        %v10802 = vshll.u32 %v10801, 23
        %v10803 = vor.u32 4788187, %v10802
        %v10804 = vand.u32 2147483647, %v10803
        %v10806 = vcvt.s32.f32 %v10799
        %v10807 = vmul.f32 %v10806, %v10804
        %v10808 = vxor.u32 %v10807, 2147483648
        %v10809 = vsel %vm10688, %v10808, %v10807
        %v10810 = vsub.s32 4, %v10786
        %v10811 = vsel %vm10688, %v10810, %v10786
        %v10812 = vsel %vm10687, %v8514, %v10809
        %v10813 = vsel %vm10687, 0, %v10811
        %v10814 = vmul.f32 %v10812, %v10812
        %v10815 = vmul.f32 %v10814, -0.001358992
        %v10816 = vadd.f32 %v10815, 0.041655596
        %v10817 = vmul.f32 %v10814, %v10816
        %v10818 = vadd.f32 %v10817, -0.4999988
        %v10819 = vmul.f32 %v10814, %v10818
        %v10820 = vadd.f32 1.0, %v10819
        %v10821 = vmul.f32 %v10812, %v10812
        %v10822 = vmul.f32 %v10821, -0.00019511016
        %v10823 = vadd.f32 %v10822, 0.008332121
        %v10824 = vmul.f32 %v10821, %v10823
        %v10825 = vadd.f32 %v10824, -0.16666654
        %v10826 = vmul.f32 %v10821, %v10825
        %v10827 = vadd.f32 %v10826, 1.0
        %v10828 = vmul.f32 %v10827, %v10812
        %vm10829 = vweird.f32 %v8514
        %v10830 = vadd.s32 %v10813, 3
        %v10831 = vand.u32 %v10830, 3
        %vm10832 = vcmp.lt.s32.totalorder %v10831, 2
        %vm10833 = vcmp.eq.s32.totalorder %v10831, 0
        %v10834 = vxor.u32 %v10828, 2147483648
        %v10835 = vsel %vm10833, %v10820, %v10834
        %vm10836 = vcmp.eq.s32.totalorder %v10831, 2
        %v10837 = vxor.u32 %v10820, 2147483648
        %v10838 = vsel %vm10836, %v10837, %v10828
        %v10839 = vsel %vm10832, %v10835, %v10838
        %v10840 = vsel %vm10829, nan, %v10839
        %v10841 = vand.u32 2147483647, %v8515
        %vm10842 = vcmp.le.f32.partialorder %v10841, 0.7853982
        %vm10843 = vcmp.lt.s32.totalorder %v8515, 0
        %v10844 = vand.u32 %v8515, 2139095040
        %v10845 = vshrl.u32 %v10844, 23
        %v10846 = vsub.s32 %v10845, 127
        %v10847 = vand.u32 2147483647, %v8515
        %v10848 = vand.u32 %v10847, 8388607
        %v10849 = vor.u32 %v10848, 8388608
        %v10850 = vsub.s32 0, %v10849
        %v10851 = vadd.s32 %v10846, 1
        %vm10852 = vcmp.gt.s32.totalorder %v10851, 0
        %v10853 = vsel %vm10852, %v10851, 0
        %v10854 = vshrl.u32 %v10853, 5
        %v10855 = vand.u32 %v10853, 31
        %v10856 = vsub.s32 32, %v10855
        %v10857 = vshrl.u32 683565275, %v10856
        %v10858 = vshll.u32 683565275, %v10855
        %v10859 = vshrl.u32 2475754826, %v10856
        %v10860 = vor.u32 %v10858, %v10859
        %v10861 = vshll.u32 2475754826, %v10855
        %v10862 = vshrl.u32 2131351028, %v10856
        %v10863 = vor.u32 %v10861, %v10862
        %v10864 = vshll.u32 2131351028, %v10855
        %v10865 = vshrl.u32 2102212464, %v10856
        %v10866 = vor.u32 %v10864, %v10865
        %v10867 = vshll.u32 2102212464, %v10855
        %v10868 = vshrl.u32 920167782, %v10856
        %v10869 = vor.u32 %v10867, %v10868
        %v10870 = vshll.u32 920167782, %v10855
        %v10871 = vshrl.u32 1326507024, %v10856
        %v10872 = vor.u32 %v10870, %v10871
        %vm10873 = vcmp.lt.s32.totalorder %v10854, 1
        %vm10874 = vcmp.lt.s32.totalorder %v10854, 2
        %vm10875 = vcmp.lt.s32.totalorder %v10854, 3
        %vm10876 = vcmp.lt.s32.totalorder %v10854, 4
        %v10877 = vsel %vm10873, %v10857, %v10860
        %v10878 = vsel %vm10876, %v10866, 2102212464
        %v10879 = vsel %vm10875, %v10863, %v10878
        %v10880 = vsel %vm10874, %v10877, %v10879
        %v10881 = vsel %vm10873, %v10860, %v10863
        %v10882 = vsel %vm10876, %v10869, 920167782
        %v10883 = vsel %vm10875, %v10866, %v10882
        %v10884 = vsel %vm10874, %v10881, %v10883
        %v10885 = vsel %vm10873, %v10863, %v10866
        %v10886 = vsel %vm10876, %v10872, 1326507024
        %v10887 = vsel %vm10875, %v10869, %v10886
        %v10888 = vsel %vm10874, %v10885, %v10887
        %v10889 = vshll.u32 %v10849, 8
        %v10890 = vand.u32 %v10889, 65535
        %v10891 = vshrl.u32 %v10889, 16
        %v10892 = vand.u32 %v10888, 65535
        %v10893 = vshrl.u32 %v10888, 16
        %v10894 = vmul.u32 %v10890, %v10892
        %v10895 = vmul.u32 %v10890, %v10893
        %v10896 = vmul.u32 %v10891, %v10892
        %v10897 = vmul.u32 %v10891, %v10893
        %v10898 = vshll.u32 %v10895, 16
        %v10899 = vshrl.u32 %v10895, 16
        %v10900 = vshll.u32 %v10896, 16
        %v10901 = vshrl.u32 %v10896, 16
        %vm10902 = vc.u32 %v10894, %v10898
        %v10903 = vsel %vm10902, 1, 0
        %v10904 = vadd.s32 %v10894, %v10898
        %v10905 = vadd.s32 %v10897, %v10903
        %vm10906 = vc.u32 %v10904, %v10900
        %v10907 = vsel %vm10906, 1, 0
        %v10908 = vadd.s32 %v10904, %v10900
        %v10909 = vadd.s32 %v10905, %v10907
        %v10910 = vadd.s32 %v10909, %v10899
        %v10911 = vadd.s32 %v10910, %v10901
        %v10912 = vand.u32 %v10889, 65535
        %v10913 = vshrl.u32 %v10889, 16
        %v10914 = vand.u32 %v10884, 65535
        %v10915 = vshrl.u32 %v10884, 16
        %v10916 = vmul.u32 %v10912, %v10914
        %v10917 = vmul.u32 %v10912, %v10915
        %v10918 = vmul.u32 %v10913, %v10914
        %v10919 = vmul.u32 %v10913, %v10915
        %v10920 = vshll.u32 %v10917, 16
        %v10921 = vshrl.u32 %v10917, 16
        %v10922 = vshll.u32 %v10918, 16
        %v10923 = vshrl.u32 %v10918, 16
        %vm10924 = vc.u32 %v10916, %v10920
        %v10925 = vsel %vm10924, 1, 0
        %v10926 = vadd.s32 %v10916, %v10920
        %v10927 = vadd.s32 %v10919, %v10925
        %vm10928 = vc.u32 %v10926, %v10922
        %v10929 = vsel %vm10928, 1, 0
        %v10930 = vadd.s32 %v10926, %v10922
        %v10931 = vadd.s32 %v10927, %v10929
        %v10932 = vadd.s32 %v10931, %v10921
        %v10933 = vadd.s32 %v10932, %v10923
        %v10934 = vmul.u32 %v10889, %v10880
        %v10935 = vadd.s32 %v10911, %v10930
        %vm10936 = vc.u32 %v10911, %v10930
        %v10937 = vadd.s32 %v10933, 1
        %v10938 = vsel %vm10936, %v10937, %v10933
        %v10939 = vadd.s32 %v10934, %v10938
        %v10940 = vadd.s32 %v10939, 536870912
        %v10941 = vshrl.u32 %v10940, 30
        %v10942 = vshll.u32 %v10941, 30
        %v10943 = vsub.s32 %v10939, %v10942
        %vm10944 = vcmp.lt.s32.totalorder %v10943, 0
        %v10945 = vsub.s32 0, %v10943
        %v10946 = vsel %vm10944, %v10945, %v10943
        %v10947 = vclz %v10946
        %v10948 = vsub.s32 %v10947, 2
        %vm10949 = vcmp.gt.s32.totalorder 0, %v10948
        %v10950 = vsel %vm10949, 0, %v10948
        %v10951 = vsub.s32 32, %v10950
        %v10952 = vshll.u32 %v10943, %v10950
        %v10953 = vshrl.u32 %v10935, %v10951
        %v10954 = vor.u32 %v10952, %v10953
        %v10955 = vsub.s32 4294967266, %v10950
        %v10956 = vadd.s32 %v10955, 127
        %v10957 = vshll.u32 %v10956, 23
        %v10958 = vor.u32 4788187, %v10957
        %v10959 = vand.u32 2147483647, %v10958
        %v10961 = vcvt.s32.f32 %v10954
        %v10962 = vmul.f32 %v10961, %v10959
        %v10963 = vxor.u32 %v10962, 2147483648
        %v10964 = vsel %vm10843, %v10963, %v10962
        %v10965 = vsub.s32 4, %v10941
        %v10966 = vsel %vm10843, %v10965, %v10941
        %v10967 = vsel %vm10842, %v8515, %v10964
        %v10968 = vsel %vm10842, 0, %v10966
        %v10969 = vmul.f32 %v10967, %v10967
        %v10970 = vmul.f32 %v10969, -0.001358992
        %v10971 = vadd.f32 %v10970, 0.041655596
        %v10972 = vmul.f32 %v10969, %v10971
        %v10973 = vadd.f32 %v10972, -0.4999988
        %v10974 = vmul.f32 %v10969, %v10973
        %v10975 = vadd.f32 1.0, %v10974
        %v10976 = vmul.f32 %v10967, %v10967
        %v10977 = vmul.f32 %v10976, -0.00019511016
        %v10978 = vadd.f32 %v10977, 0.008332121
        %v10979 = vmul.f32 %v10976, %v10978
        %v10980 = vadd.f32 %v10979, -0.16666654
        %v10981 = vmul.f32 %v10976, %v10980
        %v10982 = vadd.f32 %v10981, 1.0
        %v10983 = vmul.f32 %v10982, %v10967
        %vm10984 = vweird.f32 %v8515
        %v10985 = vadd.s32 %v10968, 3
        %v10986 = vand.u32 %v10985, 3
        %vm10987 = vcmp.lt.s32.totalorder %v10986, 2
        %vm10988 = vcmp.eq.s32.totalorder %v10986, 0
        %v10989 = vxor.u32 %v10983, 2147483648
        %v10990 = vsel %vm10988, %v10975, %v10989
        %vm10991 = vcmp.eq.s32.totalorder %v10986, 2
        %v10992 = vxor.u32 %v10975, 2147483648
        %v10993 = vsel %vm10991, %v10992, %v10983
        %v10994 = vsel %vm10987, %v10990, %v10993
        %v10995 = vsel %vm10984, nan, %v10994
        %s10996 = scalar_lea.vmem %s1, 128
        %v10997 = vld [vmem:[%s10996] sm:$0xff]
        %s10998 = scalar_lea.vmem %s2, 128
        %v10999 = vld [vmem:[%s10998] sm:$0xff]
        %11001 = vset.pattern.permute.xlu0 0
        %11002 = vperm.xlu0 %11001, %v10999
        %v11003 = vpop.permute.xlu0 %11002
        %v11006 = vsel %vm2919, %v10997, 0
        %11008 = vmatpush.msra.mxu0 0.0
        %11009 = vmatpush.msra.mxu0 0.0
        %11010 = vmatpush.msra.mxu0 0.0
        %11011 = vmatpush.msra.mxu0 0.0
        %11012 = vmatpush.msra.mxu0 0.0
        %11013 = vmatpush.msra.mxu0 0.0
        %11014 = vmatpush.msra.mxu0 0.0
        %11015 = vmatpush.msra.mxu0 0.0
        %11016 = vmatpush.msra.mxu0 0.0
        %11017 = vmatpush.msra.mxu0 0.0
        %11018 = vmatpush.msra.mxu0 0.0
        %11019 = vmatpush.msra.mxu0 0.0
        %11020 = vmatpush.msra.mxu0 %v10530
        %11021 = vmatpush.msra.mxu0 %v9910
        %11022 = vmatpush.msra.mxu0 %v9290
        %11023 = vmatpush.msra.mxu0 %v8670
        %11024 = vmatmul.f32.gmra.mxu0 %v11006
        %v11025 = vpop.f32.mrf.mxu0
        %v11026 = vadd.f32 %v11003, %v11025
        %11027 = vdwg.mxu0
        %11028 = vmatpush.msra.mxu0 0.0
        %11029 = vmatpush.msra.mxu0 0.0
        %11030 = vmatpush.msra.mxu0 0.0
        %11031 = vmatpush.msra.mxu0 0.0
        %11032 = vmatpush.msra.mxu0 0.0
        %11033 = vmatpush.msra.mxu0 0.0
        %11034 = vmatpush.msra.mxu0 0.0
        %11035 = vmatpush.msra.mxu0 0.0
        %11036 = vmatpush.msra.mxu0 0.0
        %11037 = vmatpush.msra.mxu0 0.0
        %11038 = vmatpush.msra.mxu0 0.0
        %11039 = vmatpush.msra.mxu0 0.0
        %11040 = vmatpush.msra.mxu0 %v10685
        %11041 = vmatpush.msra.mxu0 %v10065
        %11042 = vmatpush.msra.mxu0 %v9445
        %11043 = vmatpush.msra.mxu0 %v8825
        %11044 = vmatmul.f32.gmra.mxu0 %v11006
        %v11045 = vpop.f32.mrf.mxu0
        %v11046 = vadd.f32 %v11003, %v11045
        %11047 = vdwg.mxu0
        %11048 = vmatpush.msra.mxu0 0.0
        %11049 = vmatpush.msra.mxu0 0.0
        %11050 = vmatpush.msra.mxu0 0.0
        %11051 = vmatpush.msra.mxu0 0.0
        %11052 = vmatpush.msra.mxu0 0.0
        %11053 = vmatpush.msra.mxu0 0.0
        %11054 = vmatpush.msra.mxu0 0.0
        %11055 = vmatpush.msra.mxu0 0.0
        %11056 = vmatpush.msra.mxu0 0.0
        %11057 = vmatpush.msra.mxu0 0.0
        %11058 = vmatpush.msra.mxu0 0.0
        %11059 = vmatpush.msra.mxu0 0.0
        %11060 = vmatpush.msra.mxu0 %v10840
        %11061 = vmatpush.msra.mxu0 %v10220
        %11062 = vmatpush.msra.mxu0 %v9600
        %11063 = vmatpush.msra.mxu0 %v8980
        %11064 = vmatmul.f32.gmra.mxu0 %v11006
        %v11065 = vpop.f32.mrf.mxu0
        %v11066 = vadd.f32 %v11003, %v11065
        %11067 = vdwg.mxu0
        %11068 = vmatpush.msra.mxu0 0.0
        %11069 = vmatpush.msra.mxu0 0.0
        %11070 = vmatpush.msra.mxu0 0.0
        %11071 = vmatpush.msra.mxu0 0.0
        %11072 = vmatpush.msra.mxu0 0.0
        %11073 = vmatpush.msra.mxu0 0.0
        %11074 = vmatpush.msra.mxu0 0.0
        %11075 = vmatpush.msra.mxu0 0.0
        %11076 = vmatpush.msra.mxu0 0.0
        %11077 = vmatpush.msra.mxu0 0.0
        %11078 = vmatpush.msra.mxu0 0.0
        %11079 = vmatpush.msra.mxu0 0.0
        %11080 = vmatpush.msra.mxu0 %v10995
        %11081 = vmatpush.msra.mxu0 %v10375
        %11082 = vmatpush.msra.mxu0 %v9755
        %11083 = vmatpush.msra.mxu0 %v9135
        %11084 = vmatmul.f32.gmra.mxu0 %v11006
        %v11085 = vpop.f32.mrf.mxu0
        %v11086 = vadd.f32 %v11003, %v11085
        %11087 = vdwg.mxu0
        %v11092 = vrot.slane %v11046, 4
        %v11093 = vrot.slane %v11086, 4
        %vm11094 = vcmask 1043456
        %v11095 = vsel %vm11094, %v11026, %v11092
        %v11096 = vsel %vm11094, %v11066, %v11093
        %11099 = vst [vmem:[%s188] sm:$0x77] %v11095
        %11100 = vst [vmem:[%s188 + $0x8] sm:$0x77] %v11096
        %s11101 = sand.u32 %s96, 1
        %s11102 = scalar_lea.sflag [#allocation4], %s11101
        %s11103 = sand.u32 %s96, 1
        %s11104 = smul.addr %s11103, 16
        %s11105 = scalar_lea.vmem [#allocation5], %s11104
        // Predicated region
        $region37: #{tpu_custom_call.1} parent=31 // pred_check
          %p11106 = pneg %p106
        $region38: #{tpu_custom_call.1} parent=31 // pred_check_branch
          %11108 = sbr.rel (%p11106) target = $region40
        $region39: #{tpu_custom_call.1} parent=31 // pred_region
          %s11109 = smul.u32 4, %s20
          %11111 = vsyncadd %s11102, 0
          %s11112 = smul.addr %s11109, 4
          %s11113 = scalar_lea.hbm %s3, %s11112
          %s11115 = sshll.u32 %s11105, 4
          %s11116 = int_to_ptr.vmem [resolvable:$true] %s11115
          %s11117 = sshll.u32 %s11113, 4
          %s11118 = int_to_ptr.hbm [resolvable:$true] %s11117
          %11120 = dma.vmem_to_hbm [thread:$0]  %s11116, 256, %s11118, %s11102
        $region40: #{tpu_custom_call.1} parent=31 // pred_fallthru
          _
      $region32: #{tpu_custom_call.1} parent=5 // pred_fallthru
        _
      %p11121 = scmp.le.s32.totalorder 2, %s15
      // Predicated region
      $region41: #{tpu_custom_call.1} parent=5 // pred_check
        %p11122 = pneg %p11121
      $region42: #{tpu_custom_call.1} parent=5 // pred_check_branch
        %11124 = sbr.rel (%p11122) target = $region44
      $region43: #{tpu_custom_call.1} parent=5 // pred_region
        %s11125 = ssub.s32 %s15, 2
        // Predicated region
        $region45: #{tpu_custom_call.1} parent=43 // pred_check
          %p11126 = pneg %p112
        $region46: #{tpu_custom_call.1} parent=43 // pred_check_branch
          %11128 = sbr.rel (%p11126) target = $region48
        $region47: #{tpu_custom_call.1} parent=43 // pred_region
          %s11129 = sand.u32 %s97, 1
          %s11130 = scalar_lea.sflag [#allocation4], %s11129
          %s11131 = sand.u32 %s97, 1
          %s11132 = smul.addr %s11131, 16
          %s11133 = scalar_lea.vmem [#allocation5], %s11132
          %11135 = dma.done %s11130, 256
        $region48: #{tpu_custom_call.1} parent=43 // pred_fallthru
          _
      $region44: #{tpu_custom_call.1} parent=5 // pred_fallthru
        _
    $region6: #{tpu_custom_call.1} parent=1 // loop_footer
      %s19 = sadd.s32 1, %s15
    $region7: #{tpu_custom_call.1} parent=1 // loop_footer_branch
      %14 = sbr.rel target = $region3
    $region8: #{tpu_custom_call.1} parent=1 // loop_exit
      _
    %11136 = vsyncpa [#allocation3], 1
    %s11137 = scalar_lea.sflag [#allocation3], 1
    %11138 = vsyncpa %s11137, 1
    %11139 = vsyncpa [#allocation4], 1
    %s11140 = scalar_lea.sflag [#allocation4], 1
    %11141 = vsyncpa %s11140, 1

</llo_original>
